<compile_context>
chip_gen: v7x
topology: tpu7x:2x2x1
jax: 0.10.0
libtpu: 0.0.40
codegen_flags: <defaults>
</compile_context>

<pallas_src>
import numpy as np
import jax
import jax.numpy as jnp
from jax import lax
from jax.experimental import pallas as pl
from jax.experimental.pallas import tpu as pltpu


# ----------------------------------------------------------------------------
# Static per-layer plan (pure Python ints; closed over by the kernel).
#   kind: "conv"   -> 3x3 conv + ReLU, optionally fused 2x2 maxpool (pool=True)
#         "upconv" -> nearest x2 upsample + 3x3 conv + ReLU
#         "final"  -> 1x1 conv (no ReLU)
#   cin/cout include channel padding (input 3->4, final output 3->4) so every
#   HBM block / first+last matmul is a multiple of 128 lanes wide.
# ----------------------------------------------------------------------------
def unet_layer_plan(num_filters, size):
    F = num_filters
    plan = []
    s = size
    cin = 4                                    # input channels padded 3 -> 4
    for i in range(4):                         # encoders
        cout = F * (2 ** i)
        plan.append(dict(kind="conv", cin=cin, cout=cout, win=s, hin=s, pool=False))
        plan.append(dict(kind="conv", cin=cout, cout=cout, win=s, hin=s, pool=True))
        cin = cout
        s //= 2
    for cout in (4 * F, 2 * F, F, F):          # decoders
        plan.append(dict(kind="upconv", cin=cin, cout=cout, win=s, hin=s, pool=False))
        s *= 2
        plan.append(dict(kind="conv", cin=cout, cout=cout, win=s, hin=s, pool=False))
        cin = cout
    plan.append(dict(kind="final", cin=cin, cout=4, win=s, hin=s, pool=False))
    return plan


# ----------------------------------------------------------------------------
# Host-side banded-weight construction (runs once at setup, not in the kernel).
# Activation slab convention: lane index = column*Cin + ci, row index = y.
# The W zero-padding is folded into the band (out-of-range dx taps dropped),
# so K = W*Cin and the slab needs no padded lane strips.
# ----------------------------------------------------------------------------
def _band_conv3x3(w, wout, parity_out):
    """w: (Cout, Cin, 3, 3) -> (3, wout*Cin, wout*Cout)."""
    cout, cin = w.shape[0], w.shape[1]
    K, N = wout * cin, wout * cout
    half = (wout // 2) * cout
    band = np.zeros((3, K, N), np.float32)
    for dy in range(3):
        for dx in range(3):
            tap = w[:, :, dy, dx].T                         # (Cin, Cout)
            for x in range(wout):
                c = x + dx - 1                              # input column
                if c < 0 or c >= wout:
                    continue                                # zero pad: drop tap
                # parity_out interleaves even|odd output columns so the encoder
                # maxpool W-reduction is a max of the two contiguous lane halves.
                n0 = ((x % 2) * half + (x // 2) * cout) if parity_out else x * cout
                band[dy, c * cin:(c + 1) * cin, n0:n0 + cout] += tap
    return band


def _band_upconv3x3(w, win):
    """Fused nearest x2 W-upsample + 3x3 conv: (3, win*Cin, 2*win*Cout)."""
    cout, cin = w.shape[0], w.shape[1]
    wout = 2 * win
    K, N = win * cin, wout * cout
    band = np.zeros((3, K, N), np.float32)
    for dy in range(3):
        for dx in range(3):
            tap = w[:, :, dy, dx].T
            for x in range(wout):
                c = x + dx - 1                              # upsampled column
                if c < 0 or c >= wout:
                    continue
                u = c // 2                                  # pre-upsample column
                band[dy, u * cin:(u + 1) * cin, x * cout:x * cout + cout] += tap
    return band


def _band_conv1x1(w, wout):
    """1x1 conv as a block-diagonal (wout*Cin, wout*Cout) matmul."""
    cout, cin = w.shape[0], w.shape[1]
    band = np.zeros((wout * cin, wout * cout), np.float32)
    tap = w[:, :, 0, 0].T
    for x in range(wout):
        band[x * cin:(x + 1) * cin, x * cout:(x + 1) * cout] = tap
    return band


def pack_unet_params(plan, params):
    """(w, b) per conv layer -> flat [band0, biasrow0, band1, biasrow1, ...] in bf16."""
    assert len(plan) == len(params)
    ops = []
    for li, (L, (w, b)) in enumerate(zip(plan, params)):
        w = np.asarray(w, np.float32)
        b = np.asarray(b, np.float32)
        if li == 0 and L["cin"] > w.shape[1]:               # pad input channels 3 -> 4
            w = np.pad(w, ((0, 0), (0, L["cin"] - w.shape[1]), (0, 0), (0, 0)))
        if L["kind"] == "final" and L["cout"] > w.shape[0]:  # pad output channels 3 -> 4
            w = np.pad(w, ((0, L["cout"] - w.shape[0]), (0, 0), (0, 0), (0, 0)))
            b = np.pad(b, (0, L["cout"] - b.shape[0]))
        if L["kind"] == "conv":
            band, wout = _band_conv3x3(w, L["win"], L["pool"]), L["win"]
        elif L["kind"] == "upconv":
            band, wout = _band_upconv3x3(w, L["win"]), 2 * L["win"]
        else:
            band, wout = _band_conv1x1(w, L["win"]), L["win"]
        brow = np.tile(b, wout)[None, :]
        ops.append(jnp.asarray(band, jnp.bfloat16))
        ops.append(jnp.asarray(brow, jnp.bfloat16))
    return ops


def init_unet_params(key, num_filters):
    """Deterministic synthetic params, PyTorch Conv2d shapes, forward order."""
    F = num_filters
    shapes = []
    cin = 3
    for i in range(4):
        cout = F * 2 ** i
        shapes += [(cout, cin, 3), (cout, cout, 3)]
        cin = cout
    for cout in (4 * F, 2 * F, F, F):
        shapes += [(cout, cin, 3), (cout, cout, 3)]
        cin = cout
    shapes.append((3, cin, 1))
    params = []
    keys = jax.random.split(key, 2 * len(shapes))
    for i, (cout, cin_, k) in enumerate(shapes):
        scale = float(np.sqrt(2.0 / (cin_ * k * k)))
        w = jax.random.normal(keys[2 * i], (cout, cin_, k, k), jnp.float32) * scale
        b = jax.random.normal(keys[2 * i + 1], (cout,), jnp.float32) * 0.05
        params.append((w, b))
    return params


# ----------------------------------------------------------------------------
# Fused Pallas kernel
# ----------------------------------------------------------------------------
def make_unet_forward(num_filters, size, batch):
    plan = unet_layer_plan(num_filters, size)
    cin0, cout_last = plan[0]["cin"], plan[-1]["cout"]

    operand_shapes = []                     # (band, bias-row) shapes in call order
    max_rows, max_k = 0, 0
    for L in plan:
        K = L["win"] * L["cin"]
        if L["kind"] == "conv":
            wout, rows = L["win"], L["hin"] + 2
            operand_shapes += [(3, K, wout * L["cout"]), (1, wout * L["cout"])]
        elif L["kind"] == "upconv":
            wout, rows = 2 * L["win"], 2 * L["hin"] + 2
            operand_shapes += [(3, K, wout * L["cout"]), (1, wout * L["cout"])]
        else:                               # final 1x1 conv, no padded slab
            wout, rows = L["win"], 0
            operand_shapes += [(K, wout * L["cout"]), (1, wout * L["cout"])]
        max_rows, max_k = max(max_rows, rows), max(max_k, K)
    n_params = len(operand_shapes)

    def kernel(x_ref, *refs):
        param_refs = refs[:n_params]
        o_ref = refs[n_params]
        slab = refs[n_params + 1]           # single shared padded-input scratch (f32)

        def banded_conv(band_ref, off, count, stride, K):
            # 3 MXU matmuls (one per dy); K folds (dx, Cin); bf16 feed, f32 acc.
            acc = None
            for dy in range(3):
                if stride == 1:
                    lhs = slab[off + dy:off + dy + count, 0:K]
                else:
                    lhs = slab[pl.ds(off + dy, count, stride), 0:K]
                d = jnp.dot(lhs.astype(jnp.bfloat16), band_ref[dy],
                            preferred_element_type=jnp.float32)
                acc = d if acc is None else acc + d
            return acc

        a = x_ref[0]                        # (size, size*cin0) f32 activation slab
        for li, L in enumerate(plan):
            band_ref, brow_ref = param_refs[2 * li], param_refs[2 * li + 1]
            cout, win, hin = L["cout"], L["win"], L["hin"]
            K = win * L["cin"]

            if L["kind"] == "final":        # 1x1 conv (block-diag band), no ReLU
                a = (jnp.dot(a.astype(jnp.bfloat16), band_ref[...],
                             preferred_element_type=jnp.float32) + brow_ref[...])
                break

            # --- build zero-padded input slab: block store(s) + 2 border rows only
            if L["kind"] == "conv":
                rows, hconv, wout = hin + 2, hin, win
                slab[1:hin + 1, 0:K] = a
            else:                           # nearest x2 H-upsample = 2 strided stores
                rows, hconv, wout = 2 * hin + 2, 2 * hin, 2 * win
                slab[pl.ds(1, hin, 2), 0:K] = a
                slab[pl.ds(2, hin, 2), 0:K] = a
            zrow = jnp.zeros((1, K), jnp.float32)
            slab[0:1, 0:K] = zrow
            slab[rows - 1:rows, 0:K] = zrow

            # --- 3x3 conv + ReLU; encoder 2x2 maxpool fused (parity band + stride-2 rows)
            brow = brow_ref[...]
            if L["pool"]:
                h2 = hconv // 2
                even = jnp.maximum(banded_conv(band_ref, 0, h2, 2, K) + brow, 0.0)
                odd = jnp.maximum(banded_conv(band_ref, 1, h2, 2, K) + brow, 0.0)
                m = jnp.maximum(even, odd)                       # H-reduction
                half = (wout // 2) * cout
                a = jnp.maximum(m[:, :half], m[:, half:])        # W-reduction
            else:
                a = jnp.maximum(banded_conv(band_ref, 0, hconv, 1, K) + brow, 0.0)

        o_ref[0] = a.astype(o_ref.dtype)

    def _full_spec(shape):
        nd = len(shape)
        return pl.BlockSpec(shape, lambda b, _z=(0,) * nd: _z)

    in_specs = [pl.BlockSpec((1, size, size * cin0), lambda b: (b, 0, 0))]
    in_specs += [_full_spec(s) for s in operand_shapes]

    pallas_fn = pl.pallas_call(
        kernel,
        out_shape=jax.ShapeDtypeStruct((batch, size, size * cout_last), jnp.float32),
        grid=(batch,),
        in_specs=in_specs,
        out_specs=pl.BlockSpec((1, size, size * cout_last), lambda b: (b, 0, 0)),
        scratch_shapes=[pltpu.VMEM((max_rows, max_k), jnp.float32)],
        compiler_params=pltpu.CompilerParams(
            dimension_semantics=("parallel",)),   # 2 TCs on v7x, plain loop elsewhere
    )

    def forward(x_nchw, packed_params):
        B, C, H, W = x_nchw.shape
        x_nhwc = jnp.transpose(x_nchw, (0, 2, 3, 1))
        if cin0 > C:                               # pad channels so lanes are 128-dense
            x_nhwc = jnp.pad(x_nhwc, ((0, 0), (0, 0), (0, 0), (0, cin0 - C)))
        x_slab = x_nhwc.reshape(B, H, W * cin0)
        out_slab = pallas_fn(x_slab, *packed_params)
        out = out_slab.reshape(B, H, W, cout_last)[..., :3]
        return jnp.transpose(out, (0, 3, 1, 2))

    return jax.jit(forward), plan


# ----------------------------------------------------------------------------
# Pure-JAX reference (lax.conv) for correctness checking.
# ----------------------------------------------------------------------------
def unet_reference(x, params):
    hp = lax.Precision.HIGHEST

    def conv(a, w, b, pad):
        y = lax.conv_general_dilated(
            a, w, window_strides=(1, 1), padding=((pad, pad), (pad, pad)),
            dimension_numbers=("NCHW", "OIHW", "NCHW"), precision=hp)
        return y + b.reshape(1, -1, 1, 1)

    idx = 0
    a = x
    for _ in range(4):                                   # encoders
        a = jax.nn.relu(conv(a, *params[idx], 1)); idx += 1
        a = jax.nn.relu(conv(a, *params[idx], 1)); idx += 1
        a = lax.reduce_window(a, -jnp.inf, lax.max,
                              (1, 1, 2, 2), (1, 1, 2, 2), "VALID")
    for _ in range(4):                                   # decoders
        a = jnp.repeat(jnp.repeat(a, 2, axis=2), 2, axis=3)
        a = jax.nn.relu(conv(a, *params[idx], 1)); idx += 1
        a = jax.nn.relu(conv(a, *params[idx], 1)); idx += 1
    return conv(a, *params[idx], 0)                      # final 1x1 conv


if __name__ == "__main__":
    BATCH, CHANNELS, SIZE, NUM_FILTERS = 2, 3, 32, 4     # 4 pool levels -> size % 16 == 0

    key = jax.random.PRNGKey(0)
    kx, kp = jax.random.split(key)
    x = jax.random.normal(kx, (BATCH, CHANNELS, SIZE, SIZE), jnp.float32)
    params = init_unet_params(kp, NUM_FILTERS)

    forward, plan = make_unet_forward(NUM_FILTERS, SIZE, BATCH)
    packed = pack_unet_params(plan, params)

    out = jax.block_until_ready(forward(x, packed))
    assert out.shape == (BATCH, 3, SIZE, SIZE), out.shape

    ref = jax.block_until_ready(unet_reference(x, params))
    out_np, ref_np = np.asarray(out), np.asarray(ref)
    err = float(np.max(np.abs(out_np - ref_np)))
    scale = float(np.max(np.abs(ref_np)))
    # bf16 matmul operands (f32 accumulation) through 17 conv layers.
    assert err <= 0.08 * scale + 1e-2, (err, scale)
    print("KERNEL_OK")
</pallas_src>

<mosaic_0001>
module attributes {stable_mosaic.version = 11 : i64} {
  func.func @kernel(%arg0: i32, %arg1: memref<1x32x128xf32, #tpu.memory_space<vmem>>, %arg2: memref<3x128x128xbf16, #tpu.memory_space<vmem>>, %arg3: memref<1x128xbf16, #tpu.memory_space<vmem>>, %arg4: memref<3x128x128xbf16, #tpu.memory_space<vmem>>, %arg5: memref<1x128xbf16, #tpu.memory_space<vmem>>, %arg6: memref<3x64x128xbf16, #tpu.memory_space<vmem>>, %arg7: memref<1x128xbf16, #tpu.memory_space<vmem>>, %arg8: memref<3x128x128xbf16, #tpu.memory_space<vmem>>, %arg9: memref<1x128xbf16, #tpu.memory_space<vmem>>, %arg10: memref<3x64x128xbf16, #tpu.memory_space<vmem>>, %arg11: memref<1x128xbf16, #tpu.memory_space<vmem>>, %arg12: memref<3x128x128xbf16, #tpu.memory_space<vmem>>, %arg13: memref<1x128xbf16, #tpu.memory_space<vmem>>, %arg14: memref<3x64x128xbf16, #tpu.memory_space<vmem>>, %arg15: memref<1x128xbf16, #tpu.memory_space<vmem>>, %arg16: memref<3x128x128xbf16, #tpu.memory_space<vmem>>, %arg17: memref<1x128xbf16, #tpu.memory_space<vmem>>, %arg18: memref<3x64x64xbf16, #tpu.memory_space<vmem>>, %arg19: memref<1x64xbf16, #tpu.memory_space<vmem>>, %arg20: memref<3x64x64xbf16, #tpu.memory_space<vmem>>, %arg21: memref<1x64xbf16, #tpu.memory_space<vmem>>, %arg22: memref<3x64x64xbf16, #tpu.memory_space<vmem>>, %arg23: memref<1x64xbf16, #tpu.memory_space<vmem>>, %arg24: memref<3x64x64xbf16, #tpu.memory_space<vmem>>, %arg25: memref<1x64xbf16, #tpu.memory_space<vmem>>, %arg26: memref<3x64x64xbf16, #tpu.memory_space<vmem>>, %arg27: memref<1x64xbf16, #tpu.memory_space<vmem>>, %arg28: memref<3x64x64xbf16, #tpu.memory_space<vmem>>, %arg29: memref<1x64xbf16, #tpu.memory_space<vmem>>, %arg30: memref<3x64x128xbf16, #tpu.memory_space<vmem>>, %arg31: memref<1x128xbf16, #tpu.memory_space<vmem>>, %arg32: memref<3x128x128xbf16, #tpu.memory_space<vmem>>, %arg33: memref<1x128xbf16, #tpu.memory_space<vmem>>, %arg34: memref<128x128xbf16, #tpu.memory_space<vmem>>, %arg35: memref<1x128xbf16, #tpu.memory_space<vmem>>, %arg36: memref<1x32x128xf32, #tpu.memory_space<vmem>>, %arg37: memref<34x128xf32, #tpu.memory_space<vmem>>) attributes {dimension_semantics = [#tpu.dimension_semantics<parallel>], iteration_bounds = array<i64: 2>, scalar_prefetch = 0 : i64, scratch_operands = 1 : i64, tpu.core_type = #tpu.core_type<tc>, window_params = [{transform_indices = @transform_0, window_bounds = array<i64: 1, 32, 128>}, {pipeline_mode = #tpu.pipeline_mode<synchronous>, transform_indices = @transform_1, window_bounds = array<i64: 3, 128, 128>}, {pipeline_mode = #tpu.pipeline_mode<synchronous>, transform_indices = @transform_2, window_bounds = array<i64: 1, 128>}, {pipeline_mode = #tpu.pipeline_mode<synchronous>, transform_indices = @transform_3, window_bounds = array<i64: 3, 128, 128>}, {pipeline_mode = #tpu.pipeline_mode<synchronous>, transform_indices = @transform_4, window_bounds = array<i64: 1, 128>}, {pipeline_mode = #tpu.pipeline_mode<synchronous>, transform_indices = @transform_5, window_bounds = array<i64: 3, 64, 128>}, {pipeline_mode = #tpu.pipeline_mode<synchronous>, transform_indices = @transform_6, window_bounds = array<i64: 1, 128>}, {pipeline_mode = #tpu.pipeline_mode<synchronous>, transform_indices = @transform_7, window_bounds = array<i64: 3, 128, 128>}, {pipeline_mode = #tpu.pipeline_mode<synchronous>, transform_indices = @transform_8, window_bounds = array<i64: 1, 128>}, {pipeline_mode = #tpu.pipeline_mode<synchronous>, transform_indices = @transform_9, window_bounds = array<i64: 3, 64, 128>}, {pipeline_mode = #tpu.pipeline_mode<synchronous>, transform_indices = @transform_10, window_bounds = array<i64: 1, 128>}, {pipeline_mode = #tpu.pipeline_mode<synchronous>, transform_indices = @transform_11, window_bounds = array<i64: 3, 128, 128>}, {pipeline_mode = #tpu.pipeline_mode<synchronous>, transform_indices = @transform_12, window_bounds = array<i64: 1, 128>}, {pipeline_mode = #tpu.pipeline_mode<synchronous>, transform_indices = @transform_13, window_bounds = array<i64: 3, 64, 128>}, {pipeline_mode = #tpu.pipeline_mode<synchronous>, transform_indices = @transform_14, window_bounds = array<i64: 1, 128>}, {pipeline_mode = #tpu.pipeline_mode<synchronous>, transform_indices = @transform_15, window_bounds = array<i64: 3, 128, 128>}, {pipeline_mode = #tpu.pipeline_mode<synchronous>, transform_indices = @transform_16, window_bounds = array<i64: 1, 128>}, {pipeline_mode = #tpu.pipeline_mode<synchronous>, transform_indices = @transform_17, window_bounds = array<i64: 3, 64, 64>}, {pipeline_mode = #tpu.pipeline_mode<synchronous>, transform_indices = @transform_18, window_bounds = array<i64: 1, 64>}, {pipeline_mode = #tpu.pipeline_mode<synchronous>, transform_indices = @transform_19, window_bounds = array<i64: 3, 64, 64>}, {pipeline_mode = #tpu.pipeline_mode<synchronous>, transform_indices = @transform_20, window_bounds = array<i64: 1, 64>}, {pipeline_mode = #tpu.pipeline_mode<synchronous>, transform_indices = @transform_21, window_bounds = array<i64: 3, 64, 64>}, {pipeline_mode = #tpu.pipeline_mode<synchronous>, transform_indices = @transform_22, window_bounds = array<i64: 1, 64>}, {pipeline_mode = #tpu.pipeline_mode<synchronous>, transform_indices = @transform_23, window_bounds = array<i64: 3, 64, 64>}, {pipeline_mode = #tpu.pipeline_mode<synchronous>, transform_indices = @transform_24, window_bounds = array<i64: 1, 64>}, {pipeline_mode = #tpu.pipeline_mode<synchronous>, transform_indices = @transform_25, window_bounds = array<i64: 3, 64, 64>}, {pipeline_mode = #tpu.pipeline_mode<synchronous>, transform_indices = @transform_26, window_bounds = array<i64: 1, 64>}, {pipeline_mode = #tpu.pipeline_mode<synchronous>, transform_indices = @transform_27, window_bounds = array<i64: 3, 64, 64>}, {pipeline_mode = #tpu.pipeline_mode<synchronous>, transform_indices = @transform_28, window_bounds = array<i64: 1, 64>}, {pipeline_mode = #tpu.pipeline_mode<synchronous>, transform_indices = @transform_29, window_bounds = array<i64: 3, 64, 128>}, {pipeline_mode = #tpu.pipeline_mode<synchronous>, transform_indices = @transform_30, window_bounds = array<i64: 1, 128>}, {pipeline_mode = #tpu.pipeline_mode<synchronous>, transform_indices = @transform_31, window_bounds = array<i64: 3, 128, 128>}, {pipeline_mode = #tpu.pipeline_mode<synchronous>, transform_indices = @transform_32, window_bounds = array<i64: 1, 128>}, {pipeline_mode = #tpu.pipeline_mode<synchronous>, transform_indices = @transform_33, window_bounds = array<i64: 128, 128>}, {pipeline_mode = #tpu.pipeline_mode<synchronous>, transform_indices = @transform_34, window_bounds = array<i64: 1, 128>}, {transform_indices = @transform_35, window_bounds = array<i64: 1, 32, 128>}]} {
    %c0 = arith.constant 0 : index
    %c0_0 = arith.constant 0 : index
    %c0_1 = arith.constant 0 : index
    %0 = vector.load %arg1[%c0, %c0_0, %c0_1] : memref<1x32x128xf32, #tpu.memory_space<vmem>>, vector<1x32x128xf32>
    %1 = vector.shape_cast %0 : vector<1x32x128xf32> to vector<32x128xf32>
    %c1 = arith.constant 1 : index
    %c0_2 = arith.constant 0 : index
    %2 = vector.load %arg37[%c1, %c0_2] : memref<34x128xf32, #tpu.memory_space<vmem>>, vector<32x128xf32>
    tpu.vector_store %arg37[%c1, %c0_2], %1 {strides = array<i32>} : memref<34x128xf32, #tpu.memory_space<vmem>>, vector<32x128xf32>,
    %cst = arith.constant 0.000000e+00 : f32
    %3 = vector.broadcast %cst : f32 to vector<1x128xf32>
    %c0_3 = arith.constant 0 : index
    %c0_4 = arith.constant 0 : index
    %4 = vector.load %arg37[%c0_3, %c0_4] : memref<34x128xf32, #tpu.memory_space<vmem>>, vector<1x128xf32>
    tpu.vector_store %arg37[%c0_3, %c0_4], %3 {strides = array<i32>} : memref<34x128xf32, #tpu.memory_space<vmem>>, vector<1x128xf32>,
    %c33 = arith.constant 33 : index
    %c0_5 = arith.constant 0 : index
    %5 = vector.load %arg37[%c33, %c0_5] : memref<34x128xf32, #tpu.memory_space<vmem>>, vector<1x128xf32>
    tpu.vector_store %arg37[%c33, %c0_5], %3 {strides = array<i32>} : memref<34x128xf32, #tpu.memory_space<vmem>>, vector<1x128xf32>,
    %c0_6 = arith.constant 0 : index
    %c0_7 = arith.constant 0 : index
    %6 = vector.load %arg3[%c0_6, %c0_7] : memref<1x128xbf16, #tpu.memory_space<vmem>>, vector<1x128xbf16>
    %c0_8 = arith.constant 0 : index
    %c0_9 = arith.constant 0 : index
    %7 = vector.load %arg37[%c0_8, %c0_9] : memref<34x128xf32, #tpu.memory_space<vmem>>, vector<32x128xf32>
    %8 = arith.truncf %7 : vector<32x128xf32> to vector<32x128xbf16>
    %c0_10 = arith.constant 0 : index
    %c0_11 = arith.constant 0 : index
    %c0_12 = arith.constant 0 : index
    %9 = vector.load %arg2[%c0_10, %c0_11, %c0_12] : memref<3x128x128xbf16, #tpu.memory_space<vmem>>, vector<1x128x128xbf16>
    %10 = vector.shape_cast %9 : vector<1x128x128xbf16> to vector<128x128xbf16>
    %cst_13 = arith.constant dense<0.000000e+00> : vector<32x128xf32>
    %11 = tpu.matmul %8, %10, %cst_13 {dimension_numbers = #tpu.dot_dimension_numbers<[1], [0], [0], [1], [0, 0, 1, 1], [], []>} : vector<32x128xbf16>, vector<128x128xbf16>, vector<32x128xf32> -> vector<32x128xf32>
    %c1_14 = arith.constant 1 : index
    %c0_15 = arith.constant 0 : index
    %12 = vector.load %arg37[%c1_14, %c0_15] : memref<34x128xf32, #tpu.memory_space<vmem>>, vector<32x128xf32>
    %13 = arith.truncf %12 : vector<32x128xf32> to vector<32x128xbf16>
    %c1_16 = arith.constant 1 : index
    %c0_17 = arith.constant 0 : index
    %c0_18 = arith.constant 0 : index
    %14 = vector.load %arg2[%c1_16, %c0_17, %c0_18] : memref<3x128x128xbf16, #tpu.memory_space<vmem>>, vector<1x128x128xbf16>
    %15 = vector.shape_cast %14 : vector<1x128x128xbf16> to vector<128x128xbf16>
    %cst_19 = arith.constant dense<0.000000e+00> : vector<32x128xf32>
    %16 = tpu.matmul %13, %15, %cst_19 {dimension_numbers = #tpu.dot_dimension_numbers<[1], [0], [0], [1], [0, 0, 1, 1], [], []>} : vector<32x128xbf16>, vector<128x128xbf16>, vector<32x128xf32> -> vector<32x128xf32>
    %17 = arith.addf %11, %16 : vector<32x128xf32>
    %c2 = arith.constant 2 : index
    %c0_20 = arith.constant 0 : index
    %18 = vector.load %arg37[%c2, %c0_20] : memref<34x128xf32, #tpu.memory_space<vmem>>, vector<32x128xf32>
    %19 = arith.truncf %18 : vector<32x128xf32> to vector<32x128xbf16>
    %c2_21 = arith.constant 2 : index
    %c0_22 = arith.constant 0 : index
    %c0_23 = arith.constant 0 : index
    %20 = vector.load %arg2[%c2_21, %c0_22, %c0_23] : memref<3x128x128xbf16, #tpu.memory_space<vmem>>, vector<1x128x128xbf16>
    %21 = vector.shape_cast %20 : vector<1x128x128xbf16> to vector<128x128xbf16>
    %cst_24 = arith.constant dense<0.000000e+00> : vector<32x128xf32>
    %22 = tpu.matmul %19, %21, %cst_24 {dimension_numbers = #tpu.dot_dimension_numbers<[1], [0], [0], [1], [0, 0, 1, 1], [], []>} : vector<32x128xbf16>, vector<128x128xbf16>, vector<32x128xf32> -> vector<32x128xf32>
    %23 = arith.addf %17, %22 : vector<32x128xf32>
    %24 = arith.extf %6 : vector<1x128xbf16> to vector<1x128xf32>
    %25 = vector.broadcast %24 : vector<1x128xf32> to vector<32x128xf32>
    %26 = arith.addf %23, %25 : vector<32x128xf32>
    %cst_25 = arith.constant 0.000000e+00 : f32
    %27 = vector.broadcast %cst_25 : f32 to vector<32x128xf32>
    %28 = arith.maximumf %26, %27 : vector<32x128xf32>
    %c1_26 = arith.constant 1 : index
    %c0_27 = arith.constant 0 : index
    %29 = vector.load %arg37[%c1_26, %c0_27] : memref<34x128xf32, #tpu.memory_space<vmem>>, vector<32x128xf32>
    tpu.vector_store %arg37[%c1_26, %c0_27], %28 {strides = array<i32>} : memref<34x128xf32, #tpu.memory_space<vmem>>, vector<32x128xf32>,
    %cst_28 = arith.constant 0.000000e+00 : f32
    %30 = vector.broadcast %cst_28 : f32 to vector<1x128xf32>
    %c0_29 = arith.constant 0 : index
    %c0_30 = arith.constant 0 : index
    %31 = vector.load %arg37[%c0_29, %c0_30] : memref<34x128xf32, #tpu.memory_space<vmem>>, vector<1x128xf32>
    tpu.vector_store %arg37[%c0_29, %c0_30], %30 {strides = array<i32>} : memref<34x128xf32, #tpu.memory_space<vmem>>, vector<1x128xf32>,
    %c33_31 = arith.constant 33 : index
    %c0_32 = arith.constant 0 : index
    %32 = vector.load %arg37[%c33_31, %c0_32] : memref<34x128xf32, #tpu.memory_space<vmem>>, vector<1x128xf32>
    tpu.vector_store %arg37[%c33_31, %c0_32], %30 {strides = array<i32>} : memref<34x128xf32, #tpu.memory_space<vmem>>, vector<1x128xf32>,
    %c0_33 = arith.constant 0 : index
    %c0_34 = arith.constant 0 : index
    %33 = vector.load %arg5[%c0_33, %c0_34] : memref<1x128xbf16, #tpu.memory_space<vmem>>, vector<1x128xbf16>
    %c0_35 = arith.constant 0 : index
    %c0_36 = arith.constant 0 : index
    %34 = tpu.strided_load %arg37[%c0_35, %c0_36] {strides = array<i32: 2, 1>} : memref<34x128xf32, #tpu.memory_space<vmem>>, vector<16x128xf32>
    %35 = arith.truncf %34 : vector<16x128xf32> to vector<16x128xbf16>
    %c0_37 = arith.constant 0 : index
    %c0_38 = arith.constant 0 : index
    %c0_39 = arith.constant 0 : index
    %36 = vector.load %arg4[%c0_37, %c0_38, %c0_39] : memref<3x128x128xbf16, #tpu.memory_space<vmem>>, vector<1x128x128xbf16>
    %37 = vector.shape_cast %36 : vector<1x128x128xbf16> to vector<128x128xbf16>
    %cst_40 = arith.constant dense<0.000000e+00> : vector<16x128xf32>
    %38 = tpu.matmul %35, %37, %cst_40 {dimension_numbers = #tpu.dot_dimension_numbers<[1], [0], [0], [1], [0, 0, 1, 1], [], []>} : vector<16x128xbf16>, vector<128x128xbf16>, vector<16x128xf32> -> vector<16x128xf32>
    %c1_41 = arith.constant 1 : index
    %c0_42 = arith.constant 0 : index
    %39 = tpu.strided_load %arg37[%c1_41, %c0_42] {strides = array<i32: 2, 1>} : memref<34x128xf32, #tpu.memory_space<vmem>>, vector<16x128xf32>
    %40 = arith.truncf %39 : vector<16x128xf32> to vector<16x128xbf16>
    %c1_43 = arith.constant 1 : index
    %c0_44 = arith.constant 0 : index
    %c0_45 = arith.constant 0 : index
    %41 = vector.load %arg4[%c1_43, %c0_44, %c0_45] : memref<3x128x128xbf16, #tpu.memory_space<vmem>>, vector<1x128x128xbf16>
    %42 = vector.shape_cast %41 : vector<1x128x128xbf16> to vector<128x128xbf16>
    %cst_46 = arith.constant dense<0.000000e+00> : vector<16x128xf32>
    %43 = tpu.matmul %40, %42, %cst_46 {dimension_numbers = #tpu.dot_dimension_numbers<[1], [0], [0], [1], [0, 0, 1, 1], [], []>} : vector<16x128xbf16>, vector<128x128xbf16>, vector<16x128xf32> -> vector<16x128xf32>
    %44 = arith.addf %38, %43 : vector<16x128xf32>
    %c2_47 = arith.constant 2 : index
    %c0_48 = arith.constant 0 : index
    %45 = tpu.strided_load %arg37[%c2_47, %c0_48] {strides = array<i32: 2, 1>} : memref<34x128xf32, #tpu.memory_space<vmem>>, vector<16x128xf32>
    %46 = arith.truncf %45 : vector<16x128xf32> to vector<16x128xbf16>
    %c2_49 = arith.constant 2 : index
    %c0_50 = arith.constant 0 : index
    %c0_51 = arith.constant 0 : index
    %47 = vector.load %arg4[%c2_49, %c0_50, %c0_51] : memref<3x128x128xbf16, #tpu.memory_space<vmem>>, vector<1x128x128xbf16>
    %48 = vector.shape_cast %47 : vector<1x128x128xbf16> to vector<128x128xbf16>
    %cst_52 = arith.constant dense<0.000000e+00> : vector<16x128xf32>
    %49 = tpu.matmul %46, %48, %cst_52 {dimension_numbers = #tpu.dot_dimension_numbers<[1], [0], [0], [1], [0, 0, 1, 1], [], []>} : vector<16x128xbf16>, vector<128x128xbf16>, vector<16x128xf32> -> vector<16x128xf32>
    %50 = arith.addf %44, %49 : vector<16x128xf32>
    %51 = arith.extf %33 : vector<1x128xbf16> to vector<1x128xf32>
    %52 = vector.broadcast %51 : vector<1x128xf32> to vector<16x128xf32>
    %53 = arith.addf %50, %52 : vector<16x128xf32>
    %cst_53 = arith.constant 0.000000e+00 : f32
    %54 = vector.broadcast %cst_53 : f32 to vector<16x128xf32>
    %55 = arith.maximumf %53, %54 : vector<16x128xf32>
    %c1_54 = arith.constant 1 : index
    %c0_55 = arith.constant 0 : index
    %56 = tpu.strided_load %arg37[%c1_54, %c0_55] {strides = array<i32: 2, 1>} : memref<34x128xf32, #tpu.memory_space<vmem>>, vector<16x128xf32>
    %57 = arith.truncf %56 : vector<16x128xf32> to vector<16x128xbf16>
    %c0_56 = arith.constant 0 : index
    %c0_57 = arith.constant 0 : index
    %c0_58 = arith.constant 0 : index
    %58 = vector.load %arg4[%c0_56, %c0_57, %c0_58] : memref<3x128x128xbf16, #tpu.memory_space<vmem>>, vector<1x128x128xbf16>
    %59 = vector.shape_cast %58 : vector<1x128x128xbf16> to vector<128x128xbf16>
    %cst_59 = arith.constant dense<0.000000e+00> : vector<16x128xf32>
    %60 = tpu.matmul %57, %59, %cst_59 {dimension_numbers = #tpu.dot_dimension_numbers<[1], [0], [0], [1], [0, 0, 1, 1], [], []>} : vector<16x128xbf16>, vector<128x128xbf16>, vector<16x128xf32> -> vector<16x128xf32>
    %c2_60 = arith.constant 2 : index
    %c0_61 = arith.constant 0 : index
    %61 = tpu.strided_load %arg37[%c2_60, %c0_61] {strides = array<i32: 2, 1>} : memref<34x128xf32, #tpu.memory_space<vmem>>, vector<16x128xf32>
    %62 = arith.truncf %61 : vector<16x128xf32> to vector<16x128xbf16>
    %c1_62 = arith.constant 1 : index
    %c0_63 = arith.constant 0 : index
    %c0_64 = arith.constant 0 : index
    %63 = vector.load %arg4[%c1_62, %c0_63, %c0_64] : memref<3x128x128xbf16, #tpu.memory_space<vmem>>, vector<1x128x128xbf16>
    %64 = vector.shape_cast %63 : vector<1x128x128xbf16> to vector<128x128xbf16>
    %cst_65 = arith.constant dense<0.000000e+00> : vector<16x128xf32>
    %65 = tpu.matmul %62, %64, %cst_65 {dimension_numbers = #tpu.dot_dimension_numbers<[1], [0], [0], [1], [0, 0, 1, 1], [], []>} : vector<16x128xbf16>, vector<128x128xbf16>, vector<16x128xf32> -> vector<16x128xf32>
    %66 = arith.addf %60, %65 : vector<16x128xf32>
    %c3 = arith.constant 3 : index
    %c0_66 = arith.constant 0 : index
    %67 = tpu.strided_load %arg37[%c3, %c0_66] {strides = array<i32: 2, 1>} : memref<34x128xf32, #tpu.memory_space<vmem>>, vector<16x128xf32>
    %68 = arith.truncf %67 : vector<16x128xf32> to vector<16x128xbf16>
    %c2_67 = arith.constant 2 : index
    %c0_68 = arith.constant 0 : index
    %c0_69 = arith.constant 0 : index
    %69 = vector.load %arg4[%c2_67, %c0_68, %c0_69] : memref<3x128x128xbf16, #tpu.memory_space<vmem>>, vector<1x128x128xbf16>
    %70 = vector.shape_cast %69 : vector<1x128x128xbf16> to vector<128x128xbf16>
    %cst_70 = arith.constant dense<0.000000e+00> : vector<16x128xf32>
    %71 = tpu.matmul %68, %70, %cst_70 {dimension_numbers = #tpu.dot_dimension_numbers<[1], [0], [0], [1], [0, 0, 1, 1], [], []>} : vector<16x128xbf16>, vector<128x128xbf16>, vector<16x128xf32> -> vector<16x128xf32>
    %72 = arith.addf %66, %71 : vector<16x128xf32>
    %73 = arith.extf %33 : vector<1x128xbf16> to vector<1x128xf32>
    %74 = vector.broadcast %73 : vector<1x128xf32> to vector<16x128xf32>
    %75 = arith.addf %72, %74 : vector<16x128xf32>
    %cst_71 = arith.constant 0.000000e+00 : f32
    %76 = vector.broadcast %cst_71 : f32 to vector<16x128xf32>
    %77 = arith.maximumf %75, %76 : vector<16x128xf32>
    %78 = arith.maximumf %55, %77 : vector<16x128xf32>
    %79 = vector.extract_strided_slice %78 {offsets = [0, 0], sizes = [16, 64], strides = [1, 1]} : vector<16x128xf32> to vector<16x64xf32>
    %80 = vector.extract_strided_slice %78 {offsets = [0, 64], sizes = [16, 64], strides = [1, 1]} : vector<16x128xf32> to vector<16x64xf32>
    %81 = arith.maximumf %79, %80 : vector<16x64xf32>
    %c1_72 = arith.constant 1 : index
    %c0_73 = arith.constant 0 : index
    %82 = vector.load %arg37[%c1_72, %c0_73] : memref<34x128xf32, #tpu.memory_space<vmem>>, vector<16x64xf32>
    tpu.vector_store %arg37[%c1_72, %c0_73], %81 {strides = array<i32>} : memref<34x128xf32, #tpu.memory_space<vmem>>, vector<16x64xf32>,
    %cst_74 = arith.constant 0.000000e+00 : f32
    %83 = vector.broadcast %cst_74 : f32 to vector<1x64xf32>
    %c0_75 = arith.constant 0 : index
    %c0_76 = arith.constant 0 : index
    %84 = vector.load %arg37[%c0_75, %c0_76] : memref<34x128xf32, #tpu.memory_space<vmem>>, vector<1x64xf32>
    tpu.vector_store %arg37[%c0_75, %c0_76], %83 {strides = array<i32>} : memref<34x128xf32, #tpu.memory_space<vmem>>, vector<1x64xf32>,
    %c17 = arith.constant 17 : index
    %c0_77 = arith.constant 0 : index
    %85 = vector.load %arg37[%c17, %c0_77] : memref<34x128xf32, #tpu.memory_space<vmem>>, vector<1x64xf32>
    tpu.vector_store %arg37[%c17, %c0_77], %83 {strides = array<i32>} : memref<34x128xf32, #tpu.memory_space<vmem>>, vector<1x64xf32>,
    %c0_78 = arith.constant 0 : index
    %c0_79 = arith.constant 0 : index
    %86 = vector.load %arg7[%c0_78, %c0_79] : memref<1x128xbf16, #tpu.memory_space<vmem>>, vector<1x128xbf16>
    %c0_80 = arith.constant 0 : index
    %c0_81 = arith.constant 0 : index
    %87 = vector.load %arg37[%c0_80, %c0_81] : memref<34x128xf32, #tpu.memory_space<vmem>>, vector<16x64xf32>
    %88 = arith.truncf %87 : vector<16x64xf32> to vector<16x64xbf16>
    %c0_82 = arith.constant 0 : index
    %c0_83 = arith.constant 0 : index
    %c0_84 = arith.constant 0 : index
    %89 = vector.load %arg6[%c0_82, %c0_83, %c0_84] : memref<3x64x128xbf16, #tpu.memory_space<vmem>>, vector<1x64x128xbf16>
    %90 = vector.shape_cast %89 : vector<1x64x128xbf16> to vector<64x128xbf16>
    %cst_85 = arith.constant dense<0.000000e+00> : vector<16x128xf32>
    %91 = tpu.matmul %88, %90, %cst_85 {dimension_numbers = #tpu.dot_dimension_numbers<[1], [0], [0], [1], [0, 0, 1, 1], [], []>} : vector<16x64xbf16>, vector<64x128xbf16>, vector<16x128xf32> -> vector<16x128xf32>
    %c1_86 = arith.constant 1 : index
    %c0_87 = arith.constant 0 : index
    %92 = vector.load %arg37[%c1_86, %c0_87] : memref<34x128xf32, #tpu.memory_space<vmem>>, vector<16x64xf32>
    %93 = arith.truncf %92 : vector<16x64xf32> to vector<16x64xbf16>
    %c1_88 = arith.constant 1 : index
    %c0_89 = arith.constant 0 : index
    %c0_90 = arith.constant 0 : index
    %94 = vector.load %arg6[%c1_88, %c0_89, %c0_90] : memref<3x64x128xbf16, #tpu.memory_space<vmem>>, vector<1x64x128xbf16>
    %95 = vector.shape_cast %94 : vector<1x64x128xbf16> to vector<64x128xbf16>
    %cst_91 = arith.constant dense<0.000000e+00> : vector<16x128xf32>
    %96 = tpu.matmul %93, %95, %cst_91 {dimension_numbers = #tpu.dot_dimension_numbers<[1], [0], [0], [1], [0, 0, 1, 1], [], []>} : vector<16x64xbf16>, vector<64x128xbf16>, vector<16x128xf32> -> vector<16x128xf32>
    %97 = arith.addf %91, %96 : vector<16x128xf32>
    %c2_92 = arith.constant 2 : index
    %c0_93 = arith.constant 0 : index
    %98 = vector.load %arg37[%c2_92, %c0_93] : memref<34x128xf32, #tpu.memory_space<vmem>>, vector<16x64xf32>
    %99 = arith.truncf %98 : vector<16x64xf32> to vector<16x64xbf16>
    %c2_94 = arith.constant 2 : index
    %c0_95 = arith.constant 0 : index
    %c0_96 = arith.constant 0 : index
    %100 = vector.load %arg6[%c2_94, %c0_95, %c0_96] : memref<3x64x128xbf16, #tpu.memory_space<vmem>>, vector<1x64x128xbf16>
    %101 = vector.shape_cast %100 : vector<1x64x128xbf16> to vector<64x128xbf16>
    %cst_97 = arith.constant dense<0.000000e+00> : vector<16x128xf32>
    %102 = tpu.matmul %99, %101, %cst_97 {dimension_numbers = #tpu.dot_dimension_numbers<[1], [0], [0], [1], [0, 0, 1, 1], [], []>} : vector<16x64xbf16>, vector<64x128xbf16>, vector<16x128xf32> -> vector<16x128xf32>
    %103 = arith.addf %97, %102 : vector<16x128xf32>
    %104 = arith.extf %86 : vector<1x128xbf16> to vector<1x128xf32>
    %105 = vector.broadcast %104 : vector<1x128xf32> to vector<16x128xf32>
    %106 = arith.addf %103, %105 : vector<16x128xf32>
    %cst_98 = arith.constant 0.000000e+00 : f32
    %107 = vector.broadcast %cst_98 : f32 to vector<16x128xf32>
    %108 = arith.maximumf %106, %107 : vector<16x128xf32>
    %c1_99 = arith.constant 1 : index
    %c0_100 = arith.constant 0 : index
    %109 = vector.load %arg37[%c1_99, %c0_100] : memref<34x128xf32, #tpu.memory_space<vmem>>, vector<16x128xf32>
    tpu.vector_store %arg37[%c1_99, %c0_100], %108 {strides = array<i32>} : memref<34x128xf32, #tpu.memory_space<vmem>>, vector<16x128xf32>,
    %cst_101 = arith.constant 0.000000e+00 : f32
    %110 = vector.broadcast %cst_101 : f32 to vector<1x128xf32>
    %c0_102 = arith.constant 0 : index
    %c0_103 = arith.constant 0 : index
    %111 = vector.load %arg37[%c0_102, %c0_103] : memref<34x128xf32, #tpu.memory_space<vmem>>, vector<1x128xf32>
    tpu.vector_store %arg37[%c0_102, %c0_103], %110 {strides = array<i32>} : memref<34x128xf32, #tpu.memory_space<vmem>>, vector<1x128xf32>,
    %c17_104 = arith.constant 17 : index
    %c0_105 = arith.constant 0 : index
    %112 = vector.load %arg37[%c17_104, %c0_105] : memref<34x128xf32, #tpu.memory_space<vmem>>, vector<1x128xf32>
    tpu.vector_store %arg37[%c17_104, %c0_105], %110 {strides = array<i32>} : memref<34x128xf32, #tpu.memory_space<vmem>>, vector<1x128xf32>,
    %c0_106 = arith.constant 0 : index
    %c0_107 = arith.constant 0 : index
    %113 = vector.load %arg9[%c0_106, %c0_107] : memref<1x128xbf16, #tpu.memory_space<vmem>>, vector<1x128xbf16>
    %c0_108 = arith.constant 0 : index
    %c0_109 = arith.constant 0 : index
    %114 = tpu.strided_load %arg37[%c0_108, %c0_109] {strides = array<i32: 2, 1>} : memref<34x128xf32, #tpu.memory_space<vmem>>, vector<8x128xf32>
    %115 = arith.truncf %114 : vector<8x128xf32> to vector<8x128xbf16>
    %c0_110 = arith.constant 0 : index
    %c0_111 = arith.constant 0 : index
    %c0_112 = arith.constant 0 : index
    %116 = vector.load %arg8[%c0_110, %c0_111, %c0_112] : memref<3x128x128xbf16, #tpu.memory_space<vmem>>, vector<1x128x128xbf16>
    %117 = vector.shape_cast %116 : vector<1x128x128xbf16> to vector<128x128xbf16>
    %cst_113 = arith.constant dense<0.000000e+00> : vector<8x128xf32>
    %118 = tpu.matmul %115, %117, %cst_113 {dimension_numbers = #tpu.dot_dimension_numbers<[1], [0], [0], [1], [0, 0, 1, 1], [], []>} : vector<8x128xbf16>, vector<128x128xbf16>, vector<8x128xf32> -> vector<8x128xf32>
    %c1_114 = arith.constant 1 : index
    %c0_115 = arith.constant 0 : index
    %119 = tpu.strided_load %arg37[%c1_114, %c0_115] {strides = array<i32: 2, 1>} : memref<34x128xf32, #tpu.memory_space<vmem>>, vector<8x128xf32>
    %120 = arith.truncf %119 : vector<8x128xf32> to vector<8x128xbf16>
    %c1_116 = arith.constant 1 : index
    %c0_117 = arith.constant 0 : index
    %c0_118 = arith.constant 0 : index
    %121 = vector.load %arg8[%c1_116, %c0_117, %c0_118] : memref<3x128x128xbf16, #tpu.memory_space<vmem>>, vector<1x128x128xbf16>
    %122 = vector.shape_cast %121 : vector<1x128x128xbf16> to vector<128x128xbf16>
    %cst_119 = arith.constant dense<0.000000e+00> : vector<8x128xf32>
    %123 = tpu.matmul %120, %122, %cst_119 {dimension_numbers = #tpu.dot_dimension_numbers<[1], [0], [0], [1], [0, 0, 1, 1], [], []>} : vector<8x128xbf16>, vector<128x128xbf16>, vector<8x128xf32> -> vector<8x128xf32>
    %124 = arith.addf %118, %123 : vector<8x128xf32>
    %c2_120 = arith.constant 2 : index
    %c0_121 = arith.constant 0 : index
    %125 = tpu.strided_load %arg37[%c2_120, %c0_121] {strides = array<i32: 2, 1>} : memref<34x128xf32, #tpu.memory_space<vmem>>, vector<8x128xf32>
    %126 = arith.truncf %125 : vector<8x128xf32> to vector<8x128xbf16>
    %c2_122 = arith.constant 2 : index
    %c0_123 = arith.constant 0 : index
    %c0_124 = arith.constant 0 : index
    %127 = vector.load %arg8[%c2_122, %c0_123, %c0_124] : memref<3x128x128xbf16, #tpu.memory_space<vmem>>, vector<1x128x128xbf16>
    %128 = vector.shape_cast %127 : vector<1x128x128xbf16> to vector<128x128xbf16>
    %cst_125 = arith.constant dense<0.000000e+00> : vector<8x128xf32>
    %129 = tpu.matmul %126, %128, %cst_125 {dimension_numbers = #tpu.dot_dimension_numbers<[1], [0], [0], [1], [0, 0, 1, 1], [], []>} : vector<8x128xbf16>, vector<128x128xbf16>, vector<8x128xf32> -> vector<8x128xf32>
    %130 = arith.addf %124, %129 : vector<8x128xf32>
    %131 = arith.extf %113 : vector<1x128xbf16> to vector<1x128xf32>
    %132 = vector.broadcast %131 : vector<1x128xf32> to vector<8x128xf32>
    %133 = arith.addf %130, %132 : vector<8x128xf32>
    %cst_126 = arith.constant 0.000000e+00 : f32
    %134 = vector.broadcast %cst_126 : f32 to vector<8x128xf32>
    %135 = arith.maximumf %133, %134 : vector<8x128xf32>
    %c1_127 = arith.constant 1 : index
    %c0_128 = arith.constant 0 : index
    %136 = tpu.strided_load %arg37[%c1_127, %c0_128] {strides = array<i32: 2, 1>} : memref<34x128xf32, #tpu.memory_space<vmem>>, vector<8x128xf32>
    %137 = arith.truncf %136 : vector<8x128xf32> to vector<8x128xbf16>
    %c0_129 = arith.constant 0 : index
    %c0_130 = arith.constant 0 : index
    %c0_131 = arith.constant 0 : index
    %138 = vector.load %arg8[%c0_129, %c0_130, %c0_131] : memref<3x128x128xbf16, #tpu.memory_space<vmem>>, vector<1x128x128xbf16>
    %139 = vector.shape_cast %138 : vector<1x128x128xbf16> to vector<128x128xbf16>
    %cst_132 = arith.constant dense<0.000000e+00> : vector<8x128xf32>
    %140 = tpu.matmul %137, %139, %cst_132 {dimension_numbers = #tpu.dot_dimension_numbers<[1], [0], [0], [1], [0, 0, 1, 1], [], []>} : vector<8x128xbf16>, vector<128x128xbf16>, vector<8x128xf32> -> vector<8x128xf32>
    %c2_133 = arith.constant 2 : index
    %c0_134 = arith.constant 0 : index
    %141 = tpu.strided_load %arg37[%c2_133, %c0_134] {strides = array<i32: 2, 1>} : memref<34x128xf32, #tpu.memory_space<vmem>>, vector<8x128xf32>
    %142 = arith.truncf %141 : vector<8x128xf32> to vector<8x128xbf16>
    %c1_135 = arith.constant 1 : index
    %c0_136 = arith.constant 0 : index
    %c0_137 = arith.constant 0 : index
    %143 = vector.load %arg8[%c1_135, %c0_136, %c0_137] : memref<3x128x128xbf16, #tpu.memory_space<vmem>>, vector<1x128x128xbf16>
    %144 = vector.shape_cast %143 : vector<1x128x128xbf16> to vector<128x128xbf16>
    %cst_138 = arith.constant dense<0.000000e+00> : vector<8x128xf32>
    %145 = tpu.matmul %142, %144, %cst_138 {dimension_numbers = #tpu.dot_dimension_numbers<[1], [0], [0], [1], [0, 0, 1, 1], [], []>} : vector<8x128xbf16>, vector<128x128xbf16>, vector<8x128xf32> -> vector<8x128xf32>
    %146 = arith.addf %140, %145 : vector<8x128xf32>
    %c3_139 = arith.constant 3 : index
    %c0_140 = arith.constant 0 : index
    %147 = tpu.strided_load %arg37[%c3_139, %c0_140] {strides = array<i32: 2, 1>} : memref<34x128xf32, #tpu.memory_space<vmem>>, vector<8x128xf32>
    %148 = arith.truncf %147 : vector<8x128xf32> to vector<8x128xbf16>
    %c2_141 = arith.constant 2 : index
    %c0_142 = arith.constant 0 : index
    %c0_143 = arith.constant 0 : index
    %149 = vector.load %arg8[%c2_141, %c0_142, %c0_143] : memref<3x128x128xbf16, #tpu.memory_space<vmem>>, vector<1x128x128xbf16>
    %150 = vector.shape_cast %149 : vector<1x128x128xbf16> to vector<128x128xbf16>
    %cst_144 = arith.constant dense<0.000000e+00> : vector<8x128xf32>
    %151 = tpu.matmul %148, %150, %cst_144 {dimension_numbers = #tpu.dot_dimension_numbers<[1], [0], [0], [1], [0, 0, 1, 1], [], []>} : vector<8x128xbf16>, vector<128x128xbf16>, vector<8x128xf32> -> vector<8x128xf32>
    %152 = arith.addf %146, %151 : vector<8x128xf32>
    %153 = arith.extf %113 : vector<1x128xbf16> to vector<1x128xf32>
    %154 = vector.broadcast %153 : vector<1x128xf32> to vector<8x128xf32>
    %155 = arith.addf %152, %154 : vector<8x128xf32>
    %cst_145 = arith.constant 0.000000e+00 : f32
    %156 = vector.broadcast %cst_145 : f32 to vector<8x128xf32>
    %157 = arith.maximumf %155, %156 : vector<8x128xf32>
    %158 = arith.maximumf %135, %157 : vector<8x128xf32>
    %159 = vector.extract_strided_slice %158 {offsets = [0, 0], sizes = [8, 64], strides = [1, 1]} : vector<8x128xf32> to vector<8x64xf32>
    %160 = vector.extract_strided_slice %158 {offsets = [0, 64], sizes = [8, 64], strides = [1, 1]} : vector<8x128xf32> to vector<8x64xf32>
    %161 = arith.maximumf %159, %160 : vector<8x64xf32>
    %c1_146 = arith.constant 1 : index
    %c0_147 = arith.constant 0 : index
    %162 = vector.load %arg37[%c1_146, %c0_147] : memref<34x128xf32, #tpu.memory_space<vmem>>, vector<8x64xf32>
    tpu.vector_store %arg37[%c1_146, %c0_147], %161 {strides = array<i32>} : memref<34x128xf32, #tpu.memory_space<vmem>>, vector<8x64xf32>,
    %cst_148 = arith.constant 0.000000e+00 : f32
    %163 = vector.broadcast %cst_148 : f32 to vector<1x64xf32>
    %c0_149 = arith.constant 0 : index
    %c0_150 = arith.constant 0 : index
    %164 = vector.load %arg37[%c0_149, %c0_150] : memref<34x128xf32, #tpu.memory_space<vmem>>, vector<1x64xf32>
    tpu.vector_store %arg37[%c0_149, %c0_150], %163 {strides = array<i32>} : memref<34x128xf32, #tpu.memory_space<vmem>>, vector<1x64xf32>,
    %c9 = arith.constant 9 : index
    %c0_151 = arith.constant 0 : index
    %165 = vector.load %arg37[%c9, %c0_151] : memref<34x128xf32, #tpu.memory_space<vmem>>, vector<1x64xf32>
    tpu.vector_store %arg37[%c9, %c0_151], %163 {strides = array<i32>} : memref<34x128xf32, #tpu.memory_space<vmem>>, vector<1x64xf32>,
    %c0_152 = arith.constant 0 : index
    %c0_153 = arith.constant 0 : index
    %166 = vector.load %arg11[%c0_152, %c0_153] : memref<1x128xbf16, #tpu.memory_space<vmem>>, vector<1x128xbf16>
    %c0_154 = arith.constant 0 : index
    %c0_155 = arith.constant 0 : index
    %167 = vector.load %arg37[%c0_154, %c0_155] : memref<34x128xf32, #tpu.memory_space<vmem>>, vector<8x64xf32>
    %168 = arith.truncf %167 : vector<8x64xf32> to vector<8x64xbf16>
    %c0_156 = arith.constant 0 : index
    %c0_157 = arith.constant 0 : index
    %c0_158 = arith.constant 0 : index
    %169 = vector.load %arg10[%c0_156, %c0_157, %c0_158] : memref<3x64x128xbf16, #tpu.memory_space<vmem>>, vector<1x64x128xbf16>
    %170 = vector.shape_cast %169 : vector<1x64x128xbf16> to vector<64x128xbf16>
    %cst_159 = arith.constant dense<0.000000e+00> : vector<8x128xf32>
    %171 = tpu.matmul %168, %170, %cst_159 {dimension_numbers = #tpu.dot_dimension_numbers<[1], [0], [0], [1], [0, 0, 1, 1], [], []>} : vector<8x64xbf16>, vector<64x128xbf16>, vector<8x128xf32> -> vector<8x128xf32>
    %c1_160 = arith.constant 1 : index
    %c0_161 = arith.constant 0 : index
    %172 = vector.load %arg37[%c1_160, %c0_161] : memref<34x128xf32, #tpu.memory_space<vmem>>, vector<8x64xf32>
    %173 = arith.truncf %172 : vector<8x64xf32> to vector<8x64xbf16>
    %c1_162 = arith.constant 1 : index
    %c0_163 = arith.constant 0 : index
    %c0_164 = arith.constant 0 : index
    %174 = vector.load %arg10[%c1_162, %c0_163, %c0_164] : memref<3x64x128xbf16, #tpu.memory_space<vmem>>, vector<1x64x128xbf16>
    %175 = vector.shape_cast %174 : vector<1x64x128xbf16> to vector<64x128xbf16>
    %cst_165 = arith.constant dense<0.000000e+00> : vector<8x128xf32>
    %176 = tpu.matmul %173, %175, %cst_165 {dimension_numbers = #tpu.dot_dimension_numbers<[1], [0], [0], [1], [0, 0, 1, 1], [], []>} : vector<8x64xbf16>, vector<64x128xbf16>, vector<8x128xf32> -> vector<8x128xf32>
    %177 = arith.addf %171, %176 : vector<8x128xf32>
    %c2_166 = arith.constant 2 : index
    %c0_167 = arith.constant 0 : index
    %178 = vector.load %arg37[%c2_166, %c0_167] : memref<34x128xf32, #tpu.memory_space<vmem>>, vector<8x64xf32>
    %179 = arith.truncf %178 : vector<8x64xf32> to vector<8x64xbf16>
    %c2_168 = arith.constant 2 : index
    %c0_169 = arith.constant 0 : index
    %c0_170 = arith.constant 0 : index
    %180 = vector.load %arg10[%c2_168, %c0_169, %c0_170] : memref<3x64x128xbf16, #tpu.memory_space<vmem>>, vector<1x64x128xbf16>
    %181 = vector.shape_cast %180 : vector<1x64x128xbf16> to vector<64x128xbf16>
    %cst_171 = arith.constant dense<0.000000e+00> : vector<8x128xf32>
    %182 = tpu.matmul %179, %181, %cst_171 {dimension_numbers = #tpu.dot_dimension_numbers<[1], [0], [0], [1], [0, 0, 1, 1], [], []>} : vector<8x64xbf16>, vector<64x128xbf16>, vector<8x128xf32> -> vector<8x128xf32>
    %183 = arith.addf %177, %182 : vector<8x128xf32>
    %184 = arith.extf %166 : vector<1x128xbf16> to vector<1x128xf32>
    %185 = vector.broadcast %184 : vector<1x128xf32> to vector<8x128xf32>
    %186 = arith.addf %183, %185 : vector<8x128xf32>
    %cst_172 = arith.constant 0.000000e+00 : f32
    %187 = vector.broadcast %cst_172 : f32 to vector<8x128xf32>
    %188 = arith.maximumf %186, %187 : vector<8x128xf32>
    %c1_173 = arith.constant 1 : index
    %c0_174 = arith.constant 0 : index
    %189 = vector.load %arg37[%c1_173, %c0_174] : memref<34x128xf32, #tpu.memory_space<vmem>>, vector<8x128xf32>
    tpu.vector_store %arg37[%c1_173, %c0_174], %188 {strides = array<i32>} : memref<34x128xf32, #tpu.memory_space<vmem>>, vector<8x128xf32>,
    %cst_175 = arith.constant 0.000000e+00 : f32
    %190 = vector.broadcast %cst_175 : f32 to vector<1x128xf32>
    %c0_176 = arith.constant 0 : index
    %c0_177 = arith.constant 0 : index
    %191 = vector.load %arg37[%c0_176, %c0_177] : memref<34x128xf32, #tpu.memory_space<vmem>>, vector<1x128xf32>
    tpu.vector_store %arg37[%c0_176, %c0_177], %190 {strides = array<i32>} : memref<34x128xf32, #tpu.memory_space<vmem>>, vector<1x128xf32>,
    %c9_178 = arith.constant 9 : index
    %c0_179 = arith.constant 0 : index
    %192 = vector.load %arg37[%c9_178, %c0_179] : memref<34x128xf32, #tpu.memory_space<vmem>>, vector<1x128xf32>
    tpu.vector_store %arg37[%c9_178, %c0_179], %190 {strides = array<i32>} : memref<34x128xf32, #tpu.memory_space<vmem>>, vector<1x128xf32>,
    %c0_180 = arith.constant 0 : index
    %c0_181 = arith.constant 0 : index
    %193 = vector.load %arg13[%c0_180, %c0_181] : memref<1x128xbf16, #tpu.memory_space<vmem>>, vector<1x128xbf16>
    %c0_182 = arith.constant 0 : index
    %c0_183 = arith.constant 0 : index
    %194 = tpu.strided_load %arg37[%c0_182, %c0_183] {strides = array<i32: 2, 1>} : memref<34x128xf32, #tpu.memory_space<vmem>>, vector<4x128xf32>
    %195 = arith.truncf %194 : vector<4x128xf32> to vector<4x128xbf16>
    %c0_184 = arith.constant 0 : index
    %c0_185 = arith.constant 0 : index
    %c0_186 = arith.constant 0 : index
    %196 = vector.load %arg12[%c0_184, %c0_185, %c0_186] : memref<3x128x128xbf16, #tpu.memory_space<vmem>>, vector<1x128x128xbf16>
    %197 = vector.shape_cast %196 : vector<1x128x128xbf16> to vector<128x128xbf16>
    %cst_187 = arith.constant dense<0.000000e+00> : vector<4x128xf32>
    %198 = tpu.matmul %195, %197, %cst_187 {dimension_numbers = #tpu.dot_dimension_numbers<[1], [0], [0], [1], [0, 0, 1, 1], [], []>} : vector<4x128xbf16>, vector<128x128xbf16>, vector<4x128xf32> -> vector<4x128xf32>
    %c1_188 = arith.constant 1 : index
    %c0_189 = arith.constant 0 : index
    %199 = tpu.strided_load %arg37[%c1_188, %c0_189] {strides = array<i32: 2, 1>} : memref<34x128xf32, #tpu.memory_space<vmem>>, vector<4x128xf32>
    %200 = arith.truncf %199 : vector<4x128xf32> to vector<4x128xbf16>
    %c1_190 = arith.constant 1 : index
    %c0_191 = arith.constant 0 : index
    %c0_192 = arith.constant 0 : index
    %201 = vector.load %arg12[%c1_190, %c0_191, %c0_192] : memref<3x128x128xbf16, #tpu.memory_space<vmem>>, vector<1x128x128xbf16>
    %202 = vector.shape_cast %201 : vector<1x128x128xbf16> to vector<128x128xbf16>
    %cst_193 = arith.constant dense<0.000000e+00> : vector<4x128xf32>
    %203 = tpu.matmul %200, %202, %cst_193 {dimension_numbers = #tpu.dot_dimension_numbers<[1], [0], [0], [1], [0, 0, 1, 1], [], []>} : vector<4x128xbf16>, vector<128x128xbf16>, vector<4x128xf32> -> vector<4x128xf32>
    %204 = arith.addf %198, %203 : vector<4x128xf32>
    %c2_194 = arith.constant 2 : index
    %c0_195 = arith.constant 0 : index
    %205 = tpu.strided_load %arg37[%c2_194, %c0_195] {strides = array<i32: 2, 1>} : memref<34x128xf32, #tpu.memory_space<vmem>>, vector<4x128xf32>
    %206 = arith.truncf %205 : vector<4x128xf32> to vector<4x128xbf16>
    %c2_196 = arith.constant 2 : index
    %c0_197 = arith.constant 0 : index
    %c0_198 = arith.constant 0 : index
    %207 = vector.load %arg12[%c2_196, %c0_197, %c0_198] : memref<3x128x128xbf16, #tpu.memory_space<vmem>>, vector<1x128x128xbf16>
    %208 = vector.shape_cast %207 : vector<1x128x128xbf16> to vector<128x128xbf16>
    %cst_199 = arith.constant dense<0.000000e+00> : vector<4x128xf32>
    %209 = tpu.matmul %206, %208, %cst_199 {dimension_numbers = #tpu.dot_dimension_numbers<[1], [0], [0], [1], [0, 0, 1, 1], [], []>} : vector<4x128xbf16>, vector<128x128xbf16>, vector<4x128xf32> -> vector<4x128xf32>
    %210 = arith.addf %204, %209 : vector<4x128xf32>
    %211 = arith.extf %193 : vector<1x128xbf16> to vector<1x128xf32>
    %212 = vector.broadcast %211 : vector<1x128xf32> to vector<4x128xf32>
    %213 = arith.addf %210, %212 : vector<4x128xf32>
    %cst_200 = arith.constant 0.000000e+00 : f32
    %214 = vector.broadcast %cst_200 : f32 to vector<4x128xf32>
    %215 = arith.maximumf %213, %214 : vector<4x128xf32>
    %c1_201 = arith.constant 1 : index
    %c0_202 = arith.constant 0 : index
    %216 = tpu.strided_load %arg37[%c1_201, %c0_202] {strides = array<i32: 2, 1>} : memref<34x128xf32, #tpu.memory_space<vmem>>, vector<4x128xf32>
    %217 = arith.truncf %216 : vector<4x128xf32> to vector<4x128xbf16>
    %c0_203 = arith.constant 0 : index
    %c0_204 = arith.constant 0 : index
    %c0_205 = arith.constant 0 : index
    %218 = vector.load %arg12[%c0_203, %c0_204, %c0_205] : memref<3x128x128xbf16, #tpu.memory_space<vmem>>, vector<1x128x128xbf16>
    %219 = vector.shape_cast %218 : vector<1x128x128xbf16> to vector<128x128xbf16>
    %cst_206 = arith.constant dense<0.000000e+00> : vector<4x128xf32>
    %220 = tpu.matmul %217, %219, %cst_206 {dimension_numbers = #tpu.dot_dimension_numbers<[1], [0], [0], [1], [0, 0, 1, 1], [], []>} : vector<4x128xbf16>, vector<128x128xbf16>, vector<4x128xf32> -> vector<4x128xf32>
    %c2_207 = arith.constant 2 : index
    %c0_208 = arith.constant 0 : index
    %221 = tpu.strided_load %arg37[%c2_207, %c0_208] {strides = array<i32: 2, 1>} : memref<34x128xf32, #tpu.memory_space<vmem>>, vector<4x128xf32>
    %222 = arith.truncf %221 : vector<4x128xf32> to vector<4x128xbf16>
    %c1_209 = arith.constant 1 : index
    %c0_210 = arith.constant 0 : index
    %c0_211 = arith.constant 0 : index
    %223 = vector.load %arg12[%c1_209, %c0_210, %c0_211] : memref<3x128x128xbf16, #tpu.memory_space<vmem>>, vector<1x128x128xbf16>
    %224 = vector.shape_cast %223 : vector<1x128x128xbf16> to vector<128x128xbf16>
    %cst_212 = arith.constant dense<0.000000e+00> : vector<4x128xf32>
    %225 = tpu.matmul %222, %224, %cst_212 {dimension_numbers = #tpu.dot_dimension_numbers<[1], [0], [0], [1], [0, 0, 1, 1], [], []>} : vector<4x128xbf16>, vector<128x128xbf16>, vector<4x128xf32> -> vector<4x128xf32>
    %226 = arith.addf %220, %225 : vector<4x128xf32>
    %c3_213 = arith.constant 3 : index
    %c0_214 = arith.constant 0 : index
    %227 = tpu.strided_load %arg37[%c3_213, %c0_214] {strides = array<i32: 2, 1>} : memref<34x128xf32, #tpu.memory_space<vmem>>, vector<4x128xf32>
    %228 = arith.truncf %227 : vector<4x128xf32> to vector<4x128xbf16>
    %c2_215 = arith.constant 2 : index
    %c0_216 = arith.constant 0 : index
    %c0_217 = arith.constant 0 : index
    %229 = vector.load %arg12[%c2_215, %c0_216, %c0_217] : memref<3x128x128xbf16, #tpu.memory_space<vmem>>, vector<1x128x128xbf16>
    %230 = vector.shape_cast %229 : vector<1x128x128xbf16> to vector<128x128xbf16>
    %cst_218 = arith.constant dense<0.000000e+00> : vector<4x128xf32>
    %231 = tpu.matmul %228, %230, %cst_218 {dimension_numbers = #tpu.dot_dimension_numbers<[1], [0], [0], [1], [0, 0, 1, 1], [], []>} : vector<4x128xbf16>, vector<128x128xbf16>, vector<4x128xf32> -> vector<4x128xf32>
    %232 = arith.addf %226, %231 : vector<4x128xf32>
    %233 = arith.extf %193 : vector<1x128xbf16> to vector<1x128xf32>
    %234 = vector.broadcast %233 : vector<1x128xf32> to vector<4x128xf32>
    %235 = arith.addf %232, %234 : vector<4x128xf32>
    %cst_219 = arith.constant 0.000000e+00 : f32
    %236 = vector.broadcast %cst_219 : f32 to vector<4x128xf32>
    %237 = arith.maximumf %235, %236 : vector<4x128xf32>
    %238 = arith.maximumf %215, %237 : vector<4x128xf32>
    %239 = vector.extract_strided_slice %238 {offsets = [0, 0], sizes = [4, 64], strides = [1, 1]} : vector<4x128xf32> to vector<4x64xf32>
    %240 = vector.extract_strided_slice %238 {offsets = [0, 64], sizes = [4, 64], strides = [1, 1]} : vector<4x128xf32> to vector<4x64xf32>
    %241 = arith.maximumf %239, %240 : vector<4x64xf32>
    %c1_220 = arith.constant 1 : index
    %c0_221 = arith.constant 0 : index
    %242 = vector.load %arg37[%c1_220, %c0_221] : memref<34x128xf32, #tpu.memory_space<vmem>>, vector<4x64xf32>
    tpu.vector_store %arg37[%c1_220, %c0_221], %241 {strides = array<i32>} : memref<34x128xf32, #tpu.memory_space<vmem>>, vector<4x64xf32>,
    %cst_222 = arith.constant 0.000000e+00 : f32
    %243 = vector.broadcast %cst_222 : f32 to vector<1x64xf32>
    %c0_223 = arith.constant 0 : index
    %c0_224 = arith.constant 0 : index
    %244 = vector.load %arg37[%c0_223, %c0_224] : memref<34x128xf32, #tpu.memory_space<vmem>>, vector<1x64xf32>
    tpu.vector_store %arg37[%c0_223, %c0_224], %243 {strides = array<i32>} : memref<34x128xf32, #tpu.memory_space<vmem>>, vector<1x64xf32>,
    %c5 = arith.constant 5 : index
    %c0_225 = arith.constant 0 : index
    %245 = vector.load %arg37[%c5, %c0_225] : memref<34x128xf32, #tpu.memory_space<vmem>>, vector<1x64xf32>
    tpu.vector_store %arg37[%c5, %c0_225], %243 {strides = array<i32>} : memref<34x128xf32, #tpu.memory_space<vmem>>, vector<1x64xf32>,
    %c0_226 = arith.constant 0 : index
    %c0_227 = arith.constant 0 : index
    %246 = vector.load %arg15[%c0_226, %c0_227] : memref<1x128xbf16, #tpu.memory_space<vmem>>, vector<1x128xbf16>
    %c0_228 = arith.constant 0 : index
    %c0_229 = arith.constant 0 : index
    %247 = vector.load %arg37[%c0_228, %c0_229] : memref<34x128xf32, #tpu.memory_space<vmem>>, vector<4x64xf32>
    %248 = arith.truncf %247 : vector<4x64xf32> to vector<4x64xbf16>
    %c0_230 = arith.constant 0 : index
    %c0_231 = arith.constant 0 : index
    %c0_232 = arith.constant 0 : index
    %249 = vector.load %arg14[%c0_230, %c0_231, %c0_232] : memref<3x64x128xbf16, #tpu.memory_space<vmem>>, vector<1x64x128xbf16>
    %250 = vector.shape_cast %249 : vector<1x64x128xbf16> to vector<64x128xbf16>
    %cst_233 = arith.constant dense<0.000000e+00> : vector<4x128xf32>
    %251 = tpu.matmul %248, %250, %cst_233 {dimension_numbers = #tpu.dot_dimension_numbers<[1], [0], [0], [1], [0, 0, 1, 1], [], []>} : vector<4x64xbf16>, vector<64x128xbf16>, vector<4x128xf32> -> vector<4x128xf32>
    %c1_234 = arith.constant 1 : index
    %c0_235 = arith.constant 0 : index
    %252 = vector.load %arg37[%c1_234, %c0_235] : memref<34x128xf32, #tpu.memory_space<vmem>>, vector<4x64xf32>
    %253 = arith.truncf %252 : vector<4x64xf32> to vector<4x64xbf16>
    %c1_236 = arith.constant 1 : index
    %c0_237 = arith.constant 0 : index
    %c0_238 = arith.constant 0 : index
    %254 = vector.load %arg14[%c1_236, %c0_237, %c0_238] : memref<3x64x128xbf16, #tpu.memory_space<vmem>>, vector<1x64x128xbf16>
    %255 = vector.shape_cast %254 : vector<1x64x128xbf16> to vector<64x128xbf16>
    %cst_239 = arith.constant dense<0.000000e+00> : vector<4x128xf32>
    %256 = tpu.matmul %253, %255, %cst_239 {dimension_numbers = #tpu.dot_dimension_numbers<[1], [0], [0], [1], [0, 0, 1, 1], [], []>} : vector<4x64xbf16>, vector<64x128xbf16>, vector<4x128xf32> -> vector<4x128xf32>
    %257 = arith.addf %251, %256 : vector<4x128xf32>
    %c2_240 = arith.constant 2 : index
    %c0_241 = arith.constant 0 : index
    %258 = vector.load %arg37[%c2_240, %c0_241] : memref<34x128xf32, #tpu.memory_space<vmem>>, vector<4x64xf32>
    %259 = arith.truncf %258 : vector<4x64xf32> to vector<4x64xbf16>
    %c2_242 = arith.constant 2 : index
    %c0_243 = arith.constant 0 : index
    %c0_244 = arith.constant 0 : index
    %260 = vector.load %arg14[%c2_242, %c0_243, %c0_244] : memref<3x64x128xbf16, #tpu.memory_space<vmem>>, vector<1x64x128xbf16>
    %261 = vector.shape_cast %260 : vector<1x64x128xbf16> to vector<64x128xbf16>
    %cst_245 = arith.constant dense<0.000000e+00> : vector<4x128xf32>
    %262 = tpu.matmul %259, %261, %cst_245 {dimension_numbers = #tpu.dot_dimension_numbers<[1], [0], [0], [1], [0, 0, 1, 1], [], []>} : vector<4x64xbf16>, vector<64x128xbf16>, vector<4x128xf32> -> vector<4x128xf32>
    %263 = arith.addf %257, %262 : vector<4x128xf32>
    %264 = arith.extf %246 : vector<1x128xbf16> to vector<1x128xf32>
    %265 = vector.broadcast %264 : vector<1x128xf32> to vector<4x128xf32>
    %266 = arith.addf %263, %265 : vector<4x128xf32>
    %cst_246 = arith.constant 0.000000e+00 : f32
    %267 = vector.broadcast %cst_246 : f32 to vector<4x128xf32>
    %268 = arith.maximumf %266, %267 : vector<4x128xf32>
    %c1_247 = arith.constant 1 : index
    %c0_248 = arith.constant 0 : index
    %269 = vector.load %arg37[%c1_247, %c0_248] : memref<34x128xf32, #tpu.memory_space<vmem>>, vector<4x128xf32>
    tpu.vector_store %arg37[%c1_247, %c0_248], %268 {strides = array<i32>} : memref<34x128xf32, #tpu.memory_space<vmem>>, vector<4x128xf32>,
    %cst_249 = arith.constant 0.000000e+00 : f32
    %270 = vector.broadcast %cst_249 : f32 to vector<1x128xf32>
    %c0_250 = arith.constant 0 : index
    %c0_251 = arith.constant 0 : index
    %271 = vector.load %arg37[%c0_250, %c0_251] : memref<34x128xf32, #tpu.memory_space<vmem>>, vector<1x128xf32>
    tpu.vector_store %arg37[%c0_250, %c0_251], %270 {strides = array<i32>} : memref<34x128xf32, #tpu.memory_space<vmem>>, vector<1x128xf32>,
    %c5_252 = arith.constant 5 : index
    %c0_253 = arith.constant 0 : index
    %272 = vector.load %arg37[%c5_252, %c0_253] : memref<34x128xf32, #tpu.memory_space<vmem>>, vector<1x128xf32>
    tpu.vector_store %arg37[%c5_252, %c0_253], %270 {strides = array<i32>} : memref<34x128xf32, #tpu.memory_space<vmem>>, vector<1x128xf32>,
    %c0_254 = arith.constant 0 : index
    %c0_255 = arith.constant 0 : index
    %273 = vector.load %arg17[%c0_254, %c0_255] : memref<1x128xbf16, #tpu.memory_space<vmem>>, vector<1x128xbf16>
    %c0_256 = arith.constant 0 : index
    %c0_257 = arith.constant 0 : index
    %274 = tpu.strided_load %arg37[%c0_256, %c0_257] {strides = array<i32: 2, 1>} : memref<34x128xf32, #tpu.memory_space<vmem>>, vector<2x128xf32>
    %275 = arith.truncf %274 : vector<2x128xf32> to vector<2x128xbf16>
    %c0_258 = arith.constant 0 : index
    %c0_259 = arith.constant 0 : index
    %c0_260 = arith.constant 0 : index
    %276 = vector.load %arg16[%c0_258, %c0_259, %c0_260] : memref<3x128x128xbf16, #tpu.memory_space<vmem>>, vector<1x128x128xbf16>
    %277 = vector.shape_cast %276 : vector<1x128x128xbf16> to vector<128x128xbf16>
    %cst_261 = arith.constant dense<0.000000e+00> : vector<2x128xf32>
    %278 = tpu.matmul %275, %277, %cst_261 {dimension_numbers = #tpu.dot_dimension_numbers<[1], [0], [0], [1], [0, 0, 1, 1], [], []>} : vector<2x128xbf16>, vector<128x128xbf16>, vector<2x128xf32> -> vector<2x128xf32>
    %c1_262 = arith.constant 1 : index
    %c0_263 = arith.constant 0 : index
    %279 = tpu.strided_load %arg37[%c1_262, %c0_263] {strides = array<i32: 2, 1>} : memref<34x128xf32, #tpu.memory_space<vmem>>, vector<2x128xf32>
    %280 = arith.truncf %279 : vector<2x128xf32> to vector<2x128xbf16>
    %c1_264 = arith.constant 1 : index
    %c0_265 = arith.constant 0 : index
    %c0_266 = arith.constant 0 : index
    %281 = vector.load %arg16[%c1_264, %c0_265, %c0_266] : memref<3x128x128xbf16, #tpu.memory_space<vmem>>, vector<1x128x128xbf16>
    %282 = vector.shape_cast %281 : vector<1x128x128xbf16> to vector<128x128xbf16>
    %cst_267 = arith.constant dense<0.000000e+00> : vector<2x128xf32>
    %283 = tpu.matmul %280, %282, %cst_267 {dimension_numbers = #tpu.dot_dimension_numbers<[1], [0], [0], [1], [0, 0, 1, 1], [], []>} : vector<2x128xbf16>, vector<128x128xbf16>, vector<2x128xf32> -> vector<2x128xf32>
    %284 = arith.addf %278, %283 : vector<2x128xf32>
    %c2_268 = arith.constant 2 : index
    %c0_269 = arith.constant 0 : index
    %285 = tpu.strided_load %arg37[%c2_268, %c0_269] {strides = array<i32: 2, 1>} : memref<34x128xf32, #tpu.memory_space<vmem>>, vector<2x128xf32>
    %286 = arith.truncf %285 : vector<2x128xf32> to vector<2x128xbf16>
    %c2_270 = arith.constant 2 : index
    %c0_271 = arith.constant 0 : index
    %c0_272 = arith.constant 0 : index
    %287 = vector.load %arg16[%c2_270, %c0_271, %c0_272] : memref<3x128x128xbf16, #tpu.memory_space<vmem>>, vector<1x128x128xbf16>
    %288 = vector.shape_cast %287 : vector<1x128x128xbf16> to vector<128x128xbf16>
    %cst_273 = arith.constant dense<0.000000e+00> : vector<2x128xf32>
    %289 = tpu.matmul %286, %288, %cst_273 {dimension_numbers = #tpu.dot_dimension_numbers<[1], [0], [0], [1], [0, 0, 1, 1], [], []>} : vector<2x128xbf16>, vector<128x128xbf16>, vector<2x128xf32> -> vector<2x128xf32>
    %290 = arith.addf %284, %289 : vector<2x128xf32>
    %291 = arith.extf %273 : vector<1x128xbf16> to vector<1x128xf32>
    %292 = vector.broadcast %291 : vector<1x128xf32> to vector<2x128xf32>
    %293 = arith.addf %290, %292 : vector<2x128xf32>
    %cst_274 = arith.constant 0.000000e+00 : f32
    %294 = vector.broadcast %cst_274 : f32 to vector<2x128xf32>
    %295 = arith.maximumf %293, %294 : vector<2x128xf32>
    %c1_275 = arith.constant 1 : index
    %c0_276 = arith.constant 0 : index
    %296 = tpu.strided_load %arg37[%c1_275, %c0_276] {strides = array<i32: 2, 1>} : memref<34x128xf32, #tpu.memory_space<vmem>>, vector<2x128xf32>
    %297 = arith.truncf %296 : vector<2x128xf32> to vector<2x128xbf16>
    %c0_277 = arith.constant 0 : index
    %c0_278 = arith.constant 0 : index
    %c0_279 = arith.constant 0 : index
    %298 = vector.load %arg16[%c0_277, %c0_278, %c0_279] : memref<3x128x128xbf16, #tpu.memory_space<vmem>>, vector<1x128x128xbf16>
    %299 = vector.shape_cast %298 : vector<1x128x128xbf16> to vector<128x128xbf16>
    %cst_280 = arith.constant dense<0.000000e+00> : vector<2x128xf32>
    %300 = tpu.matmul %297, %299, %cst_280 {dimension_numbers = #tpu.dot_dimension_numbers<[1], [0], [0], [1], [0, 0, 1, 1], [], []>} : vector<2x128xbf16>, vector<128x128xbf16>, vector<2x128xf32> -> vector<2x128xf32>
    %c2_281 = arith.constant 2 : index
    %c0_282 = arith.constant 0 : index
    %301 = tpu.strided_load %arg37[%c2_281, %c0_282] {strides = array<i32: 2, 1>} : memref<34x128xf32, #tpu.memory_space<vmem>>, vector<2x128xf32>
    %302 = arith.truncf %301 : vector<2x128xf32> to vector<2x128xbf16>
    %c1_283 = arith.constant 1 : index
    %c0_284 = arith.constant 0 : index
    %c0_285 = arith.constant 0 : index
    %303 = vector.load %arg16[%c1_283, %c0_284, %c0_285] : memref<3x128x128xbf16, #tpu.memory_space<vmem>>, vector<1x128x128xbf16>
    %304 = vector.shape_cast %303 : vector<1x128x128xbf16> to vector<128x128xbf16>
    %cst_286 = arith.constant dense<0.000000e+00> : vector<2x128xf32>
    %305 = tpu.matmul %302, %304, %cst_286 {dimension_numbers = #tpu.dot_dimension_numbers<[1], [0], [0], [1], [0, 0, 1, 1], [], []>} : vector<2x128xbf16>, vector<128x128xbf16>, vector<2x128xf32> -> vector<2x128xf32>
    %306 = arith.addf %300, %305 : vector<2x128xf32>
    %c3_287 = arith.constant 3 : index
    %c0_288 = arith.constant 0 : index
    %307 = tpu.strided_load %arg37[%c3_287, %c0_288] {strides = array<i32: 2, 1>} : memref<34x128xf32, #tpu.memory_space<vmem>>, vector<2x128xf32>
    %308 = arith.truncf %307 : vector<2x128xf32> to vector<2x128xbf16>
    %c2_289 = arith.constant 2 : index
    %c0_290 = arith.constant 0 : index
    %c0_291 = arith.constant 0 : index
    %309 = vector.load %arg16[%c2_289, %c0_290, %c0_291] : memref<3x128x128xbf16, #tpu.memory_space<vmem>>, vector<1x128x128xbf16>
    %310 = vector.shape_cast %309 : vector<1x128x128xbf16> to vector<128x128xbf16>
    %cst_292 = arith.constant dense<0.000000e+00> : vector<2x128xf32>
    %311 = tpu.matmul %308, %310, %cst_292 {dimension_numbers = #tpu.dot_dimension_numbers<[1], [0], [0], [1], [0, 0, 1, 1], [], []>} : vector<2x128xbf16>, vector<128x128xbf16>, vector<2x128xf32> -> vector<2x128xf32>
    %312 = arith.addf %306, %311 : vector<2x128xf32>
    %313 = arith.extf %273 : vector<1x128xbf16> to vector<1x128xf32>
    %314 = vector.broadcast %313 : vector<1x128xf32> to vector<2x128xf32>
    %315 = arith.addf %312, %314 : vector<2x128xf32>
    %cst_293 = arith.constant 0.000000e+00 : f32
    %316 = vector.broadcast %cst_293 : f32 to vector<2x128xf32>
    %317 = arith.maximumf %315, %316 : vector<2x128xf32>
    %318 = arith.maximumf %295, %317 : vector<2x128xf32>
    %319 = vector.extract_strided_slice %318 {offsets = [0, 0], sizes = [2, 64], strides = [1, 1]} : vector<2x128xf32> to vector<2x64xf32>
    %320 = vector.extract_strided_slice %318 {offsets = [0, 64], sizes = [2, 64], strides = [1, 1]} : vector<2x128xf32> to vector<2x64xf32>
    %321 = arith.maximumf %319, %320 : vector<2x64xf32>
    %c1_294 = arith.constant 1 : index
    %c0_295 = arith.constant 0 : index
    %322 = tpu.strided_load %arg37[%c1_294, %c0_295] {strides = array<i32: 2, 1>} : memref<34x128xf32, #tpu.memory_space<vmem>>, vector<2x64xf32>
    tpu.strided_store %arg37[%c1_294, %c0_295], %321 {strides = array<i32: 2, 1>} : memref<34x128xf32, #tpu.memory_space<vmem>>, vector<2x64xf32>
    %c2_296 = arith.constant 2 : index
    %c0_297 = arith.constant 0 : index
    %323 = tpu.strided_load %arg37[%c2_296, %c0_297] {strides = array<i32: 2, 1>} : memref<34x128xf32, #tpu.memory_space<vmem>>, vector<2x64xf32>
    tpu.strided_store %arg37[%c2_296, %c0_297], %321 {strides = array<i32: 2, 1>} : memref<34x128xf32, #tpu.memory_space<vmem>>, vector<2x64xf32>
    %cst_298 = arith.constant 0.000000e+00 : f32
    %324 = vector.broadcast %cst_298 : f32 to vector<1x64xf32>
    %c0_299 = arith.constant 0 : index
    %c0_300 = arith.constant 0 : index
    %325 = vector.load %arg37[%c0_299, %c0_300] : memref<34x128xf32, #tpu.memory_space<vmem>>, vector<1x64xf32>
    tpu.vector_store %arg37[%c0_299, %c0_300], %324 {strides = array<i32>} : memref<34x128xf32, #tpu.memory_space<vmem>>, vector<1x64xf32>,
    %c5_301 = arith.constant 5 : index
    %c0_302 = arith.constant 0 : index
    %326 = vector.load %arg37[%c5_301, %c0_302] : memref<34x128xf32, #tpu.memory_space<vmem>>, vector<1x64xf32>
    tpu.vector_store %arg37[%c5_301, %c0_302], %324 {strides = array<i32>} : memref<34x128xf32, #tpu.memory_space<vmem>>, vector<1x64xf32>,
    %c0_303 = arith.constant 0 : index
    %c0_304 = arith.constant 0 : index
    %327 = vector.load %arg19[%c0_303, %c0_304] : memref<1x64xbf16, #tpu.memory_space<vmem>>, vector<1x64xbf16>
    %c0_305 = arith.constant 0 : index
    %c0_306 = arith.constant 0 : index
    %328 = vector.load %arg37[%c0_305, %c0_306] : memref<34x128xf32, #tpu.memory_space<vmem>>, vector<4x64xf32>
    %329 = arith.truncf %328 : vector<4x64xf32> to vector<4x64xbf16>
    %c0_307 = arith.constant 0 : index
    %c0_308 = arith.constant 0 : index
    %c0_309 = arith.constant 0 : index
    %330 = vector.load %arg18[%c0_307, %c0_308, %c0_309] : memref<3x64x64xbf16, #tpu.memory_space<vmem>>, vector<1x64x64xbf16>
    %331 = vector.shape_cast %330 : vector<1x64x64xbf16> to vector<64x64xbf16>
    %cst_310 = arith.constant dense<0.000000e+00> : vector<4x64xf32>
    %332 = tpu.matmul %329, %331, %cst_310 {dimension_numbers = #tpu.dot_dimension_numbers<[1], [0], [0], [1], [0, 0, 1, 1], [], []>} : vector<4x64xbf16>, vector<64x64xbf16>, vector<4x64xf32> -> vector<4x64xf32>
    %c1_311 = arith.constant 1 : index
    %c0_312 = arith.constant 0 : index
    %333 = vector.load %arg37[%c1_311, %c0_312] : memref<34x128xf32, #tpu.memory_space<vmem>>, vector<4x64xf32>
    %334 = arith.truncf %333 : vector<4x64xf32> to vector<4x64xbf16>
    %c1_313 = arith.constant 1 : index
    %c0_314 = arith.constant 0 : index
    %c0_315 = arith.constant 0 : index
    %335 = vector.load %arg18[%c1_313, %c0_314, %c0_315] : memref<3x64x64xbf16, #tpu.memory_space<vmem>>, vector<1x64x64xbf16>
    %336 = vector.shape_cast %335 : vector<1x64x64xbf16> to vector<64x64xbf16>
    %cst_316 = arith.constant dense<0.000000e+00> : vector<4x64xf32>
    %337 = tpu.matmul %334, %336, %cst_316 {dimension_numbers = #tpu.dot_dimension_numbers<[1], [0], [0], [1], [0, 0, 1, 1], [], []>} : vector<4x64xbf16>, vector<64x64xbf16>, vector<4x64xf32> -> vector<4x64xf32>
    %338 = arith.addf %332, %337 : vector<4x64xf32>
    %c2_317 = arith.constant 2 : index
    %c0_318 = arith.constant 0 : index
    %339 = vector.load %arg37[%c2_317, %c0_318] : memref<34x128xf32, #tpu.memory_space<vmem>>, vector<4x64xf32>
    %340 = arith.truncf %339 : vector<4x64xf32> to vector<4x64xbf16>
    %c2_319 = arith.constant 2 : index
    %c0_320 = arith.constant 0 : index
    %c0_321 = arith.constant 0 : index
    %341 = vector.load %arg18[%c2_319, %c0_320, %c0_321] : memref<3x64x64xbf16, #tpu.memory_space<vmem>>, vector<1x64x64xbf16>
    %342 = vector.shape_cast %341 : vector<1x64x64xbf16> to vector<64x64xbf16>
    %cst_322 = arith.constant dense<0.000000e+00> : vector<4x64xf32>
    %343 = tpu.matmul %340, %342, %cst_322 {dimension_numbers = #tpu.dot_dimension_numbers<[1], [0], [0], [1], [0, 0, 1, 1], [], []>} : vector<4x64xbf16>, vector<64x64xbf16>, vector<4x64xf32> -> vector<4x64xf32>
    %344 = arith.addf %338, %343 : vector<4x64xf32>
    %345 = arith.extf %327 : vector<1x64xbf16> to vector<1x64xf32>
    %346 = vector.broadcast %345 : vector<1x64xf32> to vector<4x64xf32>
    %347 = arith.addf %344, %346 : vector<4x64xf32>
    %cst_323 = arith.constant 0.000000e+00 : f32
    %348 = vector.broadcast %cst_323 : f32 to vector<4x64xf32>
    %349 = arith.maximumf %347, %348 : vector<4x64xf32>
    %c1_324 = arith.constant 1 : index
    %c0_325 = arith.constant 0 : index
    %350 = vector.load %arg37[%c1_324, %c0_325] : memref<34x128xf32, #tpu.memory_space<vmem>>, vector<4x64xf32>
    tpu.vector_store %arg37[%c1_324, %c0_325], %349 {strides = array<i32>} : memref<34x128xf32, #tpu.memory_space<vmem>>, vector<4x64xf32>,
    %cst_326 = arith.constant 0.000000e+00 : f32
    %351 = vector.broadcast %cst_326 : f32 to vector<1x64xf32>
    %c0_327 = arith.constant 0 : index
    %c0_328 = arith.constant 0 : index
    %352 = vector.load %arg37[%c0_327, %c0_328] : memref<34x128xf32, #tpu.memory_space<vmem>>, vector<1x64xf32>
    tpu.vector_store %arg37[%c0_327, %c0_328], %351 {strides = array<i32>} : memref<34x128xf32, #tpu.memory_space<vmem>>, vector<1x64xf32>,
    %c5_329 = arith.constant 5 : index
    %c0_330 = arith.constant 0 : index
    %353 = vector.load %arg37[%c5_329, %c0_330] : memref<34x128xf32, #tpu.memory_space<vmem>>, vector<1x64xf32>
    tpu.vector_store %arg37[%c5_329, %c0_330], %351 {strides = array<i32>} : memref<34x128xf32, #tpu.memory_space<vmem>>, vector<1x64xf32>,
    %c0_331 = arith.constant 0 : index
    %c0_332 = arith.constant 0 : index
    %354 = vector.load %arg21[%c0_331, %c0_332] : memref<1x64xbf16, #tpu.memory_space<vmem>>, vector<1x64xbf16>
    %c0_333 = arith.constant 0 : index
    %c0_334 = arith.constant 0 : index
    %355 = vector.load %arg37[%c0_333, %c0_334] : memref<34x128xf32, #tpu.memory_space<vmem>>, vector<4x64xf32>
    %356 = arith.truncf %355 : vector<4x64xf32> to vector<4x64xbf16>
    %c0_335 = arith.constant 0 : index
    %c0_336 = arith.constant 0 : index
    %c0_337 = arith.constant 0 : index
    %357 = vector.load %arg20[%c0_335, %c0_336, %c0_337] : memref<3x64x64xbf16, #tpu.memory_space<vmem>>, vector<1x64x64xbf16>
    %358 = vector.shape_cast %357 : vector<1x64x64xbf16> to vector<64x64xbf16>
    %cst_338 = arith.constant dense<0.000000e+00> : vector<4x64xf32>
    %359 = tpu.matmul %356, %358, %cst_338 {dimension_numbers = #tpu.dot_dimension_numbers<[1], [0], [0], [1], [0, 0, 1, 1], [], []>} : vector<4x64xbf16>, vector<64x64xbf16>, vector<4x64xf32> -> vector<4x64xf32>
    %c1_339 = arith.constant 1 : index
    %c0_340 = arith.constant 0 : index
    %360 = vector.load %arg37[%c1_339, %c0_340] : memref<34x128xf32, #tpu.memory_space<vmem>>, vector<4x64xf32>
    %361 = arith.truncf %360 : vector<4x64xf32> to vector<4x64xbf16>
    %c1_341 = arith.constant 1 : index
    %c0_342 = arith.constant 0 : index
    %c0_343 = arith.constant 0 : index
    %362 = vector.load %arg20[%c1_341, %c0_342, %c0_343] : memref<3x64x64xbf16, #tpu.memory_space<vmem>>, vector<1x64x64xbf16>
    %363 = vector.shape_cast %362 : vector<1x64x64xbf16> to vector<64x64xbf16>
    %cst_344 = arith.constant dense<0.000000e+00> : vector<4x64xf32>
    %364 = tpu.matmul %361, %363, %cst_344 {dimension_numbers = #tpu.dot_dimension_numbers<[1], [0], [0], [1], [0, 0, 1, 1], [], []>} : vector<4x64xbf16>, vector<64x64xbf16>, vector<4x64xf32> -> vector<4x64xf32>
    %365 = arith.addf %359, %364 : vector<4x64xf32>
    %c2_345 = arith.constant 2 : index
    %c0_346 = arith.constant 0 : index
    %366 = vector.load %arg37[%c2_345, %c0_346] : memref<34x128xf32, #tpu.memory_space<vmem>>, vector<4x64xf32>
    %367 = arith.truncf %366 : vector<4x64xf32> to vector<4x64xbf16>
    %c2_347 = arith.constant 2 : index
    %c0_348 = arith.constant 0 : index
    %c0_349 = arith.constant 0 : index
    %368 = vector.load %arg20[%c2_347, %c0_348, %c0_349] : memref<3x64x64xbf16, #tpu.memory_space<vmem>>, vector<1x64x64xbf16>
    %369 = vector.shape_cast %368 : vector<1x64x64xbf16> to vector<64x64xbf16>
    %cst_350 = arith.constant dense<0.000000e+00> : vector<4x64xf32>
    %370 = tpu.matmul %367, %369, %cst_350 {dimension_numbers = #tpu.dot_dimension_numbers<[1], [0], [0], [1], [0, 0, 1, 1], [], []>} : vector<4x64xbf16>, vector<64x64xbf16>, vector<4x64xf32> -> vector<4x64xf32>
    %371 = arith.addf %365, %370 : vector<4x64xf32>
    %372 = arith.extf %354 : vector<1x64xbf16> to vector<1x64xf32>
    %373 = vector.broadcast %372 : vector<1x64xf32> to vector<4x64xf32>
    %374 = arith.addf %371, %373 : vector<4x64xf32>
    %cst_351 = arith.constant 0.000000e+00 : f32
    %375 = vector.broadcast %cst_351 : f32 to vector<4x64xf32>
    %376 = arith.maximumf %374, %375 : vector<4x64xf32>
    %c1_352 = arith.constant 1 : index
    %c0_353 = arith.constant 0 : index
    %377 = tpu.strided_load %arg37[%c1_352, %c0_353] {strides = array<i32: 2, 1>} : memref<34x128xf32, #tpu.memory_space<vmem>>, vector<4x64xf32>
    tpu.strided_store %arg37[%c1_352, %c0_353], %376 {strides = array<i32: 2, 1>} : memref<34x128xf32, #tpu.memory_space<vmem>>, vector<4x64xf32>
    %c2_354 = arith.constant 2 : index
    %c0_355 = arith.constant 0 : index
    %378 = tpu.strided_load %arg37[%c2_354, %c0_355] {strides = array<i32: 2, 1>} : memref<34x128xf32, #tpu.memory_space<vmem>>, vector<4x64xf32>
    tpu.strided_store %arg37[%c2_354, %c0_355], %376 {strides = array<i32: 2, 1>} : memref<34x128xf32, #tpu.memory_space<vmem>>, vector<4x64xf32>
    %cst_356 = arith.constant 0.000000e+00 : f32
    %379 = vector.broadcast %cst_356 : f32 to vector<1x64xf32>
    %c0_357 = arith.constant 0 : index
    %c0_358 = arith.constant 0 : index
    %380 = vector.load %arg37[%c0_357, %c0_358] : memref<34x128xf32, #tpu.memory_space<vmem>>, vector<1x64xf32>
    tpu.vector_store %arg37[%c0_357, %c0_358], %379 {strides = array<i32>} : memref<34x128xf32, #tpu.memory_space<vmem>>, vector<1x64xf32>,
    %c9_359 = arith.constant 9 : index
    %c0_360 = arith.constant 0 : index
    %381 = vector.load %arg37[%c9_359, %c0_360] : memref<34x128xf32, #tpu.memory_space<vmem>>, vector<1x64xf32>
    tpu.vector_store %arg37[%c9_359, %c0_360], %379 {strides = array<i32>} : memref<34x128xf32, #tpu.memory_space<vmem>>, vector<1x64xf32>,
    %c0_361 = arith.constant 0 : index
    %c0_362 = arith.constant 0 : index
    %382 = vector.load %arg23[%c0_361, %c0_362] : memref<1x64xbf16, #tpu.memory_space<vmem>>, vector<1x64xbf16>
    %c0_363 = arith.constant 0 : index
    %c0_364 = arith.constant 0 : index
    %383 = vector.load %arg37[%c0_363, %c0_364] : memref<34x128xf32, #tpu.memory_space<vmem>>, vector<8x64xf32>
    %384 = arith.truncf %383 : vector<8x64xf32> to vector<8x64xbf16>
    %c0_365 = arith.constant 0 : index
    %c0_366 = arith.constant 0 : index
    %c0_367 = arith.constant 0 : index
    %385 = vector.load %arg22[%c0_365, %c0_366, %c0_367] : memref<3x64x64xbf16, #tpu.memory_space<vmem>>, vector<1x64x64xbf16>
    %386 = vector.shape_cast %385 : vector<1x64x64xbf16> to vector<64x64xbf16>
    %cst_368 = arith.constant dense<0.000000e+00> : vector<8x64xf32>
    %387 = tpu.matmul %384, %386, %cst_368 {dimension_numbers = #tpu.dot_dimension_numbers<[1], [0], [0], [1], [0, 0, 1, 1], [], []>} : vector<8x64xbf16>, vector<64x64xbf16>, vector<8x64xf32> -> vector<8x64xf32>
    %c1_369 = arith.constant 1 : index
    %c0_370 = arith.constant 0 : index
    %388 = vector.load %arg37[%c1_369, %c0_370] : memref<34x128xf32, #tpu.memory_space<vmem>>, vector<8x64xf32>
    %389 = arith.truncf %388 : vector<8x64xf32> to vector<8x64xbf16>
    %c1_371 = arith.constant 1 : index
    %c0_372 = arith.constant 0 : index
    %c0_373 = arith.constant 0 : index
    %390 = vector.load %arg22[%c1_371, %c0_372, %c0_373] : memref<3x64x64xbf16, #tpu.memory_space<vmem>>, vector<1x64x64xbf16>
    %391 = vector.shape_cast %390 : vector<1x64x64xbf16> to vector<64x64xbf16>
    %cst_374 = arith.constant dense<0.000000e+00> : vector<8x64xf32>
    %392 = tpu.matmul %389, %391, %cst_374 {dimension_numbers = #tpu.dot_dimension_numbers<[1], [0], [0], [1], [0, 0, 1, 1], [], []>} : vector<8x64xbf16>, vector<64x64xbf16>, vector<8x64xf32> -> vector<8x64xf32>
    %393 = arith.addf %387, %392 : vector<8x64xf32>
    %c2_375 = arith.constant 2 : index
    %c0_376 = arith.constant 0 : index
    %394 = vector.load %arg37[%c2_375, %c0_376] : memref<34x128xf32, #tpu.memory_space<vmem>>, vector<8x64xf32>
    %395 = arith.truncf %394 : vector<8x64xf32> to vector<8x64xbf16>
    %c2_377 = arith.constant 2 : index
    %c0_378 = arith.constant 0 : index
    %c0_379 = arith.constant 0 : index
    %396 = vector.load %arg22[%c2_377, %c0_378, %c0_379] : memref<3x64x64xbf16, #tpu.memory_space<vmem>>, vector<1x64x64xbf16>
    %397 = vector.shape_cast %396 : vector<1x64x64xbf16> to vector<64x64xbf16>
    %cst_380 = arith.constant dense<0.000000e+00> : vector<8x64xf32>
    %398 = tpu.matmul %395, %397, %cst_380 {dimension_numbers = #tpu.dot_dimension_numbers<[1], [0], [0], [1], [0, 0, 1, 1], [], []>} : vector<8x64xbf16>, vector<64x64xbf16>, vector<8x64xf32> -> vector<8x64xf32>
    %399 = arith.addf %393, %398 : vector<8x64xf32>
    %400 = arith.extf %382 : vector<1x64xbf16> to vector<1x64xf32>
    %401 = vector.broadcast %400 : vector<1x64xf32> to vector<8x64xf32>
    %402 = arith.addf %399, %401 : vector<8x64xf32>
    %cst_381 = arith.constant 0.000000e+00 : f32
    %403 = vector.broadcast %cst_381 : f32 to vector<8x64xf32>
    %404 = arith.maximumf %402, %403 : vector<8x64xf32>
    %c1_382 = arith.constant 1 : index
    %c0_383 = arith.constant 0 : index
    %405 = vector.load %arg37[%c1_382, %c0_383] : memref<34x128xf32, #tpu.memory_space<vmem>>, vector<8x64xf32>
    tpu.vector_store %arg37[%c1_382, %c0_383], %404 {strides = array<i32>} : memref<34x128xf32, #tpu.memory_space<vmem>>, vector<8x64xf32>,
    %cst_384 = arith.constant 0.000000e+00 : f32
    %406 = vector.broadcast %cst_384 : f32 to vector<1x64xf32>
    %c0_385 = arith.constant 0 : index
    %c0_386 = arith.constant 0 : index
    %407 = vector.load %arg37[%c0_385, %c0_386] : memref<34x128xf32, #tpu.memory_space<vmem>>, vector<1x64xf32>
    tpu.vector_store %arg37[%c0_385, %c0_386], %406 {strides = array<i32>} : memref<34x128xf32, #tpu.memory_space<vmem>>, vector<1x64xf32>,
    %c9_387 = arith.constant 9 : index
    %c0_388 = arith.constant 0 : index
    %408 = vector.load %arg37[%c9_387, %c0_388] : memref<34x128xf32, #tpu.memory_space<vmem>>, vector<1x64xf32>
    tpu.vector_store %arg37[%c9_387, %c0_388], %406 {strides = array<i32>} : memref<34x128xf32, #tpu.memory_space<vmem>>, vector<1x64xf32>,
    %c0_389 = arith.constant 0 : index
    %c0_390 = arith.constant 0 : index
    %409 = vector.load %arg25[%c0_389, %c0_390] : memref<1x64xbf16, #tpu.memory_space<vmem>>, vector<1x64xbf16>
    %c0_391 = arith.constant 0 : index
    %c0_392 = arith.constant 0 : index
    %410 = vector.load %arg37[%c0_391, %c0_392] : memref<34x128xf32, #tpu.memory_space<vmem>>, vector<8x64xf32>
    %411 = arith.truncf %410 : vector<8x64xf32> to vector<8x64xbf16>
    %c0_393 = arith.constant 0 : index
    %c0_394 = arith.constant 0 : index
    %c0_395 = arith.constant 0 : index
    %412 = vector.load %arg24[%c0_393, %c0_394, %c0_395] : memref<3x64x64xbf16, #tpu.memory_space<vmem>>, vector<1x64x64xbf16>
    %413 = vector.shape_cast %412 : vector<1x64x64xbf16> to vector<64x64xbf16>
    %cst_396 = arith.constant dense<0.000000e+00> : vector<8x64xf32>
    %414 = tpu.matmul %411, %413, %cst_396 {dimension_numbers = #tpu.dot_dimension_numbers<[1], [0], [0], [1], [0, 0, 1, 1], [], []>} : vector<8x64xbf16>, vector<64x64xbf16>, vector<8x64xf32> -> vector<8x64xf32>
    %c1_397 = arith.constant 1 : index
    %c0_398 = arith.constant 0 : index
    %415 = vector.load %arg37[%c1_397, %c0_398] : memref<34x128xf32, #tpu.memory_space<vmem>>, vector<8x64xf32>
    %416 = arith.truncf %415 : vector<8x64xf32> to vector<8x64xbf16>
    %c1_399 = arith.constant 1 : index
    %c0_400 = arith.constant 0 : index
    %c0_401 = arith.constant 0 : index
    %417 = vector.load %arg24[%c1_399, %c0_400, %c0_401] : memref<3x64x64xbf16, #tpu.memory_space<vmem>>, vector<1x64x64xbf16>
    %418 = vector.shape_cast %417 : vector<1x64x64xbf16> to vector<64x64xbf16>
    %cst_402 = arith.constant dense<0.000000e+00> : vector<8x64xf32>
    %419 = tpu.matmul %416, %418, %cst_402 {dimension_numbers = #tpu.dot_dimension_numbers<[1], [0], [0], [1], [0, 0, 1, 1], [], []>} : vector<8x64xbf16>, vector<64x64xbf16>, vector<8x64xf32> -> vector<8x64xf32>
    %420 = arith.addf %414, %419 : vector<8x64xf32>
    %c2_403 = arith.constant 2 : index
    %c0_404 = arith.constant 0 : index
    %421 = vector.load %arg37[%c2_403, %c0_404] : memref<34x128xf32, #tpu.memory_space<vmem>>, vector<8x64xf32>
    %422 = arith.truncf %421 : vector<8x64xf32> to vector<8x64xbf16>
    %c2_405 = arith.constant 2 : index
    %c0_406 = arith.constant 0 : index
    %c0_407 = arith.constant 0 : index
    %423 = vector.load %arg24[%c2_405, %c0_406, %c0_407] : memref<3x64x64xbf16, #tpu.memory_space<vmem>>, vector<1x64x64xbf16>
    %424 = vector.shape_cast %423 : vector<1x64x64xbf16> to vector<64x64xbf16>
    %cst_408 = arith.constant dense<0.000000e+00> : vector<8x64xf32>
    %425 = tpu.matmul %422, %424, %cst_408 {dimension_numbers = #tpu.dot_dimension_numbers<[1], [0], [0], [1], [0, 0, 1, 1], [], []>} : vector<8x64xbf16>, vector<64x64xbf16>, vector<8x64xf32> -> vector<8x64xf32>
    %426 = arith.addf %420, %425 : vector<8x64xf32>
    %427 = arith.extf %409 : vector<1x64xbf16> to vector<1x64xf32>
    %428 = vector.broadcast %427 : vector<1x64xf32> to vector<8x64xf32>
    %429 = arith.addf %426, %428 : vector<8x64xf32>
    %cst_409 = arith.constant 0.000000e+00 : f32
    %430 = vector.broadcast %cst_409 : f32 to vector<8x64xf32>
    %431 = arith.maximumf %429, %430 : vector<8x64xf32>
    %c1_410 = arith.constant 1 : index
    %c0_411 = arith.constant 0 : index
    %432 = tpu.strided_load %arg37[%c1_410, %c0_411] {strides = array<i32: 2, 1>} : memref<34x128xf32, #tpu.memory_space<vmem>>, vector<8x64xf32>
    tpu.strided_store %arg37[%c1_410, %c0_411], %431 {strides = array<i32: 2, 1>} : memref<34x128xf32, #tpu.memory_space<vmem>>, vector<8x64xf32>
    %c2_412 = arith.constant 2 : index
    %c0_413 = arith.constant 0 : index
    %433 = tpu.strided_load %arg37[%c2_412, %c0_413] {strides = array<i32: 2, 1>} : memref<34x128xf32, #tpu.memory_space<vmem>>, vector<8x64xf32>
    tpu.strided_store %arg37[%c2_412, %c0_413], %431 {strides = array<i32: 2, 1>} : memref<34x128xf32, #tpu.memory_space<vmem>>, vector<8x64xf32>
    %cst_414 = arith.constant 0.000000e+00 : f32
    %434 = vector.broadcast %cst_414 : f32 to vector<1x64xf32>
    %c0_415 = arith.constant 0 : index
    %c0_416 = arith.constant 0 : index
    %435 = vector.load %arg37[%c0_415, %c0_416] : memref<34x128xf32, #tpu.memory_space<vmem>>, vector<1x64xf32>
    tpu.vector_store %arg37[%c0_415, %c0_416], %434 {strides = array<i32>} : memref<34x128xf32, #tpu.memory_space<vmem>>, vector<1x64xf32>,
    %c17_417 = arith.constant 17 : index
    %c0_418 = arith.constant 0 : index
    %436 = vector.load %arg37[%c17_417, %c0_418] : memref<34x128xf32, #tpu.memory_space<vmem>>, vector<1x64xf32>
    tpu.vector_store %arg37[%c17_417, %c0_418], %434 {strides = array<i32>} : memref<34x128xf32, #tpu.memory_space<vmem>>, vector<1x64xf32>,
    %c0_419 = arith.constant 0 : index
    %c0_420 = arith.constant 0 : index
    %437 = vector.load %arg27[%c0_419, %c0_420] : memref<1x64xbf16, #tpu.memory_space<vmem>>, vector<1x64xbf16>
    %c0_421 = arith.constant 0 : index
    %c0_422 = arith.constant 0 : index
    %438 = vector.load %arg37[%c0_421, %c0_422] : memref<34x128xf32, #tpu.memory_space<vmem>>, vector<16x64xf32>
    %439 = arith.truncf %438 : vector<16x64xf32> to vector<16x64xbf16>
    %c0_423 = arith.constant 0 : index
    %c0_424 = arith.constant 0 : index
    %c0_425 = arith.constant 0 : index
    %440 = vector.load %arg26[%c0_423, %c0_424, %c0_425] : memref<3x64x64xbf16, #tpu.memory_space<vmem>>, vector<1x64x64xbf16>
    %441 = vector.shape_cast %440 : vector<1x64x64xbf16> to vector<64x64xbf16>
    %cst_426 = arith.constant dense<0.000000e+00> : vector<16x64xf32>
    %442 = tpu.matmul %439, %441, %cst_426 {dimension_numbers = #tpu.dot_dimension_numbers<[1], [0], [0], [1], [0, 0, 1, 1], [], []>} : vector<16x64xbf16>, vector<64x64xbf16>, vector<16x64xf32> -> vector<16x64xf32>
    %c1_427 = arith.constant 1 : index
    %c0_428 = arith.constant 0 : index
    %443 = vector.load %arg37[%c1_427, %c0_428] : memref<34x128xf32, #tpu.memory_space<vmem>>, vector<16x64xf32>
    %444 = arith.truncf %443 : vector<16x64xf32> to vector<16x64xbf16>
    %c1_429 = arith.constant 1 : index
    %c0_430 = arith.constant 0 : index
    %c0_431 = arith.constant 0 : index
    %445 = vector.load %arg26[%c1_429, %c0_430, %c0_431] : memref<3x64x64xbf16, #tpu.memory_space<vmem>>, vector<1x64x64xbf16>
    %446 = vector.shape_cast %445 : vector<1x64x64xbf16> to vector<64x64xbf16>
    %cst_432 = arith.constant dense<0.000000e+00> : vector<16x64xf32>
    %447 = tpu.matmul %444, %446, %cst_432 {dimension_numbers = #tpu.dot_dimension_numbers<[1], [0], [0], [1], [0, 0, 1, 1], [], []>} : vector<16x64xbf16>, vector<64x64xbf16>, vector<16x64xf32> -> vector<16x64xf32>
    %448 = arith.addf %442, %447 : vector<16x64xf32>
    %c2_433 = arith.constant 2 : index
    %c0_434 = arith.constant 0 : index
    %449 = vector.load %arg37[%c2_433, %c0_434] : memref<34x128xf32, #tpu.memory_space<vmem>>, vector<16x64xf32>
    %450 = arith.truncf %449 : vector<16x64xf32> to vector<16x64xbf16>
    %c2_435 = arith.constant 2 : index
    %c0_436 = arith.constant 0 : index
    %c0_437 = arith.constant 0 : index
    %451 = vector.load %arg26[%c2_435, %c0_436, %c0_437] : memref<3x64x64xbf16, #tpu.memory_space<vmem>>, vector<1x64x64xbf16>
    %452 = vector.shape_cast %451 : vector<1x64x64xbf16> to vector<64x64xbf16>
    %cst_438 = arith.constant dense<0.000000e+00> : vector<16x64xf32>
    %453 = tpu.matmul %450, %452, %cst_438 {dimension_numbers = #tpu.dot_dimension_numbers<[1], [0], [0], [1], [0, 0, 1, 1], [], []>} : vector<16x64xbf16>, vector<64x64xbf16>, vector<16x64xf32> -> vector<16x64xf32>
    %454 = arith.addf %448, %453 : vector<16x64xf32>
    %455 = arith.extf %437 : vector<1x64xbf16> to vector<1x64xf32>
    %456 = vector.broadcast %455 : vector<1x64xf32> to vector<16x64xf32>
    %457 = arith.addf %454, %456 : vector<16x64xf32>
    %cst_439 = arith.constant 0.000000e+00 : f32
    %458 = vector.broadcast %cst_439 : f32 to vector<16x64xf32>
    %459 = arith.maximumf %457, %458 : vector<16x64xf32>
    %c1_440 = arith.constant 1 : index
    %c0_441 = arith.constant 0 : index
    %460 = vector.load %arg37[%c1_440, %c0_441] : memref<34x128xf32, #tpu.memory_space<vmem>>, vector<16x64xf32>
    tpu.vector_store %arg37[%c1_440, %c0_441], %459 {strides = array<i32>} : memref<34x128xf32, #tpu.memory_space<vmem>>, vector<16x64xf32>,
    %cst_442 = arith.constant 0.000000e+00 : f32
    %461 = vector.broadcast %cst_442 : f32 to vector<1x64xf32>
    %c0_443 = arith.constant 0 : index
    %c0_444 = arith.constant 0 : index
    %462 = vector.load %arg37[%c0_443, %c0_444] : memref<34x128xf32, #tpu.memory_space<vmem>>, vector<1x64xf32>
    tpu.vector_store %arg37[%c0_443, %c0_444], %461 {strides = array<i32>} : memref<34x128xf32, #tpu.memory_space<vmem>>, vector<1x64xf32>,
    %c17_445 = arith.constant 17 : index
    %c0_446 = arith.constant 0 : index
    %463 = vector.load %arg37[%c17_445, %c0_446] : memref<34x128xf32, #tpu.memory_space<vmem>>, vector<1x64xf32>
    tpu.vector_store %arg37[%c17_445, %c0_446], %461 {strides = array<i32>} : memref<34x128xf32, #tpu.memory_space<vmem>>, vector<1x64xf32>,
    %c0_447 = arith.constant 0 : index
    %c0_448 = arith.constant 0 : index
    %464 = vector.load %arg29[%c0_447, %c0_448] : memref<1x64xbf16, #tpu.memory_space<vmem>>, vector<1x64xbf16>
    %c0_449 = arith.constant 0 : index
    %c0_450 = arith.constant 0 : index
    %465 = vector.load %arg37[%c0_449, %c0_450] : memref<34x128xf32, #tpu.memory_space<vmem>>, vector<16x64xf32>
    %466 = arith.truncf %465 : vector<16x64xf32> to vector<16x64xbf16>
    %c0_451 = arith.constant 0 : index
    %c0_452 = arith.constant 0 : index
    %c0_453 = arith.constant 0 : index
    %467 = vector.load %arg28[%c0_451, %c0_452, %c0_453] : memref<3x64x64xbf16, #tpu.memory_space<vmem>>, vector<1x64x64xbf16>
    %468 = vector.shape_cast %467 : vector<1x64x64xbf16> to vector<64x64xbf16>
    %cst_454 = arith.constant dense<0.000000e+00> : vector<16x64xf32>
    %469 = tpu.matmul %466, %468, %cst_454 {dimension_numbers = #tpu.dot_dimension_numbers<[1], [0], [0], [1], [0, 0, 1, 1], [], []>} : vector<16x64xbf16>, vector<64x64xbf16>, vector<16x64xf32> -> vector<16x64xf32>
    %c1_455 = arith.constant 1 : index
    %c0_456 = arith.constant 0 : index
    %470 = vector.load %arg37[%c1_455, %c0_456] : memref<34x128xf32, #tpu.memory_space<vmem>>, vector<16x64xf32>
    %471 = arith.truncf %470 : vector<16x64xf32> to vector<16x64xbf16>
    %c1_457 = arith.constant 1 : index
    %c0_458 = arith.constant 0 : index
    %c0_459 = arith.constant 0 : index
    %472 = vector.load %arg28[%c1_457, %c0_458, %c0_459] : memref<3x64x64xbf16, #tpu.memory_space<vmem>>, vector<1x64x64xbf16>
    %473 = vector.shape_cast %472 : vector<1x64x64xbf16> to vector<64x64xbf16>
    %cst_460 = arith.constant dense<0.000000e+00> : vector<16x64xf32>
    %474 = tpu.matmul %471, %473, %cst_460 {dimension_numbers = #tpu.dot_dimension_numbers<[1], [0], [0], [1], [0, 0, 1, 1], [], []>} : vector<16x64xbf16>, vector<64x64xbf16>, vector<16x64xf32> -> vector<16x64xf32>
    %475 = arith.addf %469, %474 : vector<16x64xf32>
    %c2_461 = arith.constant 2 : index
    %c0_462 = arith.constant 0 : index
    %476 = vector.load %arg37[%c2_461, %c0_462] : memref<34x128xf32, #tpu.memory_space<vmem>>, vector<16x64xf32>
    %477 = arith.truncf %476 : vector<16x64xf32> to vector<16x64xbf16>
    %c2_463 = arith.constant 2 : index
    %c0_464 = arith.constant 0 : index
    %c0_465 = arith.constant 0 : index
    %478 = vector.load %arg28[%c2_463, %c0_464, %c0_465] : memref<3x64x64xbf16, #tpu.memory_space<vmem>>, vector<1x64x64xbf16>
    %479 = vector.shape_cast %478 : vector<1x64x64xbf16> to vector<64x64xbf16>
    %cst_466 = arith.constant dense<0.000000e+00> : vector<16x64xf32>
    %480 = tpu.matmul %477, %479, %cst_466 {dimension_numbers = #tpu.dot_dimension_numbers<[1], [0], [0], [1], [0, 0, 1, 1], [], []>} : vector<16x64xbf16>, vector<64x64xbf16>, vector<16x64xf32> -> vector<16x64xf32>
    %481 = arith.addf %475, %480 : vector<16x64xf32>
    %482 = arith.extf %464 : vector<1x64xbf16> to vector<1x64xf32>
    %483 = vector.broadcast %482 : vector<1x64xf32> to vector<16x64xf32>
    %484 = arith.addf %481, %483 : vector<16x64xf32>
    %cst_467 = arith.constant 0.000000e+00 : f32
    %485 = vector.broadcast %cst_467 : f32 to vector<16x64xf32>
    %486 = arith.maximumf %484, %485 : vector<16x64xf32>
    %c1_468 = arith.constant 1 : index
    %c0_469 = arith.constant 0 : index
    %487 = tpu.strided_load %arg37[%c1_468, %c0_469] {strides = array<i32: 2, 1>} : memref<34x128xf32, #tpu.memory_space<vmem>>, vector<16x64xf32>
    tpu.strided_store %arg37[%c1_468, %c0_469], %486 {strides = array<i32: 2, 1>} : memref<34x128xf32, #tpu.memory_space<vmem>>, vector<16x64xf32>
    %c2_470 = arith.constant 2 : index
    %c0_471 = arith.constant 0 : index
    %488 = tpu.strided_load %arg37[%c2_470, %c0_471] {strides = array<i32: 2, 1>} : memref<34x128xf32, #tpu.memory_space<vmem>>, vector<16x64xf32>
    tpu.strided_store %arg37[%c2_470, %c0_471], %486 {strides = array<i32: 2, 1>} : memref<34x128xf32, #tpu.memory_space<vmem>>, vector<16x64xf32>
    %cst_472 = arith.constant 0.000000e+00 : f32
    %489 = vector.broadcast %cst_472 : f32 to vector<1x64xf32>
    %c0_473 = arith.constant 0 : index
    %c0_474 = arith.constant 0 : index
    %490 = vector.load %arg37[%c0_473, %c0_474] : memref<34x128xf32, #tpu.memory_space<vmem>>, vector<1x64xf32>
    tpu.vector_store %arg37[%c0_473, %c0_474], %489 {strides = array<i32>} : memref<34x128xf32, #tpu.memory_space<vmem>>, vector<1x64xf32>,
    %c33_475 = arith.constant 33 : index
    %c0_476 = arith.constant 0 : index
    %491 = vector.load %arg37[%c33_475, %c0_476] : memref<34x128xf32, #tpu.memory_space<vmem>>, vector<1x64xf32>
    tpu.vector_store %arg37[%c33_475, %c0_476], %489 {strides = array<i32>} : memref<34x128xf32, #tpu.memory_space<vmem>>, vector<1x64xf32>,
    %c0_477 = arith.constant 0 : index
    %c0_478 = arith.constant 0 : index
    %492 = vector.load %arg31[%c0_477, %c0_478] : memref<1x128xbf16, #tpu.memory_space<vmem>>, vector<1x128xbf16>
    %c0_479 = arith.constant 0 : index
    %c0_480 = arith.constant 0 : index
    %493 = vector.load %arg37[%c0_479, %c0_480] : memref<34x128xf32, #tpu.memory_space<vmem>>, vector<32x64xf32>
    %494 = arith.truncf %493 : vector<32x64xf32> to vector<32x64xbf16>
    %c0_481 = arith.constant 0 : index
    %c0_482 = arith.constant 0 : index
    %c0_483 = arith.constant 0 : index
    %495 = vector.load %arg30[%c0_481, %c0_482, %c0_483] : memref<3x64x128xbf16, #tpu.memory_space<vmem>>, vector<1x64x128xbf16>
    %496 = vector.shape_cast %495 : vector<1x64x128xbf16> to vector<64x128xbf16>
    %cst_484 = arith.constant dense<0.000000e+00> : vector<32x128xf32>
    %497 = tpu.matmul %494, %496, %cst_484 {dimension_numbers = #tpu.dot_dimension_numbers<[1], [0], [0], [1], [0, 0, 1, 1], [], []>} : vector<32x64xbf16>, vector<64x128xbf16>, vector<32x128xf32> -> vector<32x128xf32>
    %c1_485 = arith.constant 1 : index
    %c0_486 = arith.constant 0 : index
    %498 = vector.load %arg37[%c1_485, %c0_486] : memref<34x128xf32, #tpu.memory_space<vmem>>, vector<32x64xf32>
    %499 = arith.truncf %498 : vector<32x64xf32> to vector<32x64xbf16>
    %c1_487 = arith.constant 1 : index
    %c0_488 = arith.constant 0 : index
    %c0_489 = arith.constant 0 : index
    %500 = vector.load %arg30[%c1_487, %c0_488, %c0_489] : memref<3x64x128xbf16, #tpu.memory_space<vmem>>, vector<1x64x128xbf16>
    %501 = vector.shape_cast %500 : vector<1x64x128xbf16> to vector<64x128xbf16>
    %cst_490 = arith.constant dense<0.000000e+00> : vector<32x128xf32>
    %502 = tpu.matmul %499, %501, %cst_490 {dimension_numbers = #tpu.dot_dimension_numbers<[1], [0], [0], [1], [0, 0, 1, 1], [], []>} : vector<32x64xbf16>, vector<64x128xbf16>, vector<32x128xf32> -> vector<32x128xf32>
    %503 = arith.addf %497, %502 : vector<32x128xf32>
    %c2_491 = arith.constant 2 : index
    %c0_492 = arith.constant 0 : index
    %504 = vector.load %arg37[%c2_491, %c0_492] : memref<34x128xf32, #tpu.memory_space<vmem>>, vector<32x64xf32>
    %505 = arith.truncf %504 : vector<32x64xf32> to vector<32x64xbf16>
    %c2_493 = arith.constant 2 : index
    %c0_494 = arith.constant 0 : index
    %c0_495 = arith.constant 0 : index
    %506 = vector.load %arg30[%c2_493, %c0_494, %c0_495] : memref<3x64x128xbf16, #tpu.memory_space<vmem>>, vector<1x64x128xbf16>
    %507 = vector.shape_cast %506 : vector<1x64x128xbf16> to vector<64x128xbf16>
    %cst_496 = arith.constant dense<0.000000e+00> : vector<32x128xf32>
    %508 = tpu.matmul %505, %507, %cst_496 {dimension_numbers = #tpu.dot_dimension_numbers<[1], [0], [0], [1], [0, 0, 1, 1], [], []>} : vector<32x64xbf16>, vector<64x128xbf16>, vector<32x128xf32> -> vector<32x128xf32>
    %509 = arith.addf %503, %508 : vector<32x128xf32>
    %510 = arith.extf %492 : vector<1x128xbf16> to vector<1x128xf32>
    %511 = vector.broadcast %510 : vector<1x128xf32> to vector<32x128xf32>
    %512 = arith.addf %509, %511 : vector<32x128xf32>
    %cst_497 = arith.constant 0.000000e+00 : f32
    %513 = vector.broadcast %cst_497 : f32 to vector<32x128xf32>
    %514 = arith.maximumf %512, %513 : vector<32x128xf32>
    %c1_498 = arith.constant 1 : index
    %c0_499 = arith.constant 0 : index
    %515 = vector.load %arg37[%c1_498, %c0_499] : memref<34x128xf32, #tpu.memory_space<vmem>>, vector<32x128xf32>
    tpu.vector_store %arg37[%c1_498, %c0_499], %514 {strides = array<i32>} : memref<34x128xf32, #tpu.memory_space<vmem>>, vector<32x128xf32>,
    %cst_500 = arith.constant 0.000000e+00 : f32
    %516 = vector.broadcast %cst_500 : f32 to vector<1x128xf32>
    %c0_501 = arith.constant 0 : index
    %c0_502 = arith.constant 0 : index
    %517 = vector.load %arg37[%c0_501, %c0_502] : memref<34x128xf32, #tpu.memory_space<vmem>>, vector<1x128xf32>
    tpu.vector_store %arg37[%c0_501, %c0_502], %516 {strides = array<i32>} : memref<34x128xf32, #tpu.memory_space<vmem>>, vector<1x128xf32>,
    %c33_503 = arith.constant 33 : index
    %c0_504 = arith.constant 0 : index
    %518 = vector.load %arg37[%c33_503, %c0_504] : memref<34x128xf32, #tpu.memory_space<vmem>>, vector<1x128xf32>
    tpu.vector_store %arg37[%c33_503, %c0_504], %516 {strides = array<i32>} : memref<34x128xf32, #tpu.memory_space<vmem>>, vector<1x128xf32>,
    %c0_505 = arith.constant 0 : index
    %c0_506 = arith.constant 0 : index
    %519 = vector.load %arg33[%c0_505, %c0_506] : memref<1x128xbf16, #tpu.memory_space<vmem>>, vector<1x128xbf16>
    %c0_507 = arith.constant 0 : index
    %c0_508 = arith.constant 0 : index
    %520 = vector.load %arg37[%c0_507, %c0_508] : memref<34x128xf32, #tpu.memory_space<vmem>>, vector<32x128xf32>
    %521 = arith.truncf %520 : vector<32x128xf32> to vector<32x128xbf16>
    %c0_509 = arith.constant 0 : index
    %c0_510 = arith.constant 0 : index
    %c0_511 = arith.constant 0 : index
    %522 = vector.load %arg32[%c0_509, %c0_510, %c0_511] : memref<3x128x128xbf16, #tpu.memory_space<vmem>>, vector<1x128x128xbf16>
    %523 = vector.shape_cast %522 : vector<1x128x128xbf16> to vector<128x128xbf16>
    %cst_512 = arith.constant dense<0.000000e+00> : vector<32x128xf32>
    %524 = tpu.matmul %521, %523, %cst_512 {dimension_numbers = #tpu.dot_dimension_numbers<[1], [0], [0], [1], [0, 0, 1, 1], [], []>} : vector<32x128xbf16>, vector<128x128xbf16>, vector<32x128xf32> -> vector<32x128xf32>
    %c1_513 = arith.constant 1 : index
    %c0_514 = arith.constant 0 : index
    %525 = vector.load %arg37[%c1_513, %c0_514] : memref<34x128xf32, #tpu.memory_space<vmem>>, vector<32x128xf32>
    %526 = arith.truncf %525 : vector<32x128xf32> to vector<32x128xbf16>
    %c1_515 = arith.constant 1 : index
    %c0_516 = arith.constant 0 : index
    %c0_517 = arith.constant 0 : index
    %527 = vector.load %arg32[%c1_515, %c0_516, %c0_517] : memref<3x128x128xbf16, #tpu.memory_space<vmem>>, vector<1x128x128xbf16>
    %528 = vector.shape_cast %527 : vector<1x128x128xbf16> to vector<128x128xbf16>
    %cst_518 = arith.constant dense<0.000000e+00> : vector<32x128xf32>
    %529 = tpu.matmul %526, %528, %cst_518 {dimension_numbers = #tpu.dot_dimension_numbers<[1], [0], [0], [1], [0, 0, 1, 1], [], []>} : vector<32x128xbf16>, vector<128x128xbf16>, vector<32x128xf32> -> vector<32x128xf32>
    %530 = arith.addf %524, %529 : vector<32x128xf32>
    %c2_519 = arith.constant 2 : index
    %c0_520 = arith.constant 0 : index
    %531 = vector.load %arg37[%c2_519, %c0_520] : memref<34x128xf32, #tpu.memory_space<vmem>>, vector<32x128xf32>
    %532 = arith.truncf %531 : vector<32x128xf32> to vector<32x128xbf16>
    %c2_521 = arith.constant 2 : index
    %c0_522 = arith.constant 0 : index
    %c0_523 = arith.constant 0 : index
    %533 = vector.load %arg32[%c2_521, %c0_522, %c0_523] : memref<3x128x128xbf16, #tpu.memory_space<vmem>>, vector<1x128x128xbf16>
    %534 = vector.shape_cast %533 : vector<1x128x128xbf16> to vector<128x128xbf16>
    %cst_524 = arith.constant dense<0.000000e+00> : vector<32x128xf32>
    %535 = tpu.matmul %532, %534, %cst_524 {dimension_numbers = #tpu.dot_dimension_numbers<[1], [0], [0], [1], [0, 0, 1, 1], [], []>} : vector<32x128xbf16>, vector<128x128xbf16>, vector<32x128xf32> -> vector<32x128xf32>
    %536 = arith.addf %530, %535 : vector<32x128xf32>
    %537 = arith.extf %519 : vector<1x128xbf16> to vector<1x128xf32>
    %538 = vector.broadcast %537 : vector<1x128xf32> to vector<32x128xf32>
    %539 = arith.addf %536, %538 : vector<32x128xf32>
    %cst_525 = arith.constant 0.000000e+00 : f32
    %540 = vector.broadcast %cst_525 : f32 to vector<32x128xf32>
    %541 = arith.maximumf %539, %540 : vector<32x128xf32>
    %542 = arith.truncf %541 : vector<32x128xf32> to vector<32x128xbf16>
    %c0_526 = arith.constant 0 : index
    %c0_527 = arith.constant 0 : index
    %543 = vector.load %arg34[%c0_526, %c0_527] : memref<128x128xbf16, #tpu.memory_space<vmem>>, vector<128x128xbf16>
    %cst_528 = arith.constant dense<0.000000e+00> : vector<32x128xf32>
    %544 = tpu.matmul %542, %543, %cst_528 {dimension_numbers = #tpu.dot_dimension_numbers<[1], [0], [0], [1], [0, 0, 1, 1], [], []>} : vector<32x128xbf16>, vector<128x128xbf16>, vector<32x128xf32> -> vector<32x128xf32>
    %c0_529 = arith.constant 0 : index
    %c0_530 = arith.constant 0 : index
    %545 = vector.load %arg35[%c0_529, %c0_530] : memref<1x128xbf16, #tpu.memory_space<vmem>>, vector<1x128xbf16>
    %546 = arith.extf %545 : vector<1x128xbf16> to vector<1x128xf32>
    %547 = vector.broadcast %546 : vector<1x128xf32> to vector<32x128xf32>
    %548 = arith.addf %544, %547 : vector<32x128xf32>
    %c0_531 = arith.constant 0 : index
    %c0_532 = arith.constant 0 : index
    %c0_533 = arith.constant 0 : index
    %549 = vector.load %arg36[%c0_531, %c0_532, %c0_533] : memref<1x32x128xf32, #tpu.memory_space<vmem>>, vector<1x32x128xf32>
    %550 = vector.shape_cast %549 : vector<1x32x128xf32> to vector<32x128xf32>
    %551 = vector.shape_cast %548 : vector<32x128xf32> to vector<1x32x128xf32>
    tpu.vector_store %arg36[%c0_531, %c0_532, %c0_533], %551 {strides = array<i32>} : memref<1x32x128xf32, #tpu.memory_space<vmem>>, vector<1x32x128xf32>,
    return
  }
  func.func @transform_0(%arg0: i32) -> (i32, i32, i32) {
    %c0_i32 = arith.constant 0 : i32
    %c0_i32_0 = arith.constant 0 : i32
    %c0_i32_1 = arith.constant 0 : i32
    return %arg0, %c0_i32, %c0_i32_0 : i32, i32, i32
  }
  func.func @transform_1(%arg0: i32) -> (i32, i32, i32) {
    %c0_i32 = arith.constant 0 : i32
    %c0_i32_0 = arith.constant 0 : i32
    %c0_i32_1 = arith.constant 0 : i32
    %c0_i32_2 = arith.constant 0 : i32
    return %c0_i32, %c0_i32_0, %c0_i32_1 : i32, i32, i32
  }
  func.func @transform_2(%arg0: i32) -> (i32, i32) {
    %c0_i32 = arith.constant 0 : i32
    %c0_i32_0 = arith.constant 0 : i32
    %c0_i32_1 = arith.constant 0 : i32
    return %c0_i32, %c0_i32_0 : i32, i32
  }
  func.func @transform_3(%arg0: i32) -> (i32, i32, i32) {
    %c0_i32 = arith.constant 0 : i32
    %c0_i32_0 = arith.constant 0 : i32
    %c0_i32_1 = arith.constant 0 : i32
    %c0_i32_2 = arith.constant 0 : i32
    return %c0_i32, %c0_i32_0, %c0_i32_1 : i32, i32, i32
  }
  func.func @transform_4(%arg0: i32) -> (i32, i32) {
    %c0_i32 = arith.constant 0 : i32
    %c0_i32_0 = arith.constant 0 : i32
    %c0_i32_1 = arith.constant 0 : i32
    return %c0_i32, %c0_i32_0 : i32, i32
  }
  func.func @transform_5(%arg0: i32) -> (i32, i32, i32) {
    %c0_i32 = arith.constant 0 : i32
    %c0_i32_0 = arith.constant 0 : i32
    %c0_i32_1 = arith.constant 0 : i32
    %c0_i32_2 = arith.constant 0 : i32
    return %c0_i32, %c0_i32_0, %c0_i32_1 : i32, i32, i32
  }
  func.func @transform_6(%arg0: i32) -> (i32, i32) {
    %c0_i32 = arith.constant 0 : i32
    %c0_i32_0 = arith.constant 0 : i32
    %c0_i32_1 = arith.constant 0 : i32
    return %c0_i32, %c0_i32_0 : i32, i32
  }
  func.func @transform_7(%arg0: i32) -> (i32, i32, i32) {
    %c0_i32 = arith.constant 0 : i32
    %c0_i32_0 = arith.constant 0 : i32
    %c0_i32_1 = arith.constant 0 : i32
    %c0_i32_2 = arith.constant 0 : i32
    return %c0_i32, %c0_i32_0, %c0_i32_1 : i32, i32, i32
  }
  func.func @transform_8(%arg0: i32) -> (i32, i32) {
    %c0_i32 = arith.constant 0 : i32
    %c0_i32_0 = arith.constant 0 : i32
    %c0_i32_1 = arith.constant 0 : i32
    return %c0_i32, %c0_i32_0 : i32, i32
  }
  func.func @transform_9(%arg0: i32) -> (i32, i32, i32) {
    %c0_i32 = arith.constant 0 : i32
    %c0_i32_0 = arith.constant 0 : i32
    %c0_i32_1 = arith.constant 0 : i32
    %c0_i32_2 = arith.constant 0 : i32
    return %c0_i32, %c0_i32_0, %c0_i32_1 : i32, i32, i32
  }
  func.func @transform_10(%arg0: i32) -> (i32, i32) {
    %c0_i32 = arith.constant 0 : i32
    %c0_i32_0 = arith.constant 0 : i32
    %c0_i32_1 = arith.constant 0 : i32
    return %c0_i32, %c0_i32_0 : i32, i32
  }
  func.func @transform_11(%arg0: i32) -> (i32, i32, i32) {
    %c0_i32 = arith.constant 0 : i32
    %c0_i32_0 = arith.constant 0 : i32
    %c0_i32_1 = arith.constant 0 : i32
    %c0_i32_2 = arith.constant 0 : i32
    return %c0_i32, %c0_i32_0, %c0_i32_1 : i32, i32, i32
  }
  func.func @transform_12(%arg0: i32) -> (i32, i32) {
    %c0_i32 = arith.constant 0 : i32
    %c0_i32_0 = arith.constant 0 : i32
    %c0_i32_1 = arith.constant 0 : i32
    return %c0_i32, %c0_i32_0 : i32, i32
  }
  func.func @transform_13(%arg0: i32) -> (i32, i32, i32) {
    %c0_i32 = arith.constant 0 : i32
    %c0_i32_0 = arith.constant 0 : i32
    %c0_i32_1 = arith.constant 0 : i32
    %c0_i32_2 = arith.constant 0 : i32
    return %c0_i32, %c0_i32_0, %c0_i32_1 : i32, i32, i32
  }
  func.func @transform_14(%arg0: i32) -> (i32, i32) {
    %c0_i32 = arith.constant 0 : i32
    %c0_i32_0 = arith.constant 0 : i32
    %c0_i32_1 = arith.constant 0 : i32
    return %c0_i32, %c0_i32_0 : i32, i32
  }
  func.func @transform_15(%arg0: i32) -> (i32, i32, i32) {
    %c0_i32 = arith.constant 0 : i32
    %c0_i32_0 = arith.constant 0 : i32
    %c0_i32_1 = arith.constant 0 : i32
    %c0_i32_2 = arith.constant 0 : i32
    return %c0_i32, %c0_i32_0, %c0_i32_1 : i32, i32, i32
  }
  func.func @transform_16(%arg0: i32) -> (i32, i32) {
    %c0_i32 = arith.constant 0 : i32
    %c0_i32_0 = arith.constant 0 : i32
    %c0_i32_1 = arith.constant 0 : i32
    return %c0_i32, %c0_i32_0 : i32, i32
  }
  func.func @transform_17(%arg0: i32) -> (i32, i32, i32) {
    %c0_i32 = arith.constant 0 : i32
    %c0_i32_0 = arith.constant 0 : i32
    %c0_i32_1 = arith.constant 0 : i32
    %c0_i32_2 = arith.constant 0 : i32
    return %c0_i32, %c0_i32_0, %c0_i32_1 : i32, i32, i32
  }
  func.func @transform_18(%arg0: i32) -> (i32, i32) {
    %c0_i32 = arith.constant 0 : i32
    %c0_i32_0 = arith.constant 0 : i32
    %c0_i32_1 = arith.constant 0 : i32
    return %c0_i32, %c0_i32_0 : i32, i32
  }
  func.func @transform_19(%arg0: i32) -> (i32, i32, i32) {
    %c0_i32 = arith.constant 0 : i32
    %c0_i32_0 = arith.constant 0 : i32
    %c0_i32_1 = arith.constant 0 : i32
    %c0_i32_2 = arith.constant 0 : i32
    return %c0_i32, %c0_i32_0, %c0_i32_1 : i32, i32, i32
  }
  func.func @transform_20(%arg0: i32) -> (i32, i32) {
    %c0_i32 = arith.constant 0 : i32
    %c0_i32_0 = arith.constant 0 : i32
    %c0_i32_1 = arith.constant 0 : i32
    return %c0_i32, %c0_i32_0 : i32, i32
  }
  func.func @transform_21(%arg0: i32) -> (i32, i32, i32) {
    %c0_i32 = arith.constant 0 : i32
    %c0_i32_0 = arith.constant 0 : i32
    %c0_i32_1 = arith.constant 0 : i32
    %c0_i32_2 = arith.constant 0 : i32
    return %c0_i32, %c0_i32_0, %c0_i32_1 : i32, i32, i32
  }
  func.func @transform_22(%arg0: i32) -> (i32, i32) {
    %c0_i32 = arith.constant 0 : i32
    %c0_i32_0 = arith.constant 0 : i32
    %c0_i32_1 = arith.constant 0 : i32
    return %c0_i32, %c0_i32_0 : i32, i32
  }
  func.func @transform_23(%arg0: i32) -> (i32, i32, i32) {
    %c0_i32 = arith.constant 0 : i32
    %c0_i32_0 = arith.constant 0 : i32
    %c0_i32_1 = arith.constant 0 : i32
    %c0_i32_2 = arith.constant 0 : i32
    return %c0_i32, %c0_i32_0, %c0_i32_1 : i32, i32, i32
  }
  func.func @transform_24(%arg0: i32) -> (i32, i32) {
    %c0_i32 = arith.constant 0 : i32
    %c0_i32_0 = arith.constant 0 : i32
    %c0_i32_1 = arith.constant 0 : i32
    return %c0_i32, %c0_i32_0 : i32, i32
  }
  func.func @transform_25(%arg0: i32) -> (i32, i32, i32) {
    %c0_i32 = arith.constant 0 : i32
    %c0_i32_0 = arith.constant 0 : i32
    %c0_i32_1 = arith.constant 0 : i32
    %c0_i32_2 = arith.constant 0 : i32
    return %c0_i32, %c0_i32_0, %c0_i32_1 : i32, i32, i32
  }
  func.func @transform_26(%arg0: i32) -> (i32, i32) {
    %c0_i32 = arith.constant 0 : i32
    %c0_i32_0 = arith.constant 0 : i32
    %c0_i32_1 = arith.constant 0 : i32
    return %c0_i32, %c0_i32_0 : i32, i32
  }
  func.func @transform_27(%arg0: i32) -> (i32, i32, i32) {
    %c0_i32 = arith.constant 0 : i32
    %c0_i32_0 = arith.constant 0 : i32
    %c0_i32_1 = arith.constant 0 : i32
    %c0_i32_2 = arith.constant 0 : i32
    return %c0_i32, %c0_i32_0, %c0_i32_1 : i32, i32, i32
  }
  func.func @transform_28(%arg0: i32) -> (i32, i32) {
    %c0_i32 = arith.constant 0 : i32
    %c0_i32_0 = arith.constant 0 : i32
    %c0_i32_1 = arith.constant 0 : i32
    return %c0_i32, %c0_i32_0 : i32, i32
  }
  func.func @transform_29(%arg0: i32) -> (i32, i32, i32) {
    %c0_i32 = arith.constant 0 : i32
    %c0_i32_0 = arith.constant 0 : i32
    %c0_i32_1 = arith.constant 0 : i32
    %c0_i32_2 = arith.constant 0 : i32
    return %c0_i32, %c0_i32_0, %c0_i32_1 : i32, i32, i32
  }
  func.func @transform_30(%arg0: i32) -> (i32, i32) {
    %c0_i32 = arith.constant 0 : i32
    %c0_i32_0 = arith.constant 0 : i32
    %c0_i32_1 = arith.constant 0 : i32
    return %c0_i32, %c0_i32_0 : i32, i32
  }
  func.func @transform_31(%arg0: i32) -> (i32, i32, i32) {
    %c0_i32 = arith.constant 0 : i32
    %c0_i32_0 = arith.constant 0 : i32
    %c0_i32_1 = arith.constant 0 : i32
    %c0_i32_2 = arith.constant 0 : i32
    return %c0_i32, %c0_i32_0, %c0_i32_1 : i32, i32, i32
  }
  func.func @transform_32(%arg0: i32) -> (i32, i32) {
    %c0_i32 = arith.constant 0 : i32
    %c0_i32_0 = arith.constant 0 : i32
    %c0_i32_1 = arith.constant 0 : i32
    return %c0_i32, %c0_i32_0 : i32, i32
  }
  func.func @transform_33(%arg0: i32) -> (i32, i32) {
    %c0_i32 = arith.constant 0 : i32
    %c0_i32_0 = arith.constant 0 : i32
    %c0_i32_1 = arith.constant 0 : i32
    return %c0_i32, %c0_i32_0 : i32, i32
  }
  func.func @transform_34(%arg0: i32) -> (i32, i32) {
    %c0_i32 = arith.constant 0 : i32
    %c0_i32_0 = arith.constant 0 : i32
    %c0_i32_1 = arith.constant 0 : i32
    return %c0_i32, %c0_i32_0 : i32, i32
  }
  func.func @transform_35(%arg0: i32) -> (i32, i32, i32) {
    %c0_i32 = arith.constant 0 : i32
    %c0_i32_0 = arith.constant 0 : i32
    %c0_i32_1 = arith.constant 0 : i32
    return %arg0, %c0_i32, %c0_i32_0 : i32, i32, i32
  }
}

</mosaic_0001>

<llo_original>
// kernel: forward.1
$region0: #{forward.1}
  #allocation0 [shape = 'u32[]', space=smem, size = 0x4, offset = 0x4, fixed_abs, tag = 'smem constant byte address 0x4 - core index']
  #allocation1 [shape = 'u32[144,128]{1,0:T(1,128)}', space=vmem, size = 0x12000, scoped, tag = 'internal scratch']
  #allocation2 [shape = 'f32[34,128]{1,0:T(8,128)}', space=vmem, size = 0x5000, scoped, tag = 'scratch operand']
  %s0 = inlined_call_operand.smem [shape: u32[36], index: -1, kind: input, shape index: {}]
  %s1 = sld [smem:[%s0]]
  %s2 = scalar_lea.smem %s0, 1
  %s3 = sld [smem:[%s2]]
  %s4 = scalar_lea.smem %s0, 2
  %s5 = sld [smem:[%s4]]
  %s6 = scalar_lea.smem %s0, 3
  %s7 = sld [smem:[%s6]]
  %s8 = scalar_lea.smem %s0, 4
  %s9 = sld [smem:[%s8]]
  %s10 = scalar_lea.smem %s0, 5
  %s11 = sld [smem:[%s10]]
  %s12 = scalar_lea.smem %s0, 6
  %s13 = sld [smem:[%s12]]
  %s14 = scalar_lea.smem %s0, 7
  %s15 = sld [smem:[%s14]]
  %s16 = scalar_lea.smem %s0, 8
  %s17 = sld [smem:[%s16]]
  %s18 = scalar_lea.smem %s0, 9
  %s19 = sld [smem:[%s18]]
  %s20 = scalar_lea.smem %s0, 10
  %s21 = sld [smem:[%s20]]
  %s22 = scalar_lea.smem %s0, 11
  %s23 = sld [smem:[%s22]]
  %s24 = scalar_lea.smem %s0, 12
  %s25 = sld [smem:[%s24]]
  %s26 = scalar_lea.smem %s0, 13
  %s27 = sld [smem:[%s26]]
  %s28 = scalar_lea.smem %s0, 14
  %s29 = sld [smem:[%s28]]
  %s30 = scalar_lea.smem %s0, 15
  %s31 = sld [smem:[%s30]]
  %s32 = scalar_lea.smem %s0, 16
  %s33 = sld [smem:[%s32]]
  %s34 = scalar_lea.smem %s0, 17
  %s35 = sld [smem:[%s34]]
  %s36 = scalar_lea.smem %s0, 18
  %s37 = sld [smem:[%s36]]
  %s38 = scalar_lea.smem %s0, 19
  %s39 = sld [smem:[%s38]]
  %s40 = scalar_lea.smem %s0, 20
  %s41 = sld [smem:[%s40]]
  %s42 = scalar_lea.smem %s0, 21
  %s43 = sld [smem:[%s42]]
  %s44 = scalar_lea.smem %s0, 22
  %s45 = sld [smem:[%s44]]
  %s46 = scalar_lea.smem %s0, 23
  %s47 = sld [smem:[%s46]]
  %s48 = scalar_lea.smem %s0, 24
  %s49 = sld [smem:[%s48]]
  %s50 = scalar_lea.smem %s0, 25
  %s51 = sld [smem:[%s50]]
  %s52 = scalar_lea.smem %s0, 26
  %s53 = sld [smem:[%s52]]
  %s54 = scalar_lea.smem %s0, 27
  %s55 = sld [smem:[%s54]]
  %s56 = scalar_lea.smem %s0, 28
  %s57 = sld [smem:[%s56]]
  %s58 = scalar_lea.smem %s0, 29
  %s59 = sld [smem:[%s58]]
  %s60 = scalar_lea.smem %s0, 30
  %s61 = sld [smem:[%s60]]
  %s62 = scalar_lea.smem %s0, 31
  %s63 = sld [smem:[%s62]]
  %s64 = scalar_lea.smem %s0, 32
  %s65 = sld [smem:[%s64]]
  %s66 = scalar_lea.smem %s0, 33
  %s67 = sld [smem:[%s66]]
  %s68 = scalar_lea.smem %s0, 34
  %s69 = sld [smem:[%s68]]
  %s70 = scalar_lea.smem %s0, 35
  %s71 = sld [smem:[%s70]]
  %s72 = sld [smem:[#allocation0]]
  $region241: #{forward.1} parent=0
    _
  %s74 = ssub.s32 1, %s72
  %s75 = scalar_select 0, %s74, %s72
  $region1: #{forward.1} parent=0
    #allocation3 [shape = 'u8[512]{0}', space=vmem, size = 0x400, scoped, tag = 'input window, operand 4, single buffered']
    #allocation4 [shape = 's32[2]{0}', space=sflag, size = 0x8, scoped, tag = 'scoped memory for forward.1']
    #allocation5 [shape = 'u8[512]{0}', space=vmem, size = 0x400, scoped, tag = 'input window, operand 6, single buffered']
    #allocation6 [shape = 's32[1]{0}', space=sflag, size = 0x4, scoped, tag = 'scoped memory for forward.1']
    #allocation7 [shape = 'u8[512]{0}', space=vmem, size = 0x400, scoped, tag = 'input window, operand 8, single buffered']
    #allocation8 [shape = 'u8[49152]{0}', space=vmem, size = 0xc000, scoped, tag = 'input window, operand 9, single buffered']
    #allocation9 [shape = 's32[1]{0}', space=sflag, size = 0x4, scoped, tag = 'scoped memory for forward.1']
    #allocation10 [shape = 'u8[512]{0}', space=vmem, size = 0x400, scoped, tag = 'input window, operand 10, single buffered']
    #allocation11 [shape = 'u8[512]{0}', space=vmem, size = 0x400, scoped, tag = 'input window, operand 12, single buffered']
    #allocation12 [shape = 's32[1]{0}', space=sflag, size = 0x4, scoped, tag = 'scoped memory for forward.1']
    #allocation13 [shape = 'u8[49152]{0}', space=vmem, size = 0xc000, scoped, tag = 'input window, operand 13, single buffered']
    #allocation14 [shape = 'u8[512]{0}', space=vmem, size = 0x400, scoped, tag = 'input window, operand 14, single buffered']
    #allocation15 [shape = 's32[1]{0}', space=sflag, size = 0x4, scoped, tag = 'scoped memory for forward.1']
    #allocation16 [shape = 'u8[512]{0}', space=vmem, size = 0x400, scoped, tag = 'input window, operand 16, single buffered']
    #allocation17 [shape = 'u8[512]{0}', space=vmem, size = 0x400, scoped, tag = 'input window, operand 18, single buffered']
    #allocation18 [shape = 's32[1]{0}', space=sflag, size = 0x4, scoped, tag = 'scoped memory for forward.1']
    #allocation19 [shape = 'u8[49152]{0}', space=vmem, size = 0xc000, scoped, tag = 'input window, operand 19, single buffered']
    #allocation20 [shape = 'u8[49152]{0}', space=vmem, size = 0xc000, scoped, tag = 'input window, operand 21, single buffered']
    #allocation21 [shape = 's32[1]{0}', space=sflag, size = 0x4, scoped, tag = 'scoped memory for forward.1']
    #allocation22 [shape = 'u8[49152]{0}', space=vmem, size = 0xc000, scoped, tag = 'input window, operand 23, single buffered']
    #allocation23 [shape = 'u8[49152]{0}', space=vmem, size = 0xc000, scoped, tag = 'input window, operand 25, single buffered']
    #allocation24 [shape = 's32[1]{0}', space=sflag, size = 0x4, scoped, tag = 'scoped memory for forward.1']
    #allocation25 [shape = 'u8[49152]{0}', space=vmem, size = 0xc000, scoped, tag = 'input window, operand 27, single buffered']
    #allocation26 [shape = 'u8[49152]{0}', space=vmem, size = 0xc000, scoped, tag = 'input window, operand 29, single buffered']
    #allocation27 [shape = 's32[1]{0}', space=sflag, size = 0x4, scoped, tag = 'scoped memory for forward.1']
    #allocation28 [shape = 'u8[32768]{0}', space=vmem, size = 0x8000, scoped, tag = 'input window, operand 33, single buffered']
    %76 = vsyncpa [#allocation4], 0
    %77 = vsyncpa [#allocation6], 0
    %78 = vsyncpa [#allocation9], 0
    %79 = vsyncpa [#allocation12], 0
    %80 = vsyncpa [#allocation15], 0
    %81 = vsyncpa [#allocation18], 0
    %82 = vsyncpa [#allocation21], 0
    %83 = vsyncpa [#allocation24], 0
    %84 = vsyncpa [#allocation27], 0
    loop: start=0, step=1, limit=4
    $region2: #{forward.1} parent=1 // loop_pre_header
      _
    $region3: #{forward.1} parent=1 // loop_header
      %s86 = sphi 0, %s90
      %p87 = scmp.ge.s32.totalorder %s86, 4
      %s96 = sphi 0, %s98
      %s99 = sphi 0, %s96
      %s100 = sphi 0, %s99
      %s116 = sphi 0, %s100
      %s120 = sphi 0, %s120
      %s122 = sphi 0, %s120
      %s123 = sphi 0, %s122
      %s137 = sphi 0, %s123
      %s141 = sphi 0, %s141
      %s143 = sphi 0, %s141
      %s144 = sphi 0, %s143
      %s158 = sphi 0, %s144
      %s162 = sphi 0, %s162
      %s164 = sphi 0, %s162
      %s165 = sphi 0, %s164
      %s179 = sphi 0, %s165
      %s183 = sphi 0, %s183
      %s185 = sphi 0, %s183
      %s186 = sphi 0, %s185
      %s200 = sphi 0, %s186
      %s204 = sphi 0, %s204
      %s206 = sphi 0, %s204
      %s207 = sphi 0, %s206
      %s221 = sphi 0, %s207
      %s225 = sphi 0, %s225
      %s227 = sphi 0, %s225
      %s228 = sphi 0, %s227
      %s242 = sphi 0, %s228
      %s246 = sphi 0, %s246
      %s248 = sphi 0, %s246
      %s249 = sphi 0, %s248
      %s263 = sphi 0, %s249
      %s267 = sphi 0, %s267
      %s269 = sphi 0, %s267
      %s270 = sphi 0, %s269
      %s284 = sphi 0, %s270
      %s288 = sphi 0, %s288
      %s290 = sphi 0, %s288
      %s291 = sphi 0, %s290
      %s305 = sphi 0, %s291
      %s309 = sphi 0, %s309
      %s311 = sphi 0, %s309
      %s312 = sphi 0, %s311
      %s326 = sphi 0, %s312
      %s330 = sphi 0, %s330
      %s332 = sphi 0, %s330
      %s333 = sphi 0, %s332
      %s347 = sphi 0, %s333
      %s351 = sphi 0, %s351
      %s353 = sphi 0, %s351
      %s354 = sphi 0, %s353
      %s368 = sphi 0, %s354
      %s372 = sphi 0, %s372
      %s374 = sphi 0, %s372
      %s375 = sphi 0, %s374
      %s389 = sphi 0, %s375
      %s393 = sphi 0, %s393
      %s395 = sphi 0, %s393
      %s396 = sphi 0, %s395
      %s410 = sphi 0, %s396
      %s414 = sphi 0, %s414
      %s416 = sphi 0, %s414
      %s417 = sphi 0, %s416
      %s431 = sphi 0, %s417
      %s435 = sphi 0, %s435
      %s437 = sphi 0, %s435
      %s438 = sphi 0, %s437
      %s452 = sphi 0, %s438
      %s456 = sphi 0, %s456
      %s458 = sphi 0, %s456
      %s459 = sphi 0, %s458
      %s473 = sphi 0, %s459
      %s477 = sphi 0, %s477
      %s479 = sphi 0, %s477
      %s480 = sphi 0, %s479
      %s494 = sphi 0, %s480
      %s498 = sphi 0, %s498
      %s500 = sphi 0, %s498
      %s501 = sphi 0, %s500
      %s515 = sphi 0, %s501
      %s519 = sphi 0, %s519
      %s521 = sphi 0, %s519
      %s522 = sphi 0, %s521
      %s536 = sphi 0, %s522
      %s540 = sphi 0, %s540
      %s542 = sphi 0, %s540
      %s543 = sphi 0, %s542
      %s557 = sphi 0, %s543
      %s561 = sphi 0, %s561
      %s563 = sphi 0, %s561
      %s564 = sphi 0, %s563
      %s578 = sphi 0, %s564
      %s582 = sphi 0, %s582
      %s584 = sphi 0, %s582
      %s585 = sphi 0, %s584
      %s599 = sphi 0, %s585
      %s603 = sphi 0, %s603
      %s605 = sphi 0, %s603
      %s606 = sphi 0, %s605
      %s620 = sphi 0, %s606
      %s624 = sphi 0, %s624
      %s626 = sphi 0, %s624
      %s627 = sphi 0, %s626
      %s641 = sphi 0, %s627
      %s645 = sphi 0, %s645
      %s647 = sphi 0, %s645
      %s648 = sphi 0, %s647
      %s662 = sphi 0, %s648
      %s666 = sphi 0, %s666
      %s668 = sphi 0, %s666
      %s669 = sphi 0, %s668
      %s683 = sphi 0, %s669
      %s687 = sphi 0, %s687
      %s689 = sphi 0, %s687
      %s690 = sphi 0, %s689
      %s704 = sphi 0, %s690
      %s708 = sphi 0, %s708
      %s710 = sphi 0, %s708
      %s711 = sphi 0, %s710
      %s725 = sphi 0, %s711
      %s729 = sphi 0, %s729
      %s731 = sphi 0, %s729
      %s732 = sphi 0, %s731
      %s746 = sphi 0, %s732
      %s750 = sphi 0, %s750
      %s752 = sphi 0, %s750
      %s753 = sphi 0, %s752
      %s767 = sphi 0, %s753
      %s771 = sphi 0, %s771
      %s773 = sphi 0, %s771
      %s774 = sphi 0, %s773
      %s788 = sphi 0, %s774
      %s792 = sphi 0, %s792
      %s794 = sphi 0, %s792
      %s795 = sphi 0, %s794
      %s809 = sphi 0, %s795
      %s813 = sphi 0, %s813
      %s815 = sphi 0, %s813
      %s816 = sphi 0, %s815
      %s830 = sphi 0, %s816
      %s836 = sphi 0, %s838
      %s839 = sphi 0, %s836
      %s840 = sphi 0, %s839
      %s856 = sphi 0, %s840
    $region4: #{forward.1} parent=1 // loop_header_branch
      %89 = sbr.rel (%p87) target = $region8
    $region5: #{forward.1} parent=1 // loop_body
      %s91 = ssub.s32 %s86, 1
      %s92 = ssub.s32 %s86, 2
      %s93 = sadd.s32 %s86, 1
      %s94 = ssub.s32 %s86, %s93
      %p95 = scmp.eq.s32.totalorder %s94, 0
      %s97 = sadd.s32 %s96, 1
      %s98 = scalar_select %p95, %s96, %s97
      %p101 = pneg %p95
      %p102 = scmp.eq.s32.totalorder %s86, 1
      %p103 = por %p101, %p102
      %p104 = scmp.ne.s32.totalorder %s96, %s99
      %p105 = scmp.eq.s32.totalorder %s86, 0
      %p106 = por %p104, %p105
      %p107 = scmp.ne.s32.totalorder %s96, %s99
      %p108 = scmp.eq.s32.totalorder %s91, 1
      %p109 = por %p107, %p108
      %p110 = scmp.ne.s32.totalorder %s99, %s100
      %p111 = scmp.eq.s32.totalorder %s91, 0
      %p112 = por %p110, %p111
      %p113 = scmp.ne.s32.totalorder %s99, %s100
      %p114 = scmp.eq.s32.totalorder %s92, 1
      %p115 = por %p113, %p114
      %p117 = scmp.ne.s32.totalorder %s100, %s116
      %p118 = scmp.eq.s32.totalorder %s92, 0
      %p119 = por %p117, %p118
      %s121 = sadd.s32 %s120, 1
      %p124 = scmp.eq.s32.totalorder %s86, 1
      %p125 = scmp.ne.s32.totalorder %s120, %s122
      %p126 = scmp.eq.s32.totalorder %s86, 0
      %p127 = por %p125, %p126
      %p128 = scmp.ne.s32.totalorder %s120, %s122
      %p129 = scmp.eq.s32.totalorder %s91, 1
      %p130 = por %p128, %p129
      %p131 = scmp.ne.s32.totalorder %s122, %s123
      %p132 = scmp.eq.s32.totalorder %s91, 0
      %p133 = por %p131, %p132
      %p134 = scmp.ne.s32.totalorder %s122, %s123
      %p135 = scmp.eq.s32.totalorder %s92, 1
      %p136 = por %p134, %p135
      %p138 = scmp.ne.s32.totalorder %s123, %s137
      %p139 = scmp.eq.s32.totalorder %s92, 0
      %p140 = por %p138, %p139
      %s142 = sadd.s32 %s141, 1
      %p145 = scmp.eq.s32.totalorder %s86, 1
      %p146 = scmp.ne.s32.totalorder %s141, %s143
      %p147 = scmp.eq.s32.totalorder %s86, 0
      %p148 = por %p146, %p147
      %p149 = scmp.ne.s32.totalorder %s141, %s143
      %p150 = scmp.eq.s32.totalorder %s91, 1
      %p151 = por %p149, %p150
      %p152 = scmp.ne.s32.totalorder %s143, %s144
      %p153 = scmp.eq.s32.totalorder %s91, 0
      %p154 = por %p152, %p153
      %p155 = scmp.ne.s32.totalorder %s143, %s144
      %p156 = scmp.eq.s32.totalorder %s92, 1
      %p157 = por %p155, %p156
      %p159 = scmp.ne.s32.totalorder %s144, %s158
      %p160 = scmp.eq.s32.totalorder %s92, 0
      %p161 = por %p159, %p160
      %s163 = sadd.s32 %s162, 1
      %p166 = scmp.eq.s32.totalorder %s86, 1
      %p167 = scmp.ne.s32.totalorder %s162, %s164
      %p168 = scmp.eq.s32.totalorder %s86, 0
      %p169 = por %p167, %p168
      %p170 = scmp.ne.s32.totalorder %s162, %s164
      %p171 = scmp.eq.s32.totalorder %s91, 1
      %p172 = por %p170, %p171
      %p173 = scmp.ne.s32.totalorder %s164, %s165
      %p174 = scmp.eq.s32.totalorder %s91, 0
      %p175 = por %p173, %p174
      %p176 = scmp.ne.s32.totalorder %s164, %s165
      %p177 = scmp.eq.s32.totalorder %s92, 1
      %p178 = por %p176, %p177
      %p180 = scmp.ne.s32.totalorder %s165, %s179
      %p181 = scmp.eq.s32.totalorder %s92, 0
      %p182 = por %p180, %p181
      %s184 = sadd.s32 %s183, 1
      %p187 = scmp.eq.s32.totalorder %s86, 1
      %p188 = scmp.ne.s32.totalorder %s183, %s185
      %p189 = scmp.eq.s32.totalorder %s86, 0
      %p190 = por %p188, %p189
      %p191 = scmp.ne.s32.totalorder %s183, %s185
      %p192 = scmp.eq.s32.totalorder %s91, 1
      %p193 = por %p191, %p192
      %p194 = scmp.ne.s32.totalorder %s185, %s186
      %p195 = scmp.eq.s32.totalorder %s91, 0
      %p196 = por %p194, %p195
      %p197 = scmp.ne.s32.totalorder %s185, %s186
      %p198 = scmp.eq.s32.totalorder %s92, 1
      %p199 = por %p197, %p198
      %p201 = scmp.ne.s32.totalorder %s186, %s200
      %p202 = scmp.eq.s32.totalorder %s92, 0
      %p203 = por %p201, %p202
      %s205 = sadd.s32 %s204, 1
      %p208 = scmp.eq.s32.totalorder %s86, 1
      %p209 = scmp.ne.s32.totalorder %s204, %s206
      %p210 = scmp.eq.s32.totalorder %s86, 0
      %p211 = por %p209, %p210
      %p212 = scmp.ne.s32.totalorder %s204, %s206
      %p213 = scmp.eq.s32.totalorder %s91, 1
      %p214 = por %p212, %p213
      %p215 = scmp.ne.s32.totalorder %s206, %s207
      %p216 = scmp.eq.s32.totalorder %s91, 0
      %p217 = por %p215, %p216
      %p218 = scmp.ne.s32.totalorder %s206, %s207
      %p219 = scmp.eq.s32.totalorder %s92, 1
      %p220 = por %p218, %p219
      %p222 = scmp.ne.s32.totalorder %s207, %s221
      %p223 = scmp.eq.s32.totalorder %s92, 0
      %p224 = por %p222, %p223
      %s226 = sadd.s32 %s225, 1
      %p229 = scmp.eq.s32.totalorder %s86, 1
      %p230 = scmp.ne.s32.totalorder %s225, %s227
      %p231 = scmp.eq.s32.totalorder %s86, 0
      %p232 = por %p230, %p231
      %p233 = scmp.ne.s32.totalorder %s225, %s227
      %p234 = scmp.eq.s32.totalorder %s91, 1
      %p235 = por %p233, %p234
      %p236 = scmp.ne.s32.totalorder %s227, %s228
      %p237 = scmp.eq.s32.totalorder %s91, 0
      %p238 = por %p236, %p237
      %p239 = scmp.ne.s32.totalorder %s227, %s228
      %p240 = scmp.eq.s32.totalorder %s92, 1
      %p241 = por %p239, %p240
      %p243 = scmp.ne.s32.totalorder %s228, %s242
      %p244 = scmp.eq.s32.totalorder %s92, 0
      %p245 = por %p243, %p244
      %s247 = sadd.s32 %s246, 1
      %p250 = scmp.eq.s32.totalorder %s86, 1
      %p251 = scmp.ne.s32.totalorder %s246, %s248
      %p252 = scmp.eq.s32.totalorder %s86, 0
      %p253 = por %p251, %p252
      %p254 = scmp.ne.s32.totalorder %s246, %s248
      %p255 = scmp.eq.s32.totalorder %s91, 1
      %p256 = por %p254, %p255
      %p257 = scmp.ne.s32.totalorder %s248, %s249
      %p258 = scmp.eq.s32.totalorder %s91, 0
      %p259 = por %p257, %p258
      %p260 = scmp.ne.s32.totalorder %s248, %s249
      %p261 = scmp.eq.s32.totalorder %s92, 1
      %p262 = por %p260, %p261
      %p264 = scmp.ne.s32.totalorder %s249, %s263
      %p265 = scmp.eq.s32.totalorder %s92, 0
      %p266 = por %p264, %p265
      %s268 = sadd.s32 %s267, 1
      %p271 = scmp.eq.s32.totalorder %s86, 1
      %p272 = scmp.ne.s32.totalorder %s267, %s269
      %p273 = scmp.eq.s32.totalorder %s86, 0
      %p274 = por %p272, %p273
      %p275 = scmp.ne.s32.totalorder %s267, %s269
      %p276 = scmp.eq.s32.totalorder %s91, 1
      %p277 = por %p275, %p276
      %p278 = scmp.ne.s32.totalorder %s269, %s270
      %p279 = scmp.eq.s32.totalorder %s91, 0
      %p280 = por %p278, %p279
      %p281 = scmp.ne.s32.totalorder %s269, %s270
      %p282 = scmp.eq.s32.totalorder %s92, 1
      %p283 = por %p281, %p282
      %p285 = scmp.ne.s32.totalorder %s270, %s284
      %p286 = scmp.eq.s32.totalorder %s92, 0
      %p287 = por %p285, %p286
      %s289 = sadd.s32 %s288, 1
      %p292 = scmp.eq.s32.totalorder %s86, 1
      %p293 = scmp.ne.s32.totalorder %s288, %s290
      %p294 = scmp.eq.s32.totalorder %s86, 0
      %p295 = por %p293, %p294
      %p296 = scmp.ne.s32.totalorder %s288, %s290
      %p297 = scmp.eq.s32.totalorder %s91, 1
      %p298 = por %p296, %p297
      %p299 = scmp.ne.s32.totalorder %s290, %s291
      %p300 = scmp.eq.s32.totalorder %s91, 0
      %p301 = por %p299, %p300
      %p302 = scmp.ne.s32.totalorder %s290, %s291
      %p303 = scmp.eq.s32.totalorder %s92, 1
      %p304 = por %p302, %p303
      %p306 = scmp.ne.s32.totalorder %s291, %s305
      %p307 = scmp.eq.s32.totalorder %s92, 0
      %p308 = por %p306, %p307
      %s310 = sadd.s32 %s309, 1
      %p313 = scmp.eq.s32.totalorder %s86, 1
      %p314 = scmp.ne.s32.totalorder %s309, %s311
      %p315 = scmp.eq.s32.totalorder %s86, 0
      %p316 = por %p314, %p315
      %p317 = scmp.ne.s32.totalorder %s309, %s311
      %p318 = scmp.eq.s32.totalorder %s91, 1
      %p319 = por %p317, %p318
      %p320 = scmp.ne.s32.totalorder %s311, %s312
      %p321 = scmp.eq.s32.totalorder %s91, 0
      %p322 = por %p320, %p321
      %p323 = scmp.ne.s32.totalorder %s311, %s312
      %p324 = scmp.eq.s32.totalorder %s92, 1
      %p325 = por %p323, %p324
      %p327 = scmp.ne.s32.totalorder %s312, %s326
      %p328 = scmp.eq.s32.totalorder %s92, 0
      %p329 = por %p327, %p328
      %s331 = sadd.s32 %s330, 1
      %p334 = scmp.eq.s32.totalorder %s86, 1
      %p335 = scmp.ne.s32.totalorder %s330, %s332
      %p336 = scmp.eq.s32.totalorder %s86, 0
      %p337 = por %p335, %p336
      %p338 = scmp.ne.s32.totalorder %s330, %s332
      %p339 = scmp.eq.s32.totalorder %s91, 1
      %p340 = por %p338, %p339
      %p341 = scmp.ne.s32.totalorder %s332, %s333
      %p342 = scmp.eq.s32.totalorder %s91, 0
      %p343 = por %p341, %p342
      %p344 = scmp.ne.s32.totalorder %s332, %s333
      %p345 = scmp.eq.s32.totalorder %s92, 1
      %p346 = por %p344, %p345
      %p348 = scmp.ne.s32.totalorder %s333, %s347
      %p349 = scmp.eq.s32.totalorder %s92, 0
      %p350 = por %p348, %p349
      %s352 = sadd.s32 %s351, 1
      %p355 = scmp.eq.s32.totalorder %s86, 1
      %p356 = scmp.ne.s32.totalorder %s351, %s353
      %p357 = scmp.eq.s32.totalorder %s86, 0
      %p358 = por %p356, %p357
      %p359 = scmp.ne.s32.totalorder %s351, %s353
      %p360 = scmp.eq.s32.totalorder %s91, 1
      %p361 = por %p359, %p360
      %p362 = scmp.ne.s32.totalorder %s353, %s354
      %p363 = scmp.eq.s32.totalorder %s91, 0
      %p364 = por %p362, %p363
      %p365 = scmp.ne.s32.totalorder %s353, %s354
      %p366 = scmp.eq.s32.totalorder %s92, 1
      %p367 = por %p365, %p366
      %p369 = scmp.ne.s32.totalorder %s354, %s368
      %p370 = scmp.eq.s32.totalorder %s92, 0
      %p371 = por %p369, %p370
      %s373 = sadd.s32 %s372, 1
      %p376 = scmp.eq.s32.totalorder %s86, 1
      %p377 = scmp.ne.s32.totalorder %s372, %s374
      %p378 = scmp.eq.s32.totalorder %s86, 0
      %p379 = por %p377, %p378
      %p380 = scmp.ne.s32.totalorder %s372, %s374
      %p381 = scmp.eq.s32.totalorder %s91, 1
      %p382 = por %p380, %p381
      %p383 = scmp.ne.s32.totalorder %s374, %s375
      %p384 = scmp.eq.s32.totalorder %s91, 0
      %p385 = por %p383, %p384
      %p386 = scmp.ne.s32.totalorder %s374, %s375
      %p387 = scmp.eq.s32.totalorder %s92, 1
      %p388 = por %p386, %p387
      %p390 = scmp.ne.s32.totalorder %s375, %s389
      %p391 = scmp.eq.s32.totalorder %s92, 0
      %p392 = por %p390, %p391
      %s394 = sadd.s32 %s393, 1
      %p397 = scmp.eq.s32.totalorder %s86, 1
      %p398 = scmp.ne.s32.totalorder %s393, %s395
      %p399 = scmp.eq.s32.totalorder %s86, 0
      %p400 = por %p398, %p399
      %p401 = scmp.ne.s32.totalorder %s393, %s395
      %p402 = scmp.eq.s32.totalorder %s91, 1
      %p403 = por %p401, %p402
      %p404 = scmp.ne.s32.totalorder %s395, %s396
      %p405 = scmp.eq.s32.totalorder %s91, 0
      %p406 = por %p404, %p405
      %p407 = scmp.ne.s32.totalorder %s395, %s396
      %p408 = scmp.eq.s32.totalorder %s92, 1
      %p409 = por %p407, %p408
      %p411 = scmp.ne.s32.totalorder %s396, %s410
      %p412 = scmp.eq.s32.totalorder %s92, 0
      %p413 = por %p411, %p412
      %s415 = sadd.s32 %s414, 1
      %p418 = scmp.eq.s32.totalorder %s86, 1
      %p419 = scmp.ne.s32.totalorder %s414, %s416
      %p420 = scmp.eq.s32.totalorder %s86, 0
      %p421 = por %p419, %p420
      %p422 = scmp.ne.s32.totalorder %s414, %s416
      %p423 = scmp.eq.s32.totalorder %s91, 1
      %p424 = por %p422, %p423
      %p425 = scmp.ne.s32.totalorder %s416, %s417
      %p426 = scmp.eq.s32.totalorder %s91, 0
      %p427 = por %p425, %p426
      %p428 = scmp.ne.s32.totalorder %s416, %s417
      %p429 = scmp.eq.s32.totalorder %s92, 1
      %p430 = por %p428, %p429
      %p432 = scmp.ne.s32.totalorder %s417, %s431
      %p433 = scmp.eq.s32.totalorder %s92, 0
      %p434 = por %p432, %p433
      %s436 = sadd.s32 %s435, 1
      %p439 = scmp.eq.s32.totalorder %s86, 1
      %p440 = scmp.ne.s32.totalorder %s435, %s437
      %p441 = scmp.eq.s32.totalorder %s86, 0
      %p442 = por %p440, %p441
      %p443 = scmp.ne.s32.totalorder %s435, %s437
      %p444 = scmp.eq.s32.totalorder %s91, 1
      %p445 = por %p443, %p444
      %p446 = scmp.ne.s32.totalorder %s437, %s438
      %p447 = scmp.eq.s32.totalorder %s91, 0
      %p448 = por %p446, %p447
      %p449 = scmp.ne.s32.totalorder %s437, %s438
      %p450 = scmp.eq.s32.totalorder %s92, 1
      %p451 = por %p449, %p450
      %p453 = scmp.ne.s32.totalorder %s438, %s452
      %p454 = scmp.eq.s32.totalorder %s92, 0
      %p455 = por %p453, %p454
      %s457 = sadd.s32 %s456, 1
      %p460 = scmp.eq.s32.totalorder %s86, 1
      %p461 = scmp.ne.s32.totalorder %s456, %s458
      %p462 = scmp.eq.s32.totalorder %s86, 0
      %p463 = por %p461, %p462
      %p464 = scmp.ne.s32.totalorder %s456, %s458
      %p465 = scmp.eq.s32.totalorder %s91, 1
      %p466 = por %p464, %p465
      %p467 = scmp.ne.s32.totalorder %s458, %s459
      %p468 = scmp.eq.s32.totalorder %s91, 0
      %p469 = por %p467, %p468
      %p470 = scmp.ne.s32.totalorder %s458, %s459
      %p471 = scmp.eq.s32.totalorder %s92, 1
      %p472 = por %p470, %p471
      %p474 = scmp.ne.s32.totalorder %s459, %s473
      %p475 = scmp.eq.s32.totalorder %s92, 0
      %p476 = por %p474, %p475
      %s478 = sadd.s32 %s477, 1
      %p481 = scmp.eq.s32.totalorder %s86, 1
      %p482 = scmp.ne.s32.totalorder %s477, %s479
      %p483 = scmp.eq.s32.totalorder %s86, 0
      %p484 = por %p482, %p483
      %p485 = scmp.ne.s32.totalorder %s477, %s479
      %p486 = scmp.eq.s32.totalorder %s91, 1
      %p487 = por %p485, %p486
      %p488 = scmp.ne.s32.totalorder %s479, %s480
      %p489 = scmp.eq.s32.totalorder %s91, 0
      %p490 = por %p488, %p489
      %p491 = scmp.ne.s32.totalorder %s479, %s480
      %p492 = scmp.eq.s32.totalorder %s92, 1
      %p493 = por %p491, %p492
      %p495 = scmp.ne.s32.totalorder %s480, %s494
      %p496 = scmp.eq.s32.totalorder %s92, 0
      %p497 = por %p495, %p496
      %s499 = sadd.s32 %s498, 1
      %p502 = scmp.eq.s32.totalorder %s86, 1
      %p503 = scmp.ne.s32.totalorder %s498, %s500
      %p504 = scmp.eq.s32.totalorder %s86, 0
      %p505 = por %p503, %p504
      %p506 = scmp.ne.s32.totalorder %s498, %s500
      %p507 = scmp.eq.s32.totalorder %s91, 1
      %p508 = por %p506, %p507
      %p509 = scmp.ne.s32.totalorder %s500, %s501
      %p510 = scmp.eq.s32.totalorder %s91, 0
      %p511 = por %p509, %p510
      %p512 = scmp.ne.s32.totalorder %s500, %s501
      %p513 = scmp.eq.s32.totalorder %s92, 1
      %p514 = por %p512, %p513
      %p516 = scmp.ne.s32.totalorder %s501, %s515
      %p517 = scmp.eq.s32.totalorder %s92, 0
      %p518 = por %p516, %p517
      %s520 = sadd.s32 %s519, 1
      %p523 = scmp.eq.s32.totalorder %s86, 1
      %p524 = scmp.ne.s32.totalorder %s519, %s521
      %p525 = scmp.eq.s32.totalorder %s86, 0
      %p526 = por %p524, %p525
      %p527 = scmp.ne.s32.totalorder %s519, %s521
      %p528 = scmp.eq.s32.totalorder %s91, 1
      %p529 = por %p527, %p528
      %p530 = scmp.ne.s32.totalorder %s521, %s522
      %p531 = scmp.eq.s32.totalorder %s91, 0
      %p532 = por %p530, %p531
      %p533 = scmp.ne.s32.totalorder %s521, %s522
      %p534 = scmp.eq.s32.totalorder %s92, 1
      %p535 = por %p533, %p534
      %p537 = scmp.ne.s32.totalorder %s522, %s536
      %p538 = scmp.eq.s32.totalorder %s92, 0
      %p539 = por %p537, %p538
      %s541 = sadd.s32 %s540, 1
      %p544 = scmp.eq.s32.totalorder %s86, 1
      %p545 = scmp.ne.s32.totalorder %s540, %s542
      %p546 = scmp.eq.s32.totalorder %s86, 0
      %p547 = por %p545, %p546
      %p548 = scmp.ne.s32.totalorder %s540, %s542
      %p549 = scmp.eq.s32.totalorder %s91, 1
      %p550 = por %p548, %p549
      %p551 = scmp.ne.s32.totalorder %s542, %s543
      %p552 = scmp.eq.s32.totalorder %s91, 0
      %p553 = por %p551, %p552
      %p554 = scmp.ne.s32.totalorder %s542, %s543
      %p555 = scmp.eq.s32.totalorder %s92, 1
      %p556 = por %p554, %p555
      %p558 = scmp.ne.s32.totalorder %s543, %s557
      %p559 = scmp.eq.s32.totalorder %s92, 0
      %p560 = por %p558, %p559
      %s562 = sadd.s32 %s561, 1
      %p565 = scmp.eq.s32.totalorder %s86, 1
      %p566 = scmp.ne.s32.totalorder %s561, %s563
      %p567 = scmp.eq.s32.totalorder %s86, 0
      %p568 = por %p566, %p567
      %p569 = scmp.ne.s32.totalorder %s561, %s563
      %p570 = scmp.eq.s32.totalorder %s91, 1
      %p571 = por %p569, %p570
      %p572 = scmp.ne.s32.totalorder %s563, %s564
      %p573 = scmp.eq.s32.totalorder %s91, 0
      %p574 = por %p572, %p573
      %p575 = scmp.ne.s32.totalorder %s563, %s564
      %p576 = scmp.eq.s32.totalorder %s92, 1
      %p577 = por %p575, %p576
      %p579 = scmp.ne.s32.totalorder %s564, %s578
      %p580 = scmp.eq.s32.totalorder %s92, 0
      %p581 = por %p579, %p580
      %s583 = sadd.s32 %s582, 1
      %p586 = scmp.eq.s32.totalorder %s86, 1
      %p587 = scmp.ne.s32.totalorder %s582, %s584
      %p588 = scmp.eq.s32.totalorder %s86, 0
      %p589 = por %p587, %p588
      %p590 = scmp.ne.s32.totalorder %s582, %s584
      %p591 = scmp.eq.s32.totalorder %s91, 1
      %p592 = por %p590, %p591
      %p593 = scmp.ne.s32.totalorder %s584, %s585
      %p594 = scmp.eq.s32.totalorder %s91, 0
      %p595 = por %p593, %p594
      %p596 = scmp.ne.s32.totalorder %s584, %s585
      %p597 = scmp.eq.s32.totalorder %s92, 1
      %p598 = por %p596, %p597
      %p600 = scmp.ne.s32.totalorder %s585, %s599
      %p601 = scmp.eq.s32.totalorder %s92, 0
      %p602 = por %p600, %p601
      %s604 = sadd.s32 %s603, 1
      %p607 = scmp.eq.s32.totalorder %s86, 1
      %p608 = scmp.ne.s32.totalorder %s603, %s605
      %p609 = scmp.eq.s32.totalorder %s86, 0
      %p610 = por %p608, %p609
      %p611 = scmp.ne.s32.totalorder %s603, %s605
      %p612 = scmp.eq.s32.totalorder %s91, 1
      %p613 = por %p611, %p612
      %p614 = scmp.ne.s32.totalorder %s605, %s606
      %p615 = scmp.eq.s32.totalorder %s91, 0
      %p616 = por %p614, %p615
      %p617 = scmp.ne.s32.totalorder %s605, %s606
      %p618 = scmp.eq.s32.totalorder %s92, 1
      %p619 = por %p617, %p618
      %p621 = scmp.ne.s32.totalorder %s606, %s620
      %p622 = scmp.eq.s32.totalorder %s92, 0
      %p623 = por %p621, %p622
      %s625 = sadd.s32 %s624, 1
      %p628 = scmp.eq.s32.totalorder %s86, 1
      %p629 = scmp.ne.s32.totalorder %s624, %s626
      %p630 = scmp.eq.s32.totalorder %s86, 0
      %p631 = por %p629, %p630
      %p632 = scmp.ne.s32.totalorder %s624, %s626
      %p633 = scmp.eq.s32.totalorder %s91, 1
      %p634 = por %p632, %p633
      %p635 = scmp.ne.s32.totalorder %s626, %s627
      %p636 = scmp.eq.s32.totalorder %s91, 0
      %p637 = por %p635, %p636
      %p638 = scmp.ne.s32.totalorder %s626, %s627
      %p639 = scmp.eq.s32.totalorder %s92, 1
      %p640 = por %p638, %p639
      %p642 = scmp.ne.s32.totalorder %s627, %s641
      %p643 = scmp.eq.s32.totalorder %s92, 0
      %p644 = por %p642, %p643
      %s646 = sadd.s32 %s645, 1
      %p649 = scmp.eq.s32.totalorder %s86, 1
      %p650 = scmp.ne.s32.totalorder %s645, %s647
      %p651 = scmp.eq.s32.totalorder %s86, 0
      %p652 = por %p650, %p651
      %p653 = scmp.ne.s32.totalorder %s645, %s647
      %p654 = scmp.eq.s32.totalorder %s91, 1
      %p655 = por %p653, %p654
      %p656 = scmp.ne.s32.totalorder %s647, %s648
      %p657 = scmp.eq.s32.totalorder %s91, 0
      %p658 = por %p656, %p657
      %p659 = scmp.ne.s32.totalorder %s647, %s648
      %p660 = scmp.eq.s32.totalorder %s92, 1
      %p661 = por %p659, %p660
      %p663 = scmp.ne.s32.totalorder %s648, %s662
      %p664 = scmp.eq.s32.totalorder %s92, 0
      %p665 = por %p663, %p664
      %s667 = sadd.s32 %s666, 1
      %p670 = scmp.eq.s32.totalorder %s86, 1
      %p671 = scmp.ne.s32.totalorder %s666, %s668
      %p672 = scmp.eq.s32.totalorder %s86, 0
      %p673 = por %p671, %p672
      %p674 = scmp.ne.s32.totalorder %s666, %s668
      %p675 = scmp.eq.s32.totalorder %s91, 1
      %p676 = por %p674, %p675
      %p677 = scmp.ne.s32.totalorder %s668, %s669
      %p678 = scmp.eq.s32.totalorder %s91, 0
      %p679 = por %p677, %p678
      %p680 = scmp.ne.s32.totalorder %s668, %s669
      %p681 = scmp.eq.s32.totalorder %s92, 1
      %p682 = por %p680, %p681
      %p684 = scmp.ne.s32.totalorder %s669, %s683
      %p685 = scmp.eq.s32.totalorder %s92, 0
      %p686 = por %p684, %p685
      %s688 = sadd.s32 %s687, 1
      %p691 = scmp.eq.s32.totalorder %s86, 1
      %p692 = scmp.ne.s32.totalorder %s687, %s689
      %p693 = scmp.eq.s32.totalorder %s86, 0
      %p694 = por %p692, %p693
      %p695 = scmp.ne.s32.totalorder %s687, %s689
      %p696 = scmp.eq.s32.totalorder %s91, 1
      %p697 = por %p695, %p696
      %p698 = scmp.ne.s32.totalorder %s689, %s690
      %p699 = scmp.eq.s32.totalorder %s91, 0
      %p700 = por %p698, %p699
      %p701 = scmp.ne.s32.totalorder %s689, %s690
      %p702 = scmp.eq.s32.totalorder %s92, 1
      %p703 = por %p701, %p702
      %p705 = scmp.ne.s32.totalorder %s690, %s704
      %p706 = scmp.eq.s32.totalorder %s92, 0
      %p707 = por %p705, %p706
      %s709 = sadd.s32 %s708, 1
      %p712 = scmp.eq.s32.totalorder %s86, 1
      %p713 = scmp.ne.s32.totalorder %s708, %s710
      %p714 = scmp.eq.s32.totalorder %s86, 0
      %p715 = por %p713, %p714
      %p716 = scmp.ne.s32.totalorder %s708, %s710
      %p717 = scmp.eq.s32.totalorder %s91, 1
      %p718 = por %p716, %p717
      %p719 = scmp.ne.s32.totalorder %s710, %s711
      %p720 = scmp.eq.s32.totalorder %s91, 0
      %p721 = por %p719, %p720
      %p722 = scmp.ne.s32.totalorder %s710, %s711
      %p723 = scmp.eq.s32.totalorder %s92, 1
      %p724 = por %p722, %p723
      %p726 = scmp.ne.s32.totalorder %s711, %s725
      %p727 = scmp.eq.s32.totalorder %s92, 0
      %p728 = por %p726, %p727
      %s730 = sadd.s32 %s729, 1
      %p733 = scmp.eq.s32.totalorder %s86, 1
      %p734 = scmp.ne.s32.totalorder %s729, %s731
      %p735 = scmp.eq.s32.totalorder %s86, 0
      %p736 = por %p734, %p735
      %p737 = scmp.ne.s32.totalorder %s729, %s731
      %p738 = scmp.eq.s32.totalorder %s91, 1
      %p739 = por %p737, %p738
      %p740 = scmp.ne.s32.totalorder %s731, %s732
      %p741 = scmp.eq.s32.totalorder %s91, 0
      %p742 = por %p740, %p741
      %p743 = scmp.ne.s32.totalorder %s731, %s732
      %p744 = scmp.eq.s32.totalorder %s92, 1
      %p745 = por %p743, %p744
      %p747 = scmp.ne.s32.totalorder %s732, %s746
      %p748 = scmp.eq.s32.totalorder %s92, 0
      %p749 = por %p747, %p748
      %s751 = sadd.s32 %s750, 1
      %p754 = scmp.eq.s32.totalorder %s86, 1
      %p755 = scmp.ne.s32.totalorder %s750, %s752
      %p756 = scmp.eq.s32.totalorder %s86, 0
      %p757 = por %p755, %p756
      %p758 = scmp.ne.s32.totalorder %s750, %s752
      %p759 = scmp.eq.s32.totalorder %s91, 1
      %p760 = por %p758, %p759
      %p761 = scmp.ne.s32.totalorder %s752, %s753
      %p762 = scmp.eq.s32.totalorder %s91, 0
      %p763 = por %p761, %p762
      %p764 = scmp.ne.s32.totalorder %s752, %s753
      %p765 = scmp.eq.s32.totalorder %s92, 1
      %p766 = por %p764, %p765
      %p768 = scmp.ne.s32.totalorder %s753, %s767
      %p769 = scmp.eq.s32.totalorder %s92, 0
      %p770 = por %p768, %p769
      %s772 = sadd.s32 %s771, 1
      %p775 = scmp.eq.s32.totalorder %s86, 1
      %p776 = scmp.ne.s32.totalorder %s771, %s773
      %p777 = scmp.eq.s32.totalorder %s86, 0
      %p778 = por %p776, %p777
      %p779 = scmp.ne.s32.totalorder %s771, %s773
      %p780 = scmp.eq.s32.totalorder %s91, 1
      %p781 = por %p779, %p780
      %p782 = scmp.ne.s32.totalorder %s773, %s774
      %p783 = scmp.eq.s32.totalorder %s91, 0
      %p784 = por %p782, %p783
      %p785 = scmp.ne.s32.totalorder %s773, %s774
      %p786 = scmp.eq.s32.totalorder %s92, 1
      %p787 = por %p785, %p786
      %p789 = scmp.ne.s32.totalorder %s774, %s788
      %p790 = scmp.eq.s32.totalorder %s92, 0
      %p791 = por %p789, %p790
      %s793 = sadd.s32 %s792, 1
      %p796 = scmp.eq.s32.totalorder %s86, 1
      %p797 = scmp.ne.s32.totalorder %s792, %s794
      %p798 = scmp.eq.s32.totalorder %s86, 0
      %p799 = por %p797, %p798
      %p800 = scmp.ne.s32.totalorder %s792, %s794
      %p801 = scmp.eq.s32.totalorder %s91, 1
      %p802 = por %p800, %p801
      %p803 = scmp.ne.s32.totalorder %s794, %s795
      %p804 = scmp.eq.s32.totalorder %s91, 0
      %p805 = por %p803, %p804
      %p806 = scmp.ne.s32.totalorder %s794, %s795
      %p807 = scmp.eq.s32.totalorder %s92, 1
      %p808 = por %p806, %p807
      %p810 = scmp.ne.s32.totalorder %s795, %s809
      %p811 = scmp.eq.s32.totalorder %s92, 0
      %p812 = por %p810, %p811
      %s814 = sadd.s32 %s813, 1
      %p817 = scmp.eq.s32.totalorder %s86, 1
      %p818 = scmp.ne.s32.totalorder %s813, %s815
      %p819 = scmp.eq.s32.totalorder %s86, 0
      %p820 = por %p818, %p819
      %p821 = scmp.ne.s32.totalorder %s813, %s815
      %p822 = scmp.eq.s32.totalorder %s91, 1
      %p823 = por %p821, %p822
      %p824 = scmp.ne.s32.totalorder %s815, %s816
      %p825 = scmp.eq.s32.totalorder %s91, 0
      %p826 = por %p824, %p825
      %p827 = scmp.ne.s32.totalorder %s815, %s816
      %p828 = scmp.eq.s32.totalorder %s92, 1
      %p829 = por %p827, %p828
      %p831 = scmp.ne.s32.totalorder %s816, %s830
      %p832 = scmp.eq.s32.totalorder %s92, 0
      %p833 = por %p831, %p832
      %s834 = ssub.s32 %s86, %s93
      %p835 = scmp.eq.s32.totalorder %s834, 0
      %s837 = sadd.s32 %s836, 1
      %s838 = scalar_select %p835, %s836, %s837
      %p841 = pneg %p835
      %p842 = scmp.eq.s32.totalorder %s86, 1
      %p843 = por %p841, %p842
      %p844 = scmp.ne.s32.totalorder %s836, %s839
      %p845 = scmp.eq.s32.totalorder %s86, 0
      %p846 = por %p844, %p845
      %p847 = scmp.ne.s32.totalorder %s836, %s839
      %p848 = scmp.eq.s32.totalorder %s91, 1
      %p849 = por %p847, %p848
      %p850 = scmp.ne.s32.totalorder %s839, %s840
      %p851 = scmp.eq.s32.totalorder %s91, 0
      %p852 = por %p850, %p851
      %p853 = scmp.ne.s32.totalorder %s839, %s840
      %p854 = scmp.eq.s32.totalorder %s92, 1
      %p855 = por %p853, %p854
      %p857 = scmp.ne.s32.totalorder %s840, %s856
      %p858 = scmp.eq.s32.totalorder %s92, 0
      %p859 = por %p857, %p858
      %p860 = scmp.le.s32.totalorder 1, %s86
      %p861 = scmp.lt.s32.totalorder %s86, 3
      %p862 = pnand %p860, %p861
      %p863 = pneg %p862
      // Predicated region
      $region9: #{forward.1} parent=5 // pred_check
        _
      $region10: #{forward.1} parent=5 // pred_check_branch
        %865 = sbr.rel (%p862) target = $region12
      $region11: #{forward.1} parent=5 // pred_region
        %s866 = ssub.s32 %s86, 1
        // Predicated region
        $region13: #{forward.1} parent=11 // pred_check
          %p867 = pneg %p133
        $region14: #{forward.1} parent=11 // pred_check_branch
          %869 = sbr.rel (%p867) target = $region16
        $region15: #{forward.1} parent=11 // pred_region
          _
        $region16: #{forward.1} parent=11 // pred_fallthru
          _
        // Predicated region
        $region17: #{forward.1} parent=11 // pred_check
          %p870 = pneg %p154
        $region18: #{forward.1} parent=11 // pred_check_branch
          %872 = sbr.rel (%p870) target = $region20
        $region19: #{forward.1} parent=11 // pred_region
          _
        $region20: #{forward.1} parent=11 // pred_fallthru
          _
        // Predicated region
        $region21: #{forward.1} parent=11 // pred_check
          %p873 = pneg %p175
        $region22: #{forward.1} parent=11 // pred_check_branch
          %875 = sbr.rel (%p873) target = $region24
        $region23: #{forward.1} parent=11 // pred_region
          _
        $region24: #{forward.1} parent=11 // pred_fallthru
          _
        // Predicated region
        $region25: #{forward.1} parent=11 // pred_check
          %p876 = pneg %p196
        $region26: #{forward.1} parent=11 // pred_check_branch
          %878 = sbr.rel (%p876) target = $region28
        $region27: #{forward.1} parent=11 // pred_region
          %s880 = ssub.s32 16, 16
          %881 = vsyncadd [#allocation4], %s880
          %s883 = sshll.u32 [#allocation3], 4
          %s884 = int_to_ptr.vmem [resolvable:$true] %s883
          %886 = dma.hbm_to_vmem [thread:$0]  %s9, 16, %s884, [#allocation4]
        $region28: #{forward.1} parent=11 // pred_fallthru
          _
        // Predicated region
        $region29: #{forward.1} parent=11 // pred_check
          %p887 = pneg %p217
        $region30: #{forward.1} parent=11 // pred_check_branch
          %889 = sbr.rel (%p887) target = $region32
        $region31: #{forward.1} parent=11 // pred_region
          _
        $region32: #{forward.1} parent=11 // pred_fallthru
          _
        // Predicated region
        $region33: #{forward.1} parent=11 // pred_check
          %p890 = pneg %p238
        $region34: #{forward.1} parent=11 // pred_check_branch
          %892 = sbr.rel (%p890) target = $region36
        $region35: #{forward.1} parent=11 // pred_region
          %s894 = ssub.s32 16, 16
          %895 = vsyncadd [#allocation6], %s894
          %s897 = sshll.u32 [#allocation5], 4
          %s898 = int_to_ptr.vmem [resolvable:$true] %s897
          %900 = dma.hbm_to_vmem [thread:$0]  %s13, 16, %s898, [#allocation6]
        $region36: #{forward.1} parent=11 // pred_fallthru
          _
        // Predicated region
        $region37: #{forward.1} parent=11 // pred_check
          %p901 = pneg %p259
        $region38: #{forward.1} parent=11 // pred_check_branch
          %903 = sbr.rel (%p901) target = $region40
        $region39: #{forward.1} parent=11 // pred_region
          _
        $region40: #{forward.1} parent=11 // pred_fallthru
          _
        // Predicated region
        $region41: #{forward.1} parent=11 // pred_check
          %p904 = pneg %p280
        $region42: #{forward.1} parent=11 // pred_check_branch
          %906 = sbr.rel (%p904) target = $region44
        $region43: #{forward.1} parent=11 // pred_region
          %s908 = ssub.s32 16, 16
          %909 = vsyncadd [#allocation6], %s908
          %s911 = sshll.u32 [#allocation7], 4
          %s912 = int_to_ptr.vmem [resolvable:$true] %s911
          %914 = dma.hbm_to_vmem [thread:$0]  %s17, 16, %s912, [#allocation6]
        $region44: #{forward.1} parent=11 // pred_fallthru
          _
        // Predicated region
        $region45: #{forward.1} parent=11 // pred_check
          %p915 = pneg %p301
        $region46: #{forward.1} parent=11 // pred_check_branch
          %917 = sbr.rel (%p915) target = $region48
        $region47: #{forward.1} parent=11 // pred_region
          %s919 = ssub.s32 1536, 1536
          %920 = vsyncadd [#allocation9], %s919
          %s921 = sshll.u32 [#allocation8], 4
          %s922 = int_to_ptr.vmem [resolvable:$true] %s921
          %927 = dma.hbm_to_vmem [thread:$0]  %s19, 1536, %s922, [#allocation9], 64, 64, 4
        $region48: #{forward.1} parent=11 // pred_fallthru
          _
        // Predicated region
        $region49: #{forward.1} parent=11 // pred_check
          %p928 = pneg %p322
        $region50: #{forward.1} parent=11 // pred_check_branch
          %930 = sbr.rel (%p928) target = $region52
        $region51: #{forward.1} parent=11 // pred_region
          %s932 = ssub.s32 16, 16
          %933 = vsyncadd [#allocation9], %s932
          %s935 = sshll.u32 [#allocation10], 4
          %s936 = int_to_ptr.vmem [resolvable:$true] %s935
          %938 = dma.hbm_to_vmem [thread:$0]  %s21, 16, %s936, [#allocation9]
        $region52: #{forward.1} parent=11 // pred_fallthru
          _
        // Predicated region
        $region53: #{forward.1} parent=11 // pred_check
          %p939 = pneg %p343
        $region54: #{forward.1} parent=11 // pred_check_branch
          %941 = sbr.rel (%p939) target = $region56
        $region55: #{forward.1} parent=11 // pred_region
          _
        $region56: #{forward.1} parent=11 // pred_fallthru
          _
        // Predicated region
        $region57: #{forward.1} parent=11 // pred_check
          %p942 = pneg %p364
        $region58: #{forward.1} parent=11 // pred_check_branch
          %944 = sbr.rel (%p942) target = $region60
        $region59: #{forward.1} parent=11 // pred_region
          %s946 = ssub.s32 16, 16
          %947 = vsyncadd [#allocation12], %s946
          %s949 = sshll.u32 [#allocation11], 4
          %s950 = int_to_ptr.vmem [resolvable:$true] %s949
          %952 = dma.hbm_to_vmem [thread:$0]  %s25, 16, %s950, [#allocation12]
        $region60: #{forward.1} parent=11 // pred_fallthru
          _
        // Predicated region
        $region61: #{forward.1} parent=11 // pred_check
          %p953 = pneg %p385
        $region62: #{forward.1} parent=11 // pred_check_branch
          %955 = sbr.rel (%p953) target = $region64
        $region63: #{forward.1} parent=11 // pred_region
          %s957 = ssub.s32 1536, 1536
          %958 = vsyncadd [#allocation12], %s957
          %s959 = sshll.u32 [#allocation13], 4
          %s960 = int_to_ptr.vmem [resolvable:$true] %s959
          %965 = dma.hbm_to_vmem [thread:$0]  %s27, 1536, %s960, [#allocation12], 64, 64, 4
        $region64: #{forward.1} parent=11 // pred_fallthru
          _
        // Predicated region
        $region65: #{forward.1} parent=11 // pred_check
          %p966 = pneg %p406
        $region66: #{forward.1} parent=11 // pred_check_branch
          %968 = sbr.rel (%p966) target = $region68
        $region67: #{forward.1} parent=11 // pred_region
          %s970 = ssub.s32 16, 16
          %971 = vsyncadd [#allocation15], %s970
          %s973 = sshll.u32 [#allocation14], 4
          %s974 = int_to_ptr.vmem [resolvable:$true] %s973
          %976 = dma.hbm_to_vmem [thread:$0]  %s29, 16, %s974, [#allocation15]
        $region68: #{forward.1} parent=11 // pred_fallthru
          _
        // Predicated region
        $region69: #{forward.1} parent=11 // pred_check
          %p977 = pneg %p427
        $region70: #{forward.1} parent=11 // pred_check_branch
          %979 = sbr.rel (%p977) target = $region72
        $region71: #{forward.1} parent=11 // pred_region
          _
        $region72: #{forward.1} parent=11 // pred_fallthru
          _
        // Predicated region
        $region73: #{forward.1} parent=11 // pred_check
          %p980 = pneg %p448
        $region74: #{forward.1} parent=11 // pred_check_branch
          %982 = sbr.rel (%p980) target = $region76
        $region75: #{forward.1} parent=11 // pred_region
          %s984 = ssub.s32 16, 16
          %985 = vsyncadd [#allocation15], %s984
          %s987 = sshll.u32 [#allocation16], 4
          %s988 = int_to_ptr.vmem [resolvable:$true] %s987
          %990 = dma.hbm_to_vmem [thread:$0]  %s33, 16, %s988, [#allocation15]
        $region76: #{forward.1} parent=11 // pred_fallthru
          _
        // Predicated region
        $region77: #{forward.1} parent=11 // pred_check
          %p991 = pneg %p469
        $region78: #{forward.1} parent=11 // pred_check_branch
          %993 = sbr.rel (%p991) target = $region80
        $region79: #{forward.1} parent=11 // pred_region
          _
        $region80: #{forward.1} parent=11 // pred_fallthru
          _
        // Predicated region
        $region81: #{forward.1} parent=11 // pred_check
          %p994 = pneg %p490
        $region82: #{forward.1} parent=11 // pred_check_branch
          %996 = sbr.rel (%p994) target = $region84
        $region83: #{forward.1} parent=11 // pred_region
          %s998 = ssub.s32 16, 16
          %999 = vsyncadd [#allocation18], %s998
          %s1001 = sshll.u32 [#allocation17], 4
          %s1002 = int_to_ptr.vmem [resolvable:$true] %s1001
          %1004 = dma.hbm_to_vmem [thread:$0]  %s37, 16, %s1002, [#allocation18]
        $region84: #{forward.1} parent=11 // pred_fallthru
          _
        // Predicated region
        $region85: #{forward.1} parent=11 // pred_check
          %p1005 = pneg %p511
        $region86: #{forward.1} parent=11 // pred_check_branch
          %1007 = sbr.rel (%p1005) target = $region88
        $region87: #{forward.1} parent=11 // pred_region
          %s1009 = ssub.s32 1536, 1536
          %1010 = vsyncadd [#allocation18], %s1009
          %s1011 = sshll.u32 [#allocation19], 4
          %s1012 = int_to_ptr.vmem [resolvable:$true] %s1011
          %1017 = dma.hbm_to_vmem [thread:$0]  %s39, 1536, %s1012, [#allocation18], 64, 64, 4
        $region88: #{forward.1} parent=11 // pred_fallthru
          _
        // Predicated region
        $region89: #{forward.1} parent=11 // pred_check
          %p1018 = pneg %p532
        $region90: #{forward.1} parent=11 // pred_check_branch
          %1020 = sbr.rel (%p1018) target = $region92
        $region91: #{forward.1} parent=11 // pred_region
          _
        $region92: #{forward.1} parent=11 // pred_fallthru
          _
        // Predicated region
        $region93: #{forward.1} parent=11 // pred_check
          %p1021 = pneg %p553
        $region94: #{forward.1} parent=11 // pred_check_branch
          %1023 = sbr.rel (%p1021) target = $region96
        $region95: #{forward.1} parent=11 // pred_region
          %s1025 = ssub.s32 1536, 1536
          %1026 = vsyncadd [#allocation21], %s1025
          %s1027 = sshll.u32 [#allocation20], 4
          %s1028 = int_to_ptr.vmem [resolvable:$true] %s1027
          %1033 = dma.hbm_to_vmem [thread:$0]  %s43, 1536, %s1028, [#allocation21], 64, 64, 4
        $region96: #{forward.1} parent=11 // pred_fallthru
          _
        // Predicated region
        $region97: #{forward.1} parent=11 // pred_check
          %p1034 = pneg %p574
        $region98: #{forward.1} parent=11 // pred_check_branch
          %1036 = sbr.rel (%p1034) target = $region100
        $region99: #{forward.1} parent=11 // pred_region
          _
        $region100: #{forward.1} parent=11 // pred_fallthru
          _
        // Predicated region
        $region101: #{forward.1} parent=11 // pred_check
          %p1037 = pneg %p595
        $region102: #{forward.1} parent=11 // pred_check_branch
          %1039 = sbr.rel (%p1037) target = $region104
        $region103: #{forward.1} parent=11 // pred_region
          %s1041 = ssub.s32 1536, 1536
          %1042 = vsyncadd [#allocation21], %s1041
          %s1043 = sshll.u32 [#allocation22], 4
          %s1044 = int_to_ptr.vmem [resolvable:$true] %s1043
          %1049 = dma.hbm_to_vmem [thread:$0]  %s47, 1536, %s1044, [#allocation21], 64, 64, 4
        $region104: #{forward.1} parent=11 // pred_fallthru
          _
        // Predicated region
        $region105: #{forward.1} parent=11 // pred_check
          %p1050 = pneg %p616
        $region106: #{forward.1} parent=11 // pred_check_branch
          %1052 = sbr.rel (%p1050) target = $region108
        $region107: #{forward.1} parent=11 // pred_region
          _
        $region108: #{forward.1} parent=11 // pred_fallthru
          _
        // Predicated region
        $region109: #{forward.1} parent=11 // pred_check
          %p1053 = pneg %p637
        $region110: #{forward.1} parent=11 // pred_check_branch
          %1055 = sbr.rel (%p1053) target = $region112
        $region111: #{forward.1} parent=11 // pred_region
          %s1057 = ssub.s32 1536, 1536
          %1058 = vsyncadd [#allocation24], %s1057
          %s1059 = sshll.u32 [#allocation23], 4
          %s1060 = int_to_ptr.vmem [resolvable:$true] %s1059
          %1065 = dma.hbm_to_vmem [thread:$0]  %s51, 1536, %s1060, [#allocation24], 64, 64, 4
        $region112: #{forward.1} parent=11 // pred_fallthru
          _
        // Predicated region
        $region113: #{forward.1} parent=11 // pred_check
          %p1066 = pneg %p658
        $region114: #{forward.1} parent=11 // pred_check_branch
          %1068 = sbr.rel (%p1066) target = $region116
        $region115: #{forward.1} parent=11 // pred_region
          _
        $region116: #{forward.1} parent=11 // pred_fallthru
          _
        // Predicated region
        $region117: #{forward.1} parent=11 // pred_check
          %p1069 = pneg %p679
        $region118: #{forward.1} parent=11 // pred_check_branch
          %1071 = sbr.rel (%p1069) target = $region120
        $region119: #{forward.1} parent=11 // pred_region
          %s1073 = ssub.s32 1536, 1536
          %1074 = vsyncadd [#allocation24], %s1073
          %s1075 = sshll.u32 [#allocation25], 4
          %s1076 = int_to_ptr.vmem [resolvable:$true] %s1075
          %1081 = dma.hbm_to_vmem [thread:$0]  %s55, 1536, %s1076, [#allocation24], 64, 64, 4
        $region120: #{forward.1} parent=11 // pred_fallthru
          _
        // Predicated region
        $region121: #{forward.1} parent=11 // pred_check
          %p1082 = pneg %p700
        $region122: #{forward.1} parent=11 // pred_check_branch
          %1084 = sbr.rel (%p1082) target = $region124
        $region123: #{forward.1} parent=11 // pred_region
          _
        $region124: #{forward.1} parent=11 // pred_fallthru
          _
        // Predicated region
        $region125: #{forward.1} parent=11 // pred_check
          %p1085 = pneg %p721
        $region126: #{forward.1} parent=11 // pred_check_branch
          %1087 = sbr.rel (%p1085) target = $region128
        $region127: #{forward.1} parent=11 // pred_region
          %s1089 = ssub.s32 1536, 1536
          %1090 = vsyncadd [#allocation27], %s1089
          %s1091 = sshll.u32 [#allocation26], 4
          %s1092 = int_to_ptr.vmem [resolvable:$true] %s1091
          %1097 = dma.hbm_to_vmem [thread:$0]  %s59, 1536, %s1092, [#allocation27], 64, 64, 4
        $region128: #{forward.1} parent=11 // pred_fallthru
          _
        // Predicated region
        $region129: #{forward.1} parent=11 // pred_check
          %p1098 = pneg %p742
        $region130: #{forward.1} parent=11 // pred_check_branch
          %1100 = sbr.rel (%p1098) target = $region132
        $region131: #{forward.1} parent=11 // pred_region
          _
        $region132: #{forward.1} parent=11 // pred_fallthru
          _
        // Predicated region
        $region133: #{forward.1} parent=11 // pred_check
          %p1101 = pneg %p763
        $region134: #{forward.1} parent=11 // pred_check_branch
          %1103 = sbr.rel (%p1101) target = $region136
        $region135: #{forward.1} parent=11 // pred_region
          _
        $region136: #{forward.1} parent=11 // pred_fallthru
          _
        // Predicated region
        $region137: #{forward.1} parent=11 // pred_check
          %p1104 = pneg %p784
        $region138: #{forward.1} parent=11 // pred_check_branch
          %1106 = sbr.rel (%p1104) target = $region140
        $region139: #{forward.1} parent=11 // pred_region
          _
        $region140: #{forward.1} parent=11 // pred_fallthru
          _
        // Predicated region
        $region141: #{forward.1} parent=11 // pred_check
          %p1107 = pneg %p805
        $region142: #{forward.1} parent=11 // pred_check_branch
          %1109 = sbr.rel (%p1107) target = $region144
        $region143: #{forward.1} parent=11 // pred_region
          %s1111 = ssub.s32 1024, 1024
          %1112 = vsyncadd [#allocation27], %s1111
          %s1113 = sshll.u32 [#allocation28], 4
          %s1114 = int_to_ptr.vmem [resolvable:$true] %s1113
          %1119 = dma.hbm_to_vmem [thread:$0]  %s67, 1024, %s1114, [#allocation27], 64, 64, 4
        $region144: #{forward.1} parent=11 // pred_fallthru
          _
        // Predicated region
        $region145: #{forward.1} parent=11 // pred_check
          %p1120 = pneg %p826
        $region146: #{forward.1} parent=11 // pred_check_branch
          %1122 = sbr.rel (%p1120) target = $region148
        $region147: #{forward.1} parent=11 // pred_region
          _
        $region148: #{forward.1} parent=11 // pred_fallthru
          _
      $region12: #{forward.1} parent=5 // pred_fallthru
        _
      %p1123 = scmp.lt.s32.totalorder %s86, 2
      // Predicated region
      $region149: #{forward.1} parent=5 // pred_check
        %p1124 = pneg %p1123
      $region150: #{forward.1} parent=5 // pred_check_branch
        %1126 = sbr.rel (%p1124) target = $region152
      $region151: #{forward.1} parent=5 // pred_region
        // Predicated region
        $region153: #{forward.1} parent=151 // pred_check
          %p1127 = pneg %p106
        $region154: #{forward.1} parent=151 // pred_check_branch
          %1129 = sbr.rel (%p1127) target = $region156
        $region155: #{forward.1} parent=151 // pred_region
          %p1130 = scmp.lt.s32.totalorder %s86, 1
          %s1131 = scalar_select %p1130, %s86, 1
          %s1132 = smul.addr %s1131, 4
          %s1133 = smul.addr %s1132, 8
          %s1134 = scalar_lea.vmem %s1, %s1133
        $region156: #{forward.1} parent=151 // pred_fallthru
          _
      $region152: #{forward.1} parent=5 // pred_fallthru
        _
      %p1135 = scmp.le.s32.totalorder 1, %s86
      %p1136 = scmp.lt.s32.totalorder %s86, 3
      %p1137 = pnand %p1135, %p1136
      %p1138 = pneg %p1137
      // Predicated region
      $region157: #{forward.1} parent=5 // pred_check
        _
      $region158: #{forward.1} parent=5 // pred_check_branch
        %1140 = sbr.rel (%p1137) target = $region160
      $region159: #{forward.1} parent=5 // pred_region
        %s1141 = ssub.s32 %s86, 1
        // Predicated region
        $region161: #{forward.1} parent=159 // pred_check
          %p1142 = pneg %p196
        $region162: #{forward.1} parent=159 // pred_check_branch
          %1144 = sbr.rel (%p1142) target = $region164
        $region163: #{forward.1} parent=159 // pred_region
          %1145 = dma.done [#allocation4], 16
        $region164: #{forward.1} parent=159 // pred_fallthru
          _
        // Predicated region
        $region165: #{forward.1} parent=159 // pred_check
          %p1146 = pneg %p238
        $region166: #{forward.1} parent=159 // pred_check_branch
          %1148 = sbr.rel (%p1146) target = $region168
        $region167: #{forward.1} parent=159 // pred_region
          %1149 = dma.done [#allocation6], 16
        $region168: #{forward.1} parent=159 // pred_fallthru
          _
        // Predicated region
        $region169: #{forward.1} parent=159 // pred_check
          %p1150 = pneg %p280
        $region170: #{forward.1} parent=159 // pred_check_branch
          %1152 = sbr.rel (%p1150) target = $region172
        $region171: #{forward.1} parent=159 // pred_region
          %1153 = dma.done [#allocation6], 16
        $region172: #{forward.1} parent=159 // pred_fallthru
          _
        // Predicated region
        $region173: #{forward.1} parent=159 // pred_check
          %p1154 = pneg %p301
        $region174: #{forward.1} parent=159 // pred_check_branch
          %1156 = sbr.rel (%p1154) target = $region176
        $region175: #{forward.1} parent=159 // pred_region
          %1157 = dma.done [#allocation9], 1536
        $region176: #{forward.1} parent=159 // pred_fallthru
          _
        // Predicated region
        $region177: #{forward.1} parent=159 // pred_check
          %p1158 = pneg %p322
        $region178: #{forward.1} parent=159 // pred_check_branch
          %1160 = sbr.rel (%p1158) target = $region180
        $region179: #{forward.1} parent=159 // pred_region
          %1161 = dma.done [#allocation9], 16
        $region180: #{forward.1} parent=159 // pred_fallthru
          _
        // Predicated region
        $region181: #{forward.1} parent=159 // pred_check
          %p1162 = pneg %p364
        $region182: #{forward.1} parent=159 // pred_check_branch
          %1164 = sbr.rel (%p1162) target = $region184
        $region183: #{forward.1} parent=159 // pred_region
          %1165 = dma.done [#allocation12], 16
        $region184: #{forward.1} parent=159 // pred_fallthru
          _
        // Predicated region
        $region185: #{forward.1} parent=159 // pred_check
          %p1166 = pneg %p385
        $region186: #{forward.1} parent=159 // pred_check_branch
          %1168 = sbr.rel (%p1166) target = $region188
        $region187: #{forward.1} parent=159 // pred_region
          %1169 = dma.done [#allocation12], 1536
        $region188: #{forward.1} parent=159 // pred_fallthru
          _
        // Predicated region
        $region189: #{forward.1} parent=159 // pred_check
          %p1170 = pneg %p406
        $region190: #{forward.1} parent=159 // pred_check_branch
          %1172 = sbr.rel (%p1170) target = $region192
        $region191: #{forward.1} parent=159 // pred_region
          %1173 = dma.done [#allocation15], 16
        $region192: #{forward.1} parent=159 // pred_fallthru
          _
        // Predicated region
        $region193: #{forward.1} parent=159 // pred_check
          %p1174 = pneg %p448
        $region194: #{forward.1} parent=159 // pred_check_branch
          %1176 = sbr.rel (%p1174) target = $region196
        $region195: #{forward.1} parent=159 // pred_region
          %1177 = dma.done [#allocation15], 16
        $region196: #{forward.1} parent=159 // pred_fallthru
          _
        // Predicated region
        $region197: #{forward.1} parent=159 // pred_check
          %p1178 = pneg %p490
        $region198: #{forward.1} parent=159 // pred_check_branch
          %1180 = sbr.rel (%p1178) target = $region200
        $region199: #{forward.1} parent=159 // pred_region
          %1181 = dma.done [#allocation18], 16
        $region200: #{forward.1} parent=159 // pred_fallthru
          _
        // Predicated region
        $region201: #{forward.1} parent=159 // pred_check
          %p1182 = pneg %p511
        $region202: #{forward.1} parent=159 // pred_check_branch
          %1184 = sbr.rel (%p1182) target = $region204
        $region203: #{forward.1} parent=159 // pred_region
          %1185 = dma.done [#allocation18], 1536
        $region204: #{forward.1} parent=159 // pred_fallthru
          _
        // Predicated region
        $region205: #{forward.1} parent=159 // pred_check
          %p1186 = pneg %p553
        $region206: #{forward.1} parent=159 // pred_check_branch
          %1188 = sbr.rel (%p1186) target = $region208
        $region207: #{forward.1} parent=159 // pred_region
          %1189 = dma.done [#allocation21], 1536
        $region208: #{forward.1} parent=159 // pred_fallthru
          _
        // Predicated region
        $region209: #{forward.1} parent=159 // pred_check
          %p1190 = pneg %p595
        $region210: #{forward.1} parent=159 // pred_check_branch
          %1192 = sbr.rel (%p1190) target = $region212
        $region211: #{forward.1} parent=159 // pred_region
          %1193 = dma.done [#allocation21], 1536
        $region212: #{forward.1} parent=159 // pred_fallthru
          _
        // Predicated region
        $region213: #{forward.1} parent=159 // pred_check
          %p1194 = pneg %p637
        $region214: #{forward.1} parent=159 // pred_check_branch
          %1196 = sbr.rel (%p1194) target = $region216
        $region215: #{forward.1} parent=159 // pred_region
          %1197 = dma.done [#allocation24], 1536
        $region216: #{forward.1} parent=159 // pred_fallthru
          _
        // Predicated region
        $region217: #{forward.1} parent=159 // pred_check
          %p1198 = pneg %p679
        $region218: #{forward.1} parent=159 // pred_check_branch
          %1200 = sbr.rel (%p1198) target = $region220
        $region219: #{forward.1} parent=159 // pred_region
          %1201 = dma.done [#allocation24], 1536
        $region220: #{forward.1} parent=159 // pred_fallthru
          _
        // Predicated region
        $region221: #{forward.1} parent=159 // pred_check
          %p1202 = pneg %p721
        $region222: #{forward.1} parent=159 // pred_check_branch
          %1204 = sbr.rel (%p1202) target = $region224
        $region223: #{forward.1} parent=159 // pred_region
          %1205 = dma.done [#allocation27], 1536
        $region224: #{forward.1} parent=159 // pred_fallthru
          _
        // Predicated region
        $region225: #{forward.1} parent=159 // pred_check
          %p1206 = pneg %p805
        $region226: #{forward.1} parent=159 // pred_check_branch
          %1208 = sbr.rel (%p1206) target = $region228
        $region227: #{forward.1} parent=159 // pred_region
          %1209 = dma.done [#allocation27], 1024
        $region228: #{forward.1} parent=159 // pred_fallthru
          _
        %p1210 = scmp.lt.s32.totalorder %s91, 1
        %s1211 = scalar_select %p1210, %s91, 1
        %s1212 = smul.addr %s1211, 4
        %s1213 = smul.addr %s1212, 8
        %s1214 = scalar_lea.vmem %s1, %s1213
        %p1215 = pneg %p112
        %p1216 = pneg %p109
        %p1217 = pneg %p133
        %p1218 = pneg %p130
        %p1219 = pneg %p154
        %p1220 = pneg %p151
        %p1221 = pneg %p175
        %p1222 = pneg %p172
        %p1223 = pneg %p196
        %p1224 = pneg %p193
        %p1225 = pneg %p217
        %p1226 = pneg %p214
        %p1227 = pneg %p238
        %p1228 = pneg %p235
        %p1229 = pneg %p259
        %p1230 = pneg %p256
        %p1231 = pneg %p280
        %p1232 = pneg %p277
        %p1233 = pneg %p301
        %p1234 = pneg %p298
        %p1235 = pneg %p322
        %p1236 = pneg %p319
        %p1237 = pneg %p343
        %p1238 = pneg %p340
        %p1239 = pneg %p364
        %p1240 = pneg %p361
        %p1241 = pneg %p385
        %p1242 = pneg %p382
        %p1243 = pneg %p406
        %p1244 = pneg %p403
        %p1245 = pneg %p427
        %p1246 = pneg %p424
        %p1247 = pneg %p448
        %p1248 = pneg %p445
        %p1249 = pneg %p469
        %p1250 = pneg %p466
        %p1251 = pneg %p490
        %p1252 = pneg %p487
        %p1253 = pneg %p511
        %p1254 = pneg %p508
        %p1255 = pneg %p532
        %p1256 = pneg %p529
        %p1257 = pneg %p553
        %p1258 = pneg %p550
        %p1259 = pneg %p574
        %p1260 = pneg %p571
        %p1261 = pneg %p595
        %p1262 = pneg %p592
        %p1263 = pneg %p616
        %p1264 = pneg %p613
        %p1265 = pneg %p637
        %p1266 = pneg %p634
        %p1267 = pneg %p658
        %p1268 = pneg %p655
        %p1269 = pneg %p679
        %p1270 = pneg %p676
        %p1271 = pneg %p700
        %p1272 = pneg %p697
        %p1273 = pneg %p721
        %p1274 = pneg %p718
        %p1275 = pneg %p742
        %p1276 = pneg %p739
        %p1277 = pneg %p763
        %p1278 = pneg %p760
        %p1279 = pneg %p784
        %p1280 = pneg %p781
        %p1281 = pneg %p805
        %p1282 = pneg %p802
        %p1283 = pneg %p826
        %p1284 = pneg %p823
        %p1285 = pneg %p852
        %p1286 = pneg %p849
        %p1287 = scmp.lt.s32.totalorder %s91, 1
        %s1288 = scalar_select %p1287, %s91, 1
        %s1289 = smul.addr %s1288, 4
        %s1290 = smul.addr %s1289, 8
        %s1291 = scalar_lea.vmem %s71, %s1290
        %p1292 = scmp.lt.s32.totalorder %s91, 1
        %s1293 = scalar_select %p1292, %s91, 1
        %s1294 = smul.addr %s1293, 4
        %s1295 = smul.addr %s1294, 8
        %s1296 = scalar_lea.vmem %s1, %s1295
        %p1297 = scmp.lt.s32.totalorder %s91, 1
        %s1298 = scalar_select %p1297, %s91, 1
        %s1299 = smul.addr %s1298, 4
        %s1300 = smul.addr %s1299, 8
        %s1301 = scalar_lea.vmem %s71, %s1300
        %v1303 = vld [vmem:[%s1296] sm:$0xff]
        %v1304 = vld [vmem:[%s1296 + $0x8] sm:$0xff]
        %v1305 = vld [vmem:[%s1296 + $0x10] sm:$0xff]
        %v1306 = vld [vmem:[%s1296 + $0x18] sm:$0xff]
        %1307 = vst [vmem:[#allocation2 + $0x1] sm:$0xff] %v1303
        %1308 = vst [vmem:[#allocation2 + $0x9] sm:$0xff] %v1304
        %1309 = vst [vmem:[#allocation2 + $0x11] sm:$0xff] %v1305
        %1310 = vst [vmem:[#allocation2 + $0x19] sm:$0xff] %v1306
        %1311 = vst [vmem:[#allocation2] sm:$0x1] 0.0
        %1312 = vst [vmem:[#allocation2 + $0x21] sm:$0x1] 0.0
        %v1313 = vld [vmem:[%s5] sm:$0x1]
        %v1314 = vld [vmem:[#allocation2] sm:$0xff]
        %v1315 = vld [vmem:[#allocation2 + $0x8] sm:$0xff]
        %v1316 = vld [vmem:[#allocation2 + $0x10] sm:$0xff]
        %v1317 = vld [vmem:[#allocation2 + $0x18] sm:$0xff]
        %v1318 = vpack.c.bf16 %v1315, %v1314
        %v1319 = vpack.c.bf16 %v1317, %v1316
        %v1320 = vld [vmem:[%s3] sm:$0xf]
        %v1321 = vld [vmem:[%s3 + $0x4] sm:$0xf]
        %v1322 = vld [vmem:[%s3 + $0x8] sm:$0xf]
        %v1323 = vld [vmem:[%s3 + $0xc] sm:$0xf]
        %v1324 = vld [vmem:[%s3 + $0x10] sm:$0xf]
        %v1325 = vld [vmem:[%s3 + $0x14] sm:$0xf]
        %v1326 = vld [vmem:[%s3 + $0x18] sm:$0xf]
        %v1327 = vld [vmem:[%s3 + $0x1c] sm:$0xf]
        %v1328 = vld [vmem:[%s3 + $0x20] sm:$0xf]
        %v1329 = vld [vmem:[%s3 + $0x24] sm:$0xf]
        %v1330 = vld [vmem:[%s3 + $0x28] sm:$0xf]
        %v1331 = vld [vmem:[%s3 + $0x2c] sm:$0xf]
        %v1332 = vld [vmem:[%s3 + $0x30] sm:$0xf]
        %v1333 = vld [vmem:[%s3 + $0x34] sm:$0xf]
        %v1334 = vld [vmem:[%s3 + $0x38] sm:$0xf]
        %v1335 = vld [vmem:[%s3 + $0x3c] sm:$0xf]
        %v1336 = vld [vmem:[#allocation2 + $0x1] sm:$0xff]
        %v1337 = vld [vmem:[#allocation2 + $0x9] sm:$0xff]
        %v1338 = vld [vmem:[#allocation2 + $0x11] sm:$0xff]
        %v1339 = vld [vmem:[#allocation2 + $0x19] sm:$0xff]
        %v1340 = vpack.c.bf16 %v1337, %v1336
        %v1341 = vpack.c.bf16 %v1339, %v1338
        %s1342 = scalar_lea.vmem %s3, 64
        %v1343 = vld [vmem:[%s1342] sm:$0xf]
        %v1344 = vld [vmem:[%s1342 + $0x4] sm:$0xf]
        %v1345 = vld [vmem:[%s1342 + $0x8] sm:$0xf]
        %v1346 = vld [vmem:[%s1342 + $0xc] sm:$0xf]
        %v1347 = vld [vmem:[%s1342 + $0x10] sm:$0xf]
        %v1348 = vld [vmem:[%s1342 + $0x14] sm:$0xf]
        %v1349 = vld [vmem:[%s1342 + $0x18] sm:$0xf]
        %v1350 = vld [vmem:[%s1342 + $0x1c] sm:$0xf]
        %v1351 = vld [vmem:[%s1342 + $0x20] sm:$0xf]
        %v1352 = vld [vmem:[%s1342 + $0x24] sm:$0xf]
        %v1353 = vld [vmem:[%s1342 + $0x28] sm:$0xf]
        %v1354 = vld [vmem:[%s1342 + $0x2c] sm:$0xf]
        %v1355 = vld [vmem:[%s1342 + $0x30] sm:$0xf]
        %v1356 = vld [vmem:[%s1342 + $0x34] sm:$0xf]
        %v1357 = vld [vmem:[%s1342 + $0x38] sm:$0xf]
        %v1358 = vld [vmem:[%s1342 + $0x3c] sm:$0xf]
        %v1375 = vunpack.c.l.b16 %v1343
        %v1376 = vunpack.c.l.b16 %v1344
        %v1377 = vunpack.c.l.b16 %v1345
        %v1378 = vunpack.c.l.b16 %v1346
        %v1379 = vunpack.c.l.b16 %v1347
        %v1380 = vunpack.c.l.b16 %v1348
        %v1381 = vunpack.c.l.b16 %v1349
        %v1382 = vunpack.c.l.b16 %v1350
        %v1383 = vunpack.c.l.b16 %v1351
        %v1384 = vunpack.c.l.b16 %v1352
        %v1385 = vunpack.c.l.b16 %v1353
        %v1386 = vunpack.c.l.b16 %v1354
        %v1387 = vunpack.c.l.b16 %v1355
        %v1388 = vunpack.c.l.b16 %v1356
        %v1389 = vunpack.c.l.b16 %v1357
        %v1390 = vunpack.c.l.b16 %v1358
        %v1391 = vpack.c.b16 %v1376, %v1375
        %v1392 = vpack.c.b16 %v1378, %v1377
        %v1393 = vpack.c.b16 %v1380, %v1379
        %v1394 = vpack.c.b16 %v1382, %v1381
        %v1395 = vpack.c.b16 %v1384, %v1383
        %v1396 = vpack.c.b16 %v1386, %v1385
        %v1397 = vpack.c.b16 %v1388, %v1387
        %v1398 = vpack.c.b16 %v1390, %v1389
        %1407 = vmatprep.subr.bf16.mxu0 0
        %1408 = vmatpush1.bf16.msra.mxu0 %v1391
        %1409 = vmatprep.subr.bf16.mxu0 0
        %1410 = vmatpush1.bf16.msra.mxu0 %v1392
        %1411 = vmatprep.subr.bf16.mxu0 0
        %1412 = vmatpush1.bf16.msra.mxu0 %v1393
        %1413 = vmatprep.subr.bf16.mxu0 0
        %1414 = vmatpush1.bf16.msra.mxu0 %v1394
        %1415 = vmatprep.subr.bf16.mxu0 0
        %1416 = vmatpush1.bf16.msra.mxu0 %v1395
        %1417 = vmatprep.subr.bf16.mxu0 0
        %1418 = vmatpush1.bf16.msra.mxu0 %v1396
        %1419 = vmatprep.subr.bf16.mxu0 0
        %1420 = vmatpush1.bf16.msra.mxu0 %v1397
        %1421 = vmatprep.subr.bf16.mxu0 0
        %1422 = vmatpush1.bf16.msra.mxu0 %v1398
        %1423 = vmatprep.subr.bf16.mxu0 0
        %1424 = vmatpush1.bf16.msra.mxu0 0
        %1425 = vmatprep.subr.bf16.mxu0 0
        %1426 = vmatpush1.bf16.msra.mxu0 0
        %1427 = vmatprep.subr.bf16.mxu0 0
        %1428 = vmatpush1.bf16.msra.mxu0 0
        %1429 = vmatprep.subr.bf16.mxu0 0
        %1430 = vmatpush1.bf16.msra.mxu0 0
        %1431 = vmatprep.subr.bf16.mxu0 0
        %1432 = vmatpush1.bf16.msra.mxu0 0
        %1433 = vmatprep.subr.bf16.mxu0 0
        %1434 = vmatpush1.bf16.msra.mxu0 0
        %1435 = vmatprep.subr.bf16.mxu0 0
        %1436 = vmatpush1.bf16.msra.mxu0 0
        %1437 = vmatprep.subr.bf16.mxu0 0
        %1438 = vmatpush1.bf16.msra.mxu0 0
        %1439 = vmatprep.mubr.bf16.mxu0 0
        %1440 = vmatmul.mubr.bf16.gmra.mrb[0].mxu0 %v1340
        %v1441 = vpop.f32.mrb[0].mxu0
        %v1442 = vadd.f32 0.0, %v1441
        %v1443 = vpop.f32.mrb[0].mxu0
        %v1444 = vpop.f32.mrb[0].mxu0
        %v1445 = vadd.f32 0.0, %v1444
        %v1446 = vpop.f32.mrb[0].mxu0
        %1447 = vmatprep.mubr.bf16.mxu0 0
        %1448 = vmatmul.mubr.bf16.gmra.mrb[0].mxu0 %v1341
        %v1449 = vpop.f32.mrb[0].mxu0
        %v1450 = vadd.f32 0.0, %v1449
        %v1451 = vpop.f32.mrb[0].mxu0
        %v1452 = vpop.f32.mrb[0].mxu0
        %v1453 = vadd.f32 0.0, %v1452
        %v1454 = vpop.f32.mrb[0].mxu0
        %1455 = vdwg.mxu0
        %v1472 = vunpack.c.l.b16 %v1320
        %v1473 = vunpack.c.l.b16 %v1321
        %v1474 = vunpack.c.l.b16 %v1322
        %v1475 = vunpack.c.l.b16 %v1323
        %v1476 = vunpack.c.l.b16 %v1324
        %v1477 = vunpack.c.l.b16 %v1325
        %v1478 = vunpack.c.l.b16 %v1326
        %v1479 = vunpack.c.l.b16 %v1327
        %v1480 = vunpack.c.l.b16 %v1328
        %v1481 = vunpack.c.l.b16 %v1329
        %v1482 = vunpack.c.l.b16 %v1330
        %v1483 = vunpack.c.l.b16 %v1331
        %v1484 = vunpack.c.l.b16 %v1332
        %v1485 = vunpack.c.l.b16 %v1333
        %v1486 = vunpack.c.l.b16 %v1334
        %v1487 = vunpack.c.l.b16 %v1335
        %v1488 = vpack.c.b16 %v1473, %v1472
        %v1489 = vpack.c.b16 %v1475, %v1474
        %v1490 = vpack.c.b16 %v1477, %v1476
        %v1491 = vpack.c.b16 %v1479, %v1478
        %v1492 = vpack.c.b16 %v1481, %v1480
        %v1493 = vpack.c.b16 %v1483, %v1482
        %v1494 = vpack.c.b16 %v1485, %v1484
        %v1495 = vpack.c.b16 %v1487, %v1486
        %1504 = vmatprep.subr.bf16.mxu0 0
        %1505 = vmatpush1.bf16.msra.mxu0 %v1488
        %1506 = vmatprep.subr.bf16.mxu0 0
        %1507 = vmatpush1.bf16.msra.mxu0 %v1489
        %1508 = vmatprep.subr.bf16.mxu0 0
        %1509 = vmatpush1.bf16.msra.mxu0 %v1490
        %1510 = vmatprep.subr.bf16.mxu0 0
        %1511 = vmatpush1.bf16.msra.mxu0 %v1491
        %1512 = vmatprep.subr.bf16.mxu0 0
        %1513 = vmatpush1.bf16.msra.mxu0 %v1492
        %1514 = vmatprep.subr.bf16.mxu0 0
        %1515 = vmatpush1.bf16.msra.mxu0 %v1493
        %1516 = vmatprep.subr.bf16.mxu0 0
        %1517 = vmatpush1.bf16.msra.mxu0 %v1494
        %1518 = vmatprep.subr.bf16.mxu0 0
        %1519 = vmatpush1.bf16.msra.mxu0 %v1495
        %1520 = vmatprep.subr.bf16.mxu0 0
        %1521 = vmatpush1.bf16.msra.mxu0 0
        %1522 = vmatprep.subr.bf16.mxu0 0
        %1523 = vmatpush1.bf16.msra.mxu0 0
        %1524 = vmatprep.subr.bf16.mxu0 0
        %1525 = vmatpush1.bf16.msra.mxu0 0
        %1526 = vmatprep.subr.bf16.mxu0 0
        %1527 = vmatpush1.bf16.msra.mxu0 0
        %1528 = vmatprep.subr.bf16.mxu0 0
        %1529 = vmatpush1.bf16.msra.mxu0 0
        %1530 = vmatprep.subr.bf16.mxu0 0
        %1531 = vmatpush1.bf16.msra.mxu0 0
        %1532 = vmatprep.subr.bf16.mxu0 0
        %1533 = vmatpush1.bf16.msra.mxu0 0
        %1534 = vmatprep.subr.bf16.mxu0 0
        %1535 = vmatpush1.bf16.msra.mxu0 0
        %1536 = vmatprep.mubr.bf16.mxu0 0
        %1537 = vmatmul.mubr.bf16.gmra.mrb[0].mxu0 %v1318
        %v1538 = vpop.f32.mrb[0].mxu0
        %v1539 = vadd.f32 %v1442, %v1538
        %v1540 = vpop.f32.mrb[0].mxu0
        %v1541 = vpop.f32.mrb[0].mxu0
        %v1542 = vadd.f32 %v1445, %v1541
        %v1543 = vpop.f32.mrb[0].mxu0
        %1544 = vmatprep.mubr.bf16.mxu0 0
        %1545 = vmatmul.mubr.bf16.gmra.mrb[0].mxu0 %v1319
        %v1546 = vpop.f32.mrb[0].mxu0
        %v1547 = vadd.f32 %v1450, %v1546
        %v1548 = vpop.f32.mrb[0].mxu0
        %v1549 = vpop.f32.mrb[0].mxu0
        %v1550 = vadd.f32 %v1453, %v1549
        %v1551 = vpop.f32.mrb[0].mxu0
        %1552 = vdwg.mxu0
        %v1553 = vld [vmem:[#allocation2 + $0x2] sm:$0xff]
        %v1554 = vld [vmem:[#allocation2 + $0xa] sm:$0xff]
        %v1555 = vld [vmem:[#allocation2 + $0x12] sm:$0xff]
        %v1556 = vld [vmem:[#allocation2 + $0x1a] sm:$0xff]
        %v1557 = vpack.c.bf16 %v1554, %v1553
        %v1558 = vpack.c.bf16 %v1556, %v1555
        %s1559 = scalar_lea.vmem %s3, 128
        %v1560 = vld [vmem:[%s1559] sm:$0xf]
        %v1561 = vld [vmem:[%s1559 + $0x4] sm:$0xf]
        %v1562 = vld [vmem:[%s1559 + $0x8] sm:$0xf]
        %v1563 = vld [vmem:[%s1559 + $0xc] sm:$0xf]
        %v1564 = vld [vmem:[%s1559 + $0x10] sm:$0xf]
        %v1565 = vld [vmem:[%s1559 + $0x14] sm:$0xf]
        %v1566 = vld [vmem:[%s1559 + $0x18] sm:$0xf]
        %v1567 = vld [vmem:[%s1559 + $0x1c] sm:$0xf]
        %v1568 = vld [vmem:[%s1559 + $0x20] sm:$0xf]
        %v1569 = vld [vmem:[%s1559 + $0x24] sm:$0xf]
        %v1570 = vld [vmem:[%s1559 + $0x28] sm:$0xf]
        %v1571 = vld [vmem:[%s1559 + $0x2c] sm:$0xf]
        %v1572 = vld [vmem:[%s1559 + $0x30] sm:$0xf]
        %v1573 = vld [vmem:[%s1559 + $0x34] sm:$0xf]
        %v1574 = vld [vmem:[%s1559 + $0x38] sm:$0xf]
        %v1575 = vld [vmem:[%s1559 + $0x3c] sm:$0xf]
        %v1592 = vunpack.c.l.b16 %v1560
        %v1593 = vunpack.c.l.b16 %v1561
        %v1594 = vunpack.c.l.b16 %v1562
        %v1595 = vunpack.c.l.b16 %v1563
        %v1596 = vunpack.c.l.b16 %v1564
        %v1597 = vunpack.c.l.b16 %v1565
        %v1598 = vunpack.c.l.b16 %v1566
        %v1599 = vunpack.c.l.b16 %v1567
        %v1600 = vunpack.c.l.b16 %v1568
        %v1601 = vunpack.c.l.b16 %v1569
        %v1602 = vunpack.c.l.b16 %v1570
        %v1603 = vunpack.c.l.b16 %v1571
        %v1604 = vunpack.c.l.b16 %v1572
        %v1605 = vunpack.c.l.b16 %v1573
        %v1606 = vunpack.c.l.b16 %v1574
        %v1607 = vunpack.c.l.b16 %v1575
        %v1608 = vpack.c.b16 %v1593, %v1592
        %v1609 = vpack.c.b16 %v1595, %v1594
        %v1610 = vpack.c.b16 %v1597, %v1596
        %v1611 = vpack.c.b16 %v1599, %v1598
        %v1612 = vpack.c.b16 %v1601, %v1600
        %v1613 = vpack.c.b16 %v1603, %v1602
        %v1614 = vpack.c.b16 %v1605, %v1604
        %v1615 = vpack.c.b16 %v1607, %v1606
        %1624 = vmatprep.subr.bf16.mxu0 0
        %1625 = vmatpush1.bf16.msra.mxu0 %v1608
        %1626 = vmatprep.subr.bf16.mxu0 0
        %1627 = vmatpush1.bf16.msra.mxu0 %v1609
        %1628 = vmatprep.subr.bf16.mxu0 0
        %1629 = vmatpush1.bf16.msra.mxu0 %v1610
        %1630 = vmatprep.subr.bf16.mxu0 0
        %1631 = vmatpush1.bf16.msra.mxu0 %v1611
        %1632 = vmatprep.subr.bf16.mxu0 0
        %1633 = vmatpush1.bf16.msra.mxu0 %v1612
        %1634 = vmatprep.subr.bf16.mxu0 0
        %1635 = vmatpush1.bf16.msra.mxu0 %v1613
        %1636 = vmatprep.subr.bf16.mxu0 0
        %1637 = vmatpush1.bf16.msra.mxu0 %v1614
        %1638 = vmatprep.subr.bf16.mxu0 0
        %1639 = vmatpush1.bf16.msra.mxu0 %v1615
        %1640 = vmatprep.subr.bf16.mxu0 0
        %1641 = vmatpush1.bf16.msra.mxu0 0
        %1642 = vmatprep.subr.bf16.mxu0 0
        %1643 = vmatpush1.bf16.msra.mxu0 0
        %1644 = vmatprep.subr.bf16.mxu0 0
        %1645 = vmatpush1.bf16.msra.mxu0 0
        %1646 = vmatprep.subr.bf16.mxu0 0
        %1647 = vmatpush1.bf16.msra.mxu0 0
        %1648 = vmatprep.subr.bf16.mxu0 0
        %1649 = vmatpush1.bf16.msra.mxu0 0
        %1650 = vmatprep.subr.bf16.mxu0 0
        %1651 = vmatpush1.bf16.msra.mxu0 0
        %1652 = vmatprep.subr.bf16.mxu0 0
        %1653 = vmatpush1.bf16.msra.mxu0 0
        %1654 = vmatprep.subr.bf16.mxu0 0
        %1655 = vmatpush1.bf16.msra.mxu0 0
        %1656 = vmatprep.mubr.bf16.mxu0 0
        %1657 = vmatmul.mubr.bf16.gmra.mrb[0].mxu0 %v1557
        %v1658 = vpop.f32.mrb[0].mxu0
        %v1659 = vadd.f32 0.0, %v1658
        %v1660 = vpop.f32.mrb[0].mxu0
        %v1661 = vpop.f32.mrb[0].mxu0
        %v1662 = vadd.f32 0.0, %v1661
        %v1663 = vpop.f32.mrb[0].mxu0
        %1664 = vmatprep.mubr.bf16.mxu0 0
        %1665 = vmatmul.mubr.bf16.gmra.mrb[0].mxu0 %v1558
        %v1666 = vpop.f32.mrb[0].mxu0
        %v1667 = vadd.f32 0.0, %v1666
        %v1668 = vpop.f32.mrb[0].mxu0
        %v1669 = vpop.f32.mrb[0].mxu0
        %v1670 = vadd.f32 0.0, %v1669
        %v1671 = vpop.f32.mrb[0].mxu0
        %1672 = vdwg.mxu0
        %v1673 = vadd.f32 %v1539, %v1659
        %v1674 = vadd.f32 %v1542, %v1662
        %v1675 = vadd.f32 %v1547, %v1667
        %v1676 = vadd.f32 %v1550, %v1670
        %v1677 = vunpack.c.l.bf16 %v1313
        %v1678 = vlaneseq
        %v1679 = vshrl.u32 %v1678, 7
        %v1680 = vsub.s32 0, %v1679
        %v1681 = vrot.slane %v1677, %v1680
        %v1682 = vadd.f32 %v1673, %v1681
        %v1683 = vadd.f32 %v1674, %v1681
        %v1684 = vadd.f32 %v1675, %v1681
        %v1685 = vadd.f32 %v1676, %v1681
        %v1686 = vmax.f32 %v1682, 0.0
        %v1687 = vmax.f32 %v1683, 0.0
        %v1688 = vmax.f32 %v1684, 0.0
        %v1689 = vmax.f32 %v1685, 0.0
        %1690 = vst [vmem:[#allocation2 + $0x1] sm:$0xff] %v1686
        %1691 = vst [vmem:[#allocation2 + $0x9] sm:$0xff] %v1687
        %1692 = vst [vmem:[#allocation2 + $0x11] sm:$0xff] %v1688
        %1693 = vst [vmem:[#allocation2 + $0x19] sm:$0xff] %v1689
        %1694 = vst [vmem:[#allocation2] sm:$0x1] 0.0
        %1695 = vst [vmem:[#allocation2 + $0x21] sm:$0x1] 0.0
        %v1696 = vld [vmem:[#allocation3] sm:$0x1]
        %v1697 = vld [vmem:[#allocation2] ss:$2 sm:$0xff]
        %s1698 = scalar_lea.vmem [#allocation2], 16
        %v1699 = vld [vmem:[%s1698] ss:$2 sm:$0xff]
        %v1700 = vpack.c.bf16 %v1699, %v1697
        %v1701 = vld [vmem:[%s7] sm:$0xf]
        %v1702 = vld [vmem:[%s7 + $0x4] sm:$0xf]
        %v1703 = vld [vmem:[%s7 + $0x8] sm:$0xf]
        %v1704 = vld [vmem:[%s7 + $0xc] sm:$0xf]
        %v1705 = vld [vmem:[%s7 + $0x10] sm:$0xf]
        %v1706 = vld [vmem:[%s7 + $0x14] sm:$0xf]
        %v1707 = vld [vmem:[%s7 + $0x18] sm:$0xf]
        %v1708 = vld [vmem:[%s7 + $0x1c] sm:$0xf]
        %v1709 = vld [vmem:[%s7 + $0x20] sm:$0xf]
        %v1710 = vld [vmem:[%s7 + $0x24] sm:$0xf]
        %v1711 = vld [vmem:[%s7 + $0x28] sm:$0xf]
        %v1712 = vld [vmem:[%s7 + $0x2c] sm:$0xf]
        %v1713 = vld [vmem:[%s7 + $0x30] sm:$0xf]
        %v1714 = vld [vmem:[%s7 + $0x34] sm:$0xf]
        %v1715 = vld [vmem:[%s7 + $0x38] sm:$0xf]
        %v1716 = vld [vmem:[%s7 + $0x3c] sm:$0xf]
        %s1717 = scalar_lea.vmem [#allocation2], 1
        %v1718 = vld [vmem:[%s1717] ss:$2 sm:$0xff]
        %s1719 = scalar_lea.vmem [#allocation2], 17
        %v1720 = vld [vmem:[%s1719] ss:$2 sm:$0xff]
        %v1721 = vpack.c.bf16 %v1720, %v1718
        %s1722 = scalar_lea.vmem %s7, 64
        %v1723 = vld [vmem:[%s1722] sm:$0xf]
        %v1724 = vld [vmem:[%s1722 + $0x4] sm:$0xf]
        %v1725 = vld [vmem:[%s1722 + $0x8] sm:$0xf]
        %v1726 = vld [vmem:[%s1722 + $0xc] sm:$0xf]
        %v1727 = vld [vmem:[%s1722 + $0x10] sm:$0xf]
        %v1728 = vld [vmem:[%s1722 + $0x14] sm:$0xf]
        %v1729 = vld [vmem:[%s1722 + $0x18] sm:$0xf]
        %v1730 = vld [vmem:[%s1722 + $0x1c] sm:$0xf]
        %v1731 = vld [vmem:[%s1722 + $0x20] sm:$0xf]
        %v1732 = vld [vmem:[%s1722 + $0x24] sm:$0xf]
        %v1733 = vld [vmem:[%s1722 + $0x28] sm:$0xf]
        %v1734 = vld [vmem:[%s1722 + $0x2c] sm:$0xf]
        %v1735 = vld [vmem:[%s1722 + $0x30] sm:$0xf]
        %v1736 = vld [vmem:[%s1722 + $0x34] sm:$0xf]
        %v1737 = vld [vmem:[%s1722 + $0x38] sm:$0xf]
        %v1738 = vld [vmem:[%s1722 + $0x3c] sm:$0xf]
        %v1755 = vunpack.c.l.b16 %v1723
        %v1756 = vunpack.c.l.b16 %v1724
        %v1757 = vunpack.c.l.b16 %v1725
        %v1758 = vunpack.c.l.b16 %v1726
        %v1759 = vunpack.c.l.b16 %v1727
        %v1760 = vunpack.c.l.b16 %v1728
        %v1761 = vunpack.c.l.b16 %v1729
        %v1762 = vunpack.c.l.b16 %v1730
        %v1763 = vunpack.c.l.b16 %v1731
        %v1764 = vunpack.c.l.b16 %v1732
        %v1765 = vunpack.c.l.b16 %v1733
        %v1766 = vunpack.c.l.b16 %v1734
        %v1767 = vunpack.c.l.b16 %v1735
        %v1768 = vunpack.c.l.b16 %v1736
        %v1769 = vunpack.c.l.b16 %v1737
        %v1770 = vunpack.c.l.b16 %v1738
        %v1771 = vpack.c.b16 %v1756, %v1755
        %v1772 = vpack.c.b16 %v1758, %v1757
        %v1773 = vpack.c.b16 %v1760, %v1759
        %v1774 = vpack.c.b16 %v1762, %v1761
        %v1775 = vpack.c.b16 %v1764, %v1763
        %v1776 = vpack.c.b16 %v1766, %v1765
        %v1777 = vpack.c.b16 %v1768, %v1767
        %v1778 = vpack.c.b16 %v1770, %v1769
        %1787 = vmatprep.subr.bf16.mxu0 0
        %1788 = vmatpush1.bf16.msra.mxu0 %v1771
        %1789 = vmatprep.subr.bf16.mxu0 0
        %1790 = vmatpush1.bf16.msra.mxu0 %v1772
        %1791 = vmatprep.subr.bf16.mxu0 0
        %1792 = vmatpush1.bf16.msra.mxu0 %v1773
        %1793 = vmatprep.subr.bf16.mxu0 0
        %1794 = vmatpush1.bf16.msra.mxu0 %v1774
        %1795 = vmatprep.subr.bf16.mxu0 0
        %1796 = vmatpush1.bf16.msra.mxu0 %v1775
        %1797 = vmatprep.subr.bf16.mxu0 0
        %1798 = vmatpush1.bf16.msra.mxu0 %v1776
        %1799 = vmatprep.subr.bf16.mxu0 0
        %1800 = vmatpush1.bf16.msra.mxu0 %v1777
        %1801 = vmatprep.subr.bf16.mxu0 0
        %1802 = vmatpush1.bf16.msra.mxu0 %v1778
        %1803 = vmatprep.subr.bf16.mxu0 0
        %1804 = vmatpush1.bf16.msra.mxu0 0
        %1805 = vmatprep.subr.bf16.mxu0 0
        %1806 = vmatpush1.bf16.msra.mxu0 0
        %1807 = vmatprep.subr.bf16.mxu0 0
        %1808 = vmatpush1.bf16.msra.mxu0 0
        %1809 = vmatprep.subr.bf16.mxu0 0
        %1810 = vmatpush1.bf16.msra.mxu0 0
        %1811 = vmatprep.subr.bf16.mxu0 0
        %1812 = vmatpush1.bf16.msra.mxu0 0
        %1813 = vmatprep.subr.bf16.mxu0 0
        %1814 = vmatpush1.bf16.msra.mxu0 0
        %1815 = vmatprep.subr.bf16.mxu0 0
        %1816 = vmatpush1.bf16.msra.mxu0 0
        %1817 = vmatprep.subr.bf16.mxu0 0
        %1818 = vmatpush1.bf16.msra.mxu0 0
        %1819 = vmatprep.mubr.bf16.mxu0 0
        %1820 = vmatmul.mubr.bf16.gmra.mrb[0].mxu0 %v1721
        %v1821 = vpop.f32.mrb[0].mxu0
        %v1822 = vadd.f32 0.0, %v1821
        %v1823 = vpop.f32.mrb[0].mxu0
        %v1824 = vpop.f32.mrb[0].mxu0
        %v1825 = vadd.f32 0.0, %v1824
        %v1826 = vpop.f32.mrb[0].mxu0
        %1827 = vdwg.mxu0
        %v1844 = vunpack.c.l.b16 %v1701
        %v1845 = vunpack.c.l.b16 %v1702
        %v1846 = vunpack.c.l.b16 %v1703
        %v1847 = vunpack.c.l.b16 %v1704
        %v1848 = vunpack.c.l.b16 %v1705
        %v1849 = vunpack.c.l.b16 %v1706
        %v1850 = vunpack.c.l.b16 %v1707
        %v1851 = vunpack.c.l.b16 %v1708
        %v1852 = vunpack.c.l.b16 %v1709
        %v1853 = vunpack.c.l.b16 %v1710
        %v1854 = vunpack.c.l.b16 %v1711
        %v1855 = vunpack.c.l.b16 %v1712
        %v1856 = vunpack.c.l.b16 %v1713
        %v1857 = vunpack.c.l.b16 %v1714
        %v1858 = vunpack.c.l.b16 %v1715
        %v1859 = vunpack.c.l.b16 %v1716
        %v1860 = vpack.c.b16 %v1845, %v1844
        %v1861 = vpack.c.b16 %v1847, %v1846
        %v1862 = vpack.c.b16 %v1849, %v1848
        %v1863 = vpack.c.b16 %v1851, %v1850
        %v1864 = vpack.c.b16 %v1853, %v1852
        %v1865 = vpack.c.b16 %v1855, %v1854
        %v1866 = vpack.c.b16 %v1857, %v1856
        %v1867 = vpack.c.b16 %v1859, %v1858
        %1876 = vmatprep.subr.bf16.mxu0 0
        %1877 = vmatpush1.bf16.msra.mxu0 %v1860
        %1878 = vmatprep.subr.bf16.mxu0 0
        %1879 = vmatpush1.bf16.msra.mxu0 %v1861
        %1880 = vmatprep.subr.bf16.mxu0 0
        %1881 = vmatpush1.bf16.msra.mxu0 %v1862
        %1882 = vmatprep.subr.bf16.mxu0 0
        %1883 = vmatpush1.bf16.msra.mxu0 %v1863
        %1884 = vmatprep.subr.bf16.mxu0 0
        %1885 = vmatpush1.bf16.msra.mxu0 %v1864
        %1886 = vmatprep.subr.bf16.mxu0 0
        %1887 = vmatpush1.bf16.msra.mxu0 %v1865
        %1888 = vmatprep.subr.bf16.mxu0 0
        %1889 = vmatpush1.bf16.msra.mxu0 %v1866
        %1890 = vmatprep.subr.bf16.mxu0 0
        %1891 = vmatpush1.bf16.msra.mxu0 %v1867
        %1892 = vmatprep.subr.bf16.mxu0 0
        %1893 = vmatpush1.bf16.msra.mxu0 0
        %1894 = vmatprep.subr.bf16.mxu0 0
        %1895 = vmatpush1.bf16.msra.mxu0 0
        %1896 = vmatprep.subr.bf16.mxu0 0
        %1897 = vmatpush1.bf16.msra.mxu0 0
        %1898 = vmatprep.subr.bf16.mxu0 0
        %1899 = vmatpush1.bf16.msra.mxu0 0
        %1900 = vmatprep.subr.bf16.mxu0 0
        %1901 = vmatpush1.bf16.msra.mxu0 0
        %1902 = vmatprep.subr.bf16.mxu0 0
        %1903 = vmatpush1.bf16.msra.mxu0 0
        %1904 = vmatprep.subr.bf16.mxu0 0
        %1905 = vmatpush1.bf16.msra.mxu0 0
        %1906 = vmatprep.subr.bf16.mxu0 0
        %1907 = vmatpush1.bf16.msra.mxu0 0
        %1908 = vmatprep.mubr.bf16.mxu0 0
        %1909 = vmatmul.mubr.bf16.gmra.mrb[0].mxu0 %v1700
        %v1910 = vpop.f32.mrb[0].mxu0
        %v1911 = vadd.f32 %v1822, %v1910
        %v1912 = vpop.f32.mrb[0].mxu0
        %v1913 = vpop.f32.mrb[0].mxu0
        %v1914 = vadd.f32 %v1825, %v1913
        %v1915 = vpop.f32.mrb[0].mxu0
        %1916 = vdwg.mxu0
        %s1917 = scalar_lea.vmem [#allocation2], 2
        %v1918 = vld [vmem:[%s1917] ss:$2 sm:$0xff]
        %s1919 = scalar_lea.vmem [#allocation2], 18
        %v1920 = vld [vmem:[%s1919] ss:$2 sm:$0xff]
        %v1921 = vpack.c.bf16 %v1920, %v1918
        %s1922 = scalar_lea.vmem %s7, 128
        %v1923 = vld [vmem:[%s1922] sm:$0xf]
        %v1924 = vld [vmem:[%s1922 + $0x4] sm:$0xf]
        %v1925 = vld [vmem:[%s1922 + $0x8] sm:$0xf]
        %v1926 = vld [vmem:[%s1922 + $0xc] sm:$0xf]
        %v1927 = vld [vmem:[%s1922 + $0x10] sm:$0xf]
        %v1928 = vld [vmem:[%s1922 + $0x14] sm:$0xf]
        %v1929 = vld [vmem:[%s1922 + $0x18] sm:$0xf]
        %v1930 = vld [vmem:[%s1922 + $0x1c] sm:$0xf]
        %v1931 = vld [vmem:[%s1922 + $0x20] sm:$0xf]
        %v1932 = vld [vmem:[%s1922 + $0x24] sm:$0xf]
        %v1933 = vld [vmem:[%s1922 + $0x28] sm:$0xf]
        %v1934 = vld [vmem:[%s1922 + $0x2c] sm:$0xf]
        %v1935 = vld [vmem:[%s1922 + $0x30] sm:$0xf]
        %v1936 = vld [vmem:[%s1922 + $0x34] sm:$0xf]
        %v1937 = vld [vmem:[%s1922 + $0x38] sm:$0xf]
        %v1938 = vld [vmem:[%s1922 + $0x3c] sm:$0xf]
        %v1955 = vunpack.c.l.b16 %v1923
        %v1956 = vunpack.c.l.b16 %v1924
        %v1957 = vunpack.c.l.b16 %v1925
        %v1958 = vunpack.c.l.b16 %v1926
        %v1959 = vunpack.c.l.b16 %v1927
        %v1960 = vunpack.c.l.b16 %v1928
        %v1961 = vunpack.c.l.b16 %v1929
        %v1962 = vunpack.c.l.b16 %v1930
        %v1963 = vunpack.c.l.b16 %v1931
        %v1964 = vunpack.c.l.b16 %v1932
        %v1965 = vunpack.c.l.b16 %v1933
        %v1966 = vunpack.c.l.b16 %v1934
        %v1967 = vunpack.c.l.b16 %v1935
        %v1968 = vunpack.c.l.b16 %v1936
        %v1969 = vunpack.c.l.b16 %v1937
        %v1970 = vunpack.c.l.b16 %v1938
        %v1971 = vpack.c.b16 %v1956, %v1955
        %v1972 = vpack.c.b16 %v1958, %v1957
        %v1973 = vpack.c.b16 %v1960, %v1959
        %v1974 = vpack.c.b16 %v1962, %v1961
        %v1975 = vpack.c.b16 %v1964, %v1963
        %v1976 = vpack.c.b16 %v1966, %v1965
        %v1977 = vpack.c.b16 %v1968, %v1967
        %v1978 = vpack.c.b16 %v1970, %v1969
        %1987 = vmatprep.subr.bf16.mxu0 0
        %1988 = vmatpush1.bf16.msra.mxu0 %v1971
        %1989 = vmatprep.subr.bf16.mxu0 0
        %1990 = vmatpush1.bf16.msra.mxu0 %v1972
        %1991 = vmatprep.subr.bf16.mxu0 0
        %1992 = vmatpush1.bf16.msra.mxu0 %v1973
        %1993 = vmatprep.subr.bf16.mxu0 0
        %1994 = vmatpush1.bf16.msra.mxu0 %v1974
        %1995 = vmatprep.subr.bf16.mxu0 0
        %1996 = vmatpush1.bf16.msra.mxu0 %v1975
        %1997 = vmatprep.subr.bf16.mxu0 0
        %1998 = vmatpush1.bf16.msra.mxu0 %v1976
        %1999 = vmatprep.subr.bf16.mxu0 0
        %2000 = vmatpush1.bf16.msra.mxu0 %v1977
        %2001 = vmatprep.subr.bf16.mxu0 0
        %2002 = vmatpush1.bf16.msra.mxu0 %v1978
        %2003 = vmatprep.subr.bf16.mxu0 0
        %2004 = vmatpush1.bf16.msra.mxu0 0
        %2005 = vmatprep.subr.bf16.mxu0 0
        %2006 = vmatpush1.bf16.msra.mxu0 0
        %2007 = vmatprep.subr.bf16.mxu0 0
        %2008 = vmatpush1.bf16.msra.mxu0 0
        %2009 = vmatprep.subr.bf16.mxu0 0
        %2010 = vmatpush1.bf16.msra.mxu0 0
        %2011 = vmatprep.subr.bf16.mxu0 0
        %2012 = vmatpush1.bf16.msra.mxu0 0
        %2013 = vmatprep.subr.bf16.mxu0 0
        %2014 = vmatpush1.bf16.msra.mxu0 0
        %2015 = vmatprep.subr.bf16.mxu0 0
        %2016 = vmatpush1.bf16.msra.mxu0 0
        %2017 = vmatprep.subr.bf16.mxu0 0
        %2018 = vmatpush1.bf16.msra.mxu0 0
        %2019 = vmatprep.mubr.bf16.mxu0 0
        %2020 = vmatmul.mubr.bf16.gmra.mrb[0].mxu0 %v1921
        %v2021 = vpop.f32.mrb[0].mxu0
        %v2022 = vadd.f32 0.0, %v2021
        %v2023 = vpop.f32.mrb[0].mxu0
        %v2024 = vpop.f32.mrb[0].mxu0
        %v2025 = vadd.f32 0.0, %v2024
        %v2026 = vpop.f32.mrb[0].mxu0
        %2027 = vdwg.mxu0
        %v2028 = vadd.f32 %v1911, %v2022
        %v2029 = vadd.f32 %v1914, %v2025
        %v2030 = vunpack.c.l.bf16 %v1696
        %v2031 = vlaneseq
        %v2032 = vshrl.u32 %v2031, 7
        %v2033 = vsub.s32 0, %v2032
        %v2034 = vrot.slane %v2030, %v2033
        %v2035 = vadd.f32 %v2028, %v2034
        %v2036 = vadd.f32 %v2029, %v2034
        %v2037 = vmax.f32 %v2035, 0.0
        %v2038 = vmax.f32 %v2036, 0.0
        %2039 = vmatprep.subr.bf16.mxu0 0
        %2040 = vmatpush1.bf16.msra.mxu0 %v1771
        %2041 = vmatprep.subr.bf16.mxu0 0
        %2042 = vmatpush1.bf16.msra.mxu0 %v1772
        %2043 = vmatprep.subr.bf16.mxu0 0
        %2044 = vmatpush1.bf16.msra.mxu0 %v1773
        %2045 = vmatprep.subr.bf16.mxu0 0
        %2046 = vmatpush1.bf16.msra.mxu0 %v1774
        %2047 = vmatprep.subr.bf16.mxu0 0
        %2048 = vmatpush1.bf16.msra.mxu0 %v1775
        %2049 = vmatprep.subr.bf16.mxu0 0
        %2050 = vmatpush1.bf16.msra.mxu0 %v1776
        %2051 = vmatprep.subr.bf16.mxu0 0
        %2052 = vmatpush1.bf16.msra.mxu0 %v1777
        %2053 = vmatprep.subr.bf16.mxu0 0
        %2054 = vmatpush1.bf16.msra.mxu0 %v1778
        %2055 = vmatprep.subr.bf16.mxu0 0
        %2056 = vmatpush1.bf16.msra.mxu0 0
        %2057 = vmatprep.subr.bf16.mxu0 0
        %2058 = vmatpush1.bf16.msra.mxu0 0
        %2059 = vmatprep.subr.bf16.mxu0 0
        %2060 = vmatpush1.bf16.msra.mxu0 0
        %2061 = vmatprep.subr.bf16.mxu0 0
        %2062 = vmatpush1.bf16.msra.mxu0 0
        %2063 = vmatprep.subr.bf16.mxu0 0
        %2064 = vmatpush1.bf16.msra.mxu0 0
        %2065 = vmatprep.subr.bf16.mxu0 0
        %2066 = vmatpush1.bf16.msra.mxu0 0
        %2067 = vmatprep.subr.bf16.mxu0 0
        %2068 = vmatpush1.bf16.msra.mxu0 0
        %2069 = vmatprep.subr.bf16.mxu0 0
        %2070 = vmatpush1.bf16.msra.mxu0 0
        %2071 = vmatprep.mubr.bf16.mxu0 0
        %2072 = vmatmul.mubr.bf16.gmra.mrb[0].mxu0 %v1921
        %v2073 = vpop.f32.mrb[0].mxu0
        %v2074 = vadd.f32 0.0, %v2073
        %v2075 = vpop.f32.mrb[0].mxu0
        %v2076 = vpop.f32.mrb[0].mxu0
        %v2077 = vadd.f32 0.0, %v2076
        %v2078 = vpop.f32.mrb[0].mxu0
        %2079 = vdwg.mxu0
        %2080 = vmatprep.subr.bf16.mxu0 0
        %2081 = vmatpush1.bf16.msra.mxu0 %v1860
        %2082 = vmatprep.subr.bf16.mxu0 0
        %2083 = vmatpush1.bf16.msra.mxu0 %v1861
        %2084 = vmatprep.subr.bf16.mxu0 0
        %2085 = vmatpush1.bf16.msra.mxu0 %v1862
        %2086 = vmatprep.subr.bf16.mxu0 0
        %2087 = vmatpush1.bf16.msra.mxu0 %v1863
        %2088 = vmatprep.subr.bf16.mxu0 0
        %2089 = vmatpush1.bf16.msra.mxu0 %v1864
        %2090 = vmatprep.subr.bf16.mxu0 0
        %2091 = vmatpush1.bf16.msra.mxu0 %v1865
        %2092 = vmatprep.subr.bf16.mxu0 0
        %2093 = vmatpush1.bf16.msra.mxu0 %v1866
        %2094 = vmatprep.subr.bf16.mxu0 0
        %2095 = vmatpush1.bf16.msra.mxu0 %v1867
        %2096 = vmatprep.subr.bf16.mxu0 0
        %2097 = vmatpush1.bf16.msra.mxu0 0
        %2098 = vmatprep.subr.bf16.mxu0 0
        %2099 = vmatpush1.bf16.msra.mxu0 0
        %2100 = vmatprep.subr.bf16.mxu0 0
        %2101 = vmatpush1.bf16.msra.mxu0 0
        %2102 = vmatprep.subr.bf16.mxu0 0
        %2103 = vmatpush1.bf16.msra.mxu0 0
        %2104 = vmatprep.subr.bf16.mxu0 0
        %2105 = vmatpush1.bf16.msra.mxu0 0
        %2106 = vmatprep.subr.bf16.mxu0 0
        %2107 = vmatpush1.bf16.msra.mxu0 0
        %2108 = vmatprep.subr.bf16.mxu0 0
        %2109 = vmatpush1.bf16.msra.mxu0 0
        %2110 = vmatprep.subr.bf16.mxu0 0
        %2111 = vmatpush1.bf16.msra.mxu0 0
        %2112 = vmatprep.mubr.bf16.mxu0 0
        %2113 = vmatmul.mubr.bf16.gmra.mrb[0].mxu0 %v1721
        %v2114 = vpop.f32.mrb[0].mxu0
        %v2115 = vadd.f32 %v2074, %v2114
        %v2116 = vpop.f32.mrb[0].mxu0
        %v2117 = vpop.f32.mrb[0].mxu0
        %v2118 = vadd.f32 %v2077, %v2117
        %v2119 = vpop.f32.mrb[0].mxu0
        %2120 = vdwg.mxu0
        %s2121 = scalar_lea.vmem [#allocation2], 3
        %v2122 = vld [vmem:[%s2121] ss:$2 sm:$0xff]
        %s2123 = scalar_lea.vmem [#allocation2], 19
        %v2124 = vld [vmem:[%s2123] ss:$2 sm:$0xff]
        %v2125 = vpack.c.bf16 %v2124, %v2122
        %2126 = vmatprep.subr.bf16.mxu0 0
        %2127 = vmatpush1.bf16.msra.mxu0 %v1971
        %2128 = vmatprep.subr.bf16.mxu0 0
        %2129 = vmatpush1.bf16.msra.mxu0 %v1972
        %2130 = vmatprep.subr.bf16.mxu0 0
        %2131 = vmatpush1.bf16.msra.mxu0 %v1973
        %2132 = vmatprep.subr.bf16.mxu0 0
        %2133 = vmatpush1.bf16.msra.mxu0 %v1974
        %2134 = vmatprep.subr.bf16.mxu0 0
        %2135 = vmatpush1.bf16.msra.mxu0 %v1975
        %2136 = vmatprep.subr.bf16.mxu0 0
        %2137 = vmatpush1.bf16.msra.mxu0 %v1976
        %2138 = vmatprep.subr.bf16.mxu0 0
        %2139 = vmatpush1.bf16.msra.mxu0 %v1977
        %2140 = vmatprep.subr.bf16.mxu0 0
        %2141 = vmatpush1.bf16.msra.mxu0 %v1978
        %2142 = vmatprep.subr.bf16.mxu0 0
        %2143 = vmatpush1.bf16.msra.mxu0 0
        %2144 = vmatprep.subr.bf16.mxu0 0
        %2145 = vmatpush1.bf16.msra.mxu0 0
        %2146 = vmatprep.subr.bf16.mxu0 0
        %2147 = vmatpush1.bf16.msra.mxu0 0
        %2148 = vmatprep.subr.bf16.mxu0 0
        %2149 = vmatpush1.bf16.msra.mxu0 0
        %2150 = vmatprep.subr.bf16.mxu0 0
        %2151 = vmatpush1.bf16.msra.mxu0 0
        %2152 = vmatprep.subr.bf16.mxu0 0
        %2153 = vmatpush1.bf16.msra.mxu0 0
        %2154 = vmatprep.subr.bf16.mxu0 0
        %2155 = vmatpush1.bf16.msra.mxu0 0
        %2156 = vmatprep.subr.bf16.mxu0 0
        %2157 = vmatpush1.bf16.msra.mxu0 0
        %2158 = vmatprep.mubr.bf16.mxu0 0
        %2159 = vmatmul.mubr.bf16.gmra.mrb[0].mxu0 %v2125
        %v2160 = vpop.f32.mrb[0].mxu0
        %v2161 = vadd.f32 0.0, %v2160
        %v2162 = vpop.f32.mrb[0].mxu0
        %v2163 = vpop.f32.mrb[0].mxu0
        %v2164 = vadd.f32 0.0, %v2163
        %v2165 = vpop.f32.mrb[0].mxu0
        %2166 = vdwg.mxu0
        %v2167 = vadd.f32 %v2115, %v2161
        %v2168 = vadd.f32 %v2118, %v2164
        %v2169 = vadd.f32 %v2167, %v2034
        %v2170 = vadd.f32 %v2168, %v2034
        %v2171 = vmax.f32 %v2169, 0.0
        %v2172 = vmax.f32 %v2170, 0.0
        %v2173 = vmax.f32 %v2037, %v2171
        %v2174 = vmax.f32 %v2038, %v2172
        %2177 = vrot.lane.b32.xlu0 %v2173, 64
        %v2178 = vpop.permute.xlu0 %2177
        %2179 = vrot.lane.b32.xlu0 %v2174, 64
        %v2180 = vpop.permute.xlu0 %2179
        %v2183 = vmax.f32 %v2173, %v2178
        %v2184 = vmax.f32 %v2174, %v2180
        %vm2185 = vcmask 523264
        %2186 = vst.msk [vmem:[#allocation2 + $0x1] sm:$0xff] %vm2185, %v2183
        %2187 = vst.msk [vmem:[#allocation2 + $0x9] sm:$0xff] %vm2185, %v2184
        %vm2188 = vcmask 516096
        %2189 = vst.msk [vmem:[#allocation2] sm:$0x1] %vm2188, 0.0
        %2190 = vst.msk [vmem:[#allocation2 + $0x11] sm:$0x1] %vm2188, 0.0
        %v2191 = vld [vmem:[#allocation5] sm:$0x1]
        %v2192 = vld [vmem:[#allocation2] sm:$0xff]
        %v2193 = vld [vmem:[#allocation2 + $0x8] sm:$0xff]
        %v2194 = vpack.c.bf16 %v2193, %v2192
        %v2195 = vld [vmem:[%s11] sm:$0xf]
        %v2196 = vld [vmem:[%s11 + $0x4] sm:$0xf]
        %v2197 = vld [vmem:[%s11 + $0x8] sm:$0xf]
        %v2198 = vld [vmem:[%s11 + $0xc] sm:$0xf]
        %v2199 = vld [vmem:[%s11 + $0x10] sm:$0xf]
        %v2200 = vld [vmem:[%s11 + $0x14] sm:$0xf]
        %v2201 = vld [vmem:[%s11 + $0x18] sm:$0xf]
        %v2202 = vld [vmem:[%s11 + $0x1c] sm:$0xf]
        %v2203 = vld [vmem:[#allocation2 + $0x1] sm:$0xff]
        %v2204 = vld [vmem:[#allocation2 + $0x9] sm:$0xff]
        %v2205 = vpack.c.bf16 %v2204, %v2203
        %s2206 = scalar_lea.vmem %s11, 32
        %v2207 = vld [vmem:[%s2206] sm:$0xf]
        %v2208 = vld [vmem:[%s2206 + $0x4] sm:$0xf]
        %v2209 = vld [vmem:[%s2206 + $0x8] sm:$0xf]
        %v2210 = vld [vmem:[%s2206 + $0xc] sm:$0xf]
        %v2211 = vld [vmem:[%s2206 + $0x10] sm:$0xf]
        %v2212 = vld [vmem:[%s2206 + $0x14] sm:$0xf]
        %v2213 = vld [vmem:[%s2206 + $0x18] sm:$0xf]
        %v2214 = vld [vmem:[%s2206 + $0x1c] sm:$0xf]
        %v2223 = vunpack.c.l.b16 %v2207
        %v2224 = vunpack.c.l.b16 %v2208
        %v2225 = vunpack.c.l.b16 %v2209
        %v2226 = vunpack.c.l.b16 %v2210
        %v2227 = vunpack.c.l.b16 %v2211
        %v2228 = vunpack.c.l.b16 %v2212
        %v2229 = vunpack.c.l.b16 %v2213
        %v2230 = vunpack.c.l.b16 %v2214
        %v2231 = vpack.c.b16 %v2224, %v2223
        %v2232 = vpack.c.b16 %v2226, %v2225
        %v2233 = vpack.c.b16 %v2228, %v2227
        %v2234 = vpack.c.b16 %v2230, %v2229
        %v2240 = vsel %vm2185, %v2205, 0
        %2242 = vmatprep.subr.bf16.mxu0 0
        %2243 = vmatpush1.bf16.msra.mxu0 %v2231
        %2244 = vmatprep.subr.bf16.mxu0 0
        %2245 = vmatpush1.bf16.msra.mxu0 %v2232
        %2246 = vmatprep.subr.bf16.mxu0 0
        %2247 = vmatpush1.bf16.msra.mxu0 %v2233
        %2248 = vmatprep.subr.bf16.mxu0 0
        %2249 = vmatpush1.bf16.msra.mxu0 %v2234
        %2250 = vmatprep.subr.bf16.mxu0 0
        %2251 = vmatpush1.bf16.msra.mxu0 0
        %2252 = vmatprep.subr.bf16.mxu0 0
        %2253 = vmatpush1.bf16.msra.mxu0 0
        %2254 = vmatprep.subr.bf16.mxu0 0
        %2255 = vmatpush1.bf16.msra.mxu0 0
        %2256 = vmatprep.subr.bf16.mxu0 0
        %2257 = vmatpush1.bf16.msra.mxu0 0
        %2258 = vmatprep.subr.bf16.mxu0 0
        %2259 = vmatpush1.bf16.msra.mxu0 0
        %2260 = vmatprep.subr.bf16.mxu0 0
        %2261 = vmatpush1.bf16.msra.mxu0 0
        %2262 = vmatprep.subr.bf16.mxu0 0
        %2263 = vmatpush1.bf16.msra.mxu0 0
        %2264 = vmatprep.subr.bf16.mxu0 0
        %2265 = vmatpush1.bf16.msra.mxu0 0
        %2266 = vmatprep.subr.bf16.mxu0 0
        %2267 = vmatpush1.bf16.msra.mxu0 0
        %2268 = vmatprep.subr.bf16.mxu0 0
        %2269 = vmatpush1.bf16.msra.mxu0 0
        %2270 = vmatprep.subr.bf16.mxu0 0
        %2271 = vmatpush1.bf16.msra.mxu0 0
        %2272 = vmatprep.subr.bf16.mxu0 0
        %2273 = vmatpush1.bf16.msra.mxu0 0
        %2274 = vmatprep.mubr.bf16.mxu0 0
        %2275 = vmatmul.mubr.bf16.gmra.mrb[0].mxu0 %v2240
        %v2276 = vpop.f32.mrb[0].mxu0
        %v2277 = vadd.f32 0.0, %v2276
        %v2278 = vpop.f32.mrb[0].mxu0
        %v2279 = vpop.f32.mrb[0].mxu0
        %v2280 = vadd.f32 0.0, %v2279
        %v2281 = vpop.f32.mrb[0].mxu0
        %2282 = vdwg.mxu0
        %v2291 = vunpack.c.l.b16 %v2195
        %v2292 = vunpack.c.l.b16 %v2196
        %v2293 = vunpack.c.l.b16 %v2197
        %v2294 = vunpack.c.l.b16 %v2198
        %v2295 = vunpack.c.l.b16 %v2199
        %v2296 = vunpack.c.l.b16 %v2200
        %v2297 = vunpack.c.l.b16 %v2201
        %v2298 = vunpack.c.l.b16 %v2202
        %v2299 = vpack.c.b16 %v2292, %v2291
        %v2300 = vpack.c.b16 %v2294, %v2293
        %v2301 = vpack.c.b16 %v2296, %v2295
        %v2302 = vpack.c.b16 %v2298, %v2297
        %v2308 = vsel %vm2185, %v2194, 0
        %2310 = vmatprep.subr.bf16.mxu0 0
        %2311 = vmatpush1.bf16.msra.mxu0 %v2299
        %2312 = vmatprep.subr.bf16.mxu0 0
        %2313 = vmatpush1.bf16.msra.mxu0 %v2300
        %2314 = vmatprep.subr.bf16.mxu0 0
        %2315 = vmatpush1.bf16.msra.mxu0 %v2301
        %2316 = vmatprep.subr.bf16.mxu0 0
        %2317 = vmatpush1.bf16.msra.mxu0 %v2302
        %2318 = vmatprep.subr.bf16.mxu0 0
        %2319 = vmatpush1.bf16.msra.mxu0 0
        %2320 = vmatprep.subr.bf16.mxu0 0
        %2321 = vmatpush1.bf16.msra.mxu0 0
        %2322 = vmatprep.subr.bf16.mxu0 0
        %2323 = vmatpush1.bf16.msra.mxu0 0
        %2324 = vmatprep.subr.bf16.mxu0 0
        %2325 = vmatpush1.bf16.msra.mxu0 0
        %2326 = vmatprep.subr.bf16.mxu0 0
        %2327 = vmatpush1.bf16.msra.mxu0 0
        %2328 = vmatprep.subr.bf16.mxu0 0
        %2329 = vmatpush1.bf16.msra.mxu0 0
        %2330 = vmatprep.subr.bf16.mxu0 0
        %2331 = vmatpush1.bf16.msra.mxu0 0
        %2332 = vmatprep.subr.bf16.mxu0 0
        %2333 = vmatpush1.bf16.msra.mxu0 0
        %2334 = vmatprep.subr.bf16.mxu0 0
        %2335 = vmatpush1.bf16.msra.mxu0 0
        %2336 = vmatprep.subr.bf16.mxu0 0
        %2337 = vmatpush1.bf16.msra.mxu0 0
        %2338 = vmatprep.subr.bf16.mxu0 0
        %2339 = vmatpush1.bf16.msra.mxu0 0
        %2340 = vmatprep.subr.bf16.mxu0 0
        %2341 = vmatpush1.bf16.msra.mxu0 0
        %2342 = vmatprep.mubr.bf16.mxu0 0
        %2343 = vmatmul.mubr.bf16.gmra.mrb[0].mxu0 %v2308
        %v2344 = vpop.f32.mrb[0].mxu0
        %v2345 = vadd.f32 %v2277, %v2344
        %v2346 = vpop.f32.mrb[0].mxu0
        %v2347 = vpop.f32.mrb[0].mxu0
        %v2348 = vadd.f32 %v2280, %v2347
        %v2349 = vpop.f32.mrb[0].mxu0
        %2350 = vdwg.mxu0
        %v2351 = vld [vmem:[#allocation2 + $0x2] sm:$0xff]
        %v2352 = vld [vmem:[#allocation2 + $0xa] sm:$0xff]
        %v2353 = vpack.c.bf16 %v2352, %v2351
        %s2354 = scalar_lea.vmem %s11, 64
        %v2355 = vld [vmem:[%s2354] sm:$0xf]
        %v2356 = vld [vmem:[%s2354 + $0x4] sm:$0xf]
        %v2357 = vld [vmem:[%s2354 + $0x8] sm:$0xf]
        %v2358 = vld [vmem:[%s2354 + $0xc] sm:$0xf]
        %v2359 = vld [vmem:[%s2354 + $0x10] sm:$0xf]
        %v2360 = vld [vmem:[%s2354 + $0x14] sm:$0xf]
        %v2361 = vld [vmem:[%s2354 + $0x18] sm:$0xf]
        %v2362 = vld [vmem:[%s2354 + $0x1c] sm:$0xf]
        %v2371 = vunpack.c.l.b16 %v2355
        %v2372 = vunpack.c.l.b16 %v2356
        %v2373 = vunpack.c.l.b16 %v2357
        %v2374 = vunpack.c.l.b16 %v2358
        %v2375 = vunpack.c.l.b16 %v2359
        %v2376 = vunpack.c.l.b16 %v2360
        %v2377 = vunpack.c.l.b16 %v2361
        %v2378 = vunpack.c.l.b16 %v2362
        %v2379 = vpack.c.b16 %v2372, %v2371
        %v2380 = vpack.c.b16 %v2374, %v2373
        %v2381 = vpack.c.b16 %v2376, %v2375
        %v2382 = vpack.c.b16 %v2378, %v2377
        %v2388 = vsel %vm2185, %v2353, 0
        %2390 = vmatprep.subr.bf16.mxu0 0
        %2391 = vmatpush1.bf16.msra.mxu0 %v2379
        %2392 = vmatprep.subr.bf16.mxu0 0
        %2393 = vmatpush1.bf16.msra.mxu0 %v2380
        %2394 = vmatprep.subr.bf16.mxu0 0
        %2395 = vmatpush1.bf16.msra.mxu0 %v2381
        %2396 = vmatprep.subr.bf16.mxu0 0
        %2397 = vmatpush1.bf16.msra.mxu0 %v2382
        %2398 = vmatprep.subr.bf16.mxu0 0
        %2399 = vmatpush1.bf16.msra.mxu0 0
        %2400 = vmatprep.subr.bf16.mxu0 0
        %2401 = vmatpush1.bf16.msra.mxu0 0
        %2402 = vmatprep.subr.bf16.mxu0 0
        %2403 = vmatpush1.bf16.msra.mxu0 0
        %2404 = vmatprep.subr.bf16.mxu0 0
        %2405 = vmatpush1.bf16.msra.mxu0 0
        %2406 = vmatprep.subr.bf16.mxu0 0
        %2407 = vmatpush1.bf16.msra.mxu0 0
        %2408 = vmatprep.subr.bf16.mxu0 0
        %2409 = vmatpush1.bf16.msra.mxu0 0
        %2410 = vmatprep.subr.bf16.mxu0 0
        %2411 = vmatpush1.bf16.msra.mxu0 0
        %2412 = vmatprep.subr.bf16.mxu0 0
        %2413 = vmatpush1.bf16.msra.mxu0 0
        %2414 = vmatprep.subr.bf16.mxu0 0
        %2415 = vmatpush1.bf16.msra.mxu0 0
        %2416 = vmatprep.subr.bf16.mxu0 0
        %2417 = vmatpush1.bf16.msra.mxu0 0
        %2418 = vmatprep.subr.bf16.mxu0 0
        %2419 = vmatpush1.bf16.msra.mxu0 0
        %2420 = vmatprep.subr.bf16.mxu0 0
        %2421 = vmatpush1.bf16.msra.mxu0 0
        %2422 = vmatprep.mubr.bf16.mxu0 0
        %2423 = vmatmul.mubr.bf16.gmra.mrb[0].mxu0 %v2388
        %v2424 = vpop.f32.mrb[0].mxu0
        %v2425 = vadd.f32 0.0, %v2424
        %v2426 = vpop.f32.mrb[0].mxu0
        %v2427 = vpop.f32.mrb[0].mxu0
        %v2428 = vadd.f32 0.0, %v2427
        %v2429 = vpop.f32.mrb[0].mxu0
        %2430 = vdwg.mxu0
        %v2431 = vadd.f32 %v2345, %v2425
        %v2432 = vadd.f32 %v2348, %v2428
        %v2433 = vunpack.c.l.bf16 %v2191
        %v2434 = vlaneseq
        %v2435 = vshrl.u32 %v2434, 7
        %v2436 = vsub.s32 0, %v2435
        %v2437 = vrot.slane %v2433, %v2436
        %v2438 = vadd.f32 %v2431, %v2437
        %v2439 = vadd.f32 %v2432, %v2437
        %v2440 = vmax.f32 %v2438, 0.0
        %v2441 = vmax.f32 %v2439, 0.0
        %2442 = vst [vmem:[#allocation2 + $0x1] sm:$0xff] %v2440
        %2443 = vst [vmem:[#allocation2 + $0x9] sm:$0xff] %v2441
        %2444 = vst [vmem:[#allocation2] sm:$0x1] 0.0
        %2445 = vst [vmem:[#allocation2 + $0x11] sm:$0x1] 0.0
        %v2446 = vld [vmem:[#allocation7] sm:$0x1]
        %v2447 = vld [vmem:[#allocation2] ss:$2 sm:$0xff]
        %v2448 = vpack.c.bf16 %v2447, %v2447
        %v2449 = vld [vmem:[%s15] sm:$0xf]
        %v2450 = vld [vmem:[%s15 + $0x4] sm:$0xf]
        %v2451 = vld [vmem:[%s15 + $0x8] sm:$0xf]
        %v2452 = vld [vmem:[%s15 + $0xc] sm:$0xf]
        %v2453 = vld [vmem:[%s15 + $0x10] sm:$0xf]
        %v2454 = vld [vmem:[%s15 + $0x14] sm:$0xf]
        %v2455 = vld [vmem:[%s15 + $0x18] sm:$0xf]
        %v2456 = vld [vmem:[%s15 + $0x1c] sm:$0xf]
        %v2457 = vld [vmem:[%s15 + $0x20] sm:$0xf]
        %v2458 = vld [vmem:[%s15 + $0x24] sm:$0xf]
        %v2459 = vld [vmem:[%s15 + $0x28] sm:$0xf]
        %v2460 = vld [vmem:[%s15 + $0x2c] sm:$0xf]
        %v2461 = vld [vmem:[%s15 + $0x30] sm:$0xf]
        %v2462 = vld [vmem:[%s15 + $0x34] sm:$0xf]
        %v2463 = vld [vmem:[%s15 + $0x38] sm:$0xf]
        %v2464 = vld [vmem:[%s15 + $0x3c] sm:$0xf]
        %v2465 = vld [vmem:[%s1717] ss:$2 sm:$0xff]
        %v2466 = vpack.c.bf16 %v2465, %v2465
        %s2467 = scalar_lea.vmem %s15, 64
        %v2468 = vld [vmem:[%s2467] sm:$0xf]
        %v2469 = vld [vmem:[%s2467 + $0x4] sm:$0xf]
        %v2470 = vld [vmem:[%s2467 + $0x8] sm:$0xf]
        %v2471 = vld [vmem:[%s2467 + $0xc] sm:$0xf]
        %v2472 = vld [vmem:[%s2467 + $0x10] sm:$0xf]
        %v2473 = vld [vmem:[%s2467 + $0x14] sm:$0xf]
        %v2474 = vld [vmem:[%s2467 + $0x18] sm:$0xf]
        %v2475 = vld [vmem:[%s2467 + $0x1c] sm:$0xf]
        %v2476 = vld [vmem:[%s2467 + $0x20] sm:$0xf]
        %v2477 = vld [vmem:[%s2467 + $0x24] sm:$0xf]
        %v2478 = vld [vmem:[%s2467 + $0x28] sm:$0xf]
        %v2479 = vld [vmem:[%s2467 + $0x2c] sm:$0xf]
        %v2480 = vld [vmem:[%s2467 + $0x30] sm:$0xf]
        %v2481 = vld [vmem:[%s2467 + $0x34] sm:$0xf]
        %v2482 = vld [vmem:[%s2467 + $0x38] sm:$0xf]
        %v2483 = vld [vmem:[%s2467 + $0x3c] sm:$0xf]
        %v2500 = vunpack.c.l.b16 %v2468
        %v2501 = vunpack.c.l.b16 %v2469
        %v2502 = vunpack.c.l.b16 %v2470
        %v2503 = vunpack.c.l.b16 %v2471
        %v2504 = vunpack.c.l.b16 %v2472
        %v2505 = vunpack.c.l.b16 %v2473
        %v2506 = vunpack.c.l.b16 %v2474
        %v2507 = vunpack.c.l.b16 %v2475
        %v2508 = vunpack.c.l.b16 %v2476
        %v2509 = vunpack.c.l.b16 %v2477
        %v2510 = vunpack.c.l.b16 %v2478
        %v2511 = vunpack.c.l.b16 %v2479
        %v2512 = vunpack.c.l.b16 %v2480
        %v2513 = vunpack.c.l.b16 %v2481
        %v2514 = vunpack.c.l.b16 %v2482
        %v2515 = vunpack.c.l.b16 %v2483
        %v2516 = vpack.c.b16 %v2501, %v2500
        %v2517 = vpack.c.b16 %v2503, %v2502
        %v2518 = vpack.c.b16 %v2505, %v2504
        %v2519 = vpack.c.b16 %v2507, %v2506
        %v2520 = vpack.c.b16 %v2509, %v2508
        %v2521 = vpack.c.b16 %v2511, %v2510
        %v2522 = vpack.c.b16 %v2513, %v2512
        %v2523 = vpack.c.b16 %v2515, %v2514
        %2532 = vmatprep.subr.bf16.mxu0 0
        %2533 = vmatpush1.bf16.msra.mxu0 %v2516
        %2534 = vmatprep.subr.bf16.mxu0 0
        %2535 = vmatpush1.bf16.msra.mxu0 %v2517
        %2536 = vmatprep.subr.bf16.mxu0 0
        %2537 = vmatpush1.bf16.msra.mxu0 %v2518
        %2538 = vmatprep.subr.bf16.mxu0 0
        %2539 = vmatpush1.bf16.msra.mxu0 %v2519
        %2540 = vmatprep.subr.bf16.mxu0 0
        %2541 = vmatpush1.bf16.msra.mxu0 %v2520
        %2542 = vmatprep.subr.bf16.mxu0 0
        %2543 = vmatpush1.bf16.msra.mxu0 %v2521
        %2544 = vmatprep.subr.bf16.mxu0 0
        %2545 = vmatpush1.bf16.msra.mxu0 %v2522
        %2546 = vmatprep.subr.bf16.mxu0 0
        %2547 = vmatpush1.bf16.msra.mxu0 %v2523
        %2548 = vmatprep.subr.bf16.mxu0 0
        %2549 = vmatpush1.bf16.msra.mxu0 0
        %2550 = vmatprep.subr.bf16.mxu0 0
        %2551 = vmatpush1.bf16.msra.mxu0 0
        %2552 = vmatprep.subr.bf16.mxu0 0
        %2553 = vmatpush1.bf16.msra.mxu0 0
        %2554 = vmatprep.subr.bf16.mxu0 0
        %2555 = vmatpush1.bf16.msra.mxu0 0
        %2556 = vmatprep.subr.bf16.mxu0 0
        %2557 = vmatpush1.bf16.msra.mxu0 0
        %2558 = vmatprep.subr.bf16.mxu0 0
        %2559 = vmatpush1.bf16.msra.mxu0 0
        %2560 = vmatprep.subr.bf16.mxu0 0
        %2561 = vmatpush1.bf16.msra.mxu0 0
        %2562 = vmatprep.subr.bf16.mxu0 0
        %2563 = vmatpush1.bf16.msra.mxu0 0
        %2564 = vmatprep.mubr.bf16.mxu0 0
        %2565 = vmatmul.mubr.bf16.gmra.mrb[0].mxu0 %v2466
        %v2566 = vpop.f32.mrb[0].mxu0
        %v2567 = vadd.f32 0.0, %v2566
        %v2568 = vpop.f32.mrb[0].mxu0
        %v2569 = vpop.f32.mrb[0].mxu0
        %v2570 = vpop.f32.mrb[0].mxu0
        %2571 = vdwg.mxu0
        %v2588 = vunpack.c.l.b16 %v2449
        %v2589 = vunpack.c.l.b16 %v2450
        %v2590 = vunpack.c.l.b16 %v2451
        %v2591 = vunpack.c.l.b16 %v2452
        %v2592 = vunpack.c.l.b16 %v2453
        %v2593 = vunpack.c.l.b16 %v2454
        %v2594 = vunpack.c.l.b16 %v2455
        %v2595 = vunpack.c.l.b16 %v2456
        %v2596 = vunpack.c.l.b16 %v2457
        %v2597 = vunpack.c.l.b16 %v2458
        %v2598 = vunpack.c.l.b16 %v2459
        %v2599 = vunpack.c.l.b16 %v2460
        %v2600 = vunpack.c.l.b16 %v2461
        %v2601 = vunpack.c.l.b16 %v2462
        %v2602 = vunpack.c.l.b16 %v2463
        %v2603 = vunpack.c.l.b16 %v2464
        %v2604 = vpack.c.b16 %v2589, %v2588
        %v2605 = vpack.c.b16 %v2591, %v2590
        %v2606 = vpack.c.b16 %v2593, %v2592
        %v2607 = vpack.c.b16 %v2595, %v2594
        %v2608 = vpack.c.b16 %v2597, %v2596
        %v2609 = vpack.c.b16 %v2599, %v2598
        %v2610 = vpack.c.b16 %v2601, %v2600
        %v2611 = vpack.c.b16 %v2603, %v2602
        %2620 = vmatprep.subr.bf16.mxu0 0
        %2621 = vmatpush1.bf16.msra.mxu0 %v2604
        %2622 = vmatprep.subr.bf16.mxu0 0
        %2623 = vmatpush1.bf16.msra.mxu0 %v2605
        %2624 = vmatprep.subr.bf16.mxu0 0
        %2625 = vmatpush1.bf16.msra.mxu0 %v2606
        %2626 = vmatprep.subr.bf16.mxu0 0
        %2627 = vmatpush1.bf16.msra.mxu0 %v2607
        %2628 = vmatprep.subr.bf16.mxu0 0
        %2629 = vmatpush1.bf16.msra.mxu0 %v2608
        %2630 = vmatprep.subr.bf16.mxu0 0
        %2631 = vmatpush1.bf16.msra.mxu0 %v2609
        %2632 = vmatprep.subr.bf16.mxu0 0
        %2633 = vmatpush1.bf16.msra.mxu0 %v2610
        %2634 = vmatprep.subr.bf16.mxu0 0
        %2635 = vmatpush1.bf16.msra.mxu0 %v2611
        %2636 = vmatprep.subr.bf16.mxu0 0
        %2637 = vmatpush1.bf16.msra.mxu0 0
        %2638 = vmatprep.subr.bf16.mxu0 0
        %2639 = vmatpush1.bf16.msra.mxu0 0
        %2640 = vmatprep.subr.bf16.mxu0 0
        %2641 = vmatpush1.bf16.msra.mxu0 0
        %2642 = vmatprep.subr.bf16.mxu0 0
        %2643 = vmatpush1.bf16.msra.mxu0 0
        %2644 = vmatprep.subr.bf16.mxu0 0
        %2645 = vmatpush1.bf16.msra.mxu0 0
        %2646 = vmatprep.subr.bf16.mxu0 0
        %2647 = vmatpush1.bf16.msra.mxu0 0
        %2648 = vmatprep.subr.bf16.mxu0 0
        %2649 = vmatpush1.bf16.msra.mxu0 0
        %2650 = vmatprep.subr.bf16.mxu0 0
        %2651 = vmatpush1.bf16.msra.mxu0 0
        %2652 = vmatprep.mubr.bf16.mxu0 0
        %2653 = vmatmul.mubr.bf16.gmra.mrb[0].mxu0 %v2448
        %v2654 = vpop.f32.mrb[0].mxu0
        %v2655 = vadd.f32 %v2567, %v2654
        %v2656 = vpop.f32.mrb[0].mxu0
        %v2657 = vpop.f32.mrb[0].mxu0
        %v2658 = vpop.f32.mrb[0].mxu0
        %2659 = vdwg.mxu0
        %s2660 = scalar_lea.vmem [#allocation2], 2
        %v2661 = vld [vmem:[%s2660] ss:$2 sm:$0xff]
        %v2662 = vpack.c.bf16 %v2661, %v2661
        %s2663 = scalar_lea.vmem %s15, 128
        %v2664 = vld [vmem:[%s2663] sm:$0xf]
        %v2665 = vld [vmem:[%s2663 + $0x4] sm:$0xf]
        %v2666 = vld [vmem:[%s2663 + $0x8] sm:$0xf]
        %v2667 = vld [vmem:[%s2663 + $0xc] sm:$0xf]
        %v2668 = vld [vmem:[%s2663 + $0x10] sm:$0xf]
        %v2669 = vld [vmem:[%s2663 + $0x14] sm:$0xf]
        %v2670 = vld [vmem:[%s2663 + $0x18] sm:$0xf]
        %v2671 = vld [vmem:[%s2663 + $0x1c] sm:$0xf]
        %v2672 = vld [vmem:[%s2663 + $0x20] sm:$0xf]
        %v2673 = vld [vmem:[%s2663 + $0x24] sm:$0xf]
        %v2674 = vld [vmem:[%s2663 + $0x28] sm:$0xf]
        %v2675 = vld [vmem:[%s2663 + $0x2c] sm:$0xf]
        %v2676 = vld [vmem:[%s2663 + $0x30] sm:$0xf]
        %v2677 = vld [vmem:[%s2663 + $0x34] sm:$0xf]
        %v2678 = vld [vmem:[%s2663 + $0x38] sm:$0xf]
        %v2679 = vld [vmem:[%s2663 + $0x3c] sm:$0xf]
        %v2696 = vunpack.c.l.b16 %v2664
        %v2697 = vunpack.c.l.b16 %v2665
        %v2698 = vunpack.c.l.b16 %v2666
        %v2699 = vunpack.c.l.b16 %v2667
        %v2700 = vunpack.c.l.b16 %v2668
        %v2701 = vunpack.c.l.b16 %v2669
        %v2702 = vunpack.c.l.b16 %v2670
        %v2703 = vunpack.c.l.b16 %v2671
        %v2704 = vunpack.c.l.b16 %v2672
        %v2705 = vunpack.c.l.b16 %v2673
        %v2706 = vunpack.c.l.b16 %v2674
        %v2707 = vunpack.c.l.b16 %v2675
        %v2708 = vunpack.c.l.b16 %v2676
        %v2709 = vunpack.c.l.b16 %v2677
        %v2710 = vunpack.c.l.b16 %v2678
        %v2711 = vunpack.c.l.b16 %v2679
        %v2712 = vpack.c.b16 %v2697, %v2696
        %v2713 = vpack.c.b16 %v2699, %v2698
        %v2714 = vpack.c.b16 %v2701, %v2700
        %v2715 = vpack.c.b16 %v2703, %v2702
        %v2716 = vpack.c.b16 %v2705, %v2704
        %v2717 = vpack.c.b16 %v2707, %v2706
        %v2718 = vpack.c.b16 %v2709, %v2708
        %v2719 = vpack.c.b16 %v2711, %v2710
        %2728 = vmatprep.subr.bf16.mxu0 0
        %2729 = vmatpush1.bf16.msra.mxu0 %v2712
        %2730 = vmatprep.subr.bf16.mxu0 0
        %2731 = vmatpush1.bf16.msra.mxu0 %v2713
        %2732 = vmatprep.subr.bf16.mxu0 0
        %2733 = vmatpush1.bf16.msra.mxu0 %v2714
        %2734 = vmatprep.subr.bf16.mxu0 0
        %2735 = vmatpush1.bf16.msra.mxu0 %v2715
        %2736 = vmatprep.subr.bf16.mxu0 0
        %2737 = vmatpush1.bf16.msra.mxu0 %v2716
        %2738 = vmatprep.subr.bf16.mxu0 0
        %2739 = vmatpush1.bf16.msra.mxu0 %v2717
        %2740 = vmatprep.subr.bf16.mxu0 0
        %2741 = vmatpush1.bf16.msra.mxu0 %v2718
        %2742 = vmatprep.subr.bf16.mxu0 0
        %2743 = vmatpush1.bf16.msra.mxu0 %v2719
        %2744 = vmatprep.subr.bf16.mxu0 0
        %2745 = vmatpush1.bf16.msra.mxu0 0
        %2746 = vmatprep.subr.bf16.mxu0 0
        %2747 = vmatpush1.bf16.msra.mxu0 0
        %2748 = vmatprep.subr.bf16.mxu0 0
        %2749 = vmatpush1.bf16.msra.mxu0 0
        %2750 = vmatprep.subr.bf16.mxu0 0
        %2751 = vmatpush1.bf16.msra.mxu0 0
        %2752 = vmatprep.subr.bf16.mxu0 0
        %2753 = vmatpush1.bf16.msra.mxu0 0
        %2754 = vmatprep.subr.bf16.mxu0 0
        %2755 = vmatpush1.bf16.msra.mxu0 0
        %2756 = vmatprep.subr.bf16.mxu0 0
        %2757 = vmatpush1.bf16.msra.mxu0 0
        %2758 = vmatprep.subr.bf16.mxu0 0
        %2759 = vmatpush1.bf16.msra.mxu0 0
        %2760 = vmatprep.mubr.bf16.mxu0 0
        %2761 = vmatmul.mubr.bf16.gmra.mrb[0].mxu0 %v2662
        %v2762 = vpop.f32.mrb[0].mxu0
        %v2763 = vadd.f32 0.0, %v2762
        %v2764 = vpop.f32.mrb[0].mxu0
        %v2765 = vpop.f32.mrb[0].mxu0
        %v2766 = vpop.f32.mrb[0].mxu0
        %2767 = vdwg.mxu0
        %v2768 = vadd.f32 %v2655, %v2763
        %v2769 = vunpack.c.l.bf16 %v2446
        %v2770 = vlaneseq
        %v2771 = vshrl.u32 %v2770, 7
        %v2772 = vsub.s32 0, %v2771
        %v2773 = vrot.slane %v2769, %v2772
        %v2774 = vadd.f32 %v2768, %v2773
        %v2775 = vmax.f32 %v2774, 0.0
        %2776 = vmatprep.subr.bf16.mxu0 0
        %2777 = vmatpush1.bf16.msra.mxu0 %v2516
        %2778 = vmatprep.subr.bf16.mxu0 0
        %2779 = vmatpush1.bf16.msra.mxu0 %v2517
        %2780 = vmatprep.subr.bf16.mxu0 0
        %2781 = vmatpush1.bf16.msra.mxu0 %v2518
        %2782 = vmatprep.subr.bf16.mxu0 0
        %2783 = vmatpush1.bf16.msra.mxu0 %v2519
        %2784 = vmatprep.subr.bf16.mxu0 0
        %2785 = vmatpush1.bf16.msra.mxu0 %v2520
        %2786 = vmatprep.subr.bf16.mxu0 0
        %2787 = vmatpush1.bf16.msra.mxu0 %v2521
        %2788 = vmatprep.subr.bf16.mxu0 0
        %2789 = vmatpush1.bf16.msra.mxu0 %v2522
        %2790 = vmatprep.subr.bf16.mxu0 0
        %2791 = vmatpush1.bf16.msra.mxu0 %v2523
        %2792 = vmatprep.subr.bf16.mxu0 0
        %2793 = vmatpush1.bf16.msra.mxu0 0
        %2794 = vmatprep.subr.bf16.mxu0 0
        %2795 = vmatpush1.bf16.msra.mxu0 0
        %2796 = vmatprep.subr.bf16.mxu0 0
        %2797 = vmatpush1.bf16.msra.mxu0 0
        %2798 = vmatprep.subr.bf16.mxu0 0
        %2799 = vmatpush1.bf16.msra.mxu0 0
        %2800 = vmatprep.subr.bf16.mxu0 0
        %2801 = vmatpush1.bf16.msra.mxu0 0
        %2802 = vmatprep.subr.bf16.mxu0 0
        %2803 = vmatpush1.bf16.msra.mxu0 0
        %2804 = vmatprep.subr.bf16.mxu0 0
        %2805 = vmatpush1.bf16.msra.mxu0 0
        %2806 = vmatprep.subr.bf16.mxu0 0
        %2807 = vmatpush1.bf16.msra.mxu0 0
        %2808 = vmatprep.mubr.bf16.mxu0 0
        %2809 = vmatmul.mubr.bf16.gmra.mrb[0].mxu0 %v2662
        %v2810 = vpop.f32.mrb[0].mxu0
        %v2811 = vadd.f32 0.0, %v2810
        %v2812 = vpop.f32.mrb[0].mxu0
        %v2813 = vpop.f32.mrb[0].mxu0
        %v2814 = vpop.f32.mrb[0].mxu0
        %2815 = vdwg.mxu0
        %2816 = vmatprep.subr.bf16.mxu0 0
        %2817 = vmatpush1.bf16.msra.mxu0 %v2604
        %2818 = vmatprep.subr.bf16.mxu0 0
        %2819 = vmatpush1.bf16.msra.mxu0 %v2605
        %2820 = vmatprep.subr.bf16.mxu0 0
        %2821 = vmatpush1.bf16.msra.mxu0 %v2606
        %2822 = vmatprep.subr.bf16.mxu0 0
        %2823 = vmatpush1.bf16.msra.mxu0 %v2607
        %2824 = vmatprep.subr.bf16.mxu0 0
        %2825 = vmatpush1.bf16.msra.mxu0 %v2608
        %2826 = vmatprep.subr.bf16.mxu0 0
        %2827 = vmatpush1.bf16.msra.mxu0 %v2609
        %2828 = vmatprep.subr.bf16.mxu0 0
        %2829 = vmatpush1.bf16.msra.mxu0 %v2610
        %2830 = vmatprep.subr.bf16.mxu0 0
        %2831 = vmatpush1.bf16.msra.mxu0 %v2611
        %2832 = vmatprep.subr.bf16.mxu0 0
        %2833 = vmatpush1.bf16.msra.mxu0 0
        %2834 = vmatprep.subr.bf16.mxu0 0
        %2835 = vmatpush1.bf16.msra.mxu0 0
        %2836 = vmatprep.subr.bf16.mxu0 0
        %2837 = vmatpush1.bf16.msra.mxu0 0
        %2838 = vmatprep.subr.bf16.mxu0 0
        %2839 = vmatpush1.bf16.msra.mxu0 0
        %2840 = vmatprep.subr.bf16.mxu0 0
        %2841 = vmatpush1.bf16.msra.mxu0 0
        %2842 = vmatprep.subr.bf16.mxu0 0
        %2843 = vmatpush1.bf16.msra.mxu0 0
        %2844 = vmatprep.subr.bf16.mxu0 0
        %2845 = vmatpush1.bf16.msra.mxu0 0
        %2846 = vmatprep.subr.bf16.mxu0 0
        %2847 = vmatpush1.bf16.msra.mxu0 0
        %2848 = vmatprep.mubr.bf16.mxu0 0
        %2849 = vmatmul.mubr.bf16.gmra.mrb[0].mxu0 %v2466
        %v2850 = vpop.f32.mrb[0].mxu0
        %v2851 = vadd.f32 %v2811, %v2850
        %v2852 = vpop.f32.mrb[0].mxu0
        %v2853 = vpop.f32.mrb[0].mxu0
        %v2854 = vpop.f32.mrb[0].mxu0
        %2855 = vdwg.mxu0
        %v2856 = vld [vmem:[%s2121] ss:$2 sm:$0xff]
        %v2857 = vpack.c.bf16 %v2856, %v2856
        %2858 = vmatprep.subr.bf16.mxu0 0
        %2859 = vmatpush1.bf16.msra.mxu0 %v2712
        %2860 = vmatprep.subr.bf16.mxu0 0
        %2861 = vmatpush1.bf16.msra.mxu0 %v2713
        %2862 = vmatprep.subr.bf16.mxu0 0
        %2863 = vmatpush1.bf16.msra.mxu0 %v2714
        %2864 = vmatprep.subr.bf16.mxu0 0
        %2865 = vmatpush1.bf16.msra.mxu0 %v2715
        %2866 = vmatprep.subr.bf16.mxu0 0
        %2867 = vmatpush1.bf16.msra.mxu0 %v2716
        %2868 = vmatprep.subr.bf16.mxu0 0
        %2869 = vmatpush1.bf16.msra.mxu0 %v2717
        %2870 = vmatprep.subr.bf16.mxu0 0
        %2871 = vmatpush1.bf16.msra.mxu0 %v2718
        %2872 = vmatprep.subr.bf16.mxu0 0
        %2873 = vmatpush1.bf16.msra.mxu0 %v2719
        %2874 = vmatprep.subr.bf16.mxu0 0
        %2875 = vmatpush1.bf16.msra.mxu0 0
        %2876 = vmatprep.subr.bf16.mxu0 0
        %2877 = vmatpush1.bf16.msra.mxu0 0
        %2878 = vmatprep.subr.bf16.mxu0 0
        %2879 = vmatpush1.bf16.msra.mxu0 0
        %2880 = vmatprep.subr.bf16.mxu0 0
        %2881 = vmatpush1.bf16.msra.mxu0 0
        %2882 = vmatprep.subr.bf16.mxu0 0
        %2883 = vmatpush1.bf16.msra.mxu0 0
        %2884 = vmatprep.subr.bf16.mxu0 0
        %2885 = vmatpush1.bf16.msra.mxu0 0
        %2886 = vmatprep.subr.bf16.mxu0 0
        %2887 = vmatpush1.bf16.msra.mxu0 0
        %2888 = vmatprep.subr.bf16.mxu0 0
        %2889 = vmatpush1.bf16.msra.mxu0 0
        %2890 = vmatprep.mubr.bf16.mxu0 0
        %2891 = vmatmul.mubr.bf16.gmra.mrb[0].mxu0 %v2857
        %v2892 = vpop.f32.mrb[0].mxu0
        %v2893 = vadd.f32 0.0, %v2892
        %v2894 = vpop.f32.mrb[0].mxu0
        %v2895 = vpop.f32.mrb[0].mxu0
        %v2896 = vpop.f32.mrb[0].mxu0
        %2897 = vdwg.mxu0
        %v2898 = vadd.f32 %v2851, %v2893
        %v2899 = vadd.f32 %v2898, %v2773
        %v2900 = vmax.f32 %v2899, 0.0
        %v2901 = vmax.f32 %v2775, %v2900
        %2903 = vrot.lane.b32.xlu0 %v2901, 64
        %v2904 = vpop.permute.xlu0 %2903
        %v2906 = vmax.f32 %v2901, %v2904
        %2907 = vst.msk [vmem:[#allocation2 + $0x1] sm:$0xff] %vm2185, %v2906
        %2908 = vst.msk [vmem:[#allocation2] sm:$0x1] %vm2188, 0.0
        %2909 = vst.msk [vmem:[#allocation2 + $0x9] sm:$0x1] %vm2188, 0.0
        %v2910 = vld [vmem:[#allocation10] sm:$0x1]
        %v2911 = vld [vmem:[#allocation2] sm:$0xff]
        %v2912 = vpack.c.bf16 %v2911, %v2911
        %v2913 = vld [vmem:[#allocation8] sm:$0xf]
        %v2914 = vld [vmem:[#allocation8 + $0x4] sm:$0xf]
        %v2915 = vld [vmem:[#allocation8 + $0x8] sm:$0xf]
        %v2916 = vld [vmem:[#allocation8 + $0xc] sm:$0xf]
        %v2917 = vld [vmem:[#allocation8 + $0x10] sm:$0xf]
        %v2918 = vld [vmem:[#allocation8 + $0x14] sm:$0xf]
        %v2919 = vld [vmem:[#allocation8 + $0x18] sm:$0xf]
        %v2920 = vld [vmem:[#allocation8 + $0x1c] sm:$0xf]
        %v2921 = vld [vmem:[#allocation2 + $0x1] sm:$0xff]
        %v2922 = vpack.c.bf16 %v2921, %v2921
        %s2923 = scalar_lea.vmem [#allocation8], 32
        %v2924 = vld [vmem:[%s2923] sm:$0xf]
        %v2925 = vld [vmem:[%s2923 + $0x4] sm:$0xf]
        %v2926 = vld [vmem:[%s2923 + $0x8] sm:$0xf]
        %v2927 = vld [vmem:[%s2923 + $0xc] sm:$0xf]
        %v2928 = vld [vmem:[%s2923 + $0x10] sm:$0xf]
        %v2929 = vld [vmem:[%s2923 + $0x14] sm:$0xf]
        %v2930 = vld [vmem:[%s2923 + $0x18] sm:$0xf]
        %v2931 = vld [vmem:[%s2923 + $0x1c] sm:$0xf]
        %v2940 = vunpack.c.l.b16 %v2924
        %v2941 = vunpack.c.l.b16 %v2925
        %v2942 = vunpack.c.l.b16 %v2926
        %v2943 = vunpack.c.l.b16 %v2927
        %v2944 = vunpack.c.l.b16 %v2928
        %v2945 = vunpack.c.l.b16 %v2929
        %v2946 = vunpack.c.l.b16 %v2930
        %v2947 = vunpack.c.l.b16 %v2931
        %v2948 = vpack.c.b16 %v2941, %v2940
        %v2949 = vpack.c.b16 %v2943, %v2942
        %v2950 = vpack.c.b16 %v2945, %v2944
        %v2951 = vpack.c.b16 %v2947, %v2946
        %v2957 = vsel %vm2185, %v2922, 0
        %2959 = vmatprep.subr.bf16.mxu0 0
        %2960 = vmatpush1.bf16.msra.mxu0 %v2948
        %2961 = vmatprep.subr.bf16.mxu0 0
        %2962 = vmatpush1.bf16.msra.mxu0 %v2949
        %2963 = vmatprep.subr.bf16.mxu0 0
        %2964 = vmatpush1.bf16.msra.mxu0 %v2950
        %2965 = vmatprep.subr.bf16.mxu0 0
        %2966 = vmatpush1.bf16.msra.mxu0 %v2951
        %2967 = vmatprep.subr.bf16.mxu0 0
        %2968 = vmatpush1.bf16.msra.mxu0 0
        %2969 = vmatprep.subr.bf16.mxu0 0
        %2970 = vmatpush1.bf16.msra.mxu0 0
        %2971 = vmatprep.subr.bf16.mxu0 0
        %2972 = vmatpush1.bf16.msra.mxu0 0
        %2973 = vmatprep.subr.bf16.mxu0 0
        %2974 = vmatpush1.bf16.msra.mxu0 0
        %2975 = vmatprep.subr.bf16.mxu0 0
        %2976 = vmatpush1.bf16.msra.mxu0 0
        %2977 = vmatprep.subr.bf16.mxu0 0
        %2978 = vmatpush1.bf16.msra.mxu0 0
        %2979 = vmatprep.subr.bf16.mxu0 0
        %2980 = vmatpush1.bf16.msra.mxu0 0
        %2981 = vmatprep.subr.bf16.mxu0 0
        %2982 = vmatpush1.bf16.msra.mxu0 0
        %2983 = vmatprep.subr.bf16.mxu0 0
        %2984 = vmatpush1.bf16.msra.mxu0 0
        %2985 = vmatprep.subr.bf16.mxu0 0
        %2986 = vmatpush1.bf16.msra.mxu0 0
        %2987 = vmatprep.subr.bf16.mxu0 0
        %2988 = vmatpush1.bf16.msra.mxu0 0
        %2989 = vmatprep.subr.bf16.mxu0 0
        %2990 = vmatpush1.bf16.msra.mxu0 0
        %2991 = vmatprep.mubr.bf16.mxu0 0
        %2992 = vmatmul.mubr.bf16.gmra.mrb[0].mxu0 %v2957
        %v2993 = vpop.f32.mrb[0].mxu0
        %v2994 = vadd.f32 0.0, %v2993
        %v2995 = vpop.f32.mrb[0].mxu0
        %v2996 = vpop.f32.mrb[0].mxu0
        %v2997 = vpop.f32.mrb[0].mxu0
        %2998 = vdwg.mxu0
        %v3007 = vunpack.c.l.b16 %v2913
        %v3008 = vunpack.c.l.b16 %v2914
        %v3009 = vunpack.c.l.b16 %v2915
        %v3010 = vunpack.c.l.b16 %v2916
        %v3011 = vunpack.c.l.b16 %v2917
        %v3012 = vunpack.c.l.b16 %v2918
        %v3013 = vunpack.c.l.b16 %v2919
        %v3014 = vunpack.c.l.b16 %v2920
        %v3015 = vpack.c.b16 %v3008, %v3007
        %v3016 = vpack.c.b16 %v3010, %v3009
        %v3017 = vpack.c.b16 %v3012, %v3011
        %v3018 = vpack.c.b16 %v3014, %v3013
        %v3024 = vsel %vm2185, %v2912, 0
        %3026 = vmatprep.subr.bf16.mxu0 0
        %3027 = vmatpush1.bf16.msra.mxu0 %v3015
        %3028 = vmatprep.subr.bf16.mxu0 0
        %3029 = vmatpush1.bf16.msra.mxu0 %v3016
        %3030 = vmatprep.subr.bf16.mxu0 0
        %3031 = vmatpush1.bf16.msra.mxu0 %v3017
        %3032 = vmatprep.subr.bf16.mxu0 0
        %3033 = vmatpush1.bf16.msra.mxu0 %v3018
        %3034 = vmatprep.subr.bf16.mxu0 0
        %3035 = vmatpush1.bf16.msra.mxu0 0
        %3036 = vmatprep.subr.bf16.mxu0 0
        %3037 = vmatpush1.bf16.msra.mxu0 0
        %3038 = vmatprep.subr.bf16.mxu0 0
        %3039 = vmatpush1.bf16.msra.mxu0 0
        %3040 = vmatprep.subr.bf16.mxu0 0
        %3041 = vmatpush1.bf16.msra.mxu0 0
        %3042 = vmatprep.subr.bf16.mxu0 0
        %3043 = vmatpush1.bf16.msra.mxu0 0
        %3044 = vmatprep.subr.bf16.mxu0 0
        %3045 = vmatpush1.bf16.msra.mxu0 0
        %3046 = vmatprep.subr.bf16.mxu0 0
        %3047 = vmatpush1.bf16.msra.mxu0 0
        %3048 = vmatprep.subr.bf16.mxu0 0
        %3049 = vmatpush1.bf16.msra.mxu0 0
        %3050 = vmatprep.subr.bf16.mxu0 0
        %3051 = vmatpush1.bf16.msra.mxu0 0
        %3052 = vmatprep.subr.bf16.mxu0 0
        %3053 = vmatpush1.bf16.msra.mxu0 0
        %3054 = vmatprep.subr.bf16.mxu0 0
        %3055 = vmatpush1.bf16.msra.mxu0 0
        %3056 = vmatprep.subr.bf16.mxu0 0
        %3057 = vmatpush1.bf16.msra.mxu0 0
        %3058 = vmatprep.mubr.bf16.mxu0 0
        %3059 = vmatmul.mubr.bf16.gmra.mrb[0].mxu0 %v3024
        %v3060 = vpop.f32.mrb[0].mxu0
        %v3061 = vadd.f32 %v2994, %v3060
        %v3062 = vpop.f32.mrb[0].mxu0
        %v3063 = vpop.f32.mrb[0].mxu0
        %v3064 = vpop.f32.mrb[0].mxu0
        %3065 = vdwg.mxu0
        %v3066 = vld [vmem:[#allocation2 + $0x2] sm:$0xff]
        %v3067 = vpack.c.bf16 %v3066, %v3066
        %s3068 = scalar_lea.vmem [#allocation8], 64
        %v3069 = vld [vmem:[%s3068] sm:$0xf]
        %v3070 = vld [vmem:[%s3068 + $0x4] sm:$0xf]
        %v3071 = vld [vmem:[%s3068 + $0x8] sm:$0xf]
        %v3072 = vld [vmem:[%s3068 + $0xc] sm:$0xf]
        %v3073 = vld [vmem:[%s3068 + $0x10] sm:$0xf]
        %v3074 = vld [vmem:[%s3068 + $0x14] sm:$0xf]
        %v3075 = vld [vmem:[%s3068 + $0x18] sm:$0xf]
        %v3076 = vld [vmem:[%s3068 + $0x1c] sm:$0xf]
        %v3085 = vunpack.c.l.b16 %v3069
        %v3086 = vunpack.c.l.b16 %v3070
        %v3087 = vunpack.c.l.b16 %v3071
        %v3088 = vunpack.c.l.b16 %v3072
        %v3089 = vunpack.c.l.b16 %v3073
        %v3090 = vunpack.c.l.b16 %v3074
        %v3091 = vunpack.c.l.b16 %v3075
        %v3092 = vunpack.c.l.b16 %v3076
        %v3093 = vpack.c.b16 %v3086, %v3085
        %v3094 = vpack.c.b16 %v3088, %v3087
        %v3095 = vpack.c.b16 %v3090, %v3089
        %v3096 = vpack.c.b16 %v3092, %v3091
        %v3102 = vsel %vm2185, %v3067, 0
        %3104 = vmatprep.subr.bf16.mxu0 0
        %3105 = vmatpush1.bf16.msra.mxu0 %v3093
        %3106 = vmatprep.subr.bf16.mxu0 0
        %3107 = vmatpush1.bf16.msra.mxu0 %v3094
        %3108 = vmatprep.subr.bf16.mxu0 0
        %3109 = vmatpush1.bf16.msra.mxu0 %v3095
        %3110 = vmatprep.subr.bf16.mxu0 0
        %3111 = vmatpush1.bf16.msra.mxu0 %v3096
        %3112 = vmatprep.subr.bf16.mxu0 0
        %3113 = vmatpush1.bf16.msra.mxu0 0
        %3114 = vmatprep.subr.bf16.mxu0 0
        %3115 = vmatpush1.bf16.msra.mxu0 0
        %3116 = vmatprep.subr.bf16.mxu0 0
        %3117 = vmatpush1.bf16.msra.mxu0 0
        %3118 = vmatprep.subr.bf16.mxu0 0
        %3119 = vmatpush1.bf16.msra.mxu0 0
        %3120 = vmatprep.subr.bf16.mxu0 0
        %3121 = vmatpush1.bf16.msra.mxu0 0
        %3122 = vmatprep.subr.bf16.mxu0 0
        %3123 = vmatpush1.bf16.msra.mxu0 0
        %3124 = vmatprep.subr.bf16.mxu0 0
        %3125 = vmatpush1.bf16.msra.mxu0 0
        %3126 = vmatprep.subr.bf16.mxu0 0
        %3127 = vmatpush1.bf16.msra.mxu0 0
        %3128 = vmatprep.subr.bf16.mxu0 0
        %3129 = vmatpush1.bf16.msra.mxu0 0
        %3130 = vmatprep.subr.bf16.mxu0 0
        %3131 = vmatpush1.bf16.msra.mxu0 0
        %3132 = vmatprep.subr.bf16.mxu0 0
        %3133 = vmatpush1.bf16.msra.mxu0 0
        %3134 = vmatprep.subr.bf16.mxu0 0
        %3135 = vmatpush1.bf16.msra.mxu0 0
        %3136 = vmatprep.mubr.bf16.mxu0 0
        %3137 = vmatmul.mubr.bf16.gmra.mrb[0].mxu0 %v3102
        %v3138 = vpop.f32.mrb[0].mxu0
        %v3139 = vadd.f32 0.0, %v3138
        %v3140 = vpop.f32.mrb[0].mxu0
        %v3141 = vpop.f32.mrb[0].mxu0
        %v3142 = vpop.f32.mrb[0].mxu0
        %3143 = vdwg.mxu0
        %v3144 = vadd.f32 %v3061, %v3139
        %v3145 = vunpack.c.l.bf16 %v2910
        %v3146 = vlaneseq
        %v3147 = vshrl.u32 %v3146, 7
        %v3148 = vsub.s32 0, %v3147
        %v3149 = vrot.slane %v3145, %v3148
        %v3150 = vadd.f32 %v3144, %v3149
        %v3151 = vmax.f32 %v3150, 0.0
        %3152 = vst [vmem:[#allocation2 + $0x1] sm:$0xff] %v3151
        %3153 = vst [vmem:[#allocation2] sm:$0x1] 0.0
        %3154 = vst [vmem:[#allocation2 + $0x9] sm:$0x1] 0.0
        %v3155 = vld [vmem:[#allocation11] sm:$0x1]
        %v3156 = vld [vmem:[#allocation2] ss:$2 sm:$0xf]
        %v3157 = vpack.c.bf16 %v3156, %v3156
        %v3158 = vld [vmem:[%s23] sm:$0xf]
        %v3159 = vld [vmem:[%s23 + $0x4] sm:$0xf]
        %v3160 = vld [vmem:[%s23 + $0x8] sm:$0xf]
        %v3161 = vld [vmem:[%s23 + $0xc] sm:$0xf]
        %v3162 = vld [vmem:[%s23 + $0x10] sm:$0xf]
        %v3163 = vld [vmem:[%s23 + $0x14] sm:$0xf]
        %v3164 = vld [vmem:[%s23 + $0x18] sm:$0xf]
        %v3165 = vld [vmem:[%s23 + $0x1c] sm:$0xf]
        %v3166 = vld [vmem:[%s23 + $0x20] sm:$0xf]
        %v3167 = vld [vmem:[%s23 + $0x24] sm:$0xf]
        %v3168 = vld [vmem:[%s23 + $0x28] sm:$0xf]
        %v3169 = vld [vmem:[%s23 + $0x2c] sm:$0xf]
        %v3170 = vld [vmem:[%s23 + $0x30] sm:$0xf]
        %v3171 = vld [vmem:[%s23 + $0x34] sm:$0xf]
        %v3172 = vld [vmem:[%s23 + $0x38] sm:$0xf]
        %v3173 = vld [vmem:[%s23 + $0x3c] sm:$0xf]
        %v3174 = vld [vmem:[%s1717] ss:$2 sm:$0xf]
        %v3175 = vpack.c.bf16 %v3174, %v3174
        %s3176 = scalar_lea.vmem %s23, 64
        %v3177 = vld [vmem:[%s3176] sm:$0xf]
        %v3178 = vld [vmem:[%s3176 + $0x4] sm:$0xf]
        %v3179 = vld [vmem:[%s3176 + $0x8] sm:$0xf]
        %v3180 = vld [vmem:[%s3176 + $0xc] sm:$0xf]
        %v3181 = vld [vmem:[%s3176 + $0x10] sm:$0xf]
        %v3182 = vld [vmem:[%s3176 + $0x14] sm:$0xf]
        %v3183 = vld [vmem:[%s3176 + $0x18] sm:$0xf]
        %v3184 = vld [vmem:[%s3176 + $0x1c] sm:$0xf]
        %v3185 = vld [vmem:[%s3176 + $0x20] sm:$0xf]
        %v3186 = vld [vmem:[%s3176 + $0x24] sm:$0xf]
        %v3187 = vld [vmem:[%s3176 + $0x28] sm:$0xf]
        %v3188 = vld [vmem:[%s3176 + $0x2c] sm:$0xf]
        %v3189 = vld [vmem:[%s3176 + $0x30] sm:$0xf]
        %v3190 = vld [vmem:[%s3176 + $0x34] sm:$0xf]
        %v3191 = vld [vmem:[%s3176 + $0x38] sm:$0xf]
        %v3192 = vld [vmem:[%s3176 + $0x3c] sm:$0xf]
        %v3209 = vunpack.c.l.b16 %v3177
        %v3210 = vunpack.c.l.b16 %v3178
        %v3211 = vunpack.c.l.b16 %v3179
        %v3212 = vunpack.c.l.b16 %v3180
        %v3213 = vunpack.c.l.b16 %v3181
        %v3214 = vunpack.c.l.b16 %v3182
        %v3215 = vunpack.c.l.b16 %v3183
        %v3216 = vunpack.c.l.b16 %v3184
        %v3217 = vunpack.c.l.b16 %v3185
        %v3218 = vunpack.c.l.b16 %v3186
        %v3219 = vunpack.c.l.b16 %v3187
        %v3220 = vunpack.c.l.b16 %v3188
        %v3221 = vunpack.c.l.b16 %v3189
        %v3222 = vunpack.c.l.b16 %v3190
        %v3223 = vunpack.c.l.b16 %v3191
        %v3224 = vunpack.c.l.b16 %v3192
        %v3225 = vpack.c.b16 %v3210, %v3209
        %v3226 = vpack.c.b16 %v3212, %v3211
        %v3227 = vpack.c.b16 %v3214, %v3213
        %v3228 = vpack.c.b16 %v3216, %v3215
        %v3229 = vpack.c.b16 %v3218, %v3217
        %v3230 = vpack.c.b16 %v3220, %v3219
        %v3231 = vpack.c.b16 %v3222, %v3221
        %v3232 = vpack.c.b16 %v3224, %v3223
        %3241 = vmatprep.subr.bf16.mxu0 0
        %3242 = vmatpush1.bf16.msra.mxu0 %v3225
        %3243 = vmatprep.subr.bf16.mxu0 0
        %3244 = vmatpush1.bf16.msra.mxu0 %v3226
        %3245 = vmatprep.subr.bf16.mxu0 0
        %3246 = vmatpush1.bf16.msra.mxu0 %v3227
        %3247 = vmatprep.subr.bf16.mxu0 0
        %3248 = vmatpush1.bf16.msra.mxu0 %v3228
        %3249 = vmatprep.subr.bf16.mxu0 0
        %3250 = vmatpush1.bf16.msra.mxu0 %v3229
        %3251 = vmatprep.subr.bf16.mxu0 0
        %3252 = vmatpush1.bf16.msra.mxu0 %v3230
        %3253 = vmatprep.subr.bf16.mxu0 0
        %3254 = vmatpush1.bf16.msra.mxu0 %v3231
        %3255 = vmatprep.subr.bf16.mxu0 0
        %3256 = vmatpush1.bf16.msra.mxu0 %v3232
        %3257 = vmatprep.subr.bf16.mxu0 0
        %3258 = vmatpush1.bf16.msra.mxu0 0
        %3259 = vmatprep.subr.bf16.mxu0 0
        %3260 = vmatpush1.bf16.msra.mxu0 0
        %3261 = vmatprep.subr.bf16.mxu0 0
        %3262 = vmatpush1.bf16.msra.mxu0 0
        %3263 = vmatprep.subr.bf16.mxu0 0
        %3264 = vmatpush1.bf16.msra.mxu0 0
        %3265 = vmatprep.subr.bf16.mxu0 0
        %3266 = vmatpush1.bf16.msra.mxu0 0
        %3267 = vmatprep.subr.bf16.mxu0 0
        %3268 = vmatpush1.bf16.msra.mxu0 0
        %3269 = vmatprep.subr.bf16.mxu0 0
        %3270 = vmatpush1.bf16.msra.mxu0 0
        %3271 = vmatprep.subr.bf16.mxu0 0
        %3272 = vmatpush1.bf16.msra.mxu0 0
        %3273 = vmatprep.mubr.bf16.mxu0 0
        %3274 = vmatmul.mubr.bf16.gmra.mrb[0].mxu0 %v3175
        %v3275 = vpop.f32.mrb[0].mxu0
        %v3276 = vadd.f32 0.0, %v3275
        %v3277 = vpop.f32.mrb[0].mxu0
        %v3278 = vpop.f32.mrb[0].mxu0
        %v3279 = vpop.f32.mrb[0].mxu0
        %3280 = vdwg.mxu0
        %v3297 = vunpack.c.l.b16 %v3158
        %v3298 = vunpack.c.l.b16 %v3159
        %v3299 = vunpack.c.l.b16 %v3160
        %v3300 = vunpack.c.l.b16 %v3161
        %v3301 = vunpack.c.l.b16 %v3162
        %v3302 = vunpack.c.l.b16 %v3163
        %v3303 = vunpack.c.l.b16 %v3164
        %v3304 = vunpack.c.l.b16 %v3165
        %v3305 = vunpack.c.l.b16 %v3166
        %v3306 = vunpack.c.l.b16 %v3167
        %v3307 = vunpack.c.l.b16 %v3168
        %v3308 = vunpack.c.l.b16 %v3169
        %v3309 = vunpack.c.l.b16 %v3170
        %v3310 = vunpack.c.l.b16 %v3171
        %v3311 = vunpack.c.l.b16 %v3172
        %v3312 = vunpack.c.l.b16 %v3173
        %v3313 = vpack.c.b16 %v3298, %v3297
        %v3314 = vpack.c.b16 %v3300, %v3299
        %v3315 = vpack.c.b16 %v3302, %v3301
        %v3316 = vpack.c.b16 %v3304, %v3303
        %v3317 = vpack.c.b16 %v3306, %v3305
        %v3318 = vpack.c.b16 %v3308, %v3307
        %v3319 = vpack.c.b16 %v3310, %v3309
        %v3320 = vpack.c.b16 %v3312, %v3311
        %3329 = vmatprep.subr.bf16.mxu0 0
        %3330 = vmatpush1.bf16.msra.mxu0 %v3313
        %3331 = vmatprep.subr.bf16.mxu0 0
        %3332 = vmatpush1.bf16.msra.mxu0 %v3314
        %3333 = vmatprep.subr.bf16.mxu0 0
        %3334 = vmatpush1.bf16.msra.mxu0 %v3315
        %3335 = vmatprep.subr.bf16.mxu0 0
        %3336 = vmatpush1.bf16.msra.mxu0 %v3316
        %3337 = vmatprep.subr.bf16.mxu0 0
        %3338 = vmatpush1.bf16.msra.mxu0 %v3317
        %3339 = vmatprep.subr.bf16.mxu0 0
        %3340 = vmatpush1.bf16.msra.mxu0 %v3318
        %3341 = vmatprep.subr.bf16.mxu0 0
        %3342 = vmatpush1.bf16.msra.mxu0 %v3319
        %3343 = vmatprep.subr.bf16.mxu0 0
        %3344 = vmatpush1.bf16.msra.mxu0 %v3320
        %3345 = vmatprep.subr.bf16.mxu0 0
        %3346 = vmatpush1.bf16.msra.mxu0 0
        %3347 = vmatprep.subr.bf16.mxu0 0
        %3348 = vmatpush1.bf16.msra.mxu0 0
        %3349 = vmatprep.subr.bf16.mxu0 0
        %3350 = vmatpush1.bf16.msra.mxu0 0
        %3351 = vmatprep.subr.bf16.mxu0 0
        %3352 = vmatpush1.bf16.msra.mxu0 0
        %3353 = vmatprep.subr.bf16.mxu0 0
        %3354 = vmatpush1.bf16.msra.mxu0 0
        %3355 = vmatprep.subr.bf16.mxu0 0
        %3356 = vmatpush1.bf16.msra.mxu0 0
        %3357 = vmatprep.subr.bf16.mxu0 0
        %3358 = vmatpush1.bf16.msra.mxu0 0
        %3359 = vmatprep.subr.bf16.mxu0 0
        %3360 = vmatpush1.bf16.msra.mxu0 0
        %3361 = vmatprep.mubr.bf16.mxu0 0
        %3362 = vmatmul.mubr.bf16.gmra.mrb[0].mxu0 %v3157
        %v3363 = vpop.f32.mrb[0].mxu0
        %v3364 = vadd.f32 %v3276, %v3363
        %v3365 = vpop.f32.mrb[0].mxu0
        %v3366 = vpop.f32.mrb[0].mxu0
        %v3367 = vpop.f32.mrb[0].mxu0
        %3368 = vdwg.mxu0
        %v3369 = vld [vmem:[%s2660] ss:$2 sm:$0xf]
        %v3370 = vpack.c.bf16 %v3369, %v3369
        %s3371 = scalar_lea.vmem %s23, 128
        %v3372 = vld [vmem:[%s3371] sm:$0xf]
        %v3373 = vld [vmem:[%s3371 + $0x4] sm:$0xf]
        %v3374 = vld [vmem:[%s3371 + $0x8] sm:$0xf]
        %v3375 = vld [vmem:[%s3371 + $0xc] sm:$0xf]
        %v3376 = vld [vmem:[%s3371 + $0x10] sm:$0xf]
        %v3377 = vld [vmem:[%s3371 + $0x14] sm:$0xf]
        %v3378 = vld [vmem:[%s3371 + $0x18] sm:$0xf]
        %v3379 = vld [vmem:[%s3371 + $0x1c] sm:$0xf]
        %v3380 = vld [vmem:[%s3371 + $0x20] sm:$0xf]
        %v3381 = vld [vmem:[%s3371 + $0x24] sm:$0xf]
        %v3382 = vld [vmem:[%s3371 + $0x28] sm:$0xf]
        %v3383 = vld [vmem:[%s3371 + $0x2c] sm:$0xf]
        %v3384 = vld [vmem:[%s3371 + $0x30] sm:$0xf]
        %v3385 = vld [vmem:[%s3371 + $0x34] sm:$0xf]
        %v3386 = vld [vmem:[%s3371 + $0x38] sm:$0xf]
        %v3387 = vld [vmem:[%s3371 + $0x3c] sm:$0xf]
        %v3404 = vunpack.c.l.b16 %v3372
        %v3405 = vunpack.c.l.b16 %v3373
        %v3406 = vunpack.c.l.b16 %v3374
        %v3407 = vunpack.c.l.b16 %v3375
        %v3408 = vunpack.c.l.b16 %v3376
        %v3409 = vunpack.c.l.b16 %v3377
        %v3410 = vunpack.c.l.b16 %v3378
        %v3411 = vunpack.c.l.b16 %v3379
        %v3412 = vunpack.c.l.b16 %v3380
        %v3413 = vunpack.c.l.b16 %v3381
        %v3414 = vunpack.c.l.b16 %v3382
        %v3415 = vunpack.c.l.b16 %v3383
        %v3416 = vunpack.c.l.b16 %v3384
        %v3417 = vunpack.c.l.b16 %v3385
        %v3418 = vunpack.c.l.b16 %v3386
        %v3419 = vunpack.c.l.b16 %v3387
        %v3420 = vpack.c.b16 %v3405, %v3404
        %v3421 = vpack.c.b16 %v3407, %v3406
        %v3422 = vpack.c.b16 %v3409, %v3408
        %v3423 = vpack.c.b16 %v3411, %v3410
        %v3424 = vpack.c.b16 %v3413, %v3412
        %v3425 = vpack.c.b16 %v3415, %v3414
        %v3426 = vpack.c.b16 %v3417, %v3416
        %v3427 = vpack.c.b16 %v3419, %v3418
        %3436 = vmatprep.subr.bf16.mxu0 0
        %3437 = vmatpush1.bf16.msra.mxu0 %v3420
        %3438 = vmatprep.subr.bf16.mxu0 0
        %3439 = vmatpush1.bf16.msra.mxu0 %v3421
        %3440 = vmatprep.subr.bf16.mxu0 0
        %3441 = vmatpush1.bf16.msra.mxu0 %v3422
        %3442 = vmatprep.subr.bf16.mxu0 0
        %3443 = vmatpush1.bf16.msra.mxu0 %v3423
        %3444 = vmatprep.subr.bf16.mxu0 0
        %3445 = vmatpush1.bf16.msra.mxu0 %v3424
        %3446 = vmatprep.subr.bf16.mxu0 0
        %3447 = vmatpush1.bf16.msra.mxu0 %v3425
        %3448 = vmatprep.subr.bf16.mxu0 0
        %3449 = vmatpush1.bf16.msra.mxu0 %v3426
        %3450 = vmatprep.subr.bf16.mxu0 0
        %3451 = vmatpush1.bf16.msra.mxu0 %v3427
        %3452 = vmatprep.subr.bf16.mxu0 0
        %3453 = vmatpush1.bf16.msra.mxu0 0
        %3454 = vmatprep.subr.bf16.mxu0 0
        %3455 = vmatpush1.bf16.msra.mxu0 0
        %3456 = vmatprep.subr.bf16.mxu0 0
        %3457 = vmatpush1.bf16.msra.mxu0 0
        %3458 = vmatprep.subr.bf16.mxu0 0
        %3459 = vmatpush1.bf16.msra.mxu0 0
        %3460 = vmatprep.subr.bf16.mxu0 0
        %3461 = vmatpush1.bf16.msra.mxu0 0
        %3462 = vmatprep.subr.bf16.mxu0 0
        %3463 = vmatpush1.bf16.msra.mxu0 0
        %3464 = vmatprep.subr.bf16.mxu0 0
        %3465 = vmatpush1.bf16.msra.mxu0 0
        %3466 = vmatprep.subr.bf16.mxu0 0
        %3467 = vmatpush1.bf16.msra.mxu0 0
        %3468 = vmatprep.mubr.bf16.mxu0 0
        %3469 = vmatmul.mubr.bf16.gmra.mrb[0].mxu0 %v3370
        %v3470 = vpop.f32.mrb[0].mxu0
        %v3471 = vadd.f32 0.0, %v3470
        %v3472 = vpop.f32.mrb[0].mxu0
        %v3473 = vpop.f32.mrb[0].mxu0
        %v3474 = vpop.f32.mrb[0].mxu0
        %3475 = vdwg.mxu0
        %v3476 = vadd.f32 %v3364, %v3471
        %v3477 = vunpack.c.l.bf16 %v3155
        %v3478 = vlaneseq
        %v3479 = vshrl.u32 %v3478, 7
        %v3480 = vsub.s32 0, %v3479
        %v3481 = vrot.slane %v3477, %v3480
        %v3482 = vadd.f32 %v3476, %v3481
        %v3483 = vmax.f32 %v3482, 0.0
        %3484 = vmatprep.subr.bf16.mxu0 0
        %3485 = vmatpush1.bf16.msra.mxu0 %v3225
        %3486 = vmatprep.subr.bf16.mxu0 0
        %3487 = vmatpush1.bf16.msra.mxu0 %v3226
        %3488 = vmatprep.subr.bf16.mxu0 0
        %3489 = vmatpush1.bf16.msra.mxu0 %v3227
        %3490 = vmatprep.subr.bf16.mxu0 0
        %3491 = vmatpush1.bf16.msra.mxu0 %v3228
        %3492 = vmatprep.subr.bf16.mxu0 0
        %3493 = vmatpush1.bf16.msra.mxu0 %v3229
        %3494 = vmatprep.subr.bf16.mxu0 0
        %3495 = vmatpush1.bf16.msra.mxu0 %v3230
        %3496 = vmatprep.subr.bf16.mxu0 0
        %3497 = vmatpush1.bf16.msra.mxu0 %v3231
        %3498 = vmatprep.subr.bf16.mxu0 0
        %3499 = vmatpush1.bf16.msra.mxu0 %v3232
        %3500 = vmatprep.subr.bf16.mxu0 0
        %3501 = vmatpush1.bf16.msra.mxu0 0
        %3502 = vmatprep.subr.bf16.mxu0 0
        %3503 = vmatpush1.bf16.msra.mxu0 0
        %3504 = vmatprep.subr.bf16.mxu0 0
        %3505 = vmatpush1.bf16.msra.mxu0 0
        %3506 = vmatprep.subr.bf16.mxu0 0
        %3507 = vmatpush1.bf16.msra.mxu0 0
        %3508 = vmatprep.subr.bf16.mxu0 0
        %3509 = vmatpush1.bf16.msra.mxu0 0
        %3510 = vmatprep.subr.bf16.mxu0 0
        %3511 = vmatpush1.bf16.msra.mxu0 0
        %3512 = vmatprep.subr.bf16.mxu0 0
        %3513 = vmatpush1.bf16.msra.mxu0 0
        %3514 = vmatprep.subr.bf16.mxu0 0
        %3515 = vmatpush1.bf16.msra.mxu0 0
        %3516 = vmatprep.mubr.bf16.mxu0 0
        %3517 = vmatmul.mubr.bf16.gmra.mrb[0].mxu0 %v3370
        %v3518 = vpop.f32.mrb[0].mxu0
        %v3519 = vadd.f32 0.0, %v3518
        %v3520 = vpop.f32.mrb[0].mxu0
        %v3521 = vpop.f32.mrb[0].mxu0
        %v3522 = vpop.f32.mrb[0].mxu0
        %3523 = vdwg.mxu0
        %3524 = vmatprep.subr.bf16.mxu0 0
        %3525 = vmatpush1.bf16.msra.mxu0 %v3313
        %3526 = vmatprep.subr.bf16.mxu0 0
        %3527 = vmatpush1.bf16.msra.mxu0 %v3314
        %3528 = vmatprep.subr.bf16.mxu0 0
        %3529 = vmatpush1.bf16.msra.mxu0 %v3315
        %3530 = vmatprep.subr.bf16.mxu0 0
        %3531 = vmatpush1.bf16.msra.mxu0 %v3316
        %3532 = vmatprep.subr.bf16.mxu0 0
        %3533 = vmatpush1.bf16.msra.mxu0 %v3317
        %3534 = vmatprep.subr.bf16.mxu0 0
        %3535 = vmatpush1.bf16.msra.mxu0 %v3318
        %3536 = vmatprep.subr.bf16.mxu0 0
        %3537 = vmatpush1.bf16.msra.mxu0 %v3319
        %3538 = vmatprep.subr.bf16.mxu0 0
        %3539 = vmatpush1.bf16.msra.mxu0 %v3320
        %3540 = vmatprep.subr.bf16.mxu0 0
        %3541 = vmatpush1.bf16.msra.mxu0 0
        %3542 = vmatprep.subr.bf16.mxu0 0
        %3543 = vmatpush1.bf16.msra.mxu0 0
        %3544 = vmatprep.subr.bf16.mxu0 0
        %3545 = vmatpush1.bf16.msra.mxu0 0
        %3546 = vmatprep.subr.bf16.mxu0 0
        %3547 = vmatpush1.bf16.msra.mxu0 0
        %3548 = vmatprep.subr.bf16.mxu0 0
        %3549 = vmatpush1.bf16.msra.mxu0 0
        %3550 = vmatprep.subr.bf16.mxu0 0
        %3551 = vmatpush1.bf16.msra.mxu0 0
        %3552 = vmatprep.subr.bf16.mxu0 0
        %3553 = vmatpush1.bf16.msra.mxu0 0
        %3554 = vmatprep.subr.bf16.mxu0 0
        %3555 = vmatpush1.bf16.msra.mxu0 0
        %3556 = vmatprep.mubr.bf16.mxu0 0
        %3557 = vmatmul.mubr.bf16.gmra.mrb[0].mxu0 %v3175
        %v3558 = vpop.f32.mrb[0].mxu0
        %v3559 = vadd.f32 %v3519, %v3558
        %v3560 = vpop.f32.mrb[0].mxu0
        %v3561 = vpop.f32.mrb[0].mxu0
        %v3562 = vpop.f32.mrb[0].mxu0
        %3563 = vdwg.mxu0
        %v3564 = vld [vmem:[%s2121] ss:$2 sm:$0xf]
        %v3565 = vpack.c.bf16 %v3564, %v3564
        %3566 = vmatprep.subr.bf16.mxu0 0
        %3567 = vmatpush1.bf16.msra.mxu0 %v3420
        %3568 = vmatprep.subr.bf16.mxu0 0
        %3569 = vmatpush1.bf16.msra.mxu0 %v3421
        %3570 = vmatprep.subr.bf16.mxu0 0
        %3571 = vmatpush1.bf16.msra.mxu0 %v3422
        %3572 = vmatprep.subr.bf16.mxu0 0
        %3573 = vmatpush1.bf16.msra.mxu0 %v3423
        %3574 = vmatprep.subr.bf16.mxu0 0
        %3575 = vmatpush1.bf16.msra.mxu0 %v3424
        %3576 = vmatprep.subr.bf16.mxu0 0
        %3577 = vmatpush1.bf16.msra.mxu0 %v3425
        %3578 = vmatprep.subr.bf16.mxu0 0
        %3579 = vmatpush1.bf16.msra.mxu0 %v3426
        %3580 = vmatprep.subr.bf16.mxu0 0
        %3581 = vmatpush1.bf16.msra.mxu0 %v3427
        %3582 = vmatprep.subr.bf16.mxu0 0
        %3583 = vmatpush1.bf16.msra.mxu0 0
        %3584 = vmatprep.subr.bf16.mxu0 0
        %3585 = vmatpush1.bf16.msra.mxu0 0
        %3586 = vmatprep.subr.bf16.mxu0 0
        %3587 = vmatpush1.bf16.msra.mxu0 0
        %3588 = vmatprep.subr.bf16.mxu0 0
        %3589 = vmatpush1.bf16.msra.mxu0 0
        %3590 = vmatprep.subr.bf16.mxu0 0
        %3591 = vmatpush1.bf16.msra.mxu0 0
        %3592 = vmatprep.subr.bf16.mxu0 0
        %3593 = vmatpush1.bf16.msra.mxu0 0
        %3594 = vmatprep.subr.bf16.mxu0 0
        %3595 = vmatpush1.bf16.msra.mxu0 0
        %3596 = vmatprep.subr.bf16.mxu0 0
        %3597 = vmatpush1.bf16.msra.mxu0 0
        %3598 = vmatprep.mubr.bf16.mxu0 0
        %3599 = vmatmul.mubr.bf16.gmra.mrb[0].mxu0 %v3565
        %v3600 = vpop.f32.mrb[0].mxu0
        %v3601 = vadd.f32 0.0, %v3600
        %v3602 = vpop.f32.mrb[0].mxu0
        %v3603 = vpop.f32.mrb[0].mxu0
        %v3604 = vpop.f32.mrb[0].mxu0
        %3605 = vdwg.mxu0
        %v3606 = vadd.f32 %v3559, %v3601
        %v3607 = vadd.f32 %v3606, %v3481
        %v3608 = vmax.f32 %v3607, 0.0
        %v3609 = vmax.f32 %v3483, %v3608
        %3611 = vrot.lane.b32.xlu0 %v3609, 64
        %v3612 = vpop.permute.xlu0 %3611
        %v3614 = vmax.f32 %v3609, %v3612
        %vm3615 = vcmask 519168
        %3616 = vst.msk [vmem:[#allocation2 + $0x1] sm:$0xf] %vm3615, %v3614
        %3617 = vst.msk [vmem:[#allocation2] sm:$0x1] %vm2188, 0.0
        %3618 = vst.msk [vmem:[#allocation2 + $0x5] sm:$0x1] %vm2188, 0.0
        %v3619 = vld [vmem:[#allocation14] sm:$0x1]
        %v3620 = vld [vmem:[#allocation2] sm:$0xf]
        %v3621 = vpack.c.bf16 %v3620, %v3620
        %v3622 = vld [vmem:[#allocation13] sm:$0xf]
        %v3623 = vld [vmem:[#allocation13 + $0x4] sm:$0xf]
        %v3624 = vld [vmem:[#allocation13 + $0x8] sm:$0xf]
        %v3625 = vld [vmem:[#allocation13 + $0xc] sm:$0xf]
        %v3626 = vld [vmem:[#allocation13 + $0x10] sm:$0xf]
        %v3627 = vld [vmem:[#allocation13 + $0x14] sm:$0xf]
        %v3628 = vld [vmem:[#allocation13 + $0x18] sm:$0xf]
        %v3629 = vld [vmem:[#allocation13 + $0x1c] sm:$0xf]
        %v3630 = vld [vmem:[#allocation2 + $0x1] sm:$0xf]
        %v3631 = vpack.c.bf16 %v3630, %v3630
        %s3632 = scalar_lea.vmem [#allocation13], 32
        %v3633 = vld [vmem:[%s3632] sm:$0xf]
        %v3634 = vld [vmem:[%s3632 + $0x4] sm:$0xf]
        %v3635 = vld [vmem:[%s3632 + $0x8] sm:$0xf]
        %v3636 = vld [vmem:[%s3632 + $0xc] sm:$0xf]
        %v3637 = vld [vmem:[%s3632 + $0x10] sm:$0xf]
        %v3638 = vld [vmem:[%s3632 + $0x14] sm:$0xf]
        %v3639 = vld [vmem:[%s3632 + $0x18] sm:$0xf]
        %v3640 = vld [vmem:[%s3632 + $0x1c] sm:$0xf]
        %v3649 = vunpack.c.l.b16 %v3633
        %v3650 = vunpack.c.l.b16 %v3634
        %v3651 = vunpack.c.l.b16 %v3635
        %v3652 = vunpack.c.l.b16 %v3636
        %v3653 = vunpack.c.l.b16 %v3637
        %v3654 = vunpack.c.l.b16 %v3638
        %v3655 = vunpack.c.l.b16 %v3639
        %v3656 = vunpack.c.l.b16 %v3640
        %v3657 = vpack.c.b16 %v3650, %v3649
        %v3658 = vpack.c.b16 %v3652, %v3651
        %v3659 = vpack.c.b16 %v3654, %v3653
        %v3660 = vpack.c.b16 %v3656, %v3655
        %v3666 = vsel %vm2185, %v3631, 0
        %3668 = vmatprep.subr.bf16.mxu0 0
        %3669 = vmatpush1.bf16.msra.mxu0 %v3657
        %3670 = vmatprep.subr.bf16.mxu0 0
        %3671 = vmatpush1.bf16.msra.mxu0 %v3658
        %3672 = vmatprep.subr.bf16.mxu0 0
        %3673 = vmatpush1.bf16.msra.mxu0 %v3659
        %3674 = vmatprep.subr.bf16.mxu0 0
        %3675 = vmatpush1.bf16.msra.mxu0 %v3660
        %3676 = vmatprep.subr.bf16.mxu0 0
        %3677 = vmatpush1.bf16.msra.mxu0 0
        %3678 = vmatprep.subr.bf16.mxu0 0
        %3679 = vmatpush1.bf16.msra.mxu0 0
        %3680 = vmatprep.subr.bf16.mxu0 0
        %3681 = vmatpush1.bf16.msra.mxu0 0
        %3682 = vmatprep.subr.bf16.mxu0 0
        %3683 = vmatpush1.bf16.msra.mxu0 0
        %3684 = vmatprep.subr.bf16.mxu0 0
        %3685 = vmatpush1.bf16.msra.mxu0 0
        %3686 = vmatprep.subr.bf16.mxu0 0
        %3687 = vmatpush1.bf16.msra.mxu0 0
        %3688 = vmatprep.subr.bf16.mxu0 0
        %3689 = vmatpush1.bf16.msra.mxu0 0
        %3690 = vmatprep.subr.bf16.mxu0 0
        %3691 = vmatpush1.bf16.msra.mxu0 0
        %3692 = vmatprep.subr.bf16.mxu0 0
        %3693 = vmatpush1.bf16.msra.mxu0 0
        %3694 = vmatprep.subr.bf16.mxu0 0
        %3695 = vmatpush1.bf16.msra.mxu0 0
        %3696 = vmatprep.subr.bf16.mxu0 0
        %3697 = vmatpush1.bf16.msra.mxu0 0
        %3698 = vmatprep.subr.bf16.mxu0 0
        %3699 = vmatpush1.bf16.msra.mxu0 0
        %3700 = vmatprep.mubr.bf16.mxu0 0
        %3701 = vmatmul.mubr.bf16.gmra.mrb[0].mxu0 %v3666
        %v3702 = vpop.f32.mrb[0].mxu0
        %v3703 = vadd.f32 0.0, %v3702
        %v3704 = vpop.f32.mrb[0].mxu0
        %v3705 = vpop.f32.mrb[0].mxu0
        %v3706 = vpop.f32.mrb[0].mxu0
        %3707 = vdwg.mxu0
        %v3716 = vunpack.c.l.b16 %v3622
        %v3717 = vunpack.c.l.b16 %v3623
        %v3718 = vunpack.c.l.b16 %v3624
        %v3719 = vunpack.c.l.b16 %v3625
        %v3720 = vunpack.c.l.b16 %v3626
        %v3721 = vunpack.c.l.b16 %v3627
        %v3722 = vunpack.c.l.b16 %v3628
        %v3723 = vunpack.c.l.b16 %v3629
        %v3724 = vpack.c.b16 %v3717, %v3716
        %v3725 = vpack.c.b16 %v3719, %v3718
        %v3726 = vpack.c.b16 %v3721, %v3720
        %v3727 = vpack.c.b16 %v3723, %v3722
        %v3733 = vsel %vm2185, %v3621, 0
        %3735 = vmatprep.subr.bf16.mxu0 0
        %3736 = vmatpush1.bf16.msra.mxu0 %v3724
        %3737 = vmatprep.subr.bf16.mxu0 0
        %3738 = vmatpush1.bf16.msra.mxu0 %v3725
        %3739 = vmatprep.subr.bf16.mxu0 0
        %3740 = vmatpush1.bf16.msra.mxu0 %v3726
        %3741 = vmatprep.subr.bf16.mxu0 0
        %3742 = vmatpush1.bf16.msra.mxu0 %v3727
        %3743 = vmatprep.subr.bf16.mxu0 0
        %3744 = vmatpush1.bf16.msra.mxu0 0
        %3745 = vmatprep.subr.bf16.mxu0 0
        %3746 = vmatpush1.bf16.msra.mxu0 0
        %3747 = vmatprep.subr.bf16.mxu0 0
        %3748 = vmatpush1.bf16.msra.mxu0 0
        %3749 = vmatprep.subr.bf16.mxu0 0
        %3750 = vmatpush1.bf16.msra.mxu0 0
        %3751 = vmatprep.subr.bf16.mxu0 0
        %3752 = vmatpush1.bf16.msra.mxu0 0
        %3753 = vmatprep.subr.bf16.mxu0 0
        %3754 = vmatpush1.bf16.msra.mxu0 0
        %3755 = vmatprep.subr.bf16.mxu0 0
        %3756 = vmatpush1.bf16.msra.mxu0 0
        %3757 = vmatprep.subr.bf16.mxu0 0
        %3758 = vmatpush1.bf16.msra.mxu0 0
        %3759 = vmatprep.subr.bf16.mxu0 0
        %3760 = vmatpush1.bf16.msra.mxu0 0
        %3761 = vmatprep.subr.bf16.mxu0 0
        %3762 = vmatpush1.bf16.msra.mxu0 0
        %3763 = vmatprep.subr.bf16.mxu0 0
        %3764 = vmatpush1.bf16.msra.mxu0 0
        %3765 = vmatprep.subr.bf16.mxu0 0
        %3766 = vmatpush1.bf16.msra.mxu0 0
        %3767 = vmatprep.mubr.bf16.mxu0 0
        %3768 = vmatmul.mubr.bf16.gmra.mrb[0].mxu0 %v3733
        %v3769 = vpop.f32.mrb[0].mxu0
        %v3770 = vadd.f32 %v3703, %v3769
        %v3771 = vpop.f32.mrb[0].mxu0
        %v3772 = vpop.f32.mrb[0].mxu0
        %v3773 = vpop.f32.mrb[0].mxu0
        %3774 = vdwg.mxu0
        %v3775 = vld [vmem:[#allocation2 + $0x2] sm:$0xf]
        %v3776 = vpack.c.bf16 %v3775, %v3775
        %s3777 = scalar_lea.vmem [#allocation13], 64
        %v3778 = vld [vmem:[%s3777] sm:$0xf]
        %v3779 = vld [vmem:[%s3777 + $0x4] sm:$0xf]
        %v3780 = vld [vmem:[%s3777 + $0x8] sm:$0xf]
        %v3781 = vld [vmem:[%s3777 + $0xc] sm:$0xf]
        %v3782 = vld [vmem:[%s3777 + $0x10] sm:$0xf]
        %v3783 = vld [vmem:[%s3777 + $0x14] sm:$0xf]
        %v3784 = vld [vmem:[%s3777 + $0x18] sm:$0xf]
        %v3785 = vld [vmem:[%s3777 + $0x1c] sm:$0xf]
        %v3794 = vunpack.c.l.b16 %v3778
        %v3795 = vunpack.c.l.b16 %v3779
        %v3796 = vunpack.c.l.b16 %v3780
        %v3797 = vunpack.c.l.b16 %v3781
        %v3798 = vunpack.c.l.b16 %v3782
        %v3799 = vunpack.c.l.b16 %v3783
        %v3800 = vunpack.c.l.b16 %v3784
        %v3801 = vunpack.c.l.b16 %v3785
        %v3802 = vpack.c.b16 %v3795, %v3794
        %v3803 = vpack.c.b16 %v3797, %v3796
        %v3804 = vpack.c.b16 %v3799, %v3798
        %v3805 = vpack.c.b16 %v3801, %v3800
        %v3811 = vsel %vm2185, %v3776, 0
        %3813 = vmatprep.subr.bf16.mxu0 0
        %3814 = vmatpush1.bf16.msra.mxu0 %v3802
        %3815 = vmatprep.subr.bf16.mxu0 0
        %3816 = vmatpush1.bf16.msra.mxu0 %v3803
        %3817 = vmatprep.subr.bf16.mxu0 0
        %3818 = vmatpush1.bf16.msra.mxu0 %v3804
        %3819 = vmatprep.subr.bf16.mxu0 0
        %3820 = vmatpush1.bf16.msra.mxu0 %v3805
        %3821 = vmatprep.subr.bf16.mxu0 0
        %3822 = vmatpush1.bf16.msra.mxu0 0
        %3823 = vmatprep.subr.bf16.mxu0 0
        %3824 = vmatpush1.bf16.msra.mxu0 0
        %3825 = vmatprep.subr.bf16.mxu0 0
        %3826 = vmatpush1.bf16.msra.mxu0 0
        %3827 = vmatprep.subr.bf16.mxu0 0
        %3828 = vmatpush1.bf16.msra.mxu0 0
        %3829 = vmatprep.subr.bf16.mxu0 0
        %3830 = vmatpush1.bf16.msra.mxu0 0
        %3831 = vmatprep.subr.bf16.mxu0 0
        %3832 = vmatpush1.bf16.msra.mxu0 0
        %3833 = vmatprep.subr.bf16.mxu0 0
        %3834 = vmatpush1.bf16.msra.mxu0 0
        %3835 = vmatprep.subr.bf16.mxu0 0
        %3836 = vmatpush1.bf16.msra.mxu0 0
        %3837 = vmatprep.subr.bf16.mxu0 0
        %3838 = vmatpush1.bf16.msra.mxu0 0
        %3839 = vmatprep.subr.bf16.mxu0 0
        %3840 = vmatpush1.bf16.msra.mxu0 0
        %3841 = vmatprep.subr.bf16.mxu0 0
        %3842 = vmatpush1.bf16.msra.mxu0 0
        %3843 = vmatprep.subr.bf16.mxu0 0
        %3844 = vmatpush1.bf16.msra.mxu0 0
        %3845 = vmatprep.mubr.bf16.mxu0 0
        %3846 = vmatmul.mubr.bf16.gmra.mrb[0].mxu0 %v3811
        %v3847 = vpop.f32.mrb[0].mxu0
        %v3848 = vadd.f32 0.0, %v3847
        %v3849 = vpop.f32.mrb[0].mxu0
        %v3850 = vpop.f32.mrb[0].mxu0
        %v3851 = vpop.f32.mrb[0].mxu0
        %3852 = vdwg.mxu0
        %v3853 = vadd.f32 %v3770, %v3848
        %v3854 = vunpack.c.l.bf16 %v3619
        %v3855 = vlaneseq
        %v3856 = vshrl.u32 %v3855, 7
        %v3857 = vsub.s32 0, %v3856
        %v3858 = vrot.slane %v3854, %v3857
        %v3859 = vadd.f32 %v3853, %v3858
        %v3860 = vmax.f32 %v3859, 0.0
        %3861 = vst [vmem:[#allocation2 + $0x1] sm:$0xf] %v3860
        %3862 = vst [vmem:[#allocation2] sm:$0x1] 0.0
        %3863 = vst [vmem:[#allocation2 + $0x5] sm:$0x1] 0.0
        %v3864 = vld [vmem:[#allocation16] sm:$0x1]
        %v3865 = vld [vmem:[#allocation2] ss:$2 sm:$0x3]
        %v3866 = vpack.c.bf16 %v3865, %v3865
        %v3867 = vld [vmem:[%s31] sm:$0xf]
        %v3868 = vld [vmem:[%s31 + $0x4] sm:$0xf]
        %v3869 = vld [vmem:[%s31 + $0x8] sm:$0xf]
        %v3870 = vld [vmem:[%s31 + $0xc] sm:$0xf]
        %v3871 = vld [vmem:[%s31 + $0x10] sm:$0xf]
        %v3872 = vld [vmem:[%s31 + $0x14] sm:$0xf]
        %v3873 = vld [vmem:[%s31 + $0x18] sm:$0xf]
        %v3874 = vld [vmem:[%s31 + $0x1c] sm:$0xf]
        %v3875 = vld [vmem:[%s31 + $0x20] sm:$0xf]
        %v3876 = vld [vmem:[%s31 + $0x24] sm:$0xf]
        %v3877 = vld [vmem:[%s31 + $0x28] sm:$0xf]
        %v3878 = vld [vmem:[%s31 + $0x2c] sm:$0xf]
        %v3879 = vld [vmem:[%s31 + $0x30] sm:$0xf]
        %v3880 = vld [vmem:[%s31 + $0x34] sm:$0xf]
        %v3881 = vld [vmem:[%s31 + $0x38] sm:$0xf]
        %v3882 = vld [vmem:[%s31 + $0x3c] sm:$0xf]
        %v3883 = vld [vmem:[%s1717] ss:$2 sm:$0x3]
        %v3884 = vpack.c.bf16 %v3883, %v3883
        %s3885 = scalar_lea.vmem %s31, 64
        %v3886 = vld [vmem:[%s3885] sm:$0xf]
        %v3887 = vld [vmem:[%s3885 + $0x4] sm:$0xf]
        %v3888 = vld [vmem:[%s3885 + $0x8] sm:$0xf]
        %v3889 = vld [vmem:[%s3885 + $0xc] sm:$0xf]
        %v3890 = vld [vmem:[%s3885 + $0x10] sm:$0xf]
        %v3891 = vld [vmem:[%s3885 + $0x14] sm:$0xf]
        %v3892 = vld [vmem:[%s3885 + $0x18] sm:$0xf]
        %v3893 = vld [vmem:[%s3885 + $0x1c] sm:$0xf]
        %v3894 = vld [vmem:[%s3885 + $0x20] sm:$0xf]
        %v3895 = vld [vmem:[%s3885 + $0x24] sm:$0xf]
        %v3896 = vld [vmem:[%s3885 + $0x28] sm:$0xf]
        %v3897 = vld [vmem:[%s3885 + $0x2c] sm:$0xf]
        %v3898 = vld [vmem:[%s3885 + $0x30] sm:$0xf]
        %v3899 = vld [vmem:[%s3885 + $0x34] sm:$0xf]
        %v3900 = vld [vmem:[%s3885 + $0x38] sm:$0xf]
        %v3901 = vld [vmem:[%s3885 + $0x3c] sm:$0xf]
        %v3918 = vunpack.c.l.b16 %v3886
        %v3919 = vunpack.c.l.b16 %v3887
        %v3920 = vunpack.c.l.b16 %v3888
        %v3921 = vunpack.c.l.b16 %v3889
        %v3922 = vunpack.c.l.b16 %v3890
        %v3923 = vunpack.c.l.b16 %v3891
        %v3924 = vunpack.c.l.b16 %v3892
        %v3925 = vunpack.c.l.b16 %v3893
        %v3926 = vunpack.c.l.b16 %v3894
        %v3927 = vunpack.c.l.b16 %v3895
        %v3928 = vunpack.c.l.b16 %v3896
        %v3929 = vunpack.c.l.b16 %v3897
        %v3930 = vunpack.c.l.b16 %v3898
        %v3931 = vunpack.c.l.b16 %v3899
        %v3932 = vunpack.c.l.b16 %v3900
        %v3933 = vunpack.c.l.b16 %v3901
        %v3934 = vpack.c.b16 %v3919, %v3918
        %v3935 = vpack.c.b16 %v3921, %v3920
        %v3936 = vpack.c.b16 %v3923, %v3922
        %v3937 = vpack.c.b16 %v3925, %v3924
        %v3938 = vpack.c.b16 %v3927, %v3926
        %v3939 = vpack.c.b16 %v3929, %v3928
        %v3940 = vpack.c.b16 %v3931, %v3930
        %v3941 = vpack.c.b16 %v3933, %v3932
        %3950 = vmatprep.subr.bf16.mxu0 0
        %3951 = vmatpush1.bf16.msra.mxu0 %v3934
        %3952 = vmatprep.subr.bf16.mxu0 0
        %3953 = vmatpush1.bf16.msra.mxu0 %v3935
        %3954 = vmatprep.subr.bf16.mxu0 0
        %3955 = vmatpush1.bf16.msra.mxu0 %v3936
        %3956 = vmatprep.subr.bf16.mxu0 0
        %3957 = vmatpush1.bf16.msra.mxu0 %v3937
        %3958 = vmatprep.subr.bf16.mxu0 0
        %3959 = vmatpush1.bf16.msra.mxu0 %v3938
        %3960 = vmatprep.subr.bf16.mxu0 0
        %3961 = vmatpush1.bf16.msra.mxu0 %v3939
        %3962 = vmatprep.subr.bf16.mxu0 0
        %3963 = vmatpush1.bf16.msra.mxu0 %v3940
        %3964 = vmatprep.subr.bf16.mxu0 0
        %3965 = vmatpush1.bf16.msra.mxu0 %v3941
        %3966 = vmatprep.subr.bf16.mxu0 0
        %3967 = vmatpush1.bf16.msra.mxu0 0
        %3968 = vmatprep.subr.bf16.mxu0 0
        %3969 = vmatpush1.bf16.msra.mxu0 0
        %3970 = vmatprep.subr.bf16.mxu0 0
        %3971 = vmatpush1.bf16.msra.mxu0 0
        %3972 = vmatprep.subr.bf16.mxu0 0
        %3973 = vmatpush1.bf16.msra.mxu0 0
        %3974 = vmatprep.subr.bf16.mxu0 0
        %3975 = vmatpush1.bf16.msra.mxu0 0
        %3976 = vmatprep.subr.bf16.mxu0 0
        %3977 = vmatpush1.bf16.msra.mxu0 0
        %3978 = vmatprep.subr.bf16.mxu0 0
        %3979 = vmatpush1.bf16.msra.mxu0 0
        %3980 = vmatprep.subr.bf16.mxu0 0
        %3981 = vmatpush1.bf16.msra.mxu0 0
        %3982 = vmatprep.mubr.bf16.mxu0 0
        %3983 = vmatmul.mubr.bf16.gmra.mrb[0].mxu0 %v3884
        %v3984 = vpop.f32.mrb[0].mxu0
        %v3985 = vadd.f32 0.0, %v3984
        %v3986 = vpop.f32.mrb[0].mxu0
        %v3987 = vpop.f32.mrb[0].mxu0
        %v3988 = vpop.f32.mrb[0].mxu0
        %3989 = vdwg.mxu0
        %v4006 = vunpack.c.l.b16 %v3867
        %v4007 = vunpack.c.l.b16 %v3868
        %v4008 = vunpack.c.l.b16 %v3869
        %v4009 = vunpack.c.l.b16 %v3870
        %v4010 = vunpack.c.l.b16 %v3871
        %v4011 = vunpack.c.l.b16 %v3872
        %v4012 = vunpack.c.l.b16 %v3873
        %v4013 = vunpack.c.l.b16 %v3874
        %v4014 = vunpack.c.l.b16 %v3875
        %v4015 = vunpack.c.l.b16 %v3876
        %v4016 = vunpack.c.l.b16 %v3877
        %v4017 = vunpack.c.l.b16 %v3878
        %v4018 = vunpack.c.l.b16 %v3879
        %v4019 = vunpack.c.l.b16 %v3880
        %v4020 = vunpack.c.l.b16 %v3881
        %v4021 = vunpack.c.l.b16 %v3882
        %v4022 = vpack.c.b16 %v4007, %v4006
        %v4023 = vpack.c.b16 %v4009, %v4008
        %v4024 = vpack.c.b16 %v4011, %v4010
        %v4025 = vpack.c.b16 %v4013, %v4012
        %v4026 = vpack.c.b16 %v4015, %v4014
        %v4027 = vpack.c.b16 %v4017, %v4016
        %v4028 = vpack.c.b16 %v4019, %v4018
        %v4029 = vpack.c.b16 %v4021, %v4020
        %4038 = vmatprep.subr.bf16.mxu0 0
        %4039 = vmatpush1.bf16.msra.mxu0 %v4022
        %4040 = vmatprep.subr.bf16.mxu0 0
        %4041 = vmatpush1.bf16.msra.mxu0 %v4023
        %4042 = vmatprep.subr.bf16.mxu0 0
        %4043 = vmatpush1.bf16.msra.mxu0 %v4024
        %4044 = vmatprep.subr.bf16.mxu0 0
        %4045 = vmatpush1.bf16.msra.mxu0 %v4025
        %4046 = vmatprep.subr.bf16.mxu0 0
        %4047 = vmatpush1.bf16.msra.mxu0 %v4026
        %4048 = vmatprep.subr.bf16.mxu0 0
        %4049 = vmatpush1.bf16.msra.mxu0 %v4027
        %4050 = vmatprep.subr.bf16.mxu0 0
        %4051 = vmatpush1.bf16.msra.mxu0 %v4028
        %4052 = vmatprep.subr.bf16.mxu0 0
        %4053 = vmatpush1.bf16.msra.mxu0 %v4029
        %4054 = vmatprep.subr.bf16.mxu0 0
        %4055 = vmatpush1.bf16.msra.mxu0 0
        %4056 = vmatprep.subr.bf16.mxu0 0
        %4057 = vmatpush1.bf16.msra.mxu0 0
        %4058 = vmatprep.subr.bf16.mxu0 0
        %4059 = vmatpush1.bf16.msra.mxu0 0
        %4060 = vmatprep.subr.bf16.mxu0 0
        %4061 = vmatpush1.bf16.msra.mxu0 0
        %4062 = vmatprep.subr.bf16.mxu0 0
        %4063 = vmatpush1.bf16.msra.mxu0 0
        %4064 = vmatprep.subr.bf16.mxu0 0
        %4065 = vmatpush1.bf16.msra.mxu0 0
        %4066 = vmatprep.subr.bf16.mxu0 0
        %4067 = vmatpush1.bf16.msra.mxu0 0
        %4068 = vmatprep.subr.bf16.mxu0 0
        %4069 = vmatpush1.bf16.msra.mxu0 0
        %4070 = vmatprep.mubr.bf16.mxu0 0
        %4071 = vmatmul.mubr.bf16.gmra.mrb[0].mxu0 %v3866
        %v4072 = vpop.f32.mrb[0].mxu0
        %v4073 = vadd.f32 %v3985, %v4072
        %v4074 = vpop.f32.mrb[0].mxu0
        %v4075 = vpop.f32.mrb[0].mxu0
        %v4076 = vpop.f32.mrb[0].mxu0
        %4077 = vdwg.mxu0
        %v4078 = vld [vmem:[%s2660] ss:$2 sm:$0x3]
        %v4079 = vpack.c.bf16 %v4078, %v4078
        %s4080 = scalar_lea.vmem %s31, 128
        %v4081 = vld [vmem:[%s4080] sm:$0xf]
        %v4082 = vld [vmem:[%s4080 + $0x4] sm:$0xf]
        %v4083 = vld [vmem:[%s4080 + $0x8] sm:$0xf]
        %v4084 = vld [vmem:[%s4080 + $0xc] sm:$0xf]
        %v4085 = vld [vmem:[%s4080 + $0x10] sm:$0xf]
        %v4086 = vld [vmem:[%s4080 + $0x14] sm:$0xf]
        %v4087 = vld [vmem:[%s4080 + $0x18] sm:$0xf]
        %v4088 = vld [vmem:[%s4080 + $0x1c] sm:$0xf]
        %v4089 = vld [vmem:[%s4080 + $0x20] sm:$0xf]
        %v4090 = vld [vmem:[%s4080 + $0x24] sm:$0xf]
        %v4091 = vld [vmem:[%s4080 + $0x28] sm:$0xf]
        %v4092 = vld [vmem:[%s4080 + $0x2c] sm:$0xf]
        %v4093 = vld [vmem:[%s4080 + $0x30] sm:$0xf]
        %v4094 = vld [vmem:[%s4080 + $0x34] sm:$0xf]
        %v4095 = vld [vmem:[%s4080 + $0x38] sm:$0xf]
        %v4096 = vld [vmem:[%s4080 + $0x3c] sm:$0xf]
        %v4113 = vunpack.c.l.b16 %v4081
        %v4114 = vunpack.c.l.b16 %v4082
        %v4115 = vunpack.c.l.b16 %v4083
        %v4116 = vunpack.c.l.b16 %v4084
        %v4117 = vunpack.c.l.b16 %v4085
        %v4118 = vunpack.c.l.b16 %v4086
        %v4119 = vunpack.c.l.b16 %v4087
        %v4120 = vunpack.c.l.b16 %v4088
        %v4121 = vunpack.c.l.b16 %v4089
        %v4122 = vunpack.c.l.b16 %v4090
        %v4123 = vunpack.c.l.b16 %v4091
        %v4124 = vunpack.c.l.b16 %v4092
        %v4125 = vunpack.c.l.b16 %v4093
        %v4126 = vunpack.c.l.b16 %v4094
        %v4127 = vunpack.c.l.b16 %v4095
        %v4128 = vunpack.c.l.b16 %v4096
        %v4129 = vpack.c.b16 %v4114, %v4113
        %v4130 = vpack.c.b16 %v4116, %v4115
        %v4131 = vpack.c.b16 %v4118, %v4117
        %v4132 = vpack.c.b16 %v4120, %v4119
        %v4133 = vpack.c.b16 %v4122, %v4121
        %v4134 = vpack.c.b16 %v4124, %v4123
        %v4135 = vpack.c.b16 %v4126, %v4125
        %v4136 = vpack.c.b16 %v4128, %v4127
        %4145 = vmatprep.subr.bf16.mxu0 0
        %4146 = vmatpush1.bf16.msra.mxu0 %v4129
        %4147 = vmatprep.subr.bf16.mxu0 0
        %4148 = vmatpush1.bf16.msra.mxu0 %v4130
        %4149 = vmatprep.subr.bf16.mxu0 0
        %4150 = vmatpush1.bf16.msra.mxu0 %v4131
        %4151 = vmatprep.subr.bf16.mxu0 0
        %4152 = vmatpush1.bf16.msra.mxu0 %v4132
        %4153 = vmatprep.subr.bf16.mxu0 0
        %4154 = vmatpush1.bf16.msra.mxu0 %v4133
        %4155 = vmatprep.subr.bf16.mxu0 0
        %4156 = vmatpush1.bf16.msra.mxu0 %v4134
        %4157 = vmatprep.subr.bf16.mxu0 0
        %4158 = vmatpush1.bf16.msra.mxu0 %v4135
        %4159 = vmatprep.subr.bf16.mxu0 0
        %4160 = vmatpush1.bf16.msra.mxu0 %v4136
        %4161 = vmatprep.subr.bf16.mxu0 0
        %4162 = vmatpush1.bf16.msra.mxu0 0
        %4163 = vmatprep.subr.bf16.mxu0 0
        %4164 = vmatpush1.bf16.msra.mxu0 0
        %4165 = vmatprep.subr.bf16.mxu0 0
        %4166 = vmatpush1.bf16.msra.mxu0 0
        %4167 = vmatprep.subr.bf16.mxu0 0
        %4168 = vmatpush1.bf16.msra.mxu0 0
        %4169 = vmatprep.subr.bf16.mxu0 0
        %4170 = vmatpush1.bf16.msra.mxu0 0
        %4171 = vmatprep.subr.bf16.mxu0 0
        %4172 = vmatpush1.bf16.msra.mxu0 0
        %4173 = vmatprep.subr.bf16.mxu0 0
        %4174 = vmatpush1.bf16.msra.mxu0 0
        %4175 = vmatprep.subr.bf16.mxu0 0
        %4176 = vmatpush1.bf16.msra.mxu0 0
        %4177 = vmatprep.mubr.bf16.mxu0 0
        %4178 = vmatmul.mubr.bf16.gmra.mrb[0].mxu0 %v4079
        %v4179 = vpop.f32.mrb[0].mxu0
        %v4180 = vadd.f32 0.0, %v4179
        %v4181 = vpop.f32.mrb[0].mxu0
        %v4182 = vpop.f32.mrb[0].mxu0
        %v4183 = vpop.f32.mrb[0].mxu0
        %4184 = vdwg.mxu0
        %v4185 = vadd.f32 %v4073, %v4180
        %v4186 = vunpack.c.l.bf16 %v3864
        %v4187 = vlaneseq
        %v4188 = vshrl.u32 %v4187, 7
        %v4189 = vsub.s32 0, %v4188
        %v4190 = vrot.slane %v4186, %v4189
        %v4191 = vadd.f32 %v4185, %v4190
        %v4192 = vmax.f32 %v4191, 0.0
        %4193 = vmatprep.subr.bf16.mxu0 0
        %4194 = vmatpush1.bf16.msra.mxu0 %v3934
        %4195 = vmatprep.subr.bf16.mxu0 0
        %4196 = vmatpush1.bf16.msra.mxu0 %v3935
        %4197 = vmatprep.subr.bf16.mxu0 0
        %4198 = vmatpush1.bf16.msra.mxu0 %v3936
        %4199 = vmatprep.subr.bf16.mxu0 0
        %4200 = vmatpush1.bf16.msra.mxu0 %v3937
        %4201 = vmatprep.subr.bf16.mxu0 0
        %4202 = vmatpush1.bf16.msra.mxu0 %v3938
        %4203 = vmatprep.subr.bf16.mxu0 0
        %4204 = vmatpush1.bf16.msra.mxu0 %v3939
        %4205 = vmatprep.subr.bf16.mxu0 0
        %4206 = vmatpush1.bf16.msra.mxu0 %v3940
        %4207 = vmatprep.subr.bf16.mxu0 0
        %4208 = vmatpush1.bf16.msra.mxu0 %v3941
        %4209 = vmatprep.subr.bf16.mxu0 0
        %4210 = vmatpush1.bf16.msra.mxu0 0
        %4211 = vmatprep.subr.bf16.mxu0 0
        %4212 = vmatpush1.bf16.msra.mxu0 0
        %4213 = vmatprep.subr.bf16.mxu0 0
        %4214 = vmatpush1.bf16.msra.mxu0 0
        %4215 = vmatprep.subr.bf16.mxu0 0
        %4216 = vmatpush1.bf16.msra.mxu0 0
        %4217 = vmatprep.subr.bf16.mxu0 0
        %4218 = vmatpush1.bf16.msra.mxu0 0
        %4219 = vmatprep.subr.bf16.mxu0 0
        %4220 = vmatpush1.bf16.msra.mxu0 0
        %4221 = vmatprep.subr.bf16.mxu0 0
        %4222 = vmatpush1.bf16.msra.mxu0 0
        %4223 = vmatprep.subr.bf16.mxu0 0
        %4224 = vmatpush1.bf16.msra.mxu0 0
        %4225 = vmatprep.mubr.bf16.mxu0 0
        %4226 = vmatmul.mubr.bf16.gmra.mrb[0].mxu0 %v4079
        %v4227 = vpop.f32.mrb[0].mxu0
        %v4228 = vadd.f32 0.0, %v4227
        %v4229 = vpop.f32.mrb[0].mxu0
        %v4230 = vpop.f32.mrb[0].mxu0
        %v4231 = vpop.f32.mrb[0].mxu0
        %4232 = vdwg.mxu0
        %4233 = vmatprep.subr.bf16.mxu0 0
        %4234 = vmatpush1.bf16.msra.mxu0 %v4022
        %4235 = vmatprep.subr.bf16.mxu0 0
        %4236 = vmatpush1.bf16.msra.mxu0 %v4023
        %4237 = vmatprep.subr.bf16.mxu0 0
        %4238 = vmatpush1.bf16.msra.mxu0 %v4024
        %4239 = vmatprep.subr.bf16.mxu0 0
        %4240 = vmatpush1.bf16.msra.mxu0 %v4025
        %4241 = vmatprep.subr.bf16.mxu0 0
        %4242 = vmatpush1.bf16.msra.mxu0 %v4026
        %4243 = vmatprep.subr.bf16.mxu0 0
        %4244 = vmatpush1.bf16.msra.mxu0 %v4027
        %4245 = vmatprep.subr.bf16.mxu0 0
        %4246 = vmatpush1.bf16.msra.mxu0 %v4028
        %4247 = vmatprep.subr.bf16.mxu0 0
        %4248 = vmatpush1.bf16.msra.mxu0 %v4029
        %4249 = vmatprep.subr.bf16.mxu0 0
        %4250 = vmatpush1.bf16.msra.mxu0 0
        %4251 = vmatprep.subr.bf16.mxu0 0
        %4252 = vmatpush1.bf16.msra.mxu0 0
        %4253 = vmatprep.subr.bf16.mxu0 0
        %4254 = vmatpush1.bf16.msra.mxu0 0
        %4255 = vmatprep.subr.bf16.mxu0 0
        %4256 = vmatpush1.bf16.msra.mxu0 0
        %4257 = vmatprep.subr.bf16.mxu0 0
        %4258 = vmatpush1.bf16.msra.mxu0 0
        %4259 = vmatprep.subr.bf16.mxu0 0
        %4260 = vmatpush1.bf16.msra.mxu0 0
        %4261 = vmatprep.subr.bf16.mxu0 0
        %4262 = vmatpush1.bf16.msra.mxu0 0
        %4263 = vmatprep.subr.bf16.mxu0 0
        %4264 = vmatpush1.bf16.msra.mxu0 0
        %4265 = vmatprep.mubr.bf16.mxu0 0
        %4266 = vmatmul.mubr.bf16.gmra.mrb[0].mxu0 %v3884
        %v4267 = vpop.f32.mrb[0].mxu0
        %v4268 = vadd.f32 %v4228, %v4267
        %v4269 = vpop.f32.mrb[0].mxu0
        %v4270 = vpop.f32.mrb[0].mxu0
        %v4271 = vpop.f32.mrb[0].mxu0
        %4272 = vdwg.mxu0
        %v4273 = vld [vmem:[%s2121] ss:$2 sm:$0x3]
        %v4274 = vpack.c.bf16 %v4273, %v4273
        %4275 = vmatprep.subr.bf16.mxu0 0
        %4276 = vmatpush1.bf16.msra.mxu0 %v4129
        %4277 = vmatprep.subr.bf16.mxu0 0
        %4278 = vmatpush1.bf16.msra.mxu0 %v4130
        %4279 = vmatprep.subr.bf16.mxu0 0
        %4280 = vmatpush1.bf16.msra.mxu0 %v4131
        %4281 = vmatprep.subr.bf16.mxu0 0
        %4282 = vmatpush1.bf16.msra.mxu0 %v4132
        %4283 = vmatprep.subr.bf16.mxu0 0
        %4284 = vmatpush1.bf16.msra.mxu0 %v4133
        %4285 = vmatprep.subr.bf16.mxu0 0
        %4286 = vmatpush1.bf16.msra.mxu0 %v4134
        %4287 = vmatprep.subr.bf16.mxu0 0
        %4288 = vmatpush1.bf16.msra.mxu0 %v4135
        %4289 = vmatprep.subr.bf16.mxu0 0
        %4290 = vmatpush1.bf16.msra.mxu0 %v4136
        %4291 = vmatprep.subr.bf16.mxu0 0
        %4292 = vmatpush1.bf16.msra.mxu0 0
        %4293 = vmatprep.subr.bf16.mxu0 0
        %4294 = vmatpush1.bf16.msra.mxu0 0
        %4295 = vmatprep.subr.bf16.mxu0 0
        %4296 = vmatpush1.bf16.msra.mxu0 0
        %4297 = vmatprep.subr.bf16.mxu0 0
        %4298 = vmatpush1.bf16.msra.mxu0 0
        %4299 = vmatprep.subr.bf16.mxu0 0
        %4300 = vmatpush1.bf16.msra.mxu0 0
        %4301 = vmatprep.subr.bf16.mxu0 0
        %4302 = vmatpush1.bf16.msra.mxu0 0
        %4303 = vmatprep.subr.bf16.mxu0 0
        %4304 = vmatpush1.bf16.msra.mxu0 0
        %4305 = vmatprep.subr.bf16.mxu0 0
        %4306 = vmatpush1.bf16.msra.mxu0 0
        %4307 = vmatprep.mubr.bf16.mxu0 0
        %4308 = vmatmul.mubr.bf16.gmra.mrb[0].mxu0 %v4274
        %v4309 = vpop.f32.mrb[0].mxu0
        %v4310 = vadd.f32 0.0, %v4309
        %v4311 = vpop.f32.mrb[0].mxu0
        %v4312 = vpop.f32.mrb[0].mxu0
        %v4313 = vpop.f32.mrb[0].mxu0
        %4314 = vdwg.mxu0
        %v4315 = vadd.f32 %v4268, %v4310
        %v4316 = vadd.f32 %v4315, %v4190
        %v4317 = vmax.f32 %v4316, 0.0
        %v4318 = vmax.f32 %v4192, %v4317
        %4320 = vrot.lane.b32.xlu0 %v4318, 64
        %v4321 = vpop.permute.xlu0 %4320
        %v4323 = vmax.f32 %v4318, %v4321
        %4324 = vst [vmem:[%s1717] ss:$2 sm:$0x3] %v4323
        %4325 = vst [vmem:[%s2660] ss:$2 sm:$0x3] %v4323
        %4326 = vst.msk [vmem:[#allocation2] sm:$0x1] %vm2188, 0.0
        %4327 = vst.msk [vmem:[#allocation2 + $0x5] sm:$0x1] %vm2188, 0.0
        %v4328 = vld [vmem:[#allocation17] sm:$0x1]
        %v4329 = vld [vmem:[#allocation2] sm:$0xf]
        %v4330 = vpack.c.bf16 %v4329, %v4329
        %v4331 = vld [vmem:[%s35] sm:$0xf]
        %v4332 = vld [vmem:[%s35 + $0x4] sm:$0xf]
        %v4333 = vld [vmem:[%s35 + $0x8] sm:$0xf]
        %v4334 = vld [vmem:[%s35 + $0xc] sm:$0xf]
        %v4335 = vld [vmem:[%s35 + $0x10] sm:$0xf]
        %v4336 = vld [vmem:[%s35 + $0x14] sm:$0xf]
        %v4337 = vld [vmem:[%s35 + $0x18] sm:$0xf]
        %v4338 = vld [vmem:[%s35 + $0x1c] sm:$0xf]
        %v4339 = vld [vmem:[#allocation2 + $0x1] sm:$0xf]
        %v4340 = vpack.c.bf16 %v4339, %v4339
        %s4341 = scalar_lea.vmem %s35, 32
        %v4342 = vld [vmem:[%s4341] sm:$0xf]
        %v4343 = vld [vmem:[%s4341 + $0x4] sm:$0xf]
        %v4344 = vld [vmem:[%s4341 + $0x8] sm:$0xf]
        %v4345 = vld [vmem:[%s4341 + $0xc] sm:$0xf]
        %v4346 = vld [vmem:[%s4341 + $0x10] sm:$0xf]
        %v4347 = vld [vmem:[%s4341 + $0x14] sm:$0xf]
        %v4348 = vld [vmem:[%s4341 + $0x18] sm:$0xf]
        %v4349 = vld [vmem:[%s4341 + $0x1c] sm:$0xf]
        %v4358 = vunpack.c.l.b16 %v4342
        %v4359 = vunpack.c.l.b16 %v4343
        %v4360 = vunpack.c.l.b16 %v4344
        %v4361 = vunpack.c.l.b16 %v4345
        %v4362 = vunpack.c.l.b16 %v4346
        %v4363 = vunpack.c.l.b16 %v4347
        %v4364 = vunpack.c.l.b16 %v4348
        %v4365 = vunpack.c.l.b16 %v4349
        %v4366 = vpack.c.b16 %v4359, %v4358
        %v4367 = vpack.c.b16 %v4361, %v4360
        %v4368 = vpack.c.b16 %v4363, %v4362
        %v4369 = vpack.c.b16 %v4365, %v4364
        %v4375 = vsel %vm2185, %v4340, 0
        %4377 = vmatprep.subr.bf16.mxu0 0
        %4378 = vmatpush1.bf16.msra.mxu0 %v4366
        %4379 = vmatprep.subr.bf16.mxu0 0
        %4380 = vmatpush1.bf16.msra.mxu0 %v4367
        %4381 = vmatprep.subr.bf16.mxu0 0
        %4382 = vmatpush1.bf16.msra.mxu0 %v4368
        %4383 = vmatprep.subr.bf16.mxu0 0
        %4384 = vmatpush1.bf16.msra.mxu0 %v4369
        %4385 = vmatprep.subr.bf16.mxu0 0
        %4386 = vmatpush1.bf16.msra.mxu0 0
        %4387 = vmatprep.subr.bf16.mxu0 0
        %4388 = vmatpush1.bf16.msra.mxu0 0
        %4389 = vmatprep.subr.bf16.mxu0 0
        %4390 = vmatpush1.bf16.msra.mxu0 0
        %4391 = vmatprep.subr.bf16.mxu0 0
        %4392 = vmatpush1.bf16.msra.mxu0 0
        %4393 = vmatprep.subr.bf16.mxu0 0
        %4394 = vmatpush1.bf16.msra.mxu0 0
        %4395 = vmatprep.subr.bf16.mxu0 0
        %4396 = vmatpush1.bf16.msra.mxu0 0
        %4397 = vmatprep.subr.bf16.mxu0 0
        %4398 = vmatpush1.bf16.msra.mxu0 0
        %4399 = vmatprep.subr.bf16.mxu0 0
        %4400 = vmatpush1.bf16.msra.mxu0 0
        %4401 = vmatprep.subr.bf16.mxu0 0
        %4402 = vmatpush1.bf16.msra.mxu0 0
        %4403 = vmatprep.subr.bf16.mxu0 0
        %4404 = vmatpush1.bf16.msra.mxu0 0
        %4405 = vmatprep.subr.bf16.mxu0 0
        %4406 = vmatpush1.bf16.msra.mxu0 0
        %4407 = vmatprep.subr.bf16.mxu0 0
        %4408 = vmatpush1.bf16.msra.mxu0 0
        %4409 = vmatprep.mubr.bf16.mxu0 0
        %4410 = vmatmul.mubr.bf16.gmra.mrb[0].mxu0 %v4375
        %v4411 = vpop.f32.mrb[0].mxu0
        %v4412 = vadd.f32 0.0, %v4411
        %v4413 = vpop.f32.mrb[0].mxu0
        %v4414 = vpop.f32.mrb[0].mxu0
        %v4415 = vpop.f32.mrb[0].mxu0
        %4416 = vdwg.mxu0
        %v4425 = vunpack.c.l.b16 %v4331
        %v4426 = vunpack.c.l.b16 %v4332
        %v4427 = vunpack.c.l.b16 %v4333
        %v4428 = vunpack.c.l.b16 %v4334
        %v4429 = vunpack.c.l.b16 %v4335
        %v4430 = vunpack.c.l.b16 %v4336
        %v4431 = vunpack.c.l.b16 %v4337
        %v4432 = vunpack.c.l.b16 %v4338
        %v4433 = vpack.c.b16 %v4426, %v4425
        %v4434 = vpack.c.b16 %v4428, %v4427
        %v4435 = vpack.c.b16 %v4430, %v4429
        %v4436 = vpack.c.b16 %v4432, %v4431
        %v4442 = vsel %vm2185, %v4330, 0
        %4444 = vmatprep.subr.bf16.mxu0 0
        %4445 = vmatpush1.bf16.msra.mxu0 %v4433
        %4446 = vmatprep.subr.bf16.mxu0 0
        %4447 = vmatpush1.bf16.msra.mxu0 %v4434
        %4448 = vmatprep.subr.bf16.mxu0 0
        %4449 = vmatpush1.bf16.msra.mxu0 %v4435
        %4450 = vmatprep.subr.bf16.mxu0 0
        %4451 = vmatpush1.bf16.msra.mxu0 %v4436
        %4452 = vmatprep.subr.bf16.mxu0 0
        %4453 = vmatpush1.bf16.msra.mxu0 0
        %4454 = vmatprep.subr.bf16.mxu0 0
        %4455 = vmatpush1.bf16.msra.mxu0 0
        %4456 = vmatprep.subr.bf16.mxu0 0
        %4457 = vmatpush1.bf16.msra.mxu0 0
        %4458 = vmatprep.subr.bf16.mxu0 0
        %4459 = vmatpush1.bf16.msra.mxu0 0
        %4460 = vmatprep.subr.bf16.mxu0 0
        %4461 = vmatpush1.bf16.msra.mxu0 0
        %4462 = vmatprep.subr.bf16.mxu0 0
        %4463 = vmatpush1.bf16.msra.mxu0 0
        %4464 = vmatprep.subr.bf16.mxu0 0
        %4465 = vmatpush1.bf16.msra.mxu0 0
        %4466 = vmatprep.subr.bf16.mxu0 0
        %4467 = vmatpush1.bf16.msra.mxu0 0
        %4468 = vmatprep.subr.bf16.mxu0 0
        %4469 = vmatpush1.bf16.msra.mxu0 0
        %4470 = vmatprep.subr.bf16.mxu0 0
        %4471 = vmatpush1.bf16.msra.mxu0 0
        %4472 = vmatprep.subr.bf16.mxu0 0
        %4473 = vmatpush1.bf16.msra.mxu0 0
        %4474 = vmatprep.subr.bf16.mxu0 0
        %4475 = vmatpush1.bf16.msra.mxu0 0
        %4476 = vmatprep.mubr.bf16.mxu0 0
        %4477 = vmatmul.mubr.bf16.gmra.mrb[0].mxu0 %v4442
        %v4478 = vpop.f32.mrb[0].mxu0
        %v4479 = vadd.f32 %v4412, %v4478
        %v4480 = vpop.f32.mrb[0].mxu0
        %v4481 = vpop.f32.mrb[0].mxu0
        %v4482 = vpop.f32.mrb[0].mxu0
        %4483 = vdwg.mxu0
        %v4484 = vld [vmem:[#allocation2 + $0x2] sm:$0xf]
        %v4485 = vpack.c.bf16 %v4484, %v4484
        %s4486 = scalar_lea.vmem %s35, 64
        %v4487 = vld [vmem:[%s4486] sm:$0xf]
        %v4488 = vld [vmem:[%s4486 + $0x4] sm:$0xf]
        %v4489 = vld [vmem:[%s4486 + $0x8] sm:$0xf]
        %v4490 = vld [vmem:[%s4486 + $0xc] sm:$0xf]
        %v4491 = vld [vmem:[%s4486 + $0x10] sm:$0xf]
        %v4492 = vld [vmem:[%s4486 + $0x14] sm:$0xf]
        %v4493 = vld [vmem:[%s4486 + $0x18] sm:$0xf]
        %v4494 = vld [vmem:[%s4486 + $0x1c] sm:$0xf]
        %v4503 = vunpack.c.l.b16 %v4487
        %v4504 = vunpack.c.l.b16 %v4488
        %v4505 = vunpack.c.l.b16 %v4489
        %v4506 = vunpack.c.l.b16 %v4490
        %v4507 = vunpack.c.l.b16 %v4491
        %v4508 = vunpack.c.l.b16 %v4492
        %v4509 = vunpack.c.l.b16 %v4493
        %v4510 = vunpack.c.l.b16 %v4494
        %v4511 = vpack.c.b16 %v4504, %v4503
        %v4512 = vpack.c.b16 %v4506, %v4505
        %v4513 = vpack.c.b16 %v4508, %v4507
        %v4514 = vpack.c.b16 %v4510, %v4509
        %v4520 = vsel %vm2185, %v4485, 0
        %4522 = vmatprep.subr.bf16.mxu0 0
        %4523 = vmatpush1.bf16.msra.mxu0 %v4511
        %4524 = vmatprep.subr.bf16.mxu0 0
        %4525 = vmatpush1.bf16.msra.mxu0 %v4512
        %4526 = vmatprep.subr.bf16.mxu0 0
        %4527 = vmatpush1.bf16.msra.mxu0 %v4513
        %4528 = vmatprep.subr.bf16.mxu0 0
        %4529 = vmatpush1.bf16.msra.mxu0 %v4514
        %4530 = vmatprep.subr.bf16.mxu0 0
        %4531 = vmatpush1.bf16.msra.mxu0 0
        %4532 = vmatprep.subr.bf16.mxu0 0
        %4533 = vmatpush1.bf16.msra.mxu0 0
        %4534 = vmatprep.subr.bf16.mxu0 0
        %4535 = vmatpush1.bf16.msra.mxu0 0
        %4536 = vmatprep.subr.bf16.mxu0 0
        %4537 = vmatpush1.bf16.msra.mxu0 0
        %4538 = vmatprep.subr.bf16.mxu0 0
        %4539 = vmatpush1.bf16.msra.mxu0 0
        %4540 = vmatprep.subr.bf16.mxu0 0
        %4541 = vmatpush1.bf16.msra.mxu0 0
        %4542 = vmatprep.subr.bf16.mxu0 0
        %4543 = vmatpush1.bf16.msra.mxu0 0
        %4544 = vmatprep.subr.bf16.mxu0 0
        %4545 = vmatpush1.bf16.msra.mxu0 0
        %4546 = vmatprep.subr.bf16.mxu0 0
        %4547 = vmatpush1.bf16.msra.mxu0 0
        %4548 = vmatprep.subr.bf16.mxu0 0
        %4549 = vmatpush1.bf16.msra.mxu0 0
        %4550 = vmatprep.subr.bf16.mxu0 0
        %4551 = vmatpush1.bf16.msra.mxu0 0
        %4552 = vmatprep.subr.bf16.mxu0 0
        %4553 = vmatpush1.bf16.msra.mxu0 0
        %4554 = vmatprep.mubr.bf16.mxu0 0
        %4555 = vmatmul.mubr.bf16.gmra.mrb[0].mxu0 %v4520
        %v4556 = vpop.f32.mrb[0].mxu0
        %v4557 = vadd.f32 0.0, %v4556
        %v4558 = vpop.f32.mrb[0].mxu0
        %v4559 = vpop.f32.mrb[0].mxu0
        %v4560 = vpop.f32.mrb[0].mxu0
        %4561 = vdwg.mxu0
        %v4562 = vadd.f32 %v4479, %v4557
        %v4563 = vunpack.c.l.bf16 %v4328
        %v4564 = vlaneseq
        %v4565 = vshrl.u32 %v4564, 7
        %v4566 = vsub.s32 0, %v4565
        %v4567 = vrot.slane %v4563, %v4566
        %v4568 = vadd.f32 %v4562, %v4567
        %v4569 = vmax.f32 %v4568, 0.0
        %4570 = vst.msk [vmem:[#allocation2 + $0x1] sm:$0xf] %vm3615, %v4569
        %4571 = vst.msk [vmem:[#allocation2] sm:$0x1] %vm2188, 0.0
        %4572 = vst.msk [vmem:[#allocation2 + $0x5] sm:$0x1] %vm2188, 0.0
        %v4573 = vld [vmem:[%s41] sm:$0x1]
        %v4574 = vld [vmem:[#allocation2] sm:$0xf]
        %v4575 = vpack.c.bf16 %v4574, %v4574
        %v4576 = vld [vmem:[#allocation19] sm:$0xf]
        %v4577 = vld [vmem:[#allocation19 + $0x4] sm:$0xf]
        %v4578 = vld [vmem:[#allocation19 + $0x8] sm:$0xf]
        %v4579 = vld [vmem:[#allocation19 + $0xc] sm:$0xf]
        %v4580 = vld [vmem:[#allocation19 + $0x10] sm:$0xf]
        %v4581 = vld [vmem:[#allocation19 + $0x14] sm:$0xf]
        %v4582 = vld [vmem:[#allocation19 + $0x18] sm:$0xf]
        %v4583 = vld [vmem:[#allocation19 + $0x1c] sm:$0xf]
        %v4584 = vld [vmem:[#allocation2 + $0x1] sm:$0xf]
        %v4585 = vpack.c.bf16 %v4584, %v4584
        %s4586 = scalar_lea.vmem [#allocation19], 32
        %v4587 = vld [vmem:[%s4586] sm:$0xf]
        %v4588 = vld [vmem:[%s4586 + $0x4] sm:$0xf]
        %v4589 = vld [vmem:[%s4586 + $0x8] sm:$0xf]
        %v4590 = vld [vmem:[%s4586 + $0xc] sm:$0xf]
        %v4591 = vld [vmem:[%s4586 + $0x10] sm:$0xf]
        %v4592 = vld [vmem:[%s4586 + $0x14] sm:$0xf]
        %v4593 = vld [vmem:[%s4586 + $0x18] sm:$0xf]
        %v4594 = vld [vmem:[%s4586 + $0x1c] sm:$0xf]
        %v4603 = vunpack.c.l.b16 %v4587
        %v4604 = vunpack.c.l.b16 %v4588
        %v4605 = vunpack.c.l.b16 %v4589
        %v4606 = vunpack.c.l.b16 %v4590
        %v4607 = vunpack.c.l.b16 %v4591
        %v4608 = vunpack.c.l.b16 %v4592
        %v4609 = vunpack.c.l.b16 %v4593
        %v4610 = vunpack.c.l.b16 %v4594
        %v4611 = vpack.c.b16 %v4604, %v4603
        %v4612 = vpack.c.b16 %v4606, %v4605
        %v4613 = vpack.c.b16 %v4608, %v4607
        %v4614 = vpack.c.b16 %v4610, %v4609
        %v4620 = vsel %vm2185, %v4585, 0
        %4622 = vmatprep.subr.bf16.mxu0 0
        %4623 = vmatpush1.bf16.msra.mxu0 %v4611
        %4624 = vmatprep.subr.bf16.mxu0 0
        %4625 = vmatpush1.bf16.msra.mxu0 %v4612
        %4626 = vmatprep.subr.bf16.mxu0 0
        %4627 = vmatpush1.bf16.msra.mxu0 %v4613
        %4628 = vmatprep.subr.bf16.mxu0 0
        %4629 = vmatpush1.bf16.msra.mxu0 %v4614
        %4630 = vmatprep.subr.bf16.mxu0 0
        %4631 = vmatpush1.bf16.msra.mxu0 0
        %4632 = vmatprep.subr.bf16.mxu0 0
        %4633 = vmatpush1.bf16.msra.mxu0 0
        %4634 = vmatprep.subr.bf16.mxu0 0
        %4635 = vmatpush1.bf16.msra.mxu0 0
        %4636 = vmatprep.subr.bf16.mxu0 0
        %4637 = vmatpush1.bf16.msra.mxu0 0
        %4638 = vmatprep.subr.bf16.mxu0 0
        %4639 = vmatpush1.bf16.msra.mxu0 0
        %4640 = vmatprep.subr.bf16.mxu0 0
        %4641 = vmatpush1.bf16.msra.mxu0 0
        %4642 = vmatprep.subr.bf16.mxu0 0
        %4643 = vmatpush1.bf16.msra.mxu0 0
        %4644 = vmatprep.subr.bf16.mxu0 0
        %4645 = vmatpush1.bf16.msra.mxu0 0
        %4646 = vmatprep.subr.bf16.mxu0 0
        %4647 = vmatpush1.bf16.msra.mxu0 0
        %4648 = vmatprep.subr.bf16.mxu0 0
        %4649 = vmatpush1.bf16.msra.mxu0 0
        %4650 = vmatprep.subr.bf16.mxu0 0
        %4651 = vmatpush1.bf16.msra.mxu0 0
        %4652 = vmatprep.subr.bf16.mxu0 0
        %4653 = vmatpush1.bf16.msra.mxu0 0
        %4654 = vmatprep.mubr.bf16.mxu0 0
        %4655 = vmatmul.mubr.bf16.gmra.mrb[0].mxu0 %v4620
        %v4656 = vpop.f32.mrb[0].mxu0
        %v4657 = vadd.f32 0.0, %v4656
        %v4658 = vpop.f32.mrb[0].mxu0
        %v4659 = vpop.f32.mrb[0].mxu0
        %v4660 = vpop.f32.mrb[0].mxu0
        %4661 = vdwg.mxu0
        %v4670 = vunpack.c.l.b16 %v4576
        %v4671 = vunpack.c.l.b16 %v4577
        %v4672 = vunpack.c.l.b16 %v4578
        %v4673 = vunpack.c.l.b16 %v4579
        %v4674 = vunpack.c.l.b16 %v4580
        %v4675 = vunpack.c.l.b16 %v4581
        %v4676 = vunpack.c.l.b16 %v4582
        %v4677 = vunpack.c.l.b16 %v4583
        %v4678 = vpack.c.b16 %v4671, %v4670
        %v4679 = vpack.c.b16 %v4673, %v4672
        %v4680 = vpack.c.b16 %v4675, %v4674
        %v4681 = vpack.c.b16 %v4677, %v4676
        %v4687 = vsel %vm2185, %v4575, 0
        %4689 = vmatprep.subr.bf16.mxu0 0
        %4690 = vmatpush1.bf16.msra.mxu0 %v4678
        %4691 = vmatprep.subr.bf16.mxu0 0
        %4692 = vmatpush1.bf16.msra.mxu0 %v4679
        %4693 = vmatprep.subr.bf16.mxu0 0
        %4694 = vmatpush1.bf16.msra.mxu0 %v4680
        %4695 = vmatprep.subr.bf16.mxu0 0
        %4696 = vmatpush1.bf16.msra.mxu0 %v4681
        %4697 = vmatprep.subr.bf16.mxu0 0
        %4698 = vmatpush1.bf16.msra.mxu0 0
        %4699 = vmatprep.subr.bf16.mxu0 0
        %4700 = vmatpush1.bf16.msra.mxu0 0
        %4701 = vmatprep.subr.bf16.mxu0 0
        %4702 = vmatpush1.bf16.msra.mxu0 0
        %4703 = vmatprep.subr.bf16.mxu0 0
        %4704 = vmatpush1.bf16.msra.mxu0 0
        %4705 = vmatprep.subr.bf16.mxu0 0
        %4706 = vmatpush1.bf16.msra.mxu0 0
        %4707 = vmatprep.subr.bf16.mxu0 0
        %4708 = vmatpush1.bf16.msra.mxu0 0
        %4709 = vmatprep.subr.bf16.mxu0 0
        %4710 = vmatpush1.bf16.msra.mxu0 0
        %4711 = vmatprep.subr.bf16.mxu0 0
        %4712 = vmatpush1.bf16.msra.mxu0 0
        %4713 = vmatprep.subr.bf16.mxu0 0
        %4714 = vmatpush1.bf16.msra.mxu0 0
        %4715 = vmatprep.subr.bf16.mxu0 0
        %4716 = vmatpush1.bf16.msra.mxu0 0
        %4717 = vmatprep.subr.bf16.mxu0 0
        %4718 = vmatpush1.bf16.msra.mxu0 0
        %4719 = vmatprep.subr.bf16.mxu0 0
        %4720 = vmatpush1.bf16.msra.mxu0 0
        %4721 = vmatprep.mubr.bf16.mxu0 0
        %4722 = vmatmul.mubr.bf16.gmra.mrb[0].mxu0 %v4687
        %v4723 = vpop.f32.mrb[0].mxu0
        %v4724 = vadd.f32 %v4657, %v4723
        %v4725 = vpop.f32.mrb[0].mxu0
        %v4726 = vpop.f32.mrb[0].mxu0
        %v4727 = vpop.f32.mrb[0].mxu0
        %4728 = vdwg.mxu0
        %v4729 = vld [vmem:[#allocation2 + $0x2] sm:$0xf]
        %v4730 = vpack.c.bf16 %v4729, %v4729
        %s4731 = scalar_lea.vmem [#allocation19], 64
        %v4732 = vld [vmem:[%s4731] sm:$0xf]
        %v4733 = vld [vmem:[%s4731 + $0x4] sm:$0xf]
        %v4734 = vld [vmem:[%s4731 + $0x8] sm:$0xf]
        %v4735 = vld [vmem:[%s4731 + $0xc] sm:$0xf]
        %v4736 = vld [vmem:[%s4731 + $0x10] sm:$0xf]
        %v4737 = vld [vmem:[%s4731 + $0x14] sm:$0xf]
        %v4738 = vld [vmem:[%s4731 + $0x18] sm:$0xf]
        %v4739 = vld [vmem:[%s4731 + $0x1c] sm:$0xf]
        %v4748 = vunpack.c.l.b16 %v4732
        %v4749 = vunpack.c.l.b16 %v4733
        %v4750 = vunpack.c.l.b16 %v4734
        %v4751 = vunpack.c.l.b16 %v4735
        %v4752 = vunpack.c.l.b16 %v4736
        %v4753 = vunpack.c.l.b16 %v4737
        %v4754 = vunpack.c.l.b16 %v4738
        %v4755 = vunpack.c.l.b16 %v4739
        %v4756 = vpack.c.b16 %v4749, %v4748
        %v4757 = vpack.c.b16 %v4751, %v4750
        %v4758 = vpack.c.b16 %v4753, %v4752
        %v4759 = vpack.c.b16 %v4755, %v4754
        %v4765 = vsel %vm2185, %v4730, 0
        %4767 = vmatprep.subr.bf16.mxu0 0
        %4768 = vmatpush1.bf16.msra.mxu0 %v4756
        %4769 = vmatprep.subr.bf16.mxu0 0
        %4770 = vmatpush1.bf16.msra.mxu0 %v4757
        %4771 = vmatprep.subr.bf16.mxu0 0
        %4772 = vmatpush1.bf16.msra.mxu0 %v4758
        %4773 = vmatprep.subr.bf16.mxu0 0
        %4774 = vmatpush1.bf16.msra.mxu0 %v4759
        %4775 = vmatprep.subr.bf16.mxu0 0
        %4776 = vmatpush1.bf16.msra.mxu0 0
        %4777 = vmatprep.subr.bf16.mxu0 0
        %4778 = vmatpush1.bf16.msra.mxu0 0
        %4779 = vmatprep.subr.bf16.mxu0 0
        %4780 = vmatpush1.bf16.msra.mxu0 0
        %4781 = vmatprep.subr.bf16.mxu0 0
        %4782 = vmatpush1.bf16.msra.mxu0 0
        %4783 = vmatprep.subr.bf16.mxu0 0
        %4784 = vmatpush1.bf16.msra.mxu0 0
        %4785 = vmatprep.subr.bf16.mxu0 0
        %4786 = vmatpush1.bf16.msra.mxu0 0
        %4787 = vmatprep.subr.bf16.mxu0 0
        %4788 = vmatpush1.bf16.msra.mxu0 0
        %4789 = vmatprep.subr.bf16.mxu0 0
        %4790 = vmatpush1.bf16.msra.mxu0 0
        %4791 = vmatprep.subr.bf16.mxu0 0
        %4792 = vmatpush1.bf16.msra.mxu0 0
        %4793 = vmatprep.subr.bf16.mxu0 0
        %4794 = vmatpush1.bf16.msra.mxu0 0
        %4795 = vmatprep.subr.bf16.mxu0 0
        %4796 = vmatpush1.bf16.msra.mxu0 0
        %4797 = vmatprep.subr.bf16.mxu0 0
        %4798 = vmatpush1.bf16.msra.mxu0 0
        %4799 = vmatprep.mubr.bf16.mxu0 0
        %4800 = vmatmul.mubr.bf16.gmra.mrb[0].mxu0 %v4765
        %v4801 = vpop.f32.mrb[0].mxu0
        %v4802 = vadd.f32 0.0, %v4801
        %v4803 = vpop.f32.mrb[0].mxu0
        %v4804 = vpop.f32.mrb[0].mxu0
        %v4805 = vpop.f32.mrb[0].mxu0
        %4806 = vdwg.mxu0
        %v4807 = vadd.f32 %v4724, %v4802
        %v4808 = vunpack.c.l.bf16 %v4573
        %v4809 = vlaneseq
        %v4810 = vshrl.u32 %v4809, 7
        %v4811 = vsub.s32 0, %v4810
        %v4812 = vrot.slane %v4808, %v4811
        %v4813 = vadd.f32 %v4807, %v4812
        %v4814 = vmax.f32 %v4813, 0.0
        %4815 = vst [vmem:[%s1717] ss:$2 sm:$0xf] %v4814
        %4816 = vst [vmem:[%s2660] ss:$2 sm:$0xf] %v4814
        %4817 = vst.msk [vmem:[#allocation2] sm:$0x1] %vm2188, 0.0
        %4818 = vst.msk [vmem:[#allocation2 + $0x9] sm:$0x1] %vm2188, 0.0
        %v4819 = vld [vmem:[%s45] sm:$0x1]
        %v4820 = vld [vmem:[#allocation2] sm:$0xff]
        %v4821 = vpack.c.bf16 %v4820, %v4820
        %v4822 = vld [vmem:[#allocation20] sm:$0xf]
        %v4823 = vld [vmem:[#allocation20 + $0x4] sm:$0xf]
        %v4824 = vld [vmem:[#allocation20 + $0x8] sm:$0xf]
        %v4825 = vld [vmem:[#allocation20 + $0xc] sm:$0xf]
        %v4826 = vld [vmem:[#allocation20 + $0x10] sm:$0xf]
        %v4827 = vld [vmem:[#allocation20 + $0x14] sm:$0xf]
        %v4828 = vld [vmem:[#allocation20 + $0x18] sm:$0xf]
        %v4829 = vld [vmem:[#allocation20 + $0x1c] sm:$0xf]
        %v4830 = vld [vmem:[#allocation2 + $0x1] sm:$0xff]
        %v4831 = vpack.c.bf16 %v4830, %v4830
        %s4832 = scalar_lea.vmem [#allocation20], 32
        %v4833 = vld [vmem:[%s4832] sm:$0xf]
        %v4834 = vld [vmem:[%s4832 + $0x4] sm:$0xf]
        %v4835 = vld [vmem:[%s4832 + $0x8] sm:$0xf]
        %v4836 = vld [vmem:[%s4832 + $0xc] sm:$0xf]
        %v4837 = vld [vmem:[%s4832 + $0x10] sm:$0xf]
        %v4838 = vld [vmem:[%s4832 + $0x14] sm:$0xf]
        %v4839 = vld [vmem:[%s4832 + $0x18] sm:$0xf]
        %v4840 = vld [vmem:[%s4832 + $0x1c] sm:$0xf]
        %v4849 = vunpack.c.l.b16 %v4833
        %v4850 = vunpack.c.l.b16 %v4834
        %v4851 = vunpack.c.l.b16 %v4835
        %v4852 = vunpack.c.l.b16 %v4836
        %v4853 = vunpack.c.l.b16 %v4837
        %v4854 = vunpack.c.l.b16 %v4838
        %v4855 = vunpack.c.l.b16 %v4839
        %v4856 = vunpack.c.l.b16 %v4840
        %v4857 = vpack.c.b16 %v4850, %v4849
        %v4858 = vpack.c.b16 %v4852, %v4851
        %v4859 = vpack.c.b16 %v4854, %v4853
        %v4860 = vpack.c.b16 %v4856, %v4855
        %v4866 = vsel %vm2185, %v4831, 0
        %4868 = vmatprep.subr.bf16.mxu0 0
        %4869 = vmatpush1.bf16.msra.mxu0 %v4857
        %4870 = vmatprep.subr.bf16.mxu0 0
        %4871 = vmatpush1.bf16.msra.mxu0 %v4858
        %4872 = vmatprep.subr.bf16.mxu0 0
        %4873 = vmatpush1.bf16.msra.mxu0 %v4859
        %4874 = vmatprep.subr.bf16.mxu0 0
        %4875 = vmatpush1.bf16.msra.mxu0 %v4860
        %4876 = vmatprep.subr.bf16.mxu0 0
        %4877 = vmatpush1.bf16.msra.mxu0 0
        %4878 = vmatprep.subr.bf16.mxu0 0
        %4879 = vmatpush1.bf16.msra.mxu0 0
        %4880 = vmatprep.subr.bf16.mxu0 0
        %4881 = vmatpush1.bf16.msra.mxu0 0
        %4882 = vmatprep.subr.bf16.mxu0 0
        %4883 = vmatpush1.bf16.msra.mxu0 0
        %4884 = vmatprep.subr.bf16.mxu0 0
        %4885 = vmatpush1.bf16.msra.mxu0 0
        %4886 = vmatprep.subr.bf16.mxu0 0
        %4887 = vmatpush1.bf16.msra.mxu0 0
        %4888 = vmatprep.subr.bf16.mxu0 0
        %4889 = vmatpush1.bf16.msra.mxu0 0
        %4890 = vmatprep.subr.bf16.mxu0 0
        %4891 = vmatpush1.bf16.msra.mxu0 0
        %4892 = vmatprep.subr.bf16.mxu0 0
        %4893 = vmatpush1.bf16.msra.mxu0 0
        %4894 = vmatprep.subr.bf16.mxu0 0
        %4895 = vmatpush1.bf16.msra.mxu0 0
        %4896 = vmatprep.subr.bf16.mxu0 0
        %4897 = vmatpush1.bf16.msra.mxu0 0
        %4898 = vmatprep.subr.bf16.mxu0 0
        %4899 = vmatpush1.bf16.msra.mxu0 0
        %4900 = vmatprep.mubr.bf16.mxu0 0
        %4901 = vmatmul.mubr.bf16.gmra.mrb[0].mxu0 %v4866
        %v4902 = vpop.f32.mrb[0].mxu0
        %v4903 = vadd.f32 0.0, %v4902
        %v4904 = vpop.f32.mrb[0].mxu0
        %v4905 = vpop.f32.mrb[0].mxu0
        %v4906 = vpop.f32.mrb[0].mxu0
        %4907 = vdwg.mxu0
        %v4916 = vunpack.c.l.b16 %v4822
        %v4917 = vunpack.c.l.b16 %v4823
        %v4918 = vunpack.c.l.b16 %v4824
        %v4919 = vunpack.c.l.b16 %v4825
        %v4920 = vunpack.c.l.b16 %v4826
        %v4921 = vunpack.c.l.b16 %v4827
        %v4922 = vunpack.c.l.b16 %v4828
        %v4923 = vunpack.c.l.b16 %v4829
        %v4924 = vpack.c.b16 %v4917, %v4916
        %v4925 = vpack.c.b16 %v4919, %v4918
        %v4926 = vpack.c.b16 %v4921, %v4920
        %v4927 = vpack.c.b16 %v4923, %v4922
        %v4933 = vsel %vm2185, %v4821, 0
        %4935 = vmatprep.subr.bf16.mxu0 0
        %4936 = vmatpush1.bf16.msra.mxu0 %v4924
        %4937 = vmatprep.subr.bf16.mxu0 0
        %4938 = vmatpush1.bf16.msra.mxu0 %v4925
        %4939 = vmatprep.subr.bf16.mxu0 0
        %4940 = vmatpush1.bf16.msra.mxu0 %v4926
        %4941 = vmatprep.subr.bf16.mxu0 0
        %4942 = vmatpush1.bf16.msra.mxu0 %v4927
        %4943 = vmatprep.subr.bf16.mxu0 0
        %4944 = vmatpush1.bf16.msra.mxu0 0
        %4945 = vmatprep.subr.bf16.mxu0 0
        %4946 = vmatpush1.bf16.msra.mxu0 0
        %4947 = vmatprep.subr.bf16.mxu0 0
        %4948 = vmatpush1.bf16.msra.mxu0 0
        %4949 = vmatprep.subr.bf16.mxu0 0
        %4950 = vmatpush1.bf16.msra.mxu0 0
        %4951 = vmatprep.subr.bf16.mxu0 0
        %4952 = vmatpush1.bf16.msra.mxu0 0
        %4953 = vmatprep.subr.bf16.mxu0 0
        %4954 = vmatpush1.bf16.msra.mxu0 0
        %4955 = vmatprep.subr.bf16.mxu0 0
        %4956 = vmatpush1.bf16.msra.mxu0 0
        %4957 = vmatprep.subr.bf16.mxu0 0
        %4958 = vmatpush1.bf16.msra.mxu0 0
        %4959 = vmatprep.subr.bf16.mxu0 0
        %4960 = vmatpush1.bf16.msra.mxu0 0
        %4961 = vmatprep.subr.bf16.mxu0 0
        %4962 = vmatpush1.bf16.msra.mxu0 0
        %4963 = vmatprep.subr.bf16.mxu0 0
        %4964 = vmatpush1.bf16.msra.mxu0 0
        %4965 = vmatprep.subr.bf16.mxu0 0
        %4966 = vmatpush1.bf16.msra.mxu0 0
        %4967 = vmatprep.mubr.bf16.mxu0 0
        %4968 = vmatmul.mubr.bf16.gmra.mrb[0].mxu0 %v4933
        %v4969 = vpop.f32.mrb[0].mxu0
        %v4970 = vadd.f32 %v4903, %v4969
        %v4971 = vpop.f32.mrb[0].mxu0
        %v4972 = vpop.f32.mrb[0].mxu0
        %v4973 = vpop.f32.mrb[0].mxu0
        %4974 = vdwg.mxu0
        %v4975 = vld [vmem:[#allocation2 + $0x2] sm:$0xff]
        %v4976 = vpack.c.bf16 %v4975, %v4975
        %s4977 = scalar_lea.vmem [#allocation20], 64
        %v4978 = vld [vmem:[%s4977] sm:$0xf]
        %v4979 = vld [vmem:[%s4977 + $0x4] sm:$0xf]
        %v4980 = vld [vmem:[%s4977 + $0x8] sm:$0xf]
        %v4981 = vld [vmem:[%s4977 + $0xc] sm:$0xf]
        %v4982 = vld [vmem:[%s4977 + $0x10] sm:$0xf]
        %v4983 = vld [vmem:[%s4977 + $0x14] sm:$0xf]
        %v4984 = vld [vmem:[%s4977 + $0x18] sm:$0xf]
        %v4985 = vld [vmem:[%s4977 + $0x1c] sm:$0xf]
        %v4994 = vunpack.c.l.b16 %v4978
        %v4995 = vunpack.c.l.b16 %v4979
        %v4996 = vunpack.c.l.b16 %v4980
        %v4997 = vunpack.c.l.b16 %v4981
        %v4998 = vunpack.c.l.b16 %v4982
        %v4999 = vunpack.c.l.b16 %v4983
        %v5000 = vunpack.c.l.b16 %v4984
        %v5001 = vunpack.c.l.b16 %v4985
        %v5002 = vpack.c.b16 %v4995, %v4994
        %v5003 = vpack.c.b16 %v4997, %v4996
        %v5004 = vpack.c.b16 %v4999, %v4998
        %v5005 = vpack.c.b16 %v5001, %v5000
        %v5011 = vsel %vm2185, %v4976, 0
        %5013 = vmatprep.subr.bf16.mxu0 0
        %5014 = vmatpush1.bf16.msra.mxu0 %v5002
        %5015 = vmatprep.subr.bf16.mxu0 0
        %5016 = vmatpush1.bf16.msra.mxu0 %v5003
        %5017 = vmatprep.subr.bf16.mxu0 0
        %5018 = vmatpush1.bf16.msra.mxu0 %v5004
        %5019 = vmatprep.subr.bf16.mxu0 0
        %5020 = vmatpush1.bf16.msra.mxu0 %v5005
        %5021 = vmatprep.subr.bf16.mxu0 0
        %5022 = vmatpush1.bf16.msra.mxu0 0
        %5023 = vmatprep.subr.bf16.mxu0 0
        %5024 = vmatpush1.bf16.msra.mxu0 0
        %5025 = vmatprep.subr.bf16.mxu0 0
        %5026 = vmatpush1.bf16.msra.mxu0 0
        %5027 = vmatprep.subr.bf16.mxu0 0
        %5028 = vmatpush1.bf16.msra.mxu0 0
        %5029 = vmatprep.subr.bf16.mxu0 0
        %5030 = vmatpush1.bf16.msra.mxu0 0
        %5031 = vmatprep.subr.bf16.mxu0 0
        %5032 = vmatpush1.bf16.msra.mxu0 0
        %5033 = vmatprep.subr.bf16.mxu0 0
        %5034 = vmatpush1.bf16.msra.mxu0 0
        %5035 = vmatprep.subr.bf16.mxu0 0
        %5036 = vmatpush1.bf16.msra.mxu0 0
        %5037 = vmatprep.subr.bf16.mxu0 0
        %5038 = vmatpush1.bf16.msra.mxu0 0
        %5039 = vmatprep.subr.bf16.mxu0 0
        %5040 = vmatpush1.bf16.msra.mxu0 0
        %5041 = vmatprep.subr.bf16.mxu0 0
        %5042 = vmatpush1.bf16.msra.mxu0 0
        %5043 = vmatprep.subr.bf16.mxu0 0
        %5044 = vmatpush1.bf16.msra.mxu0 0
        %5045 = vmatprep.mubr.bf16.mxu0 0
        %5046 = vmatmul.mubr.bf16.gmra.mrb[0].mxu0 %v5011
        %v5047 = vpop.f32.mrb[0].mxu0
        %v5048 = vadd.f32 0.0, %v5047
        %v5049 = vpop.f32.mrb[0].mxu0
        %v5050 = vpop.f32.mrb[0].mxu0
        %v5051 = vpop.f32.mrb[0].mxu0
        %5052 = vdwg.mxu0
        %v5053 = vadd.f32 %v4970, %v5048
        %v5054 = vunpack.c.l.bf16 %v4819
        %v5055 = vlaneseq
        %v5056 = vshrl.u32 %v5055, 7
        %v5057 = vsub.s32 0, %v5056
        %v5058 = vrot.slane %v5054, %v5057
        %v5059 = vadd.f32 %v5053, %v5058
        %v5060 = vmax.f32 %v5059, 0.0
        %5061 = vst.msk [vmem:[#allocation2 + $0x1] sm:$0xff] %vm2185, %v5060
        %5062 = vst.msk [vmem:[#allocation2] sm:$0x1] %vm2188, 0.0
        %5063 = vst.msk [vmem:[#allocation2 + $0x9] sm:$0x1] %vm2188, 0.0
        %v5064 = vld [vmem:[%s49] sm:$0x1]
        %v5065 = vld [vmem:[#allocation2] sm:$0xff]
        %v5066 = vpack.c.bf16 %v5065, %v5065
        %v5067 = vld [vmem:[#allocation22] sm:$0xf]
        %v5068 = vld [vmem:[#allocation22 + $0x4] sm:$0xf]
        %v5069 = vld [vmem:[#allocation22 + $0x8] sm:$0xf]
        %v5070 = vld [vmem:[#allocation22 + $0xc] sm:$0xf]
        %v5071 = vld [vmem:[#allocation22 + $0x10] sm:$0xf]
        %v5072 = vld [vmem:[#allocation22 + $0x14] sm:$0xf]
        %v5073 = vld [vmem:[#allocation22 + $0x18] sm:$0xf]
        %v5074 = vld [vmem:[#allocation22 + $0x1c] sm:$0xf]
        %v5075 = vld [vmem:[#allocation2 + $0x1] sm:$0xff]
        %v5076 = vpack.c.bf16 %v5075, %v5075
        %s5077 = scalar_lea.vmem [#allocation22], 32
        %v5078 = vld [vmem:[%s5077] sm:$0xf]
        %v5079 = vld [vmem:[%s5077 + $0x4] sm:$0xf]
        %v5080 = vld [vmem:[%s5077 + $0x8] sm:$0xf]
        %v5081 = vld [vmem:[%s5077 + $0xc] sm:$0xf]
        %v5082 = vld [vmem:[%s5077 + $0x10] sm:$0xf]
        %v5083 = vld [vmem:[%s5077 + $0x14] sm:$0xf]
        %v5084 = vld [vmem:[%s5077 + $0x18] sm:$0xf]
        %v5085 = vld [vmem:[%s5077 + $0x1c] sm:$0xf]
        %v5094 = vunpack.c.l.b16 %v5078
        %v5095 = vunpack.c.l.b16 %v5079
        %v5096 = vunpack.c.l.b16 %v5080
        %v5097 = vunpack.c.l.b16 %v5081
        %v5098 = vunpack.c.l.b16 %v5082
        %v5099 = vunpack.c.l.b16 %v5083
        %v5100 = vunpack.c.l.b16 %v5084
        %v5101 = vunpack.c.l.b16 %v5085
        %v5102 = vpack.c.b16 %v5095, %v5094
        %v5103 = vpack.c.b16 %v5097, %v5096
        %v5104 = vpack.c.b16 %v5099, %v5098
        %v5105 = vpack.c.b16 %v5101, %v5100
        %v5111 = vsel %vm2185, %v5076, 0
        %5113 = vmatprep.subr.bf16.mxu0 0
        %5114 = vmatpush1.bf16.msra.mxu0 %v5102
        %5115 = vmatprep.subr.bf16.mxu0 0
        %5116 = vmatpush1.bf16.msra.mxu0 %v5103
        %5117 = vmatprep.subr.bf16.mxu0 0
        %5118 = vmatpush1.bf16.msra.mxu0 %v5104
        %5119 = vmatprep.subr.bf16.mxu0 0
        %5120 = vmatpush1.bf16.msra.mxu0 %v5105
        %5121 = vmatprep.subr.bf16.mxu0 0
        %5122 = vmatpush1.bf16.msra.mxu0 0
        %5123 = vmatprep.subr.bf16.mxu0 0
        %5124 = vmatpush1.bf16.msra.mxu0 0
        %5125 = vmatprep.subr.bf16.mxu0 0
        %5126 = vmatpush1.bf16.msra.mxu0 0
        %5127 = vmatprep.subr.bf16.mxu0 0
        %5128 = vmatpush1.bf16.msra.mxu0 0
        %5129 = vmatprep.subr.bf16.mxu0 0
        %5130 = vmatpush1.bf16.msra.mxu0 0
        %5131 = vmatprep.subr.bf16.mxu0 0
        %5132 = vmatpush1.bf16.msra.mxu0 0
        %5133 = vmatprep.subr.bf16.mxu0 0
        %5134 = vmatpush1.bf16.msra.mxu0 0
        %5135 = vmatprep.subr.bf16.mxu0 0
        %5136 = vmatpush1.bf16.msra.mxu0 0
        %5137 = vmatprep.subr.bf16.mxu0 0
        %5138 = vmatpush1.bf16.msra.mxu0 0
        %5139 = vmatprep.subr.bf16.mxu0 0
        %5140 = vmatpush1.bf16.msra.mxu0 0
        %5141 = vmatprep.subr.bf16.mxu0 0
        %5142 = vmatpush1.bf16.msra.mxu0 0
        %5143 = vmatprep.subr.bf16.mxu0 0
        %5144 = vmatpush1.bf16.msra.mxu0 0
        %5145 = vmatprep.mubr.bf16.mxu0 0
        %5146 = vmatmul.mubr.bf16.gmra.mrb[0].mxu0 %v5111
        %v5147 = vpop.f32.mrb[0].mxu0
        %v5148 = vadd.f32 0.0, %v5147
        %v5149 = vpop.f32.mrb[0].mxu0
        %v5150 = vpop.f32.mrb[0].mxu0
        %v5151 = vpop.f32.mrb[0].mxu0
        %5152 = vdwg.mxu0
        %v5161 = vunpack.c.l.b16 %v5067
        %v5162 = vunpack.c.l.b16 %v5068
        %v5163 = vunpack.c.l.b16 %v5069
        %v5164 = vunpack.c.l.b16 %v5070
        %v5165 = vunpack.c.l.b16 %v5071
        %v5166 = vunpack.c.l.b16 %v5072
        %v5167 = vunpack.c.l.b16 %v5073
        %v5168 = vunpack.c.l.b16 %v5074
        %v5169 = vpack.c.b16 %v5162, %v5161
        %v5170 = vpack.c.b16 %v5164, %v5163
        %v5171 = vpack.c.b16 %v5166, %v5165
        %v5172 = vpack.c.b16 %v5168, %v5167
        %v5178 = vsel %vm2185, %v5066, 0
        %5180 = vmatprep.subr.bf16.mxu0 0
        %5181 = vmatpush1.bf16.msra.mxu0 %v5169
        %5182 = vmatprep.subr.bf16.mxu0 0
        %5183 = vmatpush1.bf16.msra.mxu0 %v5170
        %5184 = vmatprep.subr.bf16.mxu0 0
        %5185 = vmatpush1.bf16.msra.mxu0 %v5171
        %5186 = vmatprep.subr.bf16.mxu0 0
        %5187 = vmatpush1.bf16.msra.mxu0 %v5172
        %5188 = vmatprep.subr.bf16.mxu0 0
        %5189 = vmatpush1.bf16.msra.mxu0 0
        %5190 = vmatprep.subr.bf16.mxu0 0
        %5191 = vmatpush1.bf16.msra.mxu0 0
        %5192 = vmatprep.subr.bf16.mxu0 0
        %5193 = vmatpush1.bf16.msra.mxu0 0
        %5194 = vmatprep.subr.bf16.mxu0 0
        %5195 = vmatpush1.bf16.msra.mxu0 0
        %5196 = vmatprep.subr.bf16.mxu0 0
        %5197 = vmatpush1.bf16.msra.mxu0 0
        %5198 = vmatprep.subr.bf16.mxu0 0
        %5199 = vmatpush1.bf16.msra.mxu0 0
        %5200 = vmatprep.subr.bf16.mxu0 0
        %5201 = vmatpush1.bf16.msra.mxu0 0
        %5202 = vmatprep.subr.bf16.mxu0 0
        %5203 = vmatpush1.bf16.msra.mxu0 0
        %5204 = vmatprep.subr.bf16.mxu0 0
        %5205 = vmatpush1.bf16.msra.mxu0 0
        %5206 = vmatprep.subr.bf16.mxu0 0
        %5207 = vmatpush1.bf16.msra.mxu0 0
        %5208 = vmatprep.subr.bf16.mxu0 0
        %5209 = vmatpush1.bf16.msra.mxu0 0
        %5210 = vmatprep.subr.bf16.mxu0 0
        %5211 = vmatpush1.bf16.msra.mxu0 0
        %5212 = vmatprep.mubr.bf16.mxu0 0
        %5213 = vmatmul.mubr.bf16.gmra.mrb[0].mxu0 %v5178
        %v5214 = vpop.f32.mrb[0].mxu0
        %v5215 = vadd.f32 %v5148, %v5214
        %v5216 = vpop.f32.mrb[0].mxu0
        %v5217 = vpop.f32.mrb[0].mxu0
        %v5218 = vpop.f32.mrb[0].mxu0
        %5219 = vdwg.mxu0
        %v5220 = vld [vmem:[#allocation2 + $0x2] sm:$0xff]
        %v5221 = vpack.c.bf16 %v5220, %v5220
        %s5222 = scalar_lea.vmem [#allocation22], 64
        %v5223 = vld [vmem:[%s5222] sm:$0xf]
        %v5224 = vld [vmem:[%s5222 + $0x4] sm:$0xf]
        %v5225 = vld [vmem:[%s5222 + $0x8] sm:$0xf]
        %v5226 = vld [vmem:[%s5222 + $0xc] sm:$0xf]
        %v5227 = vld [vmem:[%s5222 + $0x10] sm:$0xf]
        %v5228 = vld [vmem:[%s5222 + $0x14] sm:$0xf]
        %v5229 = vld [vmem:[%s5222 + $0x18] sm:$0xf]
        %v5230 = vld [vmem:[%s5222 + $0x1c] sm:$0xf]
        %v5239 = vunpack.c.l.b16 %v5223
        %v5240 = vunpack.c.l.b16 %v5224
        %v5241 = vunpack.c.l.b16 %v5225
        %v5242 = vunpack.c.l.b16 %v5226
        %v5243 = vunpack.c.l.b16 %v5227
        %v5244 = vunpack.c.l.b16 %v5228
        %v5245 = vunpack.c.l.b16 %v5229
        %v5246 = vunpack.c.l.b16 %v5230
        %v5247 = vpack.c.b16 %v5240, %v5239
        %v5248 = vpack.c.b16 %v5242, %v5241
        %v5249 = vpack.c.b16 %v5244, %v5243
        %v5250 = vpack.c.b16 %v5246, %v5245
        %v5256 = vsel %vm2185, %v5221, 0
        %5258 = vmatprep.subr.bf16.mxu0 0
        %5259 = vmatpush1.bf16.msra.mxu0 %v5247
        %5260 = vmatprep.subr.bf16.mxu0 0
        %5261 = vmatpush1.bf16.msra.mxu0 %v5248
        %5262 = vmatprep.subr.bf16.mxu0 0
        %5263 = vmatpush1.bf16.msra.mxu0 %v5249
        %5264 = vmatprep.subr.bf16.mxu0 0
        %5265 = vmatpush1.bf16.msra.mxu0 %v5250
        %5266 = vmatprep.subr.bf16.mxu0 0
        %5267 = vmatpush1.bf16.msra.mxu0 0
        %5268 = vmatprep.subr.bf16.mxu0 0
        %5269 = vmatpush1.bf16.msra.mxu0 0
        %5270 = vmatprep.subr.bf16.mxu0 0
        %5271 = vmatpush1.bf16.msra.mxu0 0
        %5272 = vmatprep.subr.bf16.mxu0 0
        %5273 = vmatpush1.bf16.msra.mxu0 0
        %5274 = vmatprep.subr.bf16.mxu0 0
        %5275 = vmatpush1.bf16.msra.mxu0 0
        %5276 = vmatprep.subr.bf16.mxu0 0
        %5277 = vmatpush1.bf16.msra.mxu0 0
        %5278 = vmatprep.subr.bf16.mxu0 0
        %5279 = vmatpush1.bf16.msra.mxu0 0
        %5280 = vmatprep.subr.bf16.mxu0 0
        %5281 = vmatpush1.bf16.msra.mxu0 0
        %5282 = vmatprep.subr.bf16.mxu0 0
        %5283 = vmatpush1.bf16.msra.mxu0 0
        %5284 = vmatprep.subr.bf16.mxu0 0
        %5285 = vmatpush1.bf16.msra.mxu0 0
        %5286 = vmatprep.subr.bf16.mxu0 0
        %5287 = vmatpush1.bf16.msra.mxu0 0
        %5288 = vmatprep.subr.bf16.mxu0 0
        %5289 = vmatpush1.bf16.msra.mxu0 0
        %5290 = vmatprep.mubr.bf16.mxu0 0
        %5291 = vmatmul.mubr.bf16.gmra.mrb[0].mxu0 %v5256
        %v5292 = vpop.f32.mrb[0].mxu0
        %v5293 = vadd.f32 0.0, %v5292
        %v5294 = vpop.f32.mrb[0].mxu0
        %v5295 = vpop.f32.mrb[0].mxu0
        %v5296 = vpop.f32.mrb[0].mxu0
        %5297 = vdwg.mxu0
        %v5298 = vadd.f32 %v5215, %v5293
        %v5299 = vunpack.c.l.bf16 %v5064
        %v5300 = vlaneseq
        %v5301 = vshrl.u32 %v5300, 7
        %v5302 = vsub.s32 0, %v5301
        %v5303 = vrot.slane %v5299, %v5302
        %v5304 = vadd.f32 %v5298, %v5303
        %v5305 = vmax.f32 %v5304, 0.0
        %5306 = vst [vmem:[%s1717] ss:$2 sm:$0xff] %v5305
        %5307 = vst [vmem:[%s2660] ss:$2 sm:$0xff] %v5305
        %5308 = vst.msk [vmem:[#allocation2] sm:$0x1] %vm2188, 0.0
        %5309 = vst.msk [vmem:[#allocation2 + $0x11] sm:$0x1] %vm2188, 0.0
        %v5310 = vld [vmem:[%s53] sm:$0x1]
        %v5311 = vld [vmem:[#allocation2] sm:$0xff]
        %v5312 = vld [vmem:[#allocation2 + $0x8] sm:$0xff]
        %v5313 = vpack.c.bf16 %v5312, %v5311
        %v5314 = vld [vmem:[#allocation23] sm:$0xf]
        %v5315 = vld [vmem:[#allocation23 + $0x4] sm:$0xf]
        %v5316 = vld [vmem:[#allocation23 + $0x8] sm:$0xf]
        %v5317 = vld [vmem:[#allocation23 + $0xc] sm:$0xf]
        %v5318 = vld [vmem:[#allocation23 + $0x10] sm:$0xf]
        %v5319 = vld [vmem:[#allocation23 + $0x14] sm:$0xf]
        %v5320 = vld [vmem:[#allocation23 + $0x18] sm:$0xf]
        %v5321 = vld [vmem:[#allocation23 + $0x1c] sm:$0xf]
        %v5322 = vld [vmem:[#allocation2 + $0x1] sm:$0xff]
        %v5323 = vld [vmem:[#allocation2 + $0x9] sm:$0xff]
        %v5324 = vpack.c.bf16 %v5323, %v5322
        %s5325 = scalar_lea.vmem [#allocation23], 32
        %v5326 = vld [vmem:[%s5325] sm:$0xf]
        %v5327 = vld [vmem:[%s5325 + $0x4] sm:$0xf]
        %v5328 = vld [vmem:[%s5325 + $0x8] sm:$0xf]
        %v5329 = vld [vmem:[%s5325 + $0xc] sm:$0xf]
        %v5330 = vld [vmem:[%s5325 + $0x10] sm:$0xf]
        %v5331 = vld [vmem:[%s5325 + $0x14] sm:$0xf]
        %v5332 = vld [vmem:[%s5325 + $0x18] sm:$0xf]
        %v5333 = vld [vmem:[%s5325 + $0x1c] sm:$0xf]
        %v5342 = vunpack.c.l.b16 %v5326
        %v5343 = vunpack.c.l.b16 %v5327
        %v5344 = vunpack.c.l.b16 %v5328
        %v5345 = vunpack.c.l.b16 %v5329
        %v5346 = vunpack.c.l.b16 %v5330
        %v5347 = vunpack.c.l.b16 %v5331
        %v5348 = vunpack.c.l.b16 %v5332
        %v5349 = vunpack.c.l.b16 %v5333
        %v5350 = vpack.c.b16 %v5343, %v5342
        %v5351 = vpack.c.b16 %v5345, %v5344
        %v5352 = vpack.c.b16 %v5347, %v5346
        %v5353 = vpack.c.b16 %v5349, %v5348
        %v5359 = vsel %vm2185, %v5324, 0
        %5361 = vmatprep.subr.bf16.mxu0 0
        %5362 = vmatpush1.bf16.msra.mxu0 %v5350
        %5363 = vmatprep.subr.bf16.mxu0 0
        %5364 = vmatpush1.bf16.msra.mxu0 %v5351
        %5365 = vmatprep.subr.bf16.mxu0 0
        %5366 = vmatpush1.bf16.msra.mxu0 %v5352
        %5367 = vmatprep.subr.bf16.mxu0 0
        %5368 = vmatpush1.bf16.msra.mxu0 %v5353
        %5369 = vmatprep.subr.bf16.mxu0 0
        %5370 = vmatpush1.bf16.msra.mxu0 0
        %5371 = vmatprep.subr.bf16.mxu0 0
        %5372 = vmatpush1.bf16.msra.mxu0 0
        %5373 = vmatprep.subr.bf16.mxu0 0
        %5374 = vmatpush1.bf16.msra.mxu0 0
        %5375 = vmatprep.subr.bf16.mxu0 0
        %5376 = vmatpush1.bf16.msra.mxu0 0
        %5377 = vmatprep.subr.bf16.mxu0 0
        %5378 = vmatpush1.bf16.msra.mxu0 0
        %5379 = vmatprep.subr.bf16.mxu0 0
        %5380 = vmatpush1.bf16.msra.mxu0 0
        %5381 = vmatprep.subr.bf16.mxu0 0
        %5382 = vmatpush1.bf16.msra.mxu0 0
        %5383 = vmatprep.subr.bf16.mxu0 0
        %5384 = vmatpush1.bf16.msra.mxu0 0
        %5385 = vmatprep.subr.bf16.mxu0 0
        %5386 = vmatpush1.bf16.msra.mxu0 0
        %5387 = vmatprep.subr.bf16.mxu0 0
        %5388 = vmatpush1.bf16.msra.mxu0 0
        %5389 = vmatprep.subr.bf16.mxu0 0
        %5390 = vmatpush1.bf16.msra.mxu0 0
        %5391 = vmatprep.subr.bf16.mxu0 0
        %5392 = vmatpush1.bf16.msra.mxu0 0
        %5393 = vmatprep.mubr.bf16.mxu0 0
        %5394 = vmatmul.mubr.bf16.gmra.mrb[0].mxu0 %v5359
        %v5395 = vpop.f32.mrb[0].mxu0
        %v5396 = vadd.f32 0.0, %v5395
        %v5397 = vpop.f32.mrb[0].mxu0
        %v5398 = vpop.f32.mrb[0].mxu0
        %v5399 = vadd.f32 0.0, %v5398
        %v5400 = vpop.f32.mrb[0].mxu0
        %5401 = vdwg.mxu0
        %v5410 = vunpack.c.l.b16 %v5314
        %v5411 = vunpack.c.l.b16 %v5315
        %v5412 = vunpack.c.l.b16 %v5316
        %v5413 = vunpack.c.l.b16 %v5317
        %v5414 = vunpack.c.l.b16 %v5318
        %v5415 = vunpack.c.l.b16 %v5319
        %v5416 = vunpack.c.l.b16 %v5320
        %v5417 = vunpack.c.l.b16 %v5321
        %v5418 = vpack.c.b16 %v5411, %v5410
        %v5419 = vpack.c.b16 %v5413, %v5412
        %v5420 = vpack.c.b16 %v5415, %v5414
        %v5421 = vpack.c.b16 %v5417, %v5416
        %v5427 = vsel %vm2185, %v5313, 0
        %5429 = vmatprep.subr.bf16.mxu0 0
        %5430 = vmatpush1.bf16.msra.mxu0 %v5418
        %5431 = vmatprep.subr.bf16.mxu0 0
        %5432 = vmatpush1.bf16.msra.mxu0 %v5419
        %5433 = vmatprep.subr.bf16.mxu0 0
        %5434 = vmatpush1.bf16.msra.mxu0 %v5420
        %5435 = vmatprep.subr.bf16.mxu0 0
        %5436 = vmatpush1.bf16.msra.mxu0 %v5421
        %5437 = vmatprep.subr.bf16.mxu0 0
        %5438 = vmatpush1.bf16.msra.mxu0 0
        %5439 = vmatprep.subr.bf16.mxu0 0
        %5440 = vmatpush1.bf16.msra.mxu0 0
        %5441 = vmatprep.subr.bf16.mxu0 0
        %5442 = vmatpush1.bf16.msra.mxu0 0
        %5443 = vmatprep.subr.bf16.mxu0 0
        %5444 = vmatpush1.bf16.msra.mxu0 0
        %5445 = vmatprep.subr.bf16.mxu0 0
        %5446 = vmatpush1.bf16.msra.mxu0 0
        %5447 = vmatprep.subr.bf16.mxu0 0
        %5448 = vmatpush1.bf16.msra.mxu0 0
        %5449 = vmatprep.subr.bf16.mxu0 0
        %5450 = vmatpush1.bf16.msra.mxu0 0
        %5451 = vmatprep.subr.bf16.mxu0 0
        %5452 = vmatpush1.bf16.msra.mxu0 0
        %5453 = vmatprep.subr.bf16.mxu0 0
        %5454 = vmatpush1.bf16.msra.mxu0 0
        %5455 = vmatprep.subr.bf16.mxu0 0
        %5456 = vmatpush1.bf16.msra.mxu0 0
        %5457 = vmatprep.subr.bf16.mxu0 0
        %5458 = vmatpush1.bf16.msra.mxu0 0
        %5459 = vmatprep.subr.bf16.mxu0 0
        %5460 = vmatpush1.bf16.msra.mxu0 0
        %5461 = vmatprep.mubr.bf16.mxu0 0
        %5462 = vmatmul.mubr.bf16.gmra.mrb[0].mxu0 %v5427
        %v5463 = vpop.f32.mrb[0].mxu0
        %v5464 = vadd.f32 %v5396, %v5463
        %v5465 = vpop.f32.mrb[0].mxu0
        %v5466 = vpop.f32.mrb[0].mxu0
        %v5467 = vadd.f32 %v5399, %v5466
        %v5468 = vpop.f32.mrb[0].mxu0
        %5469 = vdwg.mxu0
        %v5470 = vld [vmem:[#allocation2 + $0x2] sm:$0xff]
        %v5471 = vld [vmem:[#allocation2 + $0xa] sm:$0xff]
        %v5472 = vpack.c.bf16 %v5471, %v5470
        %s5473 = scalar_lea.vmem [#allocation23], 64
        %v5474 = vld [vmem:[%s5473] sm:$0xf]
        %v5475 = vld [vmem:[%s5473 + $0x4] sm:$0xf]
        %v5476 = vld [vmem:[%s5473 + $0x8] sm:$0xf]
        %v5477 = vld [vmem:[%s5473 + $0xc] sm:$0xf]
        %v5478 = vld [vmem:[%s5473 + $0x10] sm:$0xf]
        %v5479 = vld [vmem:[%s5473 + $0x14] sm:$0xf]
        %v5480 = vld [vmem:[%s5473 + $0x18] sm:$0xf]
        %v5481 = vld [vmem:[%s5473 + $0x1c] sm:$0xf]
        %v5490 = vunpack.c.l.b16 %v5474
        %v5491 = vunpack.c.l.b16 %v5475
        %v5492 = vunpack.c.l.b16 %v5476
        %v5493 = vunpack.c.l.b16 %v5477
        %v5494 = vunpack.c.l.b16 %v5478
        %v5495 = vunpack.c.l.b16 %v5479
        %v5496 = vunpack.c.l.b16 %v5480
        %v5497 = vunpack.c.l.b16 %v5481
        %v5498 = vpack.c.b16 %v5491, %v5490
        %v5499 = vpack.c.b16 %v5493, %v5492
        %v5500 = vpack.c.b16 %v5495, %v5494
        %v5501 = vpack.c.b16 %v5497, %v5496
        %v5507 = vsel %vm2185, %v5472, 0
        %5509 = vmatprep.subr.bf16.mxu0 0
        %5510 = vmatpush1.bf16.msra.mxu0 %v5498
        %5511 = vmatprep.subr.bf16.mxu0 0
        %5512 = vmatpush1.bf16.msra.mxu0 %v5499
        %5513 = vmatprep.subr.bf16.mxu0 0
        %5514 = vmatpush1.bf16.msra.mxu0 %v5500
        %5515 = vmatprep.subr.bf16.mxu0 0
        %5516 = vmatpush1.bf16.msra.mxu0 %v5501
        %5517 = vmatprep.subr.bf16.mxu0 0
        %5518 = vmatpush1.bf16.msra.mxu0 0
        %5519 = vmatprep.subr.bf16.mxu0 0
        %5520 = vmatpush1.bf16.msra.mxu0 0
        %5521 = vmatprep.subr.bf16.mxu0 0
        %5522 = vmatpush1.bf16.msra.mxu0 0
        %5523 = vmatprep.subr.bf16.mxu0 0
        %5524 = vmatpush1.bf16.msra.mxu0 0
        %5525 = vmatprep.subr.bf16.mxu0 0
        %5526 = vmatpush1.bf16.msra.mxu0 0
        %5527 = vmatprep.subr.bf16.mxu0 0
        %5528 = vmatpush1.bf16.msra.mxu0 0
        %5529 = vmatprep.subr.bf16.mxu0 0
        %5530 = vmatpush1.bf16.msra.mxu0 0
        %5531 = vmatprep.subr.bf16.mxu0 0
        %5532 = vmatpush1.bf16.msra.mxu0 0
        %5533 = vmatprep.subr.bf16.mxu0 0
        %5534 = vmatpush1.bf16.msra.mxu0 0
        %5535 = vmatprep.subr.bf16.mxu0 0
        %5536 = vmatpush1.bf16.msra.mxu0 0
        %5537 = vmatprep.subr.bf16.mxu0 0
        %5538 = vmatpush1.bf16.msra.mxu0 0
        %5539 = vmatprep.subr.bf16.mxu0 0
        %5540 = vmatpush1.bf16.msra.mxu0 0
        %5541 = vmatprep.mubr.bf16.mxu0 0
        %5542 = vmatmul.mubr.bf16.gmra.mrb[0].mxu0 %v5507
        %v5543 = vpop.f32.mrb[0].mxu0
        %v5544 = vadd.f32 0.0, %v5543
        %v5545 = vpop.f32.mrb[0].mxu0
        %v5546 = vpop.f32.mrb[0].mxu0
        %v5547 = vadd.f32 0.0, %v5546
        %v5548 = vpop.f32.mrb[0].mxu0
        %5549 = vdwg.mxu0
        %v5550 = vadd.f32 %v5464, %v5544
        %v5551 = vadd.f32 %v5467, %v5547
        %v5552 = vunpack.c.l.bf16 %v5310
        %v5553 = vlaneseq
        %v5554 = vshrl.u32 %v5553, 7
        %v5555 = vsub.s32 0, %v5554
        %v5556 = vrot.slane %v5552, %v5555
        %v5557 = vadd.f32 %v5550, %v5556
        %v5558 = vadd.f32 %v5551, %v5556
        %v5559 = vmax.f32 %v5557, 0.0
        %v5560 = vmax.f32 %v5558, 0.0
        %5561 = vst.msk [vmem:[#allocation2 + $0x1] sm:$0xff] %vm2185, %v5559
        %5562 = vst.msk [vmem:[#allocation2 + $0x9] sm:$0xff] %vm2185, %v5560
        %5563 = vst.msk [vmem:[#allocation2] sm:$0x1] %vm2188, 0.0
        %5564 = vst.msk [vmem:[#allocation2 + $0x11] sm:$0x1] %vm2188, 0.0
        %v5565 = vld [vmem:[%s57] sm:$0x1]
        %v5566 = vld [vmem:[#allocation2] sm:$0xff]
        %v5567 = vld [vmem:[#allocation2 + $0x8] sm:$0xff]
        %v5568 = vpack.c.bf16 %v5567, %v5566
        %v5569 = vld [vmem:[#allocation25] sm:$0xf]
        %v5570 = vld [vmem:[#allocation25 + $0x4] sm:$0xf]
        %v5571 = vld [vmem:[#allocation25 + $0x8] sm:$0xf]
        %v5572 = vld [vmem:[#allocation25 + $0xc] sm:$0xf]
        %v5573 = vld [vmem:[#allocation25 + $0x10] sm:$0xf]
        %v5574 = vld [vmem:[#allocation25 + $0x14] sm:$0xf]
        %v5575 = vld [vmem:[#allocation25 + $0x18] sm:$0xf]
        %v5576 = vld [vmem:[#allocation25 + $0x1c] sm:$0xf]
        %v5577 = vld [vmem:[#allocation2 + $0x1] sm:$0xff]
        %v5578 = vld [vmem:[#allocation2 + $0x9] sm:$0xff]
        %v5579 = vpack.c.bf16 %v5578, %v5577
        %s5580 = scalar_lea.vmem [#allocation25], 32
        %v5581 = vld [vmem:[%s5580] sm:$0xf]
        %v5582 = vld [vmem:[%s5580 + $0x4] sm:$0xf]
        %v5583 = vld [vmem:[%s5580 + $0x8] sm:$0xf]
        %v5584 = vld [vmem:[%s5580 + $0xc] sm:$0xf]
        %v5585 = vld [vmem:[%s5580 + $0x10] sm:$0xf]
        %v5586 = vld [vmem:[%s5580 + $0x14] sm:$0xf]
        %v5587 = vld [vmem:[%s5580 + $0x18] sm:$0xf]
        %v5588 = vld [vmem:[%s5580 + $0x1c] sm:$0xf]
        %v5597 = vunpack.c.l.b16 %v5581
        %v5598 = vunpack.c.l.b16 %v5582
        %v5599 = vunpack.c.l.b16 %v5583
        %v5600 = vunpack.c.l.b16 %v5584
        %v5601 = vunpack.c.l.b16 %v5585
        %v5602 = vunpack.c.l.b16 %v5586
        %v5603 = vunpack.c.l.b16 %v5587
        %v5604 = vunpack.c.l.b16 %v5588
        %v5605 = vpack.c.b16 %v5598, %v5597
        %v5606 = vpack.c.b16 %v5600, %v5599
        %v5607 = vpack.c.b16 %v5602, %v5601
        %v5608 = vpack.c.b16 %v5604, %v5603
        %v5614 = vsel %vm2185, %v5579, 0
        %5616 = vmatprep.subr.bf16.mxu0 0
        %5617 = vmatpush1.bf16.msra.mxu0 %v5605
        %5618 = vmatprep.subr.bf16.mxu0 0
        %5619 = vmatpush1.bf16.msra.mxu0 %v5606
        %5620 = vmatprep.subr.bf16.mxu0 0
        %5621 = vmatpush1.bf16.msra.mxu0 %v5607
        %5622 = vmatprep.subr.bf16.mxu0 0
        %5623 = vmatpush1.bf16.msra.mxu0 %v5608
        %5624 = vmatprep.subr.bf16.mxu0 0
        %5625 = vmatpush1.bf16.msra.mxu0 0
        %5626 = vmatprep.subr.bf16.mxu0 0
        %5627 = vmatpush1.bf16.msra.mxu0 0
        %5628 = vmatprep.subr.bf16.mxu0 0
        %5629 = vmatpush1.bf16.msra.mxu0 0
        %5630 = vmatprep.subr.bf16.mxu0 0
        %5631 = vmatpush1.bf16.msra.mxu0 0
        %5632 = vmatprep.subr.bf16.mxu0 0
        %5633 = vmatpush1.bf16.msra.mxu0 0
        %5634 = vmatprep.subr.bf16.mxu0 0
        %5635 = vmatpush1.bf16.msra.mxu0 0
        %5636 = vmatprep.subr.bf16.mxu0 0
        %5637 = vmatpush1.bf16.msra.mxu0 0
        %5638 = vmatprep.subr.bf16.mxu0 0
        %5639 = vmatpush1.bf16.msra.mxu0 0
        %5640 = vmatprep.subr.bf16.mxu0 0
        %5641 = vmatpush1.bf16.msra.mxu0 0
        %5642 = vmatprep.subr.bf16.mxu0 0
        %5643 = vmatpush1.bf16.msra.mxu0 0
        %5644 = vmatprep.subr.bf16.mxu0 0
        %5645 = vmatpush1.bf16.msra.mxu0 0
        %5646 = vmatprep.subr.bf16.mxu0 0
        %5647 = vmatpush1.bf16.msra.mxu0 0
        %5648 = vmatprep.mubr.bf16.mxu0 0
        %5649 = vmatmul.mubr.bf16.gmra.mrb[0].mxu0 %v5614
        %v5650 = vpop.f32.mrb[0].mxu0
        %v5651 = vadd.f32 0.0, %v5650
        %v5652 = vpop.f32.mrb[0].mxu0
        %v5653 = vpop.f32.mrb[0].mxu0
        %v5654 = vadd.f32 0.0, %v5653
        %v5655 = vpop.f32.mrb[0].mxu0
        %5656 = vdwg.mxu0
        %v5665 = vunpack.c.l.b16 %v5569
        %v5666 = vunpack.c.l.b16 %v5570
        %v5667 = vunpack.c.l.b16 %v5571
        %v5668 = vunpack.c.l.b16 %v5572
        %v5669 = vunpack.c.l.b16 %v5573
        %v5670 = vunpack.c.l.b16 %v5574
        %v5671 = vunpack.c.l.b16 %v5575
        %v5672 = vunpack.c.l.b16 %v5576
        %v5673 = vpack.c.b16 %v5666, %v5665
        %v5674 = vpack.c.b16 %v5668, %v5667
        %v5675 = vpack.c.b16 %v5670, %v5669
        %v5676 = vpack.c.b16 %v5672, %v5671
        %v5682 = vsel %vm2185, %v5568, 0
        %5684 = vmatprep.subr.bf16.mxu0 0
        %5685 = vmatpush1.bf16.msra.mxu0 %v5673
        %5686 = vmatprep.subr.bf16.mxu0 0
        %5687 = vmatpush1.bf16.msra.mxu0 %v5674
        %5688 = vmatprep.subr.bf16.mxu0 0
        %5689 = vmatpush1.bf16.msra.mxu0 %v5675
        %5690 = vmatprep.subr.bf16.mxu0 0
        %5691 = vmatpush1.bf16.msra.mxu0 %v5676
        %5692 = vmatprep.subr.bf16.mxu0 0
        %5693 = vmatpush1.bf16.msra.mxu0 0
        %5694 = vmatprep.subr.bf16.mxu0 0
        %5695 = vmatpush1.bf16.msra.mxu0 0
        %5696 = vmatprep.subr.bf16.mxu0 0
        %5697 = vmatpush1.bf16.msra.mxu0 0
        %5698 = vmatprep.subr.bf16.mxu0 0
        %5699 = vmatpush1.bf16.msra.mxu0 0
        %5700 = vmatprep.subr.bf16.mxu0 0
        %5701 = vmatpush1.bf16.msra.mxu0 0
        %5702 = vmatprep.subr.bf16.mxu0 0
        %5703 = vmatpush1.bf16.msra.mxu0 0
        %5704 = vmatprep.subr.bf16.mxu0 0
        %5705 = vmatpush1.bf16.msra.mxu0 0
        %5706 = vmatprep.subr.bf16.mxu0 0
        %5707 = vmatpush1.bf16.msra.mxu0 0
        %5708 = vmatprep.subr.bf16.mxu0 0
        %5709 = vmatpush1.bf16.msra.mxu0 0
        %5710 = vmatprep.subr.bf16.mxu0 0
        %5711 = vmatpush1.bf16.msra.mxu0 0
        %5712 = vmatprep.subr.bf16.mxu0 0
        %5713 = vmatpush1.bf16.msra.mxu0 0
        %5714 = vmatprep.subr.bf16.mxu0 0
        %5715 = vmatpush1.bf16.msra.mxu0 0
        %5716 = vmatprep.mubr.bf16.mxu0 0
        %5717 = vmatmul.mubr.bf16.gmra.mrb[0].mxu0 %v5682
        %v5718 = vpop.f32.mrb[0].mxu0
        %v5719 = vadd.f32 %v5651, %v5718
        %v5720 = vpop.f32.mrb[0].mxu0
        %v5721 = vpop.f32.mrb[0].mxu0
        %v5722 = vadd.f32 %v5654, %v5721
        %v5723 = vpop.f32.mrb[0].mxu0
        %5724 = vdwg.mxu0
        %v5725 = vld [vmem:[#allocation2 + $0x2] sm:$0xff]
        %v5726 = vld [vmem:[#allocation2 + $0xa] sm:$0xff]
        %v5727 = vpack.c.bf16 %v5726, %v5725
        %s5728 = scalar_lea.vmem [#allocation25], 64
        %v5729 = vld [vmem:[%s5728] sm:$0xf]
        %v5730 = vld [vmem:[%s5728 + $0x4] sm:$0xf]
        %v5731 = vld [vmem:[%s5728 + $0x8] sm:$0xf]
        %v5732 = vld [vmem:[%s5728 + $0xc] sm:$0xf]
        %v5733 = vld [vmem:[%s5728 + $0x10] sm:$0xf]
        %v5734 = vld [vmem:[%s5728 + $0x14] sm:$0xf]
        %v5735 = vld [vmem:[%s5728 + $0x18] sm:$0xf]
        %v5736 = vld [vmem:[%s5728 + $0x1c] sm:$0xf]
        %v5745 = vunpack.c.l.b16 %v5729
        %v5746 = vunpack.c.l.b16 %v5730
        %v5747 = vunpack.c.l.b16 %v5731
        %v5748 = vunpack.c.l.b16 %v5732
        %v5749 = vunpack.c.l.b16 %v5733
        %v5750 = vunpack.c.l.b16 %v5734
        %v5751 = vunpack.c.l.b16 %v5735
        %v5752 = vunpack.c.l.b16 %v5736
        %v5753 = vpack.c.b16 %v5746, %v5745
        %v5754 = vpack.c.b16 %v5748, %v5747
        %v5755 = vpack.c.b16 %v5750, %v5749
        %v5756 = vpack.c.b16 %v5752, %v5751
        %v5762 = vsel %vm2185, %v5727, 0
        %5764 = vmatprep.subr.bf16.mxu0 0
        %5765 = vmatpush1.bf16.msra.mxu0 %v5753
        %5766 = vmatprep.subr.bf16.mxu0 0
        %5767 = vmatpush1.bf16.msra.mxu0 %v5754
        %5768 = vmatprep.subr.bf16.mxu0 0
        %5769 = vmatpush1.bf16.msra.mxu0 %v5755
        %5770 = vmatprep.subr.bf16.mxu0 0
        %5771 = vmatpush1.bf16.msra.mxu0 %v5756
        %5772 = vmatprep.subr.bf16.mxu0 0
        %5773 = vmatpush1.bf16.msra.mxu0 0
        %5774 = vmatprep.subr.bf16.mxu0 0
        %5775 = vmatpush1.bf16.msra.mxu0 0
        %5776 = vmatprep.subr.bf16.mxu0 0
        %5777 = vmatpush1.bf16.msra.mxu0 0
        %5778 = vmatprep.subr.bf16.mxu0 0
        %5779 = vmatpush1.bf16.msra.mxu0 0
        %5780 = vmatprep.subr.bf16.mxu0 0
        %5781 = vmatpush1.bf16.msra.mxu0 0
        %5782 = vmatprep.subr.bf16.mxu0 0
        %5783 = vmatpush1.bf16.msra.mxu0 0
        %5784 = vmatprep.subr.bf16.mxu0 0
        %5785 = vmatpush1.bf16.msra.mxu0 0
        %5786 = vmatprep.subr.bf16.mxu0 0
        %5787 = vmatpush1.bf16.msra.mxu0 0
        %5788 = vmatprep.subr.bf16.mxu0 0
        %5789 = vmatpush1.bf16.msra.mxu0 0
        %5790 = vmatprep.subr.bf16.mxu0 0
        %5791 = vmatpush1.bf16.msra.mxu0 0
        %5792 = vmatprep.subr.bf16.mxu0 0
        %5793 = vmatpush1.bf16.msra.mxu0 0
        %5794 = vmatprep.subr.bf16.mxu0 0
        %5795 = vmatpush1.bf16.msra.mxu0 0
        %5796 = vmatprep.mubr.bf16.mxu0 0
        %5797 = vmatmul.mubr.bf16.gmra.mrb[0].mxu0 %v5762
        %v5798 = vpop.f32.mrb[0].mxu0
        %v5799 = vadd.f32 0.0, %v5798
        %v5800 = vpop.f32.mrb[0].mxu0
        %v5801 = vpop.f32.mrb[0].mxu0
        %v5802 = vadd.f32 0.0, %v5801
        %v5803 = vpop.f32.mrb[0].mxu0
        %5804 = vdwg.mxu0
        %v5805 = vadd.f32 %v5719, %v5799
        %v5806 = vadd.f32 %v5722, %v5802
        %v5807 = vunpack.c.l.bf16 %v5565
        %v5808 = vlaneseq
        %v5809 = vshrl.u32 %v5808, 7
        %v5810 = vsub.s32 0, %v5809
        %v5811 = vrot.slane %v5807, %v5810
        %v5812 = vadd.f32 %v5805, %v5811
        %v5813 = vadd.f32 %v5806, %v5811
        %v5814 = vmax.f32 %v5812, 0.0
        %v5815 = vmax.f32 %v5813, 0.0
        %5816 = vst [vmem:[%s1717] ss:$2 sm:$0xff] %v5814
        %5817 = vst [vmem:[%s1719] ss:$2 sm:$0xff] %v5815
        %5818 = vst [vmem:[%s1917] ss:$2 sm:$0xff] %v5814
        %5819 = vst [vmem:[%s1919] ss:$2 sm:$0xff] %v5815
        %5820 = vst.msk [vmem:[#allocation2] sm:$0x1] %vm2188, 0.0
        %5821 = vst.msk [vmem:[#allocation2 + $0x21] sm:$0x1] %vm2188, 0.0
        %v5822 = vld [vmem:[%s61] sm:$0x1]
        %v5823 = vld [vmem:[#allocation2] sm:$0xff]
        %v5824 = vld [vmem:[#allocation2 + $0x8] sm:$0xff]
        %v5825 = vld [vmem:[#allocation2 + $0x10] sm:$0xff]
        %v5826 = vld [vmem:[#allocation2 + $0x18] sm:$0xff]
        %v5827 = vpack.c.bf16 %v5824, %v5823
        %v5828 = vpack.c.bf16 %v5826, %v5825
        %v5829 = vld [vmem:[#allocation26] sm:$0xf]
        %v5830 = vld [vmem:[#allocation26 + $0x4] sm:$0xf]
        %v5831 = vld [vmem:[#allocation26 + $0x8] sm:$0xf]
        %v5832 = vld [vmem:[#allocation26 + $0xc] sm:$0xf]
        %v5833 = vld [vmem:[#allocation26 + $0x10] sm:$0xf]
        %v5834 = vld [vmem:[#allocation26 + $0x14] sm:$0xf]
        %v5835 = vld [vmem:[#allocation26 + $0x18] sm:$0xf]
        %v5836 = vld [vmem:[#allocation26 + $0x1c] sm:$0xf]
        %v5837 = vld [vmem:[#allocation2 + $0x1] sm:$0xff]
        %v5838 = vld [vmem:[#allocation2 + $0x9] sm:$0xff]
        %v5839 = vld [vmem:[#allocation2 + $0x11] sm:$0xff]
        %v5840 = vld [vmem:[#allocation2 + $0x19] sm:$0xff]
        %v5841 = vpack.c.bf16 %v5838, %v5837
        %v5842 = vpack.c.bf16 %v5840, %v5839
        %s5843 = scalar_lea.vmem [#allocation26], 32
        %v5844 = vld [vmem:[%s5843] sm:$0xf]
        %v5845 = vld [vmem:[%s5843 + $0x4] sm:$0xf]
        %v5846 = vld [vmem:[%s5843 + $0x8] sm:$0xf]
        %v5847 = vld [vmem:[%s5843 + $0xc] sm:$0xf]
        %v5848 = vld [vmem:[%s5843 + $0x10] sm:$0xf]
        %v5849 = vld [vmem:[%s5843 + $0x14] sm:$0xf]
        %v5850 = vld [vmem:[%s5843 + $0x18] sm:$0xf]
        %v5851 = vld [vmem:[%s5843 + $0x1c] sm:$0xf]
        %v5860 = vunpack.c.l.b16 %v5844
        %v5861 = vunpack.c.l.b16 %v5845
        %v5862 = vunpack.c.l.b16 %v5846
        %v5863 = vunpack.c.l.b16 %v5847
        %v5864 = vunpack.c.l.b16 %v5848
        %v5865 = vunpack.c.l.b16 %v5849
        %v5866 = vunpack.c.l.b16 %v5850
        %v5867 = vunpack.c.l.b16 %v5851
        %v5868 = vpack.c.b16 %v5861, %v5860
        %v5869 = vpack.c.b16 %v5863, %v5862
        %v5870 = vpack.c.b16 %v5865, %v5864
        %v5871 = vpack.c.b16 %v5867, %v5866
        %v5877 = vsel %vm2185, %v5841, 0
        %v5880 = vsel %vm2185, %v5842, 0
        %5882 = vmatprep.subr.bf16.mxu0 0
        %5883 = vmatpush1.bf16.msra.mxu0 %v5868
        %5884 = vmatprep.subr.bf16.mxu0 0
        %5885 = vmatpush1.bf16.msra.mxu0 %v5869
        %5886 = vmatprep.subr.bf16.mxu0 0
        %5887 = vmatpush1.bf16.msra.mxu0 %v5870
        %5888 = vmatprep.subr.bf16.mxu0 0
        %5889 = vmatpush1.bf16.msra.mxu0 %v5871
        %5890 = vmatprep.subr.bf16.mxu0 0
        %5891 = vmatpush1.bf16.msra.mxu0 0
        %5892 = vmatprep.subr.bf16.mxu0 0
        %5893 = vmatpush1.bf16.msra.mxu0 0
        %5894 = vmatprep.subr.bf16.mxu0 0
        %5895 = vmatpush1.bf16.msra.mxu0 0
        %5896 = vmatprep.subr.bf16.mxu0 0
        %5897 = vmatpush1.bf16.msra.mxu0 0
        %5898 = vmatprep.subr.bf16.mxu0 0
        %5899 = vmatpush1.bf16.msra.mxu0 0
        %5900 = vmatprep.subr.bf16.mxu0 0
        %5901 = vmatpush1.bf16.msra.mxu0 0
        %5902 = vmatprep.subr.bf16.mxu0 0
        %5903 = vmatpush1.bf16.msra.mxu0 0
        %5904 = vmatprep.subr.bf16.mxu0 0
        %5905 = vmatpush1.bf16.msra.mxu0 0
        %5906 = vmatprep.subr.bf16.mxu0 0
        %5907 = vmatpush1.bf16.msra.mxu0 0
        %5908 = vmatprep.subr.bf16.mxu0 0
        %5909 = vmatpush1.bf16.msra.mxu0 0
        %5910 = vmatprep.subr.bf16.mxu0 0
        %5911 = vmatpush1.bf16.msra.mxu0 0
        %5912 = vmatprep.subr.bf16.mxu0 0
        %5913 = vmatpush1.bf16.msra.mxu0 0
        %5914 = vmatprep.mubr.bf16.mxu0 0
        %5915 = vmatmul.mubr.bf16.gmra.mrb[0].mxu0 %v5877
        %v5916 = vpop.f32.mrb[0].mxu0
        %v5917 = vadd.f32 0.0, %v5916
        %v5918 = vpop.f32.mrb[0].mxu0
        %v5919 = vpop.f32.mrb[0].mxu0
        %v5920 = vadd.f32 0.0, %v5919
        %v5921 = vpop.f32.mrb[0].mxu0
        %5922 = vmatprep.mubr.bf16.mxu0 0
        %5923 = vmatmul.mubr.bf16.gmra.mrb[0].mxu0 %v5880
        %v5924 = vpop.f32.mrb[0].mxu0
        %v5925 = vadd.f32 0.0, %v5924
        %v5926 = vpop.f32.mrb[0].mxu0
        %v5927 = vpop.f32.mrb[0].mxu0
        %v5928 = vadd.f32 0.0, %v5927
        %v5929 = vpop.f32.mrb[0].mxu0
        %5930 = vdwg.mxu0
        %v5939 = vunpack.c.l.b16 %v5829
        %v5940 = vunpack.c.l.b16 %v5830
        %v5941 = vunpack.c.l.b16 %v5831
        %v5942 = vunpack.c.l.b16 %v5832
        %v5943 = vunpack.c.l.b16 %v5833
        %v5944 = vunpack.c.l.b16 %v5834
        %v5945 = vunpack.c.l.b16 %v5835
        %v5946 = vunpack.c.l.b16 %v5836
        %v5947 = vpack.c.b16 %v5940, %v5939
        %v5948 = vpack.c.b16 %v5942, %v5941
        %v5949 = vpack.c.b16 %v5944, %v5943
        %v5950 = vpack.c.b16 %v5946, %v5945
        %v5956 = vsel %vm2185, %v5827, 0
        %v5959 = vsel %vm2185, %v5828, 0
        %5961 = vmatprep.subr.bf16.mxu0 0
        %5962 = vmatpush1.bf16.msra.mxu0 %v5947
        %5963 = vmatprep.subr.bf16.mxu0 0
        %5964 = vmatpush1.bf16.msra.mxu0 %v5948
        %5965 = vmatprep.subr.bf16.mxu0 0
        %5966 = vmatpush1.bf16.msra.mxu0 %v5949
        %5967 = vmatprep.subr.bf16.mxu0 0
        %5968 = vmatpush1.bf16.msra.mxu0 %v5950
        %5969 = vmatprep.subr.bf16.mxu0 0
        %5970 = vmatpush1.bf16.msra.mxu0 0
        %5971 = vmatprep.subr.bf16.mxu0 0
        %5972 = vmatpush1.bf16.msra.mxu0 0
        %5973 = vmatprep.subr.bf16.mxu0 0
        %5974 = vmatpush1.bf16.msra.mxu0 0
        %5975 = vmatprep.subr.bf16.mxu0 0
        %5976 = vmatpush1.bf16.msra.mxu0 0
        %5977 = vmatprep.subr.bf16.mxu0 0
        %5978 = vmatpush1.bf16.msra.mxu0 0
        %5979 = vmatprep.subr.bf16.mxu0 0
        %5980 = vmatpush1.bf16.msra.mxu0 0
        %5981 = vmatprep.subr.bf16.mxu0 0
        %5982 = vmatpush1.bf16.msra.mxu0 0
        %5983 = vmatprep.subr.bf16.mxu0 0
        %5984 = vmatpush1.bf16.msra.mxu0 0
        %5985 = vmatprep.subr.bf16.mxu0 0
        %5986 = vmatpush1.bf16.msra.mxu0 0
        %5987 = vmatprep.subr.bf16.mxu0 0
        %5988 = vmatpush1.bf16.msra.mxu0 0
        %5989 = vmatprep.subr.bf16.mxu0 0
        %5990 = vmatpush1.bf16.msra.mxu0 0
        %5991 = vmatprep.subr.bf16.mxu0 0
        %5992 = vmatpush1.bf16.msra.mxu0 0
        %5993 = vmatprep.mubr.bf16.mxu0 0
        %5994 = vmatmul.mubr.bf16.gmra.mrb[0].mxu0 %v5956
        %v5995 = vpop.f32.mrb[0].mxu0
        %v5996 = vadd.f32 %v5917, %v5995
        %v5997 = vpop.f32.mrb[0].mxu0
        %v5998 = vpop.f32.mrb[0].mxu0
        %v5999 = vadd.f32 %v5920, %v5998
        %v6000 = vpop.f32.mrb[0].mxu0
        %6001 = vmatprep.mubr.bf16.mxu0 0
        %6002 = vmatmul.mubr.bf16.gmra.mrb[0].mxu0 %v5959
        %v6003 = vpop.f32.mrb[0].mxu0
        %v6004 = vadd.f32 %v5925, %v6003
        %v6005 = vpop.f32.mrb[0].mxu0
        %v6006 = vpop.f32.mrb[0].mxu0
        %v6007 = vadd.f32 %v5928, %v6006
        %v6008 = vpop.f32.mrb[0].mxu0
        %6009 = vdwg.mxu0
        %v6010 = vld [vmem:[#allocation2 + $0x2] sm:$0xff]
        %v6011 = vld [vmem:[#allocation2 + $0xa] sm:$0xff]
        %v6012 = vld [vmem:[#allocation2 + $0x12] sm:$0xff]
        %v6013 = vld [vmem:[#allocation2 + $0x1a] sm:$0xff]
        %v6014 = vpack.c.bf16 %v6011, %v6010
        %v6015 = vpack.c.bf16 %v6013, %v6012
        %s6016 = scalar_lea.vmem [#allocation26], 64
        %v6017 = vld [vmem:[%s6016] sm:$0xf]
        %v6018 = vld [vmem:[%s6016 + $0x4] sm:$0xf]
        %v6019 = vld [vmem:[%s6016 + $0x8] sm:$0xf]
        %v6020 = vld [vmem:[%s6016 + $0xc] sm:$0xf]
        %v6021 = vld [vmem:[%s6016 + $0x10] sm:$0xf]
        %v6022 = vld [vmem:[%s6016 + $0x14] sm:$0xf]
        %v6023 = vld [vmem:[%s6016 + $0x18] sm:$0xf]
        %v6024 = vld [vmem:[%s6016 + $0x1c] sm:$0xf]
        %v6033 = vunpack.c.l.b16 %v6017
        %v6034 = vunpack.c.l.b16 %v6018
        %v6035 = vunpack.c.l.b16 %v6019
        %v6036 = vunpack.c.l.b16 %v6020
        %v6037 = vunpack.c.l.b16 %v6021
        %v6038 = vunpack.c.l.b16 %v6022
        %v6039 = vunpack.c.l.b16 %v6023
        %v6040 = vunpack.c.l.b16 %v6024
        %v6041 = vpack.c.b16 %v6034, %v6033
        %v6042 = vpack.c.b16 %v6036, %v6035
        %v6043 = vpack.c.b16 %v6038, %v6037
        %v6044 = vpack.c.b16 %v6040, %v6039
        %v6050 = vsel %vm2185, %v6014, 0
        %v6053 = vsel %vm2185, %v6015, 0
        %6055 = vmatprep.subr.bf16.mxu0 0
        %6056 = vmatpush1.bf16.msra.mxu0 %v6041
        %6057 = vmatprep.subr.bf16.mxu0 0
        %6058 = vmatpush1.bf16.msra.mxu0 %v6042
        %6059 = vmatprep.subr.bf16.mxu0 0
        %6060 = vmatpush1.bf16.msra.mxu0 %v6043
        %6061 = vmatprep.subr.bf16.mxu0 0
        %6062 = vmatpush1.bf16.msra.mxu0 %v6044
        %6063 = vmatprep.subr.bf16.mxu0 0
        %6064 = vmatpush1.bf16.msra.mxu0 0
        %6065 = vmatprep.subr.bf16.mxu0 0
        %6066 = vmatpush1.bf16.msra.mxu0 0
        %6067 = vmatprep.subr.bf16.mxu0 0
        %6068 = vmatpush1.bf16.msra.mxu0 0
        %6069 = vmatprep.subr.bf16.mxu0 0
        %6070 = vmatpush1.bf16.msra.mxu0 0
        %6071 = vmatprep.subr.bf16.mxu0 0
        %6072 = vmatpush1.bf16.msra.mxu0 0
        %6073 = vmatprep.subr.bf16.mxu0 0
        %6074 = vmatpush1.bf16.msra.mxu0 0
        %6075 = vmatprep.subr.bf16.mxu0 0
        %6076 = vmatpush1.bf16.msra.mxu0 0
        %6077 = vmatprep.subr.bf16.mxu0 0
        %6078 = vmatpush1.bf16.msra.mxu0 0
        %6079 = vmatprep.subr.bf16.mxu0 0
        %6080 = vmatpush1.bf16.msra.mxu0 0
        %6081 = vmatprep.subr.bf16.mxu0 0
        %6082 = vmatpush1.bf16.msra.mxu0 0
        %6083 = vmatprep.subr.bf16.mxu0 0
        %6084 = vmatpush1.bf16.msra.mxu0 0
        %6085 = vmatprep.subr.bf16.mxu0 0
        %6086 = vmatpush1.bf16.msra.mxu0 0
        %6087 = vmatprep.mubr.bf16.mxu0 0
        %6088 = vmatmul.mubr.bf16.gmra.mrb[0].mxu0 %v6050
        %v6089 = vpop.f32.mrb[0].mxu0
        %v6090 = vadd.f32 0.0, %v6089
        %v6091 = vpop.f32.mrb[0].mxu0
        %v6092 = vpop.f32.mrb[0].mxu0
        %v6093 = vadd.f32 0.0, %v6092
        %v6094 = vpop.f32.mrb[0].mxu0
        %6095 = vmatprep.mubr.bf16.mxu0 0
        %6096 = vmatmul.mubr.bf16.gmra.mrb[0].mxu0 %v6053
        %v6097 = vpop.f32.mrb[0].mxu0
        %v6098 = vadd.f32 0.0, %v6097
        %v6099 = vpop.f32.mrb[0].mxu0
        %v6100 = vpop.f32.mrb[0].mxu0
        %v6101 = vadd.f32 0.0, %v6100
        %v6102 = vpop.f32.mrb[0].mxu0
        %6103 = vdwg.mxu0
        %v6104 = vadd.f32 %v5996, %v6090
        %v6105 = vadd.f32 %v5999, %v6093
        %v6106 = vadd.f32 %v6004, %v6098
        %v6107 = vadd.f32 %v6007, %v6101
        %v6108 = vunpack.c.l.bf16 %v5822
        %v6109 = vlaneseq
        %v6110 = vshrl.u32 %v6109, 7
        %v6111 = vsub.s32 0, %v6110
        %v6112 = vrot.slane %v6108, %v6111
        %v6113 = vadd.f32 %v6104, %v6112
        %v6114 = vadd.f32 %v6105, %v6112
        %v6115 = vadd.f32 %v6106, %v6112
        %v6116 = vadd.f32 %v6107, %v6112
        %v6117 = vmax.f32 %v6113, 0.0
        %v6118 = vmax.f32 %v6114, 0.0
        %v6119 = vmax.f32 %v6115, 0.0
        %v6120 = vmax.f32 %v6116, 0.0
        %6121 = vst [vmem:[#allocation2 + $0x1] sm:$0xff] %v6117
        %6122 = vst [vmem:[#allocation2 + $0x9] sm:$0xff] %v6118
        %6123 = vst [vmem:[#allocation2 + $0x11] sm:$0xff] %v6119
        %6124 = vst [vmem:[#allocation2 + $0x19] sm:$0xff] %v6120
        %6125 = vst [vmem:[#allocation2] sm:$0x1] 0.0
        %6126 = vst [vmem:[#allocation2 + $0x21] sm:$0x1] 0.0
        %v6127 = vld [vmem:[%s65] sm:$0x1]
        %v6128 = vld [vmem:[#allocation2] sm:$0xff]
        %v6129 = vld [vmem:[#allocation2 + $0x8] sm:$0xff]
        %v6130 = vld [vmem:[#allocation2 + $0x10] sm:$0xff]
        %v6131 = vld [vmem:[#allocation2 + $0x18] sm:$0xff]
        %v6132 = vpack.c.bf16 %v6129, %v6128
        %v6133 = vpack.c.bf16 %v6131, %v6130
        %v6134 = vld [vmem:[%s63] sm:$0xf]
        %v6135 = vld [vmem:[%s63 + $0x4] sm:$0xf]
        %v6136 = vld [vmem:[%s63 + $0x8] sm:$0xf]
        %v6137 = vld [vmem:[%s63 + $0xc] sm:$0xf]
        %v6138 = vld [vmem:[%s63 + $0x10] sm:$0xf]
        %v6139 = vld [vmem:[%s63 + $0x14] sm:$0xf]
        %v6140 = vld [vmem:[%s63 + $0x18] sm:$0xf]
        %v6141 = vld [vmem:[%s63 + $0x1c] sm:$0xf]
        %v6142 = vld [vmem:[%s63 + $0x20] sm:$0xf]
        %v6143 = vld [vmem:[%s63 + $0x24] sm:$0xf]
        %v6144 = vld [vmem:[%s63 + $0x28] sm:$0xf]
        %v6145 = vld [vmem:[%s63 + $0x2c] sm:$0xf]
        %v6146 = vld [vmem:[%s63 + $0x30] sm:$0xf]
        %v6147 = vld [vmem:[%s63 + $0x34] sm:$0xf]
        %v6148 = vld [vmem:[%s63 + $0x38] sm:$0xf]
        %v6149 = vld [vmem:[%s63 + $0x3c] sm:$0xf]
        %v6150 = vld [vmem:[#allocation2 + $0x1] sm:$0xff]
        %v6151 = vld [vmem:[#allocation2 + $0x9] sm:$0xff]
        %v6152 = vld [vmem:[#allocation2 + $0x11] sm:$0xff]
        %v6153 = vld [vmem:[#allocation2 + $0x19] sm:$0xff]
        %v6154 = vpack.c.bf16 %v6151, %v6150
        %v6155 = vpack.c.bf16 %v6153, %v6152
        %s6156 = scalar_lea.vmem %s63, 64
        %v6157 = vld [vmem:[%s6156] sm:$0xf]
        %v6158 = vld [vmem:[%s6156 + $0x4] sm:$0xf]
        %v6159 = vld [vmem:[%s6156 + $0x8] sm:$0xf]
        %v6160 = vld [vmem:[%s6156 + $0xc] sm:$0xf]
        %v6161 = vld [vmem:[%s6156 + $0x10] sm:$0xf]
        %v6162 = vld [vmem:[%s6156 + $0x14] sm:$0xf]
        %v6163 = vld [vmem:[%s6156 + $0x18] sm:$0xf]
        %v6164 = vld [vmem:[%s6156 + $0x1c] sm:$0xf]
        %v6165 = vld [vmem:[%s6156 + $0x20] sm:$0xf]
        %v6166 = vld [vmem:[%s6156 + $0x24] sm:$0xf]
        %v6167 = vld [vmem:[%s6156 + $0x28] sm:$0xf]
        %v6168 = vld [vmem:[%s6156 + $0x2c] sm:$0xf]
        %v6169 = vld [vmem:[%s6156 + $0x30] sm:$0xf]
        %v6170 = vld [vmem:[%s6156 + $0x34] sm:$0xf]
        %v6171 = vld [vmem:[%s6156 + $0x38] sm:$0xf]
        %v6172 = vld [vmem:[%s6156 + $0x3c] sm:$0xf]
        %v6189 = vunpack.c.l.b16 %v6157
        %v6190 = vunpack.c.l.b16 %v6158
        %v6191 = vunpack.c.l.b16 %v6159
        %v6192 = vunpack.c.l.b16 %v6160
        %v6193 = vunpack.c.l.b16 %v6161
        %v6194 = vunpack.c.l.b16 %v6162
        %v6195 = vunpack.c.l.b16 %v6163
        %v6196 = vunpack.c.l.b16 %v6164
        %v6197 = vunpack.c.l.b16 %v6165
        %v6198 = vunpack.c.l.b16 %v6166
        %v6199 = vunpack.c.l.b16 %v6167
        %v6200 = vunpack.c.l.b16 %v6168
        %v6201 = vunpack.c.l.b16 %v6169
        %v6202 = vunpack.c.l.b16 %v6170
        %v6203 = vunpack.c.l.b16 %v6171
        %v6204 = vunpack.c.l.b16 %v6172
        %v6205 = vpack.c.b16 %v6190, %v6189
        %v6206 = vpack.c.b16 %v6192, %v6191
        %v6207 = vpack.c.b16 %v6194, %v6193
        %v6208 = vpack.c.b16 %v6196, %v6195
        %v6209 = vpack.c.b16 %v6198, %v6197
        %v6210 = vpack.c.b16 %v6200, %v6199
        %v6211 = vpack.c.b16 %v6202, %v6201
        %v6212 = vpack.c.b16 %v6204, %v6203
        %6221 = vmatprep.subr.bf16.mxu0 0
        %6222 = vmatpush1.bf16.msra.mxu0 %v6205
        %6223 = vmatprep.subr.bf16.mxu0 0
        %6224 = vmatpush1.bf16.msra.mxu0 %v6206
        %6225 = vmatprep.subr.bf16.mxu0 0
        %6226 = vmatpush1.bf16.msra.mxu0 %v6207
        %6227 = vmatprep.subr.bf16.mxu0 0
        %6228 = vmatpush1.bf16.msra.mxu0 %v6208
        %6229 = vmatprep.subr.bf16.mxu0 0
        %6230 = vmatpush1.bf16.msra.mxu0 %v6209
        %6231 = vmatprep.subr.bf16.mxu0 0
        %6232 = vmatpush1.bf16.msra.mxu0 %v6210
        %6233 = vmatprep.subr.bf16.mxu0 0
        %6234 = vmatpush1.bf16.msra.mxu0 %v6211
        %6235 = vmatprep.subr.bf16.mxu0 0
        %6236 = vmatpush1.bf16.msra.mxu0 %v6212
        %6237 = vmatprep.subr.bf16.mxu0 0
        %6238 = vmatpush1.bf16.msra.mxu0 0
        %6239 = vmatprep.subr.bf16.mxu0 0
        %6240 = vmatpush1.bf16.msra.mxu0 0
        %6241 = vmatprep.subr.bf16.mxu0 0
        %6242 = vmatpush1.bf16.msra.mxu0 0
        %6243 = vmatprep.subr.bf16.mxu0 0
        %6244 = vmatpush1.bf16.msra.mxu0 0
        %6245 = vmatprep.subr.bf16.mxu0 0
        %6246 = vmatpush1.bf16.msra.mxu0 0
        %6247 = vmatprep.subr.bf16.mxu0 0
        %6248 = vmatpush1.bf16.msra.mxu0 0
        %6249 = vmatprep.subr.bf16.mxu0 0
        %6250 = vmatpush1.bf16.msra.mxu0 0
        %6251 = vmatprep.subr.bf16.mxu0 0
        %6252 = vmatpush1.bf16.msra.mxu0 0
        %6253 = vmatprep.mubr.bf16.mxu0 0
        %6254 = vmatmul.mubr.bf16.gmra.mrb[0].mxu0 %v6154
        %v6255 = vpop.f32.mrb[0].mxu0
        %v6256 = vadd.f32 0.0, %v6255
        %v6257 = vpop.f32.mrb[0].mxu0
        %v6258 = vpop.f32.mrb[0].mxu0
        %v6259 = vadd.f32 0.0, %v6258
        %v6260 = vpop.f32.mrb[0].mxu0
        %6261 = vmatprep.mubr.bf16.mxu0 0
        %6262 = vmatmul.mubr.bf16.gmra.mrb[0].mxu0 %v6155
        %v6263 = vpop.f32.mrb[0].mxu0
        %v6264 = vadd.f32 0.0, %v6263
        %v6265 = vpop.f32.mrb[0].mxu0
        %v6266 = vpop.f32.mrb[0].mxu0
        %v6267 = vadd.f32 0.0, %v6266
        %v6268 = vpop.f32.mrb[0].mxu0
        %6269 = vdwg.mxu0
        %v6286 = vunpack.c.l.b16 %v6134
        %v6287 = vunpack.c.l.b16 %v6135
        %v6288 = vunpack.c.l.b16 %v6136
        %v6289 = vunpack.c.l.b16 %v6137
        %v6290 = vunpack.c.l.b16 %v6138
        %v6291 = vunpack.c.l.b16 %v6139
        %v6292 = vunpack.c.l.b16 %v6140
        %v6293 = vunpack.c.l.b16 %v6141
        %v6294 = vunpack.c.l.b16 %v6142
        %v6295 = vunpack.c.l.b16 %v6143
        %v6296 = vunpack.c.l.b16 %v6144
        %v6297 = vunpack.c.l.b16 %v6145
        %v6298 = vunpack.c.l.b16 %v6146
        %v6299 = vunpack.c.l.b16 %v6147
        %v6300 = vunpack.c.l.b16 %v6148
        %v6301 = vunpack.c.l.b16 %v6149
        %v6302 = vpack.c.b16 %v6287, %v6286
        %v6303 = vpack.c.b16 %v6289, %v6288
        %v6304 = vpack.c.b16 %v6291, %v6290
        %v6305 = vpack.c.b16 %v6293, %v6292
        %v6306 = vpack.c.b16 %v6295, %v6294
        %v6307 = vpack.c.b16 %v6297, %v6296
        %v6308 = vpack.c.b16 %v6299, %v6298
        %v6309 = vpack.c.b16 %v6301, %v6300
        %6318 = vmatprep.subr.bf16.mxu0 0
        %6319 = vmatpush1.bf16.msra.mxu0 %v6302
        %6320 = vmatprep.subr.bf16.mxu0 0
        %6321 = vmatpush1.bf16.msra.mxu0 %v6303
        %6322 = vmatprep.subr.bf16.mxu0 0
        %6323 = vmatpush1.bf16.msra.mxu0 %v6304
        %6324 = vmatprep.subr.bf16.mxu0 0
        %6325 = vmatpush1.bf16.msra.mxu0 %v6305
        %6326 = vmatprep.subr.bf16.mxu0 0
        %6327 = vmatpush1.bf16.msra.mxu0 %v6306
        %6328 = vmatprep.subr.bf16.mxu0 0
        %6329 = vmatpush1.bf16.msra.mxu0 %v6307
        %6330 = vmatprep.subr.bf16.mxu0 0
        %6331 = vmatpush1.bf16.msra.mxu0 %v6308
        %6332 = vmatprep.subr.bf16.mxu0 0
        %6333 = vmatpush1.bf16.msra.mxu0 %v6309
        %6334 = vmatprep.subr.bf16.mxu0 0
        %6335 = vmatpush1.bf16.msra.mxu0 0
        %6336 = vmatprep.subr.bf16.mxu0 0
        %6337 = vmatpush1.bf16.msra.mxu0 0
        %6338 = vmatprep.subr.bf16.mxu0 0
        %6339 = vmatpush1.bf16.msra.mxu0 0
        %6340 = vmatprep.subr.bf16.mxu0 0
        %6341 = vmatpush1.bf16.msra.mxu0 0
        %6342 = vmatprep.subr.bf16.mxu0 0
        %6343 = vmatpush1.bf16.msra.mxu0 0
        %6344 = vmatprep.subr.bf16.mxu0 0
        %6345 = vmatpush1.bf16.msra.mxu0 0
        %6346 = vmatprep.subr.bf16.mxu0 0
        %6347 = vmatpush1.bf16.msra.mxu0 0
        %6348 = vmatprep.subr.bf16.mxu0 0
        %6349 = vmatpush1.bf16.msra.mxu0 0
        %6350 = vmatprep.mubr.bf16.mxu0 0
        %6351 = vmatmul.mubr.bf16.gmra.mrb[0].mxu0 %v6132
        %v6352 = vpop.f32.mrb[0].mxu0
        %v6353 = vadd.f32 %v6256, %v6352
        %v6354 = vpop.f32.mrb[0].mxu0
        %v6355 = vpop.f32.mrb[0].mxu0
        %v6356 = vadd.f32 %v6259, %v6355
        %v6357 = vpop.f32.mrb[0].mxu0
        %6358 = vmatprep.mubr.bf16.mxu0 0
        %6359 = vmatmul.mubr.bf16.gmra.mrb[0].mxu0 %v6133
        %v6360 = vpop.f32.mrb[0].mxu0
        %v6361 = vadd.f32 %v6264, %v6360
        %v6362 = vpop.f32.mrb[0].mxu0
        %v6363 = vpop.f32.mrb[0].mxu0
        %v6364 = vadd.f32 %v6267, %v6363
        %v6365 = vpop.f32.mrb[0].mxu0
        %6366 = vdwg.mxu0
        %v6367 = vld [vmem:[#allocation2 + $0x2] sm:$0xff]
        %v6368 = vld [vmem:[#allocation2 + $0xa] sm:$0xff]
        %v6369 = vld [vmem:[#allocation2 + $0x12] sm:$0xff]
        %v6370 = vld [vmem:[#allocation2 + $0x1a] sm:$0xff]
        %v6371 = vpack.c.bf16 %v6368, %v6367
        %v6372 = vpack.c.bf16 %v6370, %v6369
        %s6373 = scalar_lea.vmem %s63, 128
        %v6374 = vld [vmem:[%s6373] sm:$0xf]
        %v6375 = vld [vmem:[%s6373 + $0x4] sm:$0xf]
        %v6376 = vld [vmem:[%s6373 + $0x8] sm:$0xf]
        %v6377 = vld [vmem:[%s6373 + $0xc] sm:$0xf]
        %v6378 = vld [vmem:[%s6373 + $0x10] sm:$0xf]
        %v6379 = vld [vmem:[%s6373 + $0x14] sm:$0xf]
        %v6380 = vld [vmem:[%s6373 + $0x18] sm:$0xf]
        %v6381 = vld [vmem:[%s6373 + $0x1c] sm:$0xf]
        %v6382 = vld [vmem:[%s6373 + $0x20] sm:$0xf]
        %v6383 = vld [vmem:[%s6373 + $0x24] sm:$0xf]
        %v6384 = vld [vmem:[%s6373 + $0x28] sm:$0xf]
        %v6385 = vld [vmem:[%s6373 + $0x2c] sm:$0xf]
        %v6386 = vld [vmem:[%s6373 + $0x30] sm:$0xf]
        %v6387 = vld [vmem:[%s6373 + $0x34] sm:$0xf]
        %v6388 = vld [vmem:[%s6373 + $0x38] sm:$0xf]
        %v6389 = vld [vmem:[%s6373 + $0x3c] sm:$0xf]
        %v6406 = vunpack.c.l.b16 %v6374
        %v6407 = vunpack.c.l.b16 %v6375
        %v6408 = vunpack.c.l.b16 %v6376
        %v6409 = vunpack.c.l.b16 %v6377
        %v6410 = vunpack.c.l.b16 %v6378
        %v6411 = vunpack.c.l.b16 %v6379
        %v6412 = vunpack.c.l.b16 %v6380
        %v6413 = vunpack.c.l.b16 %v6381
        %v6414 = vunpack.c.l.b16 %v6382
        %v6415 = vunpack.c.l.b16 %v6383
        %v6416 = vunpack.c.l.b16 %v6384
        %v6417 = vunpack.c.l.b16 %v6385
        %v6418 = vunpack.c.l.b16 %v6386
        %v6419 = vunpack.c.l.b16 %v6387
        %v6420 = vunpack.c.l.b16 %v6388
        %v6421 = vunpack.c.l.b16 %v6389
        %v6422 = vpack.c.b16 %v6407, %v6406
        %v6423 = vpack.c.b16 %v6409, %v6408
        %v6424 = vpack.c.b16 %v6411, %v6410
        %v6425 = vpack.c.b16 %v6413, %v6412
        %v6426 = vpack.c.b16 %v6415, %v6414
        %v6427 = vpack.c.b16 %v6417, %v6416
        %v6428 = vpack.c.b16 %v6419, %v6418
        %v6429 = vpack.c.b16 %v6421, %v6420
        %6438 = vmatprep.subr.bf16.mxu0 0
        %6439 = vmatpush1.bf16.msra.mxu0 %v6422
        %6440 = vmatprep.subr.bf16.mxu0 0
        %6441 = vmatpush1.bf16.msra.mxu0 %v6423
        %6442 = vmatprep.subr.bf16.mxu0 0
        %6443 = vmatpush1.bf16.msra.mxu0 %v6424
        %6444 = vmatprep.subr.bf16.mxu0 0
        %6445 = vmatpush1.bf16.msra.mxu0 %v6425
        %6446 = vmatprep.subr.bf16.mxu0 0
        %6447 = vmatpush1.bf16.msra.mxu0 %v6426
        %6448 = vmatprep.subr.bf16.mxu0 0
        %6449 = vmatpush1.bf16.msra.mxu0 %v6427
        %6450 = vmatprep.subr.bf16.mxu0 0
        %6451 = vmatpush1.bf16.msra.mxu0 %v6428
        %6452 = vmatprep.subr.bf16.mxu0 0
        %6453 = vmatpush1.bf16.msra.mxu0 %v6429
        %6454 = vmatprep.subr.bf16.mxu0 0
        %6455 = vmatpush1.bf16.msra.mxu0 0
        %6456 = vmatprep.subr.bf16.mxu0 0
        %6457 = vmatpush1.bf16.msra.mxu0 0
        %6458 = vmatprep.subr.bf16.mxu0 0
        %6459 = vmatpush1.bf16.msra.mxu0 0
        %6460 = vmatprep.subr.bf16.mxu0 0
        %6461 = vmatpush1.bf16.msra.mxu0 0
        %6462 = vmatprep.subr.bf16.mxu0 0
        %6463 = vmatpush1.bf16.msra.mxu0 0
        %6464 = vmatprep.subr.bf16.mxu0 0
        %6465 = vmatpush1.bf16.msra.mxu0 0
        %6466 = vmatprep.subr.bf16.mxu0 0
        %6467 = vmatpush1.bf16.msra.mxu0 0
        %6468 = vmatprep.subr.bf16.mxu0 0
        %6469 = vmatpush1.bf16.msra.mxu0 0
        %6470 = vmatprep.mubr.bf16.mxu0 0
        %6471 = vmatmul.mubr.bf16.gmra.mrb[0].mxu0 %v6371
        %v6472 = vpop.f32.mrb[0].mxu0
        %v6473 = vadd.f32 0.0, %v6472
        %v6474 = vpop.f32.mrb[0].mxu0
        %v6475 = vpop.f32.mrb[0].mxu0
        %v6476 = vadd.f32 0.0, %v6475
        %v6477 = vpop.f32.mrb[0].mxu0
        %6478 = vmatprep.mubr.bf16.mxu0 0
        %6479 = vmatmul.mubr.bf16.gmra.mrb[0].mxu0 %v6372
        %v6480 = vpop.f32.mrb[0].mxu0
        %v6481 = vadd.f32 0.0, %v6480
        %v6482 = vpop.f32.mrb[0].mxu0
        %v6483 = vpop.f32.mrb[0].mxu0
        %v6484 = vadd.f32 0.0, %v6483
        %v6485 = vpop.f32.mrb[0].mxu0
        %6486 = vdwg.mxu0
        %v6487 = vadd.f32 %v6353, %v6473
        %v6488 = vadd.f32 %v6356, %v6476
        %v6489 = vadd.f32 %v6361, %v6481
        %v6490 = vadd.f32 %v6364, %v6484
        %v6491 = vunpack.c.l.bf16 %v6127
        %v6492 = vlaneseq
        %v6493 = vshrl.u32 %v6492, 7
        %v6494 = vsub.s32 0, %v6493
        %v6495 = vrot.slane %v6491, %v6494
        %v6496 = vadd.f32 %v6487, %v6495
        %v6497 = vadd.f32 %v6488, %v6495
        %v6498 = vadd.f32 %v6489, %v6495
        %v6499 = vadd.f32 %v6490, %v6495
        %v6500 = vmax.f32 %v6496, 0.0
        %v6501 = vmax.f32 %v6497, 0.0
        %v6502 = vmax.f32 %v6498, 0.0
        %v6503 = vmax.f32 %v6499, 0.0
        %v6504 = vpack.c.bf16 %v6501, %v6500
        %v6505 = vpack.c.bf16 %v6503, %v6502
        %v6506 = vld [vmem:[#allocation28] sm:$0xf]
        %v6507 = vld [vmem:[#allocation28 + $0x4] sm:$0xf]
        %v6508 = vld [vmem:[#allocation28 + $0x8] sm:$0xf]
        %v6509 = vld [vmem:[#allocation28 + $0xc] sm:$0xf]
        %v6510 = vld [vmem:[#allocation28 + $0x10] sm:$0xf]
        %v6511 = vld [vmem:[#allocation28 + $0x14] sm:$0xf]
        %v6512 = vld [vmem:[#allocation28 + $0x18] sm:$0xf]
        %v6513 = vld [vmem:[#allocation28 + $0x1c] sm:$0xf]
        %v6514 = vld [vmem:[#allocation28 + $0x20] sm:$0xf]
        %v6515 = vld [vmem:[#allocation28 + $0x24] sm:$0xf]
        %v6516 = vld [vmem:[#allocation28 + $0x28] sm:$0xf]
        %v6517 = vld [vmem:[#allocation28 + $0x2c] sm:$0xf]
        %v6518 = vld [vmem:[#allocation28 + $0x30] sm:$0xf]
        %v6519 = vld [vmem:[#allocation28 + $0x34] sm:$0xf]
        %v6520 = vld [vmem:[#allocation28 + $0x38] sm:$0xf]
        %v6521 = vld [vmem:[#allocation28 + $0x3c] sm:$0xf]
        %v6522 = vld [vmem:[%s69] sm:$0x1]
        %v6523 = vunpack.c.l.bf16 %v6522
        %v6524 = vlaneseq
        %v6525 = vshrl.u32 %v6524, 7
        %v6526 = vsub.s32 0, %v6525
        %v6527 = vrot.slane %v6523, %v6526
        %v6544 = vunpack.c.l.b16 %v6506
        %v6545 = vunpack.c.l.b16 %v6507
        %v6546 = vunpack.c.l.b16 %v6508
        %v6547 = vunpack.c.l.b16 %v6509
        %v6548 = vunpack.c.l.b16 %v6510
        %v6549 = vunpack.c.l.b16 %v6511
        %v6550 = vunpack.c.l.b16 %v6512
        %v6551 = vunpack.c.l.b16 %v6513
        %v6552 = vunpack.c.l.b16 %v6514
        %v6553 = vunpack.c.l.b16 %v6515
        %v6554 = vunpack.c.l.b16 %v6516
        %v6555 = vunpack.c.l.b16 %v6517
        %v6556 = vunpack.c.l.b16 %v6518
        %v6557 = vunpack.c.l.b16 %v6519
        %v6558 = vunpack.c.l.b16 %v6520
        %v6559 = vunpack.c.l.b16 %v6521
        %v6560 = vpack.c.b16 %v6545, %v6544
        %v6561 = vpack.c.b16 %v6547, %v6546
        %v6562 = vpack.c.b16 %v6549, %v6548
        %v6563 = vpack.c.b16 %v6551, %v6550
        %v6564 = vpack.c.b16 %v6553, %v6552
        %v6565 = vpack.c.b16 %v6555, %v6554
        %v6566 = vpack.c.b16 %v6557, %v6556
        %v6567 = vpack.c.b16 %v6559, %v6558
        %6576 = vmatprep.subr.bf16.mxu0 0
        %6577 = vmatpush1.bf16.msra.mxu0 %v6560
        %6578 = vmatprep.subr.bf16.mxu0 0
        %6579 = vmatpush1.bf16.msra.mxu0 %v6561
        %6580 = vmatprep.subr.bf16.mxu0 0
        %6581 = vmatpush1.bf16.msra.mxu0 %v6562
        %6582 = vmatprep.subr.bf16.mxu0 0
        %6583 = vmatpush1.bf16.msra.mxu0 %v6563
        %6584 = vmatprep.subr.bf16.mxu0 0
        %6585 = vmatpush1.bf16.msra.mxu0 %v6564
        %6586 = vmatprep.subr.bf16.mxu0 0
        %6587 = vmatpush1.bf16.msra.mxu0 %v6565
        %6588 = vmatprep.subr.bf16.mxu0 0
        %6589 = vmatpush1.bf16.msra.mxu0 %v6566
        %6590 = vmatprep.subr.bf16.mxu0 0
        %6591 = vmatpush1.bf16.msra.mxu0 %v6567
        %6592 = vmatprep.subr.bf16.mxu0 0
        %6593 = vmatpush1.bf16.msra.mxu0 0
        %6594 = vmatprep.subr.bf16.mxu0 0
        %6595 = vmatpush1.bf16.msra.mxu0 0
        %6596 = vmatprep.subr.bf16.mxu0 0
        %6597 = vmatpush1.bf16.msra.mxu0 0
        %6598 = vmatprep.subr.bf16.mxu0 0
        %6599 = vmatpush1.bf16.msra.mxu0 0
        %6600 = vmatprep.subr.bf16.mxu0 0
        %6601 = vmatpush1.bf16.msra.mxu0 0
        %6602 = vmatprep.subr.bf16.mxu0 0
        %6603 = vmatpush1.bf16.msra.mxu0 0
        %6604 = vmatprep.subr.bf16.mxu0 0
        %6605 = vmatpush1.bf16.msra.mxu0 0
        %6606 = vmatprep.subr.bf16.mxu0 0
        %6607 = vmatpush1.bf16.msra.mxu0 0
        %6608 = vmatprep.mubr.bf16.mxu0 0
        %6609 = vmatmul.mubr.bf16.gmra.mrb[0].mxu0 %v6504
        %v6610 = vpop.f32.mrb[0].mxu0
        %v6611 = vadd.f32 %v6527, %v6610
        %v6612 = vpop.f32.mrb[0].mxu0
        %v6613 = vpop.f32.mrb[0].mxu0
        %v6614 = vadd.f32 %v6527, %v6613
        %v6615 = vpop.f32.mrb[0].mxu0
        %6616 = vmatprep.mubr.bf16.mxu0 0
        %6617 = vmatmul.mubr.bf16.gmra.mrb[0].mxu0 %v6505
        %v6618 = vpop.f32.mrb[0].mxu0
        %v6619 = vadd.f32 %v6527, %v6618
        %v6620 = vpop.f32.mrb[0].mxu0
        %v6621 = vpop.f32.mrb[0].mxu0
        %v6622 = vadd.f32 %v6527, %v6621
        %v6623 = vpop.f32.mrb[0].mxu0
        %6624 = vdwg.mxu0
        %6625 = vst [vmem:[%s1301] sm:$0xff] %v6611
        %6626 = vst [vmem:[%s1301 + $0x8] sm:$0xff] %v6614
        %6627 = vst [vmem:[%s1301 + $0x10] sm:$0xff] %v6619
        %6628 = vst [vmem:[%s1301 + $0x18] sm:$0xff] %v6622
        %p6629 = scmp.lt.s32.totalorder %s91, 1
        %s6630 = scalar_select %p6629, %s91, 1
        %s6631 = smul.addr %s6630, 4
        %s6632 = smul.addr %s6631, 8
        %s6633 = scalar_lea.vmem %s71, %s6632
        // Predicated region
        $region229: #{forward.1} parent=159 // pred_check
          %p6634 = pneg %p849
        $region230: #{forward.1} parent=159 // pred_check_branch
          %6636 = sbr.rel (%p6634) target = $region232
        $region231: #{forward.1} parent=159 // pred_region
          _
        $region232: #{forward.1} parent=159 // pred_fallthru
          _
      $region160: #{forward.1} parent=5 // pred_fallthru
        _
      %p6637 = scmp.le.s32.totalorder 2, %s86
      // Predicated region
      $region233: #{forward.1} parent=5 // pred_check
        %p6638 = pneg %p6637
      $region234: #{forward.1} parent=5 // pred_check_branch
        %6640 = sbr.rel (%p6638) target = $region236
      $region235: #{forward.1} parent=5 // pred_region
        %s6641 = ssub.s32 %s86, 2
        // Predicated region
        $region237: #{forward.1} parent=235 // pred_check
          %p6642 = pneg %p855
        $region238: #{forward.1} parent=235 // pred_check_branch
          %6644 = sbr.rel (%p6642) target = $region240
        $region239: #{forward.1} parent=235 // pred_region
          %p6645 = scmp.lt.s32.totalorder %s92, 1
          %s6646 = scalar_select %p6645, %s92, 1
          %s6647 = smul.addr %s6646, 4
          %s6648 = smul.addr %s6647, 8
          %s6649 = scalar_lea.vmem %s71, %s6648
        $region240: #{forward.1} parent=235 // pred_fallthru
          _
      $region236: #{forward.1} parent=5 // pred_fallthru
        _
    $region6: #{forward.1} parent=1 // loop_footer
      %s90 = sadd.s32 1, %s86
    $region7: #{forward.1} parent=1 // loop_footer_branch
      %85 = sbr.rel target = $region3
    $region8: #{forward.1} parent=1 // loop_exit
      _
    %6650 = vsyncpa [#allocation4], 1
    %s6651 = scalar_lea.sflag [#allocation4], 1
    %6652 = vsyncpa %s6651, 1
    %6653 = vsyncpa [#allocation6], 1
    %6654 = vsyncpa [#allocation9], 1
    %6655 = vsyncpa [#allocation12], 1
    %6656 = vsyncpa [#allocation15], 1
    %6657 = vsyncpa [#allocation18], 1
    %6658 = vsyncpa [#allocation21], 1
    %6659 = vsyncpa [#allocation24], 1
    %6660 = vsyncpa [#allocation27], 1

</llo_original>
